<compile_context>
chip_gen: v5e
topology: v5e:2x2
jax: 0.10.0
libtpu: 0.0.40
codegen_flags: <defaults>
</compile_context>

<pallas_src>
import functools

import jax
import jax.numpy as jnp
import numpy as np
from jax.experimental import pallas as pl
from jax.experimental.pallas import tpu as pltpu


# --------------------------------------------------------------------------
# Fixed AvgPool2d(kernel=5, stride=3) expressed as a (transposed) pooling
# matrix:  PT[s, hw] = 1/25 if flat spatial index hw lies in window s.
# --------------------------------------------------------------------------
def build_pool_matrix_t(H, W, K, S):
    OH = (H - K) // S + 1
    OW = (W - K) // S + 1
    PT = np.zeros((OH * OW, H * W), dtype=np.float32)
    inv = 1.0 / float(K * K)
    for oh in range(OH):
        for ow in range(OW):
            row = oh * OW + ow
            for kh in range(K):
                for kw in range(K):
                    PT[row, (oh * S + kh) * W + (ow * S + kw)] = inv
    return jnp.asarray(PT), OH, OW


# --------------------------------------------------------------------------
# Fused kernel: 1x1 conv -> avg-pool(+bias,ReLU) -> fc1(+ReLU) -> fc2
# Grid: (batch tiles [parallel], fc1 weight slabs [arbitrary / reduction]).
# --------------------------------------------------------------------------
def _inception_aux_kernel(x_ref, pt_ref, wc_ref, bc_ref, w1_ref, b1_ref,
                          w2_ref, b2_ref, o_ref, conv_sc, h_sc,
                          *, tb, n_slabs):
    """
    x_ref  : (TB, HW, C)     bf16  input tile, NHWC flattened over spatial
    pt_ref : (S, HW)         bf16  transposed avg-pool matrix (1/25 entries)
    wc_ref : (C, 128)        bf16  1x1 conv weight
    bc_ref : (1, 128)        f32   1x1 conv bias
    w1_ref : (1, 256, 1024)  bf16  one fc1 weight slab, rows ordered s*128+k
    b1_ref : (1, 1024)       f32
    w2_ref : (1024, NCP)     bf16  fc2 weight padded to a 128-lane multiple
    b2_ref : (1, NCP)        f32
    o_ref  : (TB, NCP)       f32
    conv_sc: (SG, TB, 256)   bf16  scratch: pooled conv acts, slab g = (2g,2g+1)
    h_sc   : (TB, 1024)      f32   scratch: fc1 accumulator
    """
    s = pl.program_id(1)

    # ---- once per batch tile: 1x1 conv -> avg-pool -> +bias -> ReLU --------
    @pl.when(s == 0)
    def _():
        x = x_ref[...]                                        # (TB, HW, C)
        hw, c = x.shape[1], x.shape[2]
        # 1x1 conv (no bias) as ONE 2D matmul over every pixel of every sample.
        y = jnp.dot(x.reshape(tb * hw, c), wc_ref[...],
                    preferred_element_type=jnp.float32)       # (TB*HW, 128)
        y = y.reshape(tb, hw, 128).astype(jnp.bfloat16)
        pt = pt_ref[...]                                      # (S, HW)
        bc = bc_ref[...]                                      # (1, 128)
        rows = []
        for n in range(tb):                                   # tiny pool matmuls
            pooled = jnp.dot(pt, y[n],
                             preferred_element_type=jnp.float32)   # (S, 128)
            act = jnp.maximum(pooled + bc, 0.0).astype(jnp.bfloat16)
            # (S,128) -> (SG,256): spatial pair (2g, 2g+1) along lanes, matching
            # the host-side (s*128+k)-ordered fc1 weight slabs (K=256 per slab).
            rows.append(act.reshape(n_slabs, 256))
        conv_all = jnp.stack(rows, axis=0)                    # (TB, SG, 256)
        for g in range(n_slabs):
            conv_sc[g] = conv_all[:, g, :]
        h_sc[...] = jnp.broadcast_to(b1_ref[...], h_sc.shape)

    # ---- fc1: one K=256 slab per grid step, f32 accumulation ---------------
    h_sc[...] += jnp.dot(conv_sc[s], w1_ref[0],
                         preferred_element_type=jnp.float32)

    # ---- last slab: ReLU -> (dropout id) -> fc2 -> single unmasked store ---
    @pl.when(s == n_slabs - 1)
    def _():
        h = jnp.maximum(h_sc[...], 0.0).astype(jnp.bfloat16)
        # TODO(synk): dropout(p=0.5) eval-mode identity (see header).
        o_ref[...] = (jnp.dot(h, w2_ref[...],
                              preferred_element_type=jnp.float32)
                      + b2_ref[...]).astype(o_ref.dtype)


# --------------------------------------------------------------------------
# One-time host-side parameter preparation.
# --------------------------------------------------------------------------
def prepare_kernel_params(params, num_classes, H=14, W=14):
    PT, OH, OW = build_pool_matrix_t(H, W, K=5, S=3)          # (S, H*W)
    S = OH * OW
    fc1_w = params["fc1_w"]                                    # (128*S, hid)
    hid = fc1_w.shape[1]
    assert fc1_w.shape[0] == 128 * S, (
        f"fc1 expects 128*{S}={128 * S} flattened features (i.e. {H}x{W} "
        f"spatial input); got {fc1_w.shape[0]}")
    assert S % 2 == 0, "slab pairing needs an even number of pooled positions"
    SG = S // 2

    # Re-order fc1 rows from torch.flatten order f = k*S + s to (s*128 + k),
    # then split into SG slabs of K=256 (one spatial pair per slab).
    w1_sk = fc1_w.reshape(128, S, hid).transpose(1, 0, 2).reshape(S * 128, hid)
    w1_slabs = jnp.asarray(w1_sk, jnp.bfloat16).reshape(SG, 256, hid)

    ncp = ((num_classes + 127) // 128) * 128
    w2p = jnp.pad(params["fc2_w"].astype(jnp.bfloat16),
                  ((0, 0), (0, ncp - num_classes)))
    b2p = jnp.pad(params["fc2_b"].astype(jnp.float32),
                  (0, ncp - num_classes)).reshape(1, ncp)

    return {
        "pt": PT.astype(jnp.bfloat16),                         # (S, HW)
        "wc": params["conv_w"].astype(jnp.bfloat16),           # (C, 128)
        "bc": params["conv_b"].reshape(1, -1).astype(jnp.float32),
        "w1": w1_slabs,                                        # (SG, 256, hid)
        "b1": params["fc1_b"].reshape(1, -1).astype(jnp.float32),
        "w2": w2p,                                             # (hid, ncp)
        "b2": b2p,                                             # (1, ncp)
        "num_classes": num_classes,
        "n_pool": S,
        "n_slabs": SG,
    }


def _padded_block_bytes(shape, dtype):
    """VMEM footprint of a block: lanes padded to 128, sublanes to 8/16."""
    itemsize = np.dtype(dtype).itemsize
    sub = 8 * (4 // itemsize)
    dims = list(shape)
    dims[-1] = -(-dims[-1] // 128) * 128
    if len(dims) >= 2:
        dims[-2] = -(-dims[-2] // sub) * sub
    n = 1
    for d in dims:
        n *= int(d)
    return n * itemsize


# --------------------------------------------------------------------------
# InceptionAux forward (single fused pallas_call)
# --------------------------------------------------------------------------
def inception_aux_forward(x, kp, *, batch_tile=8):
    """x: (N, C, 14, 14) float32 NCHW (PyTorch convention)."""
    N, C, H, W = x.shape
    HW = H * W
    S, SG = kp["n_pool"], kp["n_slabs"]
    hid = kp["w2"].shape[0]
    ncp = kp["w2"].shape[1]

    # Layout transform outside the kernel: NCHW -> (N, HW, C), bf16 stream.
    x_hwc = jnp.transpose(x, (0, 2, 3, 1)).reshape(N, HW, C).astype(jnp.bfloat16)
    TB = batch_tile
    NP = -(-N // TB) * TB
    if NP != N:
        x_hwc = jnp.pad(x_hwc, ((0, NP - N), (0, 0), (0, 0)))
    NB = NP // TB

    blocks = [
        ((TB, HW, C), jnp.bfloat16), ((S, HW), jnp.bfloat16),
        ((C, 128), jnp.bfloat16), ((1, 128), jnp.float32),
        ((1, 256, hid), jnp.bfloat16), ((1, hid), jnp.float32),
        ((hid, ncp), jnp.bfloat16), ((1, ncp), jnp.float32),
        ((TB, ncp), jnp.float32),
    ]
    scratch_bytes = (_padded_block_bytes((SG, TB, 256), jnp.bfloat16)
                     + _padded_block_bytes((TB, hid), jnp.float32))
    vmem_limit = int(2 * sum(_padded_block_bytes(s, d) for s, d in blocks)
                     + scratch_bytes + (4 << 20))

    flops = 2 * NP * (HW * C * 128 + S * HW * 128 + S * 128 * hid + hid * ncp)
    bytes_accessed = int(x_hwc.size * 2 + kp["pt"].size * 2 + kp["wc"].size * 2
                         + kp["bc"].size * 4 + kp["w1"].size * 2 * NB
                         + kp["b1"].size * 4 + kp["w2"].size * 2
                         + kp["b2"].size * 4 + NP * ncp * 4)

    kernel = functools.partial(_inception_aux_kernel, tb=TB, n_slabs=SG)
    out_pad = pl.pallas_call(
        kernel,
        out_shape=jax.ShapeDtypeStruct((NP, ncp), jnp.float32),
        grid=(NB, SG),
        in_specs=[
            pl.BlockSpec((TB, HW, C), lambda b, s: (b, 0, 0)),     # x (resident across s)
            pl.BlockSpec((S, HW), lambda b, s: (0, 0)),            # pool matrix
            pl.BlockSpec((C, 128), lambda b, s: (0, 0)),           # conv weight
            pl.BlockSpec((1, 128), lambda b, s: (0, 0)),           # conv bias
            pl.BlockSpec((1, 256, hid), lambda b, s: (s, 0, 0)),   # fc1 slab (streamed)
            pl.BlockSpec((1, hid), lambda b, s: (0, 0)),           # fc1 bias
            pl.BlockSpec((hid, ncp), lambda b, s: (0, 0)),         # fc2 weight
            pl.BlockSpec((1, ncp), lambda b, s: (0, 0)),           # fc2 bias
        ],
        out_specs=pl.BlockSpec((TB, ncp), lambda b, s: (b, 0)),
        scratch_shapes=[
            pltpu.VMEM((SG, TB, 256), jnp.bfloat16),   # conv activations
            pltpu.VMEM((TB, hid), jnp.float32),        # fc1 accumulator
        ],
        compiler_params=pltpu.CompilerParams(
            dimension_semantics=("parallel", "arbitrary"),
            vmem_limit_bytes=vmem_limit,
        ),
        cost_estimate=pl.CostEstimate(
            flops=flops, transcendentals=0, bytes_accessed=bytes_accessed),
    )(x_hwc, kp["pt"], kp["wc"], kp["bc"], kp["w1"], kp["b1"],
      kp["w2"], kp["b2"])

    return out_pad[:N, :kp["num_classes"]]


# --------------------------------------------------------------------------
# Pure-JAX f32 reference (module semantics, for the correctness check).
# --------------------------------------------------------------------------
def reference_forward(x, params):
    N, C, H, W = x.shape
    pooled = jax.lax.reduce_window(
        x, 0.0, jax.lax.add,
        window_dimensions=(1, 1, 5, 5),
        window_strides=(1, 1, 3, 3),
        padding="VALID",
    ) / 25.0                                                    # (N, C, 4, 4)
    conv = jnp.einsum("nchw,ck->nkhw", pooled, params["conv_w"])
    conv = conv + params["conv_b"][None, :, None, None]
    conv = jnp.maximum(conv, 0.0)
    feat = conv.reshape(N, -1)                                  # (N, 2048)
    h = jnp.maximum(feat @ params["fc1_w"] + params["fc1_b"], 0.0)
    return h @ params["fc2_w"] + params["fc2_b"]


# --------------------------------------------------------------------------
# Deterministic parameter init (module shapes from InceptionAux.__init__).
# Biases are nonzero so the bias-add paths are actually exercised.
# --------------------------------------------------------------------------
def init_params(key, in_channel, num_classes):
    k1, k2, k3, k4, k5, k6 = jax.random.split(key, 6)
    sc = 1.0 / np.sqrt(in_channel)
    s1 = 1.0 / np.sqrt(2048.0)
    s2 = 1.0 / np.sqrt(1024.0)
    return {
        # nn.Conv2d(in_channel, 128, 1): weight (128, C, 1, 1) -> stored (C, 128)
        "conv_w": jax.random.uniform(k1, (in_channel, 128), jnp.float32, -sc, sc),
        "conv_b": jax.random.uniform(k5, (128,), jnp.float32, -sc, sc),
        # nn.Linear(2048, 1024): weight (1024, 2048) -> stored (2048, 1024)
        "fc1_w": jax.random.uniform(k2, (2048, 1024), jnp.float32, -s1, s1),
        "fc1_b": jax.random.uniform(k3, (1024,), jnp.float32, -s1, s1),
        # nn.Linear(1024, num_classes): weight (NC, 1024) -> stored (1024, NC)
        "fc2_w": jax.random.uniform(k4, (1024, num_classes), jnp.float32, -s2, s2),
        "fc2_b": jax.random.uniform(k6, (num_classes,), jnp.float32, -s2, s2),
    }


if __name__ == "__main__":
    # fc1 expects 2048 = 128 * 4 * 4 features, which forces 14x14 spatial input
    # (AvgPool2d(5, stride=3): 14 -> 4). Keep batch / channels small.
    batch, in_channel, num_classes = 2, 8, 10
    H = W = 14

    key = jax.random.PRNGKey(0)
    kx, kp_key = jax.random.split(key)
    x = jax.random.normal(kx, (batch, in_channel, H, W), jnp.float32)
    params = init_params(kp_key, in_channel, num_classes)

    kparams = prepare_kernel_params(params, num_classes, H=H, W=W)

    out = inception_aux_forward(x, kparams)
    out = jax.block_until_ready(out)

    ref = reference_forward(x, params)
    assert out.shape == (batch, num_classes)
    # Inputs/weights are streamed in bf16 (f32 MXU accumulation), so compare
    # against the f32 reference with a correspondingly relaxed tolerance.
    np.testing.assert_allclose(np.asarray(out), np.asarray(ref),
                               rtol=2e-2, atol=1e-2)

    print("KERNEL_OK")
</pallas_src>

<mosaic_0001>
module attributes {stable_mosaic.version = 11 : i64} {
  func.func @_inception_aux_kernel(%arg0: i32, %arg1: i32, %arg2: memref<8x196x8xbf16, #tpu.memory_space<vmem>>, %arg3: memref<16x196xbf16, #tpu.memory_space<vmem>>, %arg4: memref<8x128xbf16, #tpu.memory_space<vmem>>, %arg5: memref<1x128xf32, #tpu.memory_space<vmem>>, %arg6: memref<1x256x1024xbf16, #tpu.memory_space<vmem>>, %arg7: memref<1x1024xf32, #tpu.memory_space<vmem>>, %arg8: memref<1024x128xbf16, #tpu.memory_space<vmem>>, %arg9: memref<1x128xf32, #tpu.memory_space<vmem>>, %arg10: memref<8x128xf32, #tpu.memory_space<vmem>>, %arg11: memref<8x8x256xbf16, #tpu.memory_space<vmem>>, %arg12: memref<8x1024xf32, #tpu.memory_space<vmem>>) attributes {dimension_semantics = [#tpu.dimension_semantics<parallel>, #tpu.dimension_semantics<arbitrary>], iteration_bounds = array<i64: 1, 8>, scalar_prefetch = 0 : i64, scratch_operands = 2 : i64, tpu.core_type = #tpu.core_type<tc>, window_params = [{transform_indices = @transform_0, window_bounds = array<i64: 8, 196, 8>}, {pipeline_mode = #tpu.pipeline_mode<synchronous>, transform_indices = @transform_1, window_bounds = array<i64: 16, 196>}, {pipeline_mode = #tpu.pipeline_mode<synchronous>, transform_indices = @transform_2, window_bounds = array<i64: 8, 128>}, {pipeline_mode = #tpu.pipeline_mode<synchronous>, transform_indices = @transform_3, window_bounds = array<i64: 1, 128>}, {transform_indices = @transform_4, window_bounds = array<i64: 1, 256, 1024>}, {pipeline_mode = #tpu.pipeline_mode<synchronous>, transform_indices = @transform_5, window_bounds = array<i64: 1, 1024>}, {pipeline_mode = #tpu.pipeline_mode<synchronous>, transform_indices = @transform_6, window_bounds = array<i64: 1024, 128>}, {pipeline_mode = #tpu.pipeline_mode<synchronous>, transform_indices = @transform_7, window_bounds = array<i64: 1, 128>}, {transform_indices = @transform_8, window_bounds = array<i64: 8, 128>}]} {
    %c0_i32 = arith.constant 0 : i32
    %0 = arith.cmpi eq, %arg1, %c0_i32 : i32
    %1 = arith.extui %0 : i1 to i32
    %c0_i32_0 = arith.constant 0 : i32
    %2 = arith.cmpi ne, %1, %c0_i32_0 : i32
    scf.if %2 {
      %c0_10 = arith.constant 0 : index
      %c0_11 = arith.constant 0 : index
      %c0_12 = arith.constant 0 : index
      %15 = vector.load %arg2[%c0_10, %c0_11, %c0_12] : memref<8x196x8xbf16, #tpu.memory_space<vmem>>, vector<8x196x8xbf16>
      %16 = vector.shape_cast %15 : vector<8x196x8xbf16> to vector<1568x8xbf16>
      %c0_13 = arith.constant 0 : index
      %c0_14 = arith.constant 0 : index
      %17 = vector.load %arg4[%c0_13, %c0_14] : memref<8x128xbf16, #tpu.memory_space<vmem>>, vector<8x128xbf16>
      %cst_15 = arith.constant dense<0.000000e+00> : vector<1568x128xf32>
      %18 = tpu.matmul %16, %17, %cst_15 {dimension_numbers = #tpu.dot_dimension_numbers<[1], [0], [0], [1], [0, 0, 1, 1], [], []>} : vector<1568x8xbf16>, vector<8x128xbf16>, vector<1568x128xf32> -> vector<1568x128xf32>
      %19 = vector.shape_cast %18 : vector<1568x128xf32> to vector<8x196x128xf32>
      %20 = arith.truncf %19 : vector<8x196x128xf32> to vector<8x196x128xbf16>
      %c0_16 = arith.constant 0 : index
      %c0_17 = arith.constant 0 : index
      %21 = vector.load %arg3[%c0_16, %c0_17] : memref<16x196xbf16, #tpu.memory_space<vmem>>, vector<16x196xbf16>
      %c0_18 = arith.constant 0 : index
      %c0_19 = arith.constant 0 : index
      %22 = vector.load %arg5[%c0_18, %c0_19] : memref<1x128xf32, #tpu.memory_space<vmem>>, vector<1x128xf32>
      %23 = vector.extract_strided_slice %20 {offsets = [0, 0, 0], sizes = [1, 196, 128], strides = [1, 1, 1]} : vector<8x196x128xbf16> to vector<1x196x128xbf16>
      %24 = vector.shape_cast %23 : vector<1x196x128xbf16> to vector<196x128xbf16>
      %cst_20 = arith.constant dense<0.000000e+00> : vector<16x128xf32>
      %25 = tpu.matmul %21, %24, %cst_20 {dimension_numbers = #tpu.dot_dimension_numbers<[1], [0], [0], [1], [0, 0, 1, 1], [], []>} : vector<16x196xbf16>, vector<196x128xbf16>, vector<16x128xf32> -> vector<16x128xf32>
      %26 = vector.broadcast %22 : vector<1x128xf32> to vector<16x128xf32>
      %27 = arith.addf %25, %26 : vector<16x128xf32>
      %cst_21 = arith.constant 0.000000e+00 : f32
      %28 = vector.broadcast %cst_21 : f32 to vector<16x128xf32>
      %29 = arith.maximumf %27, %28 : vector<16x128xf32>
      %30 = arith.truncf %29 : vector<16x128xf32> to vector<16x128xbf16>
      %31 = vector.shape_cast %30 : vector<16x128xbf16> to vector<8x256xbf16>
      %32 = vector.extract_strided_slice %20 {offsets = [1, 0, 0], sizes = [1, 196, 128], strides = [1, 1, 1]} : vector<8x196x128xbf16> to vector<1x196x128xbf16>
      %33 = vector.shape_cast %32 : vector<1x196x128xbf16> to vector<196x128xbf16>
      %cst_22 = arith.constant dense<0.000000e+00> : vector<16x128xf32>
      %34 = tpu.matmul %21, %33, %cst_22 {dimension_numbers = #tpu.dot_dimension_numbers<[1], [0], [0], [1], [0, 0, 1, 1], [], []>} : vector<16x196xbf16>, vector<196x128xbf16>, vector<16x128xf32> -> vector<16x128xf32>
      %35 = vector.broadcast %22 : vector<1x128xf32> to vector<16x128xf32>
      %36 = arith.addf %34, %35 : vector<16x128xf32>
      %cst_23 = arith.constant 0.000000e+00 : f32
      %37 = vector.broadcast %cst_23 : f32 to vector<16x128xf32>
      %38 = arith.maximumf %36, %37 : vector<16x128xf32>
      %39 = arith.truncf %38 : vector<16x128xf32> to vector<16x128xbf16>
      %40 = vector.shape_cast %39 : vector<16x128xbf16> to vector<8x256xbf16>
      %41 = vector.extract_strided_slice %20 {offsets = [2, 0, 0], sizes = [1, 196, 128], strides = [1, 1, 1]} : vector<8x196x128xbf16> to vector<1x196x128xbf16>
      %42 = vector.shape_cast %41 : vector<1x196x128xbf16> to vector<196x128xbf16>
      %cst_24 = arith.constant dense<0.000000e+00> : vector<16x128xf32>
      %43 = tpu.matmul %21, %42, %cst_24 {dimension_numbers = #tpu.dot_dimension_numbers<[1], [0], [0], [1], [0, 0, 1, 1], [], []>} : vector<16x196xbf16>, vector<196x128xbf16>, vector<16x128xf32> -> vector<16x128xf32>
      %44 = vector.broadcast %22 : vector<1x128xf32> to vector<16x128xf32>
      %45 = arith.addf %43, %44 : vector<16x128xf32>
      %cst_25 = arith.constant 0.000000e+00 : f32
      %46 = vector.broadcast %cst_25 : f32 to vector<16x128xf32>
      %47 = arith.maximumf %45, %46 : vector<16x128xf32>
      %48 = arith.truncf %47 : vector<16x128xf32> to vector<16x128xbf16>
      %49 = vector.shape_cast %48 : vector<16x128xbf16> to vector<8x256xbf16>
      %50 = vector.extract_strided_slice %20 {offsets = [3, 0, 0], sizes = [1, 196, 128], strides = [1, 1, 1]} : vector<8x196x128xbf16> to vector<1x196x128xbf16>
      %51 = vector.shape_cast %50 : vector<1x196x128xbf16> to vector<196x128xbf16>
      %cst_26 = arith.constant dense<0.000000e+00> : vector<16x128xf32>
      %52 = tpu.matmul %21, %51, %cst_26 {dimension_numbers = #tpu.dot_dimension_numbers<[1], [0], [0], [1], [0, 0, 1, 1], [], []>} : vector<16x196xbf16>, vector<196x128xbf16>, vector<16x128xf32> -> vector<16x128xf32>
      %53 = vector.broadcast %22 : vector<1x128xf32> to vector<16x128xf32>
      %54 = arith.addf %52, %53 : vector<16x128xf32>
      %cst_27 = arith.constant 0.000000e+00 : f32
      %55 = vector.broadcast %cst_27 : f32 to vector<16x128xf32>
      %56 = arith.maximumf %54, %55 : vector<16x128xf32>
      %57 = arith.truncf %56 : vector<16x128xf32> to vector<16x128xbf16>
      %58 = vector.shape_cast %57 : vector<16x128xbf16> to vector<8x256xbf16>
      %59 = vector.extract_strided_slice %20 {offsets = [4, 0, 0], sizes = [1, 196, 128], strides = [1, 1, 1]} : vector<8x196x128xbf16> to vector<1x196x128xbf16>
      %60 = vector.shape_cast %59 : vector<1x196x128xbf16> to vector<196x128xbf16>
      %cst_28 = arith.constant dense<0.000000e+00> : vector<16x128xf32>
      %61 = tpu.matmul %21, %60, %cst_28 {dimension_numbers = #tpu.dot_dimension_numbers<[1], [0], [0], [1], [0, 0, 1, 1], [], []>} : vector<16x196xbf16>, vector<196x128xbf16>, vector<16x128xf32> -> vector<16x128xf32>
      %62 = vector.broadcast %22 : vector<1x128xf32> to vector<16x128xf32>
      %63 = arith.addf %61, %62 : vector<16x128xf32>
      %cst_29 = arith.constant 0.000000e+00 : f32
      %64 = vector.broadcast %cst_29 : f32 to vector<16x128xf32>
      %65 = arith.maximumf %63, %64 : vector<16x128xf32>
      %66 = arith.truncf %65 : vector<16x128xf32> to vector<16x128xbf16>
      %67 = vector.shape_cast %66 : vector<16x128xbf16> to vector<8x256xbf16>
      %68 = vector.extract_strided_slice %20 {offsets = [5, 0, 0], sizes = [1, 196, 128], strides = [1, 1, 1]} : vector<8x196x128xbf16> to vector<1x196x128xbf16>
      %69 = vector.shape_cast %68 : vector<1x196x128xbf16> to vector<196x128xbf16>
      %cst_30 = arith.constant dense<0.000000e+00> : vector<16x128xf32>
      %70 = tpu.matmul %21, %69, %cst_30 {dimension_numbers = #tpu.dot_dimension_numbers<[1], [0], [0], [1], [0, 0, 1, 1], [], []>} : vector<16x196xbf16>, vector<196x128xbf16>, vector<16x128xf32> -> vector<16x128xf32>
      %71 = vector.broadcast %22 : vector<1x128xf32> to vector<16x128xf32>
      %72 = arith.addf %70, %71 : vector<16x128xf32>
      %cst_31 = arith.constant 0.000000e+00 : f32
      %73 = vector.broadcast %cst_31 : f32 to vector<16x128xf32>
      %74 = arith.maximumf %72, %73 : vector<16x128xf32>
      %75 = arith.truncf %74 : vector<16x128xf32> to vector<16x128xbf16>
      %76 = vector.shape_cast %75 : vector<16x128xbf16> to vector<8x256xbf16>
      %77 = vector.extract_strided_slice %20 {offsets = [6, 0, 0], sizes = [1, 196, 128], strides = [1, 1, 1]} : vector<8x196x128xbf16> to vector<1x196x128xbf16>
      %78 = vector.shape_cast %77 : vector<1x196x128xbf16> to vector<196x128xbf16>
      %cst_32 = arith.constant dense<0.000000e+00> : vector<16x128xf32>
      %79 = tpu.matmul %21, %78, %cst_32 {dimension_numbers = #tpu.dot_dimension_numbers<[1], [0], [0], [1], [0, 0, 1, 1], [], []>} : vector<16x196xbf16>, vector<196x128xbf16>, vector<16x128xf32> -> vector<16x128xf32>
      %80 = vector.broadcast %22 : vector<1x128xf32> to vector<16x128xf32>
      %81 = arith.addf %79, %80 : vector<16x128xf32>
      %cst_33 = arith.constant 0.000000e+00 : f32
      %82 = vector.broadcast %cst_33 : f32 to vector<16x128xf32>
      %83 = arith.maximumf %81, %82 : vector<16x128xf32>
      %84 = arith.truncf %83 : vector<16x128xf32> to vector<16x128xbf16>
      %85 = vector.shape_cast %84 : vector<16x128xbf16> to vector<8x256xbf16>
      %86 = vector.extract_strided_slice %20 {offsets = [7, 0, 0], sizes = [1, 196, 128], strides = [1, 1, 1]} : vector<8x196x128xbf16> to vector<1x196x128xbf16>
      %87 = vector.shape_cast %86 : vector<1x196x128xbf16> to vector<196x128xbf16>
      %cst_34 = arith.constant dense<0.000000e+00> : vector<16x128xf32>
      %88 = tpu.matmul %21, %87, %cst_34 {dimension_numbers = #tpu.dot_dimension_numbers<[1], [0], [0], [1], [0, 0, 1, 1], [], []>} : vector<16x196xbf16>, vector<196x128xbf16>, vector<16x128xf32> -> vector<16x128xf32>
      %89 = vector.broadcast %22 : vector<1x128xf32> to vector<16x128xf32>
      %90 = arith.addf %88, %89 : vector<16x128xf32>
      %cst_35 = arith.constant 0.000000e+00 : f32
      %91 = vector.broadcast %cst_35 : f32 to vector<16x128xf32>
      %92 = arith.maximumf %90, %91 : vector<16x128xf32>
      %93 = arith.truncf %92 : vector<16x128xf32> to vector<16x128xbf16>
      %94 = vector.shape_cast %93 : vector<16x128xbf16> to vector<8x256xbf16>
      %95 = vector.shape_cast %31 : vector<8x256xbf16> to vector<1x8x256xbf16>
      %96 = vector.shape_cast %40 : vector<8x256xbf16> to vector<1x8x256xbf16>
      %97 = vector.shape_cast %49 : vector<8x256xbf16> to vector<1x8x256xbf16>
      %98 = vector.shape_cast %58 : vector<8x256xbf16> to vector<1x8x256xbf16>
      %99 = vector.shape_cast %67 : vector<8x256xbf16> to vector<1x8x256xbf16>
      %100 = vector.shape_cast %76 : vector<8x256xbf16> to vector<1x8x256xbf16>
      %101 = vector.shape_cast %85 : vector<8x256xbf16> to vector<1x8x256xbf16>
      %102 = vector.shape_cast %94 : vector<8x256xbf16> to vector<1x8x256xbf16>
      %103 = tpu.concatenate %95, %96, %97, %98, %99, %100, %101, %102 in 0 : vector<1x8x256xbf16>, vector<1x8x256xbf16>, vector<1x8x256xbf16>, vector<1x8x256xbf16>, vector<1x8x256xbf16>, vector<1x8x256xbf16>, vector<1x8x256xbf16>, vector<1x8x256xbf16> -> vector<8x8x256xbf16>
      %104 = vector.extract_strided_slice %103 {offsets = [0, 0, 0], sizes = [8, 1, 256], strides = [1, 1, 1]} : vector<8x8x256xbf16> to vector<8x1x256xbf16>
      %105 = vector.shape_cast %104 : vector<8x1x256xbf16> to vector<8x256xbf16>
      %c0_36 = arith.constant 0 : index
      %c0_37 = arith.constant 0 : index
      %c0_38 = arith.constant 0 : index
      %106 = vector.load %arg11[%c0_36, %c0_37, %c0_38] : memref<8x8x256xbf16, #tpu.memory_space<vmem>>, vector<1x8x256xbf16>
      %107 = vector.shape_cast %106 : vector<1x8x256xbf16> to vector<8x256xbf16>
      %108 = vector.shape_cast %105 : vector<8x256xbf16> to vector<1x8x256xbf16>
      tpu.vector_store %arg11[%c0_36, %c0_37, %c0_38], %108 {strides = array<i32>} : memref<8x8x256xbf16, #tpu.memory_space<vmem>>, vector<1x8x256xbf16>,
      %109 = vector.extract_strided_slice %103 {offsets = [0, 1, 0], sizes = [8, 1, 256], strides = [1, 1, 1]} : vector<8x8x256xbf16> to vector<8x1x256xbf16>
      %110 = vector.shape_cast %109 : vector<8x1x256xbf16> to vector<8x256xbf16>
      %c1 = arith.constant 1 : index
      %c0_39 = arith.constant 0 : index
      %c0_40 = arith.constant 0 : index
      %111 = vector.load %arg11[%c1, %c0_39, %c0_40] : memref<8x8x256xbf16, #tpu.memory_space<vmem>>, vector<1x8x256xbf16>
      %112 = vector.shape_cast %111 : vector<1x8x256xbf16> to vector<8x256xbf16>
      %113 = vector.shape_cast %110 : vector<8x256xbf16> to vector<1x8x256xbf16>
      tpu.vector_store %arg11[%c1, %c0_39, %c0_40], %113 {strides = array<i32>} : memref<8x8x256xbf16, #tpu.memory_space<vmem>>, vector<1x8x256xbf16>,
      %114 = vector.extract_strided_slice %103 {offsets = [0, 2, 0], sizes = [8, 1, 256], strides = [1, 1, 1]} : vector<8x8x256xbf16> to vector<8x1x256xbf16>
      %115 = vector.shape_cast %114 : vector<8x1x256xbf16> to vector<8x256xbf16>
      %c2 = arith.constant 2 : index
      %c0_41 = arith.constant 0 : index
      %c0_42 = arith.constant 0 : index
      %116 = vector.load %arg11[%c2, %c0_41, %c0_42] : memref<8x8x256xbf16, #tpu.memory_space<vmem>>, vector<1x8x256xbf16>
      %117 = vector.shape_cast %116 : vector<1x8x256xbf16> to vector<8x256xbf16>
      %118 = vector.shape_cast %115 : vector<8x256xbf16> to vector<1x8x256xbf16>
      tpu.vector_store %arg11[%c2, %c0_41, %c0_42], %118 {strides = array<i32>} : memref<8x8x256xbf16, #tpu.memory_space<vmem>>, vector<1x8x256xbf16>,
      %119 = vector.extract_strided_slice %103 {offsets = [0, 3, 0], sizes = [8, 1, 256], strides = [1, 1, 1]} : vector<8x8x256xbf16> to vector<8x1x256xbf16>
      %120 = vector.shape_cast %119 : vector<8x1x256xbf16> to vector<8x256xbf16>
      %c3 = arith.constant 3 : index
      %c0_43 = arith.constant 0 : index
      %c0_44 = arith.constant 0 : index
      %121 = vector.load %arg11[%c3, %c0_43, %c0_44] : memref<8x8x256xbf16, #tpu.memory_space<vmem>>, vector<1x8x256xbf16>
      %122 = vector.shape_cast %121 : vector<1x8x256xbf16> to vector<8x256xbf16>
      %123 = vector.shape_cast %120 : vector<8x256xbf16> to vector<1x8x256xbf16>
      tpu.vector_store %arg11[%c3, %c0_43, %c0_44], %123 {strides = array<i32>} : memref<8x8x256xbf16, #tpu.memory_space<vmem>>, vector<1x8x256xbf16>,
      %124 = vector.extract_strided_slice %103 {offsets = [0, 4, 0], sizes = [8, 1, 256], strides = [1, 1, 1]} : vector<8x8x256xbf16> to vector<8x1x256xbf16>
      %125 = vector.shape_cast %124 : vector<8x1x256xbf16> to vector<8x256xbf16>
      %c4 = arith.constant 4 : index
      %c0_45 = arith.constant 0 : index
      %c0_46 = arith.constant 0 : index
      %126 = vector.load %arg11[%c4, %c0_45, %c0_46] : memref<8x8x256xbf16, #tpu.memory_space<vmem>>, vector<1x8x256xbf16>
      %127 = vector.shape_cast %126 : vector<1x8x256xbf16> to vector<8x256xbf16>
      %128 = vector.shape_cast %125 : vector<8x256xbf16> to vector<1x8x256xbf16>
      tpu.vector_store %arg11[%c4, %c0_45, %c0_46], %128 {strides = array<i32>} : memref<8x8x256xbf16, #tpu.memory_space<vmem>>, vector<1x8x256xbf16>,
      %129 = vector.extract_strided_slice %103 {offsets = [0, 5, 0], sizes = [8, 1, 256], strides = [1, 1, 1]} : vector<8x8x256xbf16> to vector<8x1x256xbf16>
      %130 = vector.shape_cast %129 : vector<8x1x256xbf16> to vector<8x256xbf16>
      %c5 = arith.constant 5 : index
      %c0_47 = arith.constant 0 : index
      %c0_48 = arith.constant 0 : index
      %131 = vector.load %arg11[%c5, %c0_47, %c0_48] : memref<8x8x256xbf16, #tpu.memory_space<vmem>>, vector<1x8x256xbf16>
      %132 = vector.shape_cast %131 : vector<1x8x256xbf16> to vector<8x256xbf16>
      %133 = vector.shape_cast %130 : vector<8x256xbf16> to vector<1x8x256xbf16>
      tpu.vector_store %arg11[%c5, %c0_47, %c0_48], %133 {strides = array<i32>} : memref<8x8x256xbf16, #tpu.memory_space<vmem>>, vector<1x8x256xbf16>,
      %134 = vector.extract_strided_slice %103 {offsets = [0, 6, 0], sizes = [8, 1, 256], strides = [1, 1, 1]} : vector<8x8x256xbf16> to vector<8x1x256xbf16>
      %135 = vector.shape_cast %134 : vector<8x1x256xbf16> to vector<8x256xbf16>
      %c6 = arith.constant 6 : index
      %c0_49 = arith.constant 0 : index
      %c0_50 = arith.constant 0 : index
      %136 = vector.load %arg11[%c6, %c0_49, %c0_50] : memref<8x8x256xbf16, #tpu.memory_space<vmem>>, vector<1x8x256xbf16>
      %137 = vector.shape_cast %136 : vector<1x8x256xbf16> to vector<8x256xbf16>
      %138 = vector.shape_cast %135 : vector<8x256xbf16> to vector<1x8x256xbf16>
      tpu.vector_store %arg11[%c6, %c0_49, %c0_50], %138 {strides = array<i32>} : memref<8x8x256xbf16, #tpu.memory_space<vmem>>, vector<1x8x256xbf16>,
      %139 = vector.extract_strided_slice %103 {offsets = [0, 7, 0], sizes = [8, 1, 256], strides = [1, 1, 1]} : vector<8x8x256xbf16> to vector<8x1x256xbf16>
      %140 = vector.shape_cast %139 : vector<8x1x256xbf16> to vector<8x256xbf16>
      %c7 = arith.constant 7 : index
      %c0_51 = arith.constant 0 : index
      %c0_52 = arith.constant 0 : index
      %141 = vector.load %arg11[%c7, %c0_51, %c0_52] : memref<8x8x256xbf16, #tpu.memory_space<vmem>>, vector<1x8x256xbf16>
      %142 = vector.shape_cast %141 : vector<1x8x256xbf16> to vector<8x256xbf16>
      %143 = vector.shape_cast %140 : vector<8x256xbf16> to vector<1x8x256xbf16>
      tpu.vector_store %arg11[%c7, %c0_51, %c0_52], %143 {strides = array<i32>} : memref<8x8x256xbf16, #tpu.memory_space<vmem>>, vector<1x8x256xbf16>,
      %c0_53 = arith.constant 0 : index
      %c0_54 = arith.constant 0 : index
      %144 = vector.load %arg7[%c0_53, %c0_54] : memref<1x1024xf32, #tpu.memory_space<vmem>>, vector<1x1024xf32>
      %145 = vector.shape_cast %144 : vector<1x1024xf32> to vector<1x1024xf32>
      %146 = vector.broadcast %145 : vector<1x1024xf32> to vector<8x1024xf32>
      %c0_55 = arith.constant 0 : index
      %c0_56 = arith.constant 0 : index
      %147 = vector.load %arg12[%c0_55, %c0_56] : memref<8x1024xf32, #tpu.memory_space<vmem>>, vector<8x1024xf32>
      tpu.vector_store %arg12[%c0_55, %c0_56], %146 {strides = array<i32>} : memref<8x1024xf32, #tpu.memory_space<vmem>>, vector<8x1024xf32>,
    } else {
    }
    %c0 = arith.constant 0 : index
    %c0_1 = arith.constant 0 : index
    %3 = vector.load %arg12[%c0, %c0_1] : memref<8x1024xf32, #tpu.memory_space<vmem>>, vector<8x1024xf32>
    %4 = arith.index_cast %arg1 : i32 to index
    %c0_2 = arith.constant 0 : index
    %c0_3 = arith.constant 0 : index
    %5 = vector.load %arg11[%4, %c0_2, %c0_3] : memref<8x8x256xbf16, #tpu.memory_space<vmem>>, vector<1x8x256xbf16>
    %6 = vector.shape_cast %5 : vector<1x8x256xbf16> to vector<8x256xbf16>
    %c0_4 = arith.constant 0 : index
    %c0_5 = arith.constant 0 : index
    %c0_6 = arith.constant 0 : index
    %7 = vector.load %arg6[%c0_4, %c0_5, %c0_6] : memref<1x256x1024xbf16, #tpu.memory_space<vmem>>, vector<1x256x1024xbf16>
    %8 = vector.shape_cast %7 : vector<1x256x1024xbf16> to vector<256x1024xbf16>
    %cst = arith.constant dense<0.000000e+00> : vector<8x1024xf32>
    %9 = tpu.matmul %6, %8, %cst {dimension_numbers = #tpu.dot_dimension_numbers<[1], [0], [0], [1], [0, 0, 1, 1], [], []>} : vector<8x256xbf16>, vector<256x1024xbf16>, vector<8x1024xf32> -> vector<8x1024xf32>
    %10 = arith.addf %3, %9 : vector<8x1024xf32>
    %c0_7 = arith.constant 0 : index
    %c0_8 = arith.constant 0 : index
    %11 = vector.load %arg12[%c0_7, %c0_8] : memref<8x1024xf32, #tpu.memory_space<vmem>>, vector<8x1024xf32>
    tpu.vector_store %arg12[%c0_7, %c0_8], %10 {strides = array<i32>} : memref<8x1024xf32, #tpu.memory_space<vmem>>, vector<8x1024xf32>,
    %c7_i32 = arith.constant 7 : i32
    %12 = arith.cmpi eq, %arg1, %c7_i32 : i32
    %13 = arith.extui %12 : i1 to i32
    %c0_i32_9 = arith.constant 0 : i32
    %14 = arith.cmpi ne, %13, %c0_i32_9 : i32
    scf.if %14 {
      %c0_10 = arith.constant 0 : index
      %c0_11 = arith.constant 0 : index
      %15 = vector.load %arg12[%c0_10, %c0_11] : memref<8x1024xf32, #tpu.memory_space<vmem>>, vector<8x1024xf32>
      %cst_12 = arith.constant 0.000000e+00 : f32
      %16 = vector.broadcast %cst_12 : f32 to vector<8x1024xf32>
      %17 = arith.maximumf %15, %16 : vector<8x1024xf32>
      %18 = arith.truncf %17 : vector<8x1024xf32> to vector<8x1024xbf16>
      %c0_13 = arith.constant 0 : index
      %c0_14 = arith.constant 0 : index
      %19 = vector.load %arg8[%c0_13, %c0_14] : memref<1024x128xbf16, #tpu.memory_space<vmem>>, vector<1024x128xbf16>
      %cst_15 = arith.constant dense<0.000000e+00> : vector<8x128xf32>
      %20 = tpu.matmul %18, %19, %cst_15 {dimension_numbers = #tpu.dot_dimension_numbers<[1], [0], [0], [1], [0, 0, 1, 1], [], []>} : vector<8x1024xbf16>, vector<1024x128xbf16>, vector<8x128xf32> -> vector<8x128xf32>
      %c0_16 = arith.constant 0 : index
      %c0_17 = arith.constant 0 : index
      %21 = vector.load %arg9[%c0_16, %c0_17] : memref<1x128xf32, #tpu.memory_space<vmem>>, vector<1x128xf32>
      %22 = vector.broadcast %21 : vector<1x128xf32> to vector<8x128xf32>
      %23 = arith.addf %20, %22 : vector<8x128xf32>
      %c0_18 = arith.constant 0 : index
      %c0_19 = arith.constant 0 : index
      %24 = vector.load %arg10[%c0_18, %c0_19] : memref<8x128xf32, #tpu.memory_space<vmem>>, vector<8x128xf32>
      tpu.vector_store %arg10[%c0_18, %c0_19], %23 {strides = array<i32>} : memref<8x128xf32, #tpu.memory_space<vmem>>, vector<8x128xf32>,
    } else {
    }
    return
  }
  func.func @transform_0(%arg0: i32, %arg1: i32) -> (i32, i32, i32) {
    %c0_i32 = arith.constant 0 : i32
    %c0_i32_0 = arith.constant 0 : i32
    %c0_i32_1 = arith.constant 0 : i32
    return %arg0, %c0_i32, %c0_i32_0 : i32, i32, i32
  }
  func.func @transform_1(%arg0: i32, %arg1: i32) -> (i32, i32) {
    %c0_i32 = arith.constant 0 : i32
    %c0_i32_0 = arith.constant 0 : i32
    %c0_i32_1 = arith.constant 0 : i32
    return %c0_i32, %c0_i32_0 : i32, i32
  }
  func.func @transform_2(%arg0: i32, %arg1: i32) -> (i32, i32) {
    %c0_i32 = arith.constant 0 : i32
    %c0_i32_0 = arith.constant 0 : i32
    %c0_i32_1 = arith.constant 0 : i32
    return %c0_i32, %c0_i32_0 : i32, i32
  }
  func.func @transform_3(%arg0: i32, %arg1: i32) -> (i32, i32) {
    %c0_i32 = arith.constant 0 : i32
    %c0_i32_0 = arith.constant 0 : i32
    %c0_i32_1 = arith.constant 0 : i32
    return %c0_i32, %c0_i32_0 : i32, i32
  }
  func.func @transform_4(%arg0: i32, %arg1: i32) -> (i32, i32, i32) {
    %c0_i32 = arith.constant 0 : i32
    %c0_i32_0 = arith.constant 0 : i32
    %c0_i32_1 = arith.constant 0 : i32
    return %arg1, %c0_i32, %c0_i32_0 : i32, i32, i32
  }
  func.func @transform_5(%arg0: i32, %arg1: i32) -> (i32, i32) {
    %c0_i32 = arith.constant 0 : i32
    %c0_i32_0 = arith.constant 0 : i32
    %c0_i32_1 = arith.constant 0 : i32
    return %c0_i32, %c0_i32_0 : i32, i32
  }
  func.func @transform_6(%arg0: i32, %arg1: i32) -> (i32, i32) {
    %c0_i32 = arith.constant 0 : i32
    %c0_i32_0 = arith.constant 0 : i32
    %c0_i32_1 = arith.constant 0 : i32
    return %c0_i32, %c0_i32_0 : i32, i32
  }
  func.func @transform_7(%arg0: i32, %arg1: i32) -> (i32, i32) {
    %c0_i32 = arith.constant 0 : i32
    %c0_i32_0 = arith.constant 0 : i32
    %c0_i32_1 = arith.constant 0 : i32
    return %c0_i32, %c0_i32_0 : i32, i32
  }
  func.func @transform_8(%arg0: i32, %arg1: i32) -> (i32, i32) {
    %c0_i32 = arith.constant 0 : i32
    %c0_i32_0 = arith.constant 0 : i32
    return %arg0, %c0_i32 : i32, i32
  }
}

</mosaic_0001>

<llo_original>
// kernel: tpu_custom_call.1
$region0: #{tpu_custom_call.1}
  #allocation0 [shape = 'u32[]', space=smem, size = 0x4, offset = 0x4, fixed_abs, tag = 'smem constant byte address 0x4 - core index']
  #allocation1 [shape = 'u32[72,128]{1,0:T(1,128)}', space=vmem, size = 0x9000, scoped, tag = 'internal scratch']
  #allocation2 [shape = 'bf16[8,8,256]{2,1,0:T(8,128)(2,1)}', space=vmem, size = 0x8000, scoped, tag = 'scratch operand']
  #allocation3 [shape = 'f32[8,1024]{1,0:T(8,128)}', space=vmem, size = 0x8000, scoped, tag = 'scratch operand']
  %s0 = inlined_call_operand.vmem [shape: bf16[8,196,8], index: 0, kind: input, shape index: {}]
  %s1 = inlined_call_operand.hbm [shape: bf16[16,196], index: 1, kind: input, shape index: {}]
  %s2 = inlined_call_operand.hbm [shape: bf16[8,128], index: 2, kind: input, shape index: {}]
  %s3 = inlined_call_operand.hbm [shape: f32[1,128], index: 3, kind: input, shape index: {}]
  %s4 = inlined_call_operand.hbm [shape: bf16[8,256,1024], index: 4, kind: input, shape index: {}]
  %s5 = inlined_call_operand.hbm [shape: f32[1,1024], index: 5, kind: input, shape index: {}]
  %s6 = inlined_call_operand.hbm [shape: bf16[1024,128], index: 6, kind: input, shape index: {}]
  %s7 = inlined_call_operand.hbm [shape: f32[1,128], index: 7, kind: input, shape index: {}]
  %s8 = inlined_call_operand.hbm [shape: f32[8,128], index: 8, kind: output, shape index: {}]
  %s9 = sld [smem:[#allocation0]]
  $region101: #{tpu_custom_call.1} parent=0
    _
  %s11 = ssub.s32 1, %s9
  %s12 = scalar_select 0, %s11, %s9
  $region1: #{tpu_custom_call.1} parent=0
    #allocation4 [shape = 'u8[8192]{0}', space=vmem, size = 0x2000, scoped, tag = 'input window, operand 1, single buffered']
    #allocation5 [shape = 's32[2]{0}', space=sflag, size = 0x8, scoped, tag = 'scoped memory for tpu_custom_call.1']
    #allocation6 [shape = 's32[2]{0}', space=sflag, size = 0x8, scoped, tag = 'scoped memory for tpu_custom_call.1']
    #allocation7 [shape = 'u8[2048]{0}', space=vmem, size = 0x800, scoped, tag = 'input window, operand 2, single buffered']
    #allocation8 [shape = 's32[1]{0}', space=sflag, size = 0x4, scoped, tag = 'scoped memory for tpu_custom_call.1']
    #allocation9 [shape = 'u8[512]{0}', space=vmem, size = 0x400, scoped, tag = 'input window, operand 3, single buffered']
    #allocation10 [shape = 'u8[1048576]{0}', space=vmem, size = 0x100000, scoped, tag = 'input window, operand 4']
    #allocation11 [shape = 's32[2]{0}', space=sflag, size = 0x8, scoped, tag = 'scoped memory for tpu_custom_call.1']
    #allocation12 [shape = 'u8[4096]{0}', space=vmem, size = 0x1000, scoped, tag = 'input window, operand 5, single buffered']
    #allocation13 [shape = 'u8[262144]{0}', space=vmem, size = 0x40000, scoped, tag = 'input window, operand 6, single buffered']
    #allocation14 [shape = 's32[1]{0}', space=sflag, size = 0x4, scoped, tag = 'scoped memory for tpu_custom_call.1']
    #allocation15 [shape = 'u8[512]{0}', space=vmem, size = 0x400, scoped, tag = 'input window, operand 7, single buffered']
    #allocation16 [shape = 'u8[4096]{0}', space=vmem, size = 0x1000, scoped, tag = 'output window, operand 0, single buffered']
    %13 = vsyncpa [#allocation5], 0
    %14 = vsyncpa [#allocation8], 0
    %15 = vsyncpa [#allocation11], 0
    %s16 = scalar_lea.sflag [#allocation11], 1
    %17 = vsyncpa %s16, 0
    %18 = vsyncpa [#allocation14], 0
    %19 = vsyncpa [#allocation6], 0
    loop: start=0, step=1, limit=10
    $region2: #{tpu_custom_call.1} parent=1 // loop_pre_header
      _
    $region3: #{tpu_custom_call.1} parent=1 // loop_header
      %s21 = sphi 0, %s25
      %p22 = scmp.ge.s32.totalorder %s21, 10
      %s28 = sphi 0, %s40
      %s29 = sphi 0, %s36
      %s30 = sphi 0, %s28
      %s31 = sphi 0, %s29
      %s32 = sphi 0, %s30
      %s33 = sphi 0, %s31
      %s43 = sphi 0, %s45
      %s46 = sphi 0, %s43
      %s47 = sphi 0, %s46
      %s63 = sphi 0, %s47
      %s67 = sphi 0, %s67
      %s69 = sphi 0, %s67
      %s70 = sphi 0, %s69
      %s84 = sphi 0, %s70
      %s88 = sphi 0, %s88
      %s90 = sphi 0, %s88
      %s91 = sphi 0, %s90
      %s105 = sphi 0, %s91
      %s109 = sphi 0, %s109
      %s111 = sphi 0, %s109
      %s112 = sphi 0, %s111
      %s126 = sphi 0, %s112
      %s132 = sphi 0, %s134
      %s135 = sphi 0, %s132
      %s136 = sphi 0, %s135
      %s152 = sphi 0, %s136
      %s156 = sphi 0, %s156
      %s158 = sphi 0, %s156
      %s159 = sphi 0, %s158
      %s173 = sphi 0, %s159
      %s177 = sphi 0, %s177
      %s179 = sphi 0, %s177
      %s180 = sphi 0, %s179
      %s194 = sphi 0, %s180
      %s198 = sphi 0, %s198
      %s200 = sphi 0, %s198
      %s201 = sphi 0, %s200
      %s215 = sphi 0, %s201
      %s221 = sphi 0, %s223
      %s224 = sphi 0, %s221
      %s225 = sphi 0, %s224
      %s241 = sphi 0, %s225
    $region4: #{tpu_custom_call.1} parent=1 // loop_header_branch
      %24 = sbr.rel (%p22) target = $region8
    $region5: #{tpu_custom_call.1} parent=1 // loop_body
      %s26 = ssub.s32 %s21, 1
      %s27 = ssub.s32 %s21, 2
      %s34 = sadd.s32 1, %s29
      %p35 = scmp.ge.s32.totalorder %s34, 8
      %s36 = scalar_select %p35, 0, %s34
      %s37 = sadd.s32 1, %s28
      %s38 = scalar_select %p35, %s37, %s28
      %p39 = scmp.ge.s32.totalorder %s38, 1
      %s40 = scalar_select %p39, 0, %s38
      %s41 = ssub.s32 %s28, %s40
      %p42 = scmp.eq.s32.totalorder %s41, 0
      %s44 = sadd.s32 %s43, 1
      %s45 = scalar_select %p42, %s43, %s44
      %p48 = pneg %p42
      %p49 = scmp.eq.s32.totalorder %s21, 7
      %p50 = por %p48, %p49
      %p51 = scmp.ne.s32.totalorder %s43, %s46
      %p52 = scmp.eq.s32.totalorder %s21, 0
      %p53 = por %p51, %p52
      %p54 = scmp.ne.s32.totalorder %s43, %s46
      %p55 = scmp.eq.s32.totalorder %s26, 7
      %p56 = por %p54, %p55
      %p57 = scmp.ne.s32.totalorder %s46, %s47
      %p58 = scmp.eq.s32.totalorder %s26, 0
      %p59 = por %p57, %p58
      %p60 = scmp.ne.s32.totalorder %s46, %s47
      %p61 = scmp.eq.s32.totalorder %s27, 7
      %p62 = por %p60, %p61
      %p64 = scmp.ne.s32.totalorder %s47, %s63
      %p65 = scmp.eq.s32.totalorder %s27, 0
      %p66 = por %p64, %p65
      %s68 = sadd.s32 %s67, 1
      %p71 = scmp.eq.s32.totalorder %s21, 7
      %p72 = scmp.ne.s32.totalorder %s67, %s69
      %p73 = scmp.eq.s32.totalorder %s21, 0
      %p74 = por %p72, %p73
      %p75 = scmp.ne.s32.totalorder %s67, %s69
      %p76 = scmp.eq.s32.totalorder %s26, 7
      %p77 = por %p75, %p76
      %p78 = scmp.ne.s32.totalorder %s69, %s70
      %p79 = scmp.eq.s32.totalorder %s26, 0
      %p80 = por %p78, %p79
      %p81 = scmp.ne.s32.totalorder %s69, %s70
      %p82 = scmp.eq.s32.totalorder %s27, 7
      %p83 = por %p81, %p82
      %p85 = scmp.ne.s32.totalorder %s70, %s84
      %p86 = scmp.eq.s32.totalorder %s27, 0
      %p87 = por %p85, %p86
      %s89 = sadd.s32 %s88, 1
      %p92 = scmp.eq.s32.totalorder %s21, 7
      %p93 = scmp.ne.s32.totalorder %s88, %s90
      %p94 = scmp.eq.s32.totalorder %s21, 0
      %p95 = por %p93, %p94
      %p96 = scmp.ne.s32.totalorder %s88, %s90
      %p97 = scmp.eq.s32.totalorder %s26, 7
      %p98 = por %p96, %p97
      %p99 = scmp.ne.s32.totalorder %s90, %s91
      %p100 = scmp.eq.s32.totalorder %s26, 0
      %p101 = por %p99, %p100
      %p102 = scmp.ne.s32.totalorder %s90, %s91
      %p103 = scmp.eq.s32.totalorder %s27, 7
      %p104 = por %p102, %p103
      %p106 = scmp.ne.s32.totalorder %s91, %s105
      %p107 = scmp.eq.s32.totalorder %s27, 0
      %p108 = por %p106, %p107
      %s110 = sadd.s32 %s109, 1
      %p113 = scmp.eq.s32.totalorder %s21, 7
      %p114 = scmp.ne.s32.totalorder %s109, %s111
      %p115 = scmp.eq.s32.totalorder %s21, 0
      %p116 = por %p114, %p115
      %p117 = scmp.ne.s32.totalorder %s109, %s111
      %p118 = scmp.eq.s32.totalorder %s26, 7
      %p119 = por %p117, %p118
      %p120 = scmp.ne.s32.totalorder %s111, %s112
      %p121 = scmp.eq.s32.totalorder %s26, 0
      %p122 = por %p120, %p121
      %p123 = scmp.ne.s32.totalorder %s111, %s112
      %p124 = scmp.eq.s32.totalorder %s27, 7
      %p125 = por %p123, %p124
      %p127 = scmp.ne.s32.totalorder %s112, %s126
      %p128 = scmp.eq.s32.totalorder %s27, 0
      %p129 = por %p127, %p128
      %s130 = ssub.s32 %s29, %s36
      %p131 = scmp.eq.s32.totalorder %s130, 0
      %s133 = sadd.s32 %s132, 1
      %s134 = scalar_select %p131, %s132, %s133
      %p137 = pneg %p131
      %p138 = scmp.eq.s32.totalorder %s21, 7
      %p139 = por %p137, %p138
      %p140 = scmp.ne.s32.totalorder %s132, %s135
      %p141 = scmp.eq.s32.totalorder %s21, 0
      %p142 = por %p140, %p141
      %p143 = scmp.ne.s32.totalorder %s132, %s135
      %p144 = scmp.eq.s32.totalorder %s26, 7
      %p145 = por %p143, %p144
      %p146 = scmp.ne.s32.totalorder %s135, %s136
      %p147 = scmp.eq.s32.totalorder %s26, 0
      %p148 = por %p146, %p147
      %p149 = scmp.ne.s32.totalorder %s135, %s136
      %p150 = scmp.eq.s32.totalorder %s27, 7
      %p151 = por %p149, %p150
      %p153 = scmp.ne.s32.totalorder %s136, %s152
      %p154 = scmp.eq.s32.totalorder %s27, 0
      %p155 = por %p153, %p154
      %s157 = sadd.s32 %s156, 1
      %p160 = scmp.eq.s32.totalorder %s21, 7
      %p161 = scmp.ne.s32.totalorder %s156, %s158
      %p162 = scmp.eq.s32.totalorder %s21, 0
      %p163 = por %p161, %p162
      %p164 = scmp.ne.s32.totalorder %s156, %s158
      %p165 = scmp.eq.s32.totalorder %s26, 7
      %p166 = por %p164, %p165
      %p167 = scmp.ne.s32.totalorder %s158, %s159
      %p168 = scmp.eq.s32.totalorder %s26, 0
      %p169 = por %p167, %p168
      %p170 = scmp.ne.s32.totalorder %s158, %s159
      %p171 = scmp.eq.s32.totalorder %s27, 7
      %p172 = por %p170, %p171
      %p174 = scmp.ne.s32.totalorder %s159, %s173
      %p175 = scmp.eq.s32.totalorder %s27, 0
      %p176 = por %p174, %p175
      %s178 = sadd.s32 %s177, 1
      %p181 = scmp.eq.s32.totalorder %s21, 7
      %p182 = scmp.ne.s32.totalorder %s177, %s179
      %p183 = scmp.eq.s32.totalorder %s21, 0
      %p184 = por %p182, %p183
      %p185 = scmp.ne.s32.totalorder %s177, %s179
      %p186 = scmp.eq.s32.totalorder %s26, 7
      %p187 = por %p185, %p186
      %p188 = scmp.ne.s32.totalorder %s179, %s180
      %p189 = scmp.eq.s32.totalorder %s26, 0
      %p190 = por %p188, %p189
      %p191 = scmp.ne.s32.totalorder %s179, %s180
      %p192 = scmp.eq.s32.totalorder %s27, 7
      %p193 = por %p191, %p192
      %p195 = scmp.ne.s32.totalorder %s180, %s194
      %p196 = scmp.eq.s32.totalorder %s27, 0
      %p197 = por %p195, %p196
      %s199 = sadd.s32 %s198, 1
      %p202 = scmp.eq.s32.totalorder %s21, 7
      %p203 = scmp.ne.s32.totalorder %s198, %s200
      %p204 = scmp.eq.s32.totalorder %s21, 0
      %p205 = por %p203, %p204
      %p206 = scmp.ne.s32.totalorder %s198, %s200
      %p207 = scmp.eq.s32.totalorder %s26, 7
      %p208 = por %p206, %p207
      %p209 = scmp.ne.s32.totalorder %s200, %s201
      %p210 = scmp.eq.s32.totalorder %s26, 0
      %p211 = por %p209, %p210
      %p212 = scmp.ne.s32.totalorder %s200, %s201
      %p213 = scmp.eq.s32.totalorder %s27, 7
      %p214 = por %p212, %p213
      %p216 = scmp.ne.s32.totalorder %s201, %s215
      %p217 = scmp.eq.s32.totalorder %s27, 0
      %p218 = por %p216, %p217
      %s219 = ssub.s32 %s28, %s40
      %p220 = scmp.eq.s32.totalorder %s219, 0
      %s222 = sadd.s32 %s221, 1
      %s223 = scalar_select %p220, %s221, %s222
      %p226 = pneg %p220
      %p227 = scmp.eq.s32.totalorder %s21, 7
      %p228 = por %p226, %p227
      %p229 = scmp.ne.s32.totalorder %s221, %s224
      %p230 = scmp.eq.s32.totalorder %s21, 0
      %p231 = por %p229, %p230
      %p232 = scmp.ne.s32.totalorder %s221, %s224
      %p233 = scmp.eq.s32.totalorder %s26, 7
      %p234 = por %p232, %p233
      %p235 = scmp.ne.s32.totalorder %s224, %s225
      %p236 = scmp.eq.s32.totalorder %s26, 0
      %p237 = por %p235, %p236
      %p238 = scmp.ne.s32.totalorder %s224, %s225
      %p239 = scmp.eq.s32.totalorder %s27, 7
      %p240 = por %p238, %p239
      %p242 = scmp.ne.s32.totalorder %s225, %s241
      %p243 = scmp.eq.s32.totalorder %s27, 0
      %p244 = por %p242, %p243
      %p245 = scmp.le.s32.totalorder 1, %s21
      %p246 = scmp.lt.s32.totalorder %s21, 9
      %p247 = pnand %p245, %p246
      %p248 = pneg %p247
      // Predicated region
      $region9: #{tpu_custom_call.1} parent=5 // pred_check
        _
      $region10: #{tpu_custom_call.1} parent=5 // pred_check_branch
        %250 = sbr.rel (%p247) target = $region12
      $region11: #{tpu_custom_call.1} parent=5 // pred_region
        %s251 = ssub.s32 %s21, 1
        // Predicated region
        $region13: #{tpu_custom_call.1} parent=11 // pred_check
          %p252 = pneg %p59
        $region14: #{tpu_custom_call.1} parent=11 // pred_check_branch
          %254 = sbr.rel (%p252) target = $region16
        $region15: #{tpu_custom_call.1} parent=11 // pred_region
          %s255 = smul.u32 8, %s30
          %p256 = scmp.lt.s32.totalorder %s255, 7
          %s257 = scalar_select %p256, %s255, 7
          %s258 = smul.addr %s257, 25
          %s259 = smul.addr %s258, 4
          %s260 = scalar_lea.vmem %s0, %s259
          %s261 = smul.u32 8, %s30
        $region16: #{tpu_custom_call.1} parent=11 // pred_fallthru
          _
        // Predicated region
        $region17: #{tpu_custom_call.1} parent=11 // pred_check
          %p262 = pneg %p80
        $region18: #{tpu_custom_call.1} parent=11 // pred_check_branch
          %264 = sbr.rel (%p262) target = $region20
        $region19: #{tpu_custom_call.1} parent=11 // pred_region
          %266 = vsyncadd [#allocation5], 0
          %s267 = sshll.u32 %s1, 4
          %s268 = int_to_ptr.hbm [resolvable:$true] %s267
          %s269 = sshll.u32 [#allocation4], 4
          %s270 = int_to_ptr.vmem [resolvable:$true] %s269
          %275 = dma.hbm_to_vmem [thread:$0]  %s268, 256, %s270, [#allocation5], 128, 128, 8
        $region20: #{tpu_custom_call.1} parent=11 // pred_fallthru
          _
        // Predicated region
        $region21: #{tpu_custom_call.1} parent=11 // pred_check
          %p276 = pneg %p101
        $region22: #{tpu_custom_call.1} parent=11 // pred_check_branch
          %278 = sbr.rel (%p276) target = $region24
        $region23: #{tpu_custom_call.1} parent=11 // pred_region
          %280 = vsyncadd [#allocation8], 0
          %s282 = sshll.u32 %s2, 4
          %s283 = int_to_ptr.hbm [resolvable:$true] %s282
          %s284 = sshll.u32 [#allocation7], 4
          %s285 = int_to_ptr.vmem [resolvable:$true] %s284
          %287 = dma.hbm_to_vmem [thread:$0]  %s283, 64, %s285, [#allocation8]
        $region24: #{tpu_custom_call.1} parent=11 // pred_fallthru
          _
        // Predicated region
        $region25: #{tpu_custom_call.1} parent=11 // pred_check
          %p288 = pneg %p122
        $region26: #{tpu_custom_call.1} parent=11 // pred_check_branch
          %290 = sbr.rel (%p288) target = $region28
        $region27: #{tpu_custom_call.1} parent=11 // pred_region
          %292 = vsyncadd [#allocation8], 0
          %s294 = sshll.u32 %s3, 4
          %s295 = int_to_ptr.hbm [resolvable:$true] %s294
          %s296 = sshll.u32 [#allocation9], 4
          %s297 = int_to_ptr.vmem [resolvable:$true] %s296
          %299 = dma.hbm_to_vmem [thread:$0]  %s295, 16, %s297, [#allocation8]
        $region28: #{tpu_custom_call.1} parent=11 // pred_fallthru
          _
        // Predicated region
        $region29: #{tpu_custom_call.1} parent=11 // pred_check
          %p300 = pneg %p169
        $region30: #{tpu_custom_call.1} parent=11 // pred_check_branch
          %302 = sbr.rel (%p300) target = $region32
        $region31: #{tpu_custom_call.1} parent=11 // pred_region
          %304 = vsyncadd [#allocation11], 0
          %s306 = sshll.u32 %s5, 4
          %s307 = int_to_ptr.hbm [resolvable:$true] %s306
          %s308 = sshll.u32 [#allocation12], 4
          %s309 = int_to_ptr.vmem [resolvable:$true] %s308
          %311 = dma.hbm_to_vmem [thread:$0]  %s307, 128, %s309, [#allocation11]
        $region32: #{tpu_custom_call.1} parent=11 // pred_fallthru
          _
        // Predicated region
        $region33: #{tpu_custom_call.1} parent=11 // pred_check
          %p312 = pneg %p190
        $region34: #{tpu_custom_call.1} parent=11 // pred_check_branch
          %314 = sbr.rel (%p312) target = $region36
        $region35: #{tpu_custom_call.1} parent=11 // pred_region
          %316 = vsyncadd [#allocation14], 0
          %s317 = sshll.u32 %s6, 4
          %s318 = int_to_ptr.hbm [resolvable:$true] %s317
          %s319 = sshll.u32 [#allocation13], 4
          %s320 = int_to_ptr.vmem [resolvable:$true] %s319
          %325 = dma.hbm_to_vmem [thread:$0]  %s318, 8192, %s320, [#allocation14], 64, 64, 4
        $region36: #{tpu_custom_call.1} parent=11 // pred_fallthru
          _
        // Predicated region
        $region37: #{tpu_custom_call.1} parent=11 // pred_check
          %p326 = pneg %p211
        $region38: #{tpu_custom_call.1} parent=11 // pred_check_branch
          %328 = sbr.rel (%p326) target = $region40
        $region39: #{tpu_custom_call.1} parent=11 // pred_region
          %330 = vsyncadd [#allocation14], 0
          %s332 = sshll.u32 %s7, 4
          %s333 = int_to_ptr.hbm [resolvable:$true] %s332
          %s334 = sshll.u32 [#allocation15], 4
          %s335 = int_to_ptr.vmem [resolvable:$true] %s334
          %337 = dma.hbm_to_vmem [thread:$0]  %s333, 16, %s335, [#allocation14]
        $region40: #{tpu_custom_call.1} parent=11 // pred_fallthru
          _
      $region12: #{tpu_custom_call.1} parent=5 // pred_fallthru
        _
      %p338 = scmp.lt.s32.totalorder %s21, 8
      // Predicated region
      $region41: #{tpu_custom_call.1} parent=5 // pred_check
        %p339 = pneg %p338
      $region42: #{tpu_custom_call.1} parent=5 // pred_check_branch
        %341 = sbr.rel (%p339) target = $region44
      $region43: #{tpu_custom_call.1} parent=5 // pred_region
        // Predicated region
        $region45: #{tpu_custom_call.1} parent=43 // pred_check
          %p342 = pneg %p142
        $region46: #{tpu_custom_call.1} parent=43 // pred_check_branch
          %344 = sbr.rel (%p342) target = $region48
        $region47: #{tpu_custom_call.1} parent=43 // pred_region
          %s345 = sand.u32 %s21, 1
          %s346 = scalar_lea.sflag [#allocation11], %s345
          %s347 = sand.u32 %s132, 1
          %s348 = smul.addr %s347, 1024
          %s349 = scalar_lea.vmem [#allocation10], %s348
          %351 = vsyncadd %s346, 0
          %s352 = smul.addr %s29, 256
          %s353 = smul.addr %s352, 4
          %s354 = scalar_lea.hbm %s4, %s353
          %s355 = sshll.u32 %s354, 4
          %s356 = int_to_ptr.hbm [resolvable:$true] %s355
          %s357 = sshll.u32 %s349, 4
          %s358 = int_to_ptr.vmem [resolvable:$true] %s357
          %363 = dma.hbm_to_vmem [thread:$0]  %s356, 16384, %s358, %s346, 512, 512, 32
        $region48: #{tpu_custom_call.1} parent=43 // pred_fallthru
          _
      $region44: #{tpu_custom_call.1} parent=5 // pred_fallthru
        _
      %p364 = scmp.le.s32.totalorder 1, %s21
      %p365 = scmp.lt.s32.totalorder %s21, 9
      %p366 = pnand %p364, %p365
      %p367 = pneg %p366
      // Predicated region
      $region49: #{tpu_custom_call.1} parent=5 // pred_check
        _
      $region50: #{tpu_custom_call.1} parent=5 // pred_check_branch
        %369 = sbr.rel (%p366) target = $region52
      $region51: #{tpu_custom_call.1} parent=5 // pred_region
        %s370 = ssub.s32 %s21, 1
        // Predicated region
        $region53: #{tpu_custom_call.1} parent=51 // pred_check
          %p371 = pneg %p80
        $region54: #{tpu_custom_call.1} parent=51 // pred_check_branch
          %373 = sbr.rel (%p371) target = $region56
        $region55: #{tpu_custom_call.1} parent=51 // pred_region
          %375 = dma.done [#allocation5], 256
        $region56: #{tpu_custom_call.1} parent=51 // pred_fallthru
          _
        // Predicated region
        $region57: #{tpu_custom_call.1} parent=51 // pred_check
          %p376 = pneg %p101
        $region58: #{tpu_custom_call.1} parent=51 // pred_check_branch
          %378 = sbr.rel (%p376) target = $region60
        $region59: #{tpu_custom_call.1} parent=51 // pred_region
          %380 = dma.done [#allocation8], 64
        $region60: #{tpu_custom_call.1} parent=51 // pred_fallthru
          _
        // Predicated region
        $region61: #{tpu_custom_call.1} parent=51 // pred_check
          %p381 = pneg %p122
        $region62: #{tpu_custom_call.1} parent=51 // pred_check_branch
          %383 = sbr.rel (%p381) target = $region64
        $region63: #{tpu_custom_call.1} parent=51 // pred_region
          %385 = dma.done [#allocation8], 16
        $region64: #{tpu_custom_call.1} parent=51 // pred_fallthru
          _
        %s386 = sand.u32 %s26, 1
        %s387 = scalar_lea.sflag [#allocation11], %s386
        %s388 = sand.u32 %s135, 1
        %s389 = smul.addr %s388, 1024
        %s390 = scalar_lea.vmem [#allocation10], %s389
        // Predicated region
        $region65: #{tpu_custom_call.1} parent=51 // pred_check
          %p391 = pneg %p148
        $region66: #{tpu_custom_call.1} parent=51 // pred_check_branch
          %393 = sbr.rel (%p391) target = $region68
        $region67: #{tpu_custom_call.1} parent=51 // pred_region
          %395 = dma.done %s387, 16384
        $region68: #{tpu_custom_call.1} parent=51 // pred_fallthru
          _
        // Predicated region
        $region69: #{tpu_custom_call.1} parent=51 // pred_check
          %p396 = pneg %p169
        $region70: #{tpu_custom_call.1} parent=51 // pred_check_branch
          %398 = sbr.rel (%p396) target = $region72
        $region71: #{tpu_custom_call.1} parent=51 // pred_region
          %400 = dma.done [#allocation11], 128
        $region72: #{tpu_custom_call.1} parent=51 // pred_fallthru
          _
        // Predicated region
        $region73: #{tpu_custom_call.1} parent=51 // pred_check
          %p401 = pneg %p190
        $region74: #{tpu_custom_call.1} parent=51 // pred_check_branch
          %403 = sbr.rel (%p401) target = $region76
        $region75: #{tpu_custom_call.1} parent=51 // pred_region
          %405 = dma.done [#allocation14], 8192
        $region76: #{tpu_custom_call.1} parent=51 // pred_fallthru
          _
        // Predicated region
        $region77: #{tpu_custom_call.1} parent=51 // pred_check
          %p406 = pneg %p211
        $region78: #{tpu_custom_call.1} parent=51 // pred_check_branch
          %408 = sbr.rel (%p406) target = $region80
        $region79: #{tpu_custom_call.1} parent=51 // pred_region
          %410 = dma.done [#allocation14], 16
        $region80: #{tpu_custom_call.1} parent=51 // pred_fallthru
          _
        %s411 = smul.u32 8, %s30
        %p412 = scmp.lt.s32.totalorder %s411, 7
        %s413 = scalar_select %p412, %s411, 7
        %s414 = smul.addr %s413, 25
        %s415 = smul.addr %s414, 4
        %s416 = scalar_lea.vmem %s0, %s415
        %p417 = pneg %p59
        %p418 = pneg %p56
        %p419 = pneg %p80
        %p420 = pneg %p77
        %p421 = pneg %p101
        %p422 = pneg %p98
        %p423 = pneg %p122
        %p424 = pneg %p119
        %s425 = sand.u32 %s26, 1
        %s426 = scalar_lea.sflag [#allocation11], %s425
        %s427 = sand.u32 %s135, 1
        %s428 = smul.addr %s427, 1024
        %s429 = scalar_lea.vmem [#allocation10], %s428
        %p430 = pneg %p148
        %p431 = pneg %p145
        %p432 = pneg %p169
        %p433 = pneg %p166
        %p434 = pneg %p190
        %p435 = pneg %p187
        %p436 = pneg %p211
        %p437 = pneg %p208
        %p438 = pneg %p237
        %p439 = pneg %p234
        %s440 = smul.u32 8, %s30
        %p441 = scmp.lt.s32.totalorder %s440, 7
        %s442 = scalar_select %p441, %s440, 7
        %s443 = smul.addr %s442, 25
        %s444 = smul.addr %s443, 4
        %s445 = scalar_lea.vmem %s0, %s444
        %s446 = smul.u32 8, %s30
        %p448 = scmp.eq.s32.totalorder %s31, 0
        // Predicated region
        $region81: #{tpu_custom_call.1} parent=51 // pred_check
          %p449 = pneg %p448
        $region82: #{tpu_custom_call.1} parent=51 // pred_check_branch
          %451 = sbr.rel (%p449) target = $region84
        $region83: #{tpu_custom_call.1} parent=51 // pred_region
          %v452 = vld [vmem:[%s445] sm:$0xf]
          %v453 = vld [vmem:[%s445 + $0x4] sm:$0xf]
          %v454 = vld [vmem:[%s445 + $0x8] sm:$0xf]
          %v455 = vld [vmem:[%s445 + $0xc] sm:$0xf]
          %v456 = vld [vmem:[%s445 + $0x10] sm:$0xf]
          %v457 = vld [vmem:[%s445 + $0x14] sm:$0xf]
          %v458 = vld [vmem:[%s445 + $0x18] sm:$0xf]
          %v459 = vld [vmem:[%s445 + $0x1c] sm:$0xf]
          %v460 = vld [vmem:[%s445 + $0x20] sm:$0xf]
          %v461 = vld [vmem:[%s445 + $0x24] sm:$0xf]
          %v462 = vld [vmem:[%s445 + $0x28] sm:$0xf]
          %v463 = vld [vmem:[%s445 + $0x2c] sm:$0xf]
          %v464 = vld [vmem:[%s445 + $0x30] sm:$0xf]
          %v465 = vld [vmem:[%s445 + $0x34] sm:$0xf]
          %v466 = vld [vmem:[%s445 + $0x38] sm:$0xf]
          %v467 = vld [vmem:[%s445 + $0x3c] sm:$0xf]
          %v468 = vld [vmem:[%s445 + $0x40] sm:$0xf]
          %v469 = vld [vmem:[%s445 + $0x44] sm:$0xf]
          %v470 = vld [vmem:[%s445 + $0x48] sm:$0xf]
          %v471 = vld [vmem:[%s445 + $0x4c] sm:$0xf]
          %v472 = vld [vmem:[%s445 + $0x50] sm:$0xf]
          %v473 = vld [vmem:[%s445 + $0x54] sm:$0xf]
          %v474 = vld [vmem:[%s445 + $0x58] sm:$0xf]
          %v475 = vld [vmem:[%s445 + $0x5c] sm:$0xf]
          %v476 = vld [vmem:[%s445 + $0x60] sm:$0x3]
          %v477 = vld [vmem:[%s445 + $0x64] sm:$0xf]
          %v478 = vld [vmem:[%s445 + $0x68] sm:$0xf]
          %v479 = vld [vmem:[%s445 + $0x6c] sm:$0xf]
          %v480 = vld [vmem:[%s445 + $0x70] sm:$0xf]
          %v481 = vld [vmem:[%s445 + $0x74] sm:$0xf]
          %v482 = vld [vmem:[%s445 + $0x78] sm:$0xf]
          %v483 = vld [vmem:[%s445 + $0x7c] sm:$0xf]
          %v484 = vld [vmem:[%s445 + $0x80] sm:$0xf]
          %v485 = vld [vmem:[%s445 + $0x84] sm:$0xf]
          %v486 = vld [vmem:[%s445 + $0x88] sm:$0xf]
          %v487 = vld [vmem:[%s445 + $0x8c] sm:$0xf]
          %v488 = vld [vmem:[%s445 + $0x90] sm:$0xf]
          %v489 = vld [vmem:[%s445 + $0x94] sm:$0xf]
          %v490 = vld [vmem:[%s445 + $0x98] sm:$0xf]
          %v491 = vld [vmem:[%s445 + $0x9c] sm:$0xf]
          %v492 = vld [vmem:[%s445 + $0xa0] sm:$0xf]
          %v493 = vld [vmem:[%s445 + $0xa4] sm:$0xf]
          %v494 = vld [vmem:[%s445 + $0xa8] sm:$0xf]
          %v495 = vld [vmem:[%s445 + $0xac] sm:$0xf]
          %v496 = vld [vmem:[%s445 + $0xb0] sm:$0xf]
          %v497 = vld [vmem:[%s445 + $0xb4] sm:$0xf]
          %v498 = vld [vmem:[%s445 + $0xb8] sm:$0xf]
          %v499 = vld [vmem:[%s445 + $0xbc] sm:$0xf]
          %v500 = vld [vmem:[%s445 + $0xc0] sm:$0xf]
          %v501 = vld [vmem:[%s445 + $0xc4] sm:$0x3]
          %v502 = vld [vmem:[%s445 + $0xc8] sm:$0xf]
          %v503 = vld [vmem:[%s445 + $0xcc] sm:$0xf]
          %v504 = vld [vmem:[%s445 + $0xd0] sm:$0xf]
          %v505 = vld [vmem:[%s445 + $0xd4] sm:$0xf]
          %v506 = vld [vmem:[%s445 + $0xd8] sm:$0xf]
          %v507 = vld [vmem:[%s445 + $0xdc] sm:$0xf]
          %v508 = vld [vmem:[%s445 + $0xe0] sm:$0xf]
          %v509 = vld [vmem:[%s445 + $0xe4] sm:$0xf]
          %v510 = vld [vmem:[%s445 + $0xe8] sm:$0xf]
          %v511 = vld [vmem:[%s445 + $0xec] sm:$0xf]
          %v512 = vld [vmem:[%s445 + $0xf0] sm:$0xf]
          %v513 = vld [vmem:[%s445 + $0xf4] sm:$0xf]
          %v514 = vld [vmem:[%s445 + $0xf8] sm:$0xf]
          %v515 = vld [vmem:[%s445 + $0xfc] sm:$0xf]
          %v516 = vld [vmem:[%s445 + $0x100] sm:$0xf]
          %v517 = vld [vmem:[%s445 + $0x104] sm:$0xf]
          %v518 = vld [vmem:[%s445 + $0x108] sm:$0xf]
          %v519 = vld [vmem:[%s445 + $0x10c] sm:$0xf]
          %v520 = vld [vmem:[%s445 + $0x110] sm:$0xf]
          %v521 = vld [vmem:[%s445 + $0x114] sm:$0xf]
          %v522 = vld [vmem:[%s445 + $0x118] sm:$0xf]
          %v523 = vld [vmem:[%s445 + $0x11c] sm:$0xf]
          %v524 = vld [vmem:[%s445 + $0x120] sm:$0xf]
          %v525 = vld [vmem:[%s445 + $0x124] sm:$0xf]
          %v526 = vld [vmem:[%s445 + $0x128] sm:$0x3]
          %v527 = vld [vmem:[%s445 + $0x12c] sm:$0xf]
          %v528 = vld [vmem:[%s445 + $0x130] sm:$0xf]
          %v529 = vld [vmem:[%s445 + $0x134] sm:$0xf]
          %v530 = vld [vmem:[%s445 + $0x138] sm:$0xf]
          %v531 = vld [vmem:[%s445 + $0x13c] sm:$0xf]
          %v532 = vld [vmem:[%s445 + $0x140] sm:$0xf]
          %v533 = vld [vmem:[%s445 + $0x144] sm:$0xf]
          %v534 = vld [vmem:[%s445 + $0x148] sm:$0xf]
          %v535 = vld [vmem:[%s445 + $0x14c] sm:$0xf]
          %v536 = vld [vmem:[%s445 + $0x150] sm:$0xf]
          %v537 = vld [vmem:[%s445 + $0x154] sm:$0xf]
          %v538 = vld [vmem:[%s445 + $0x158] sm:$0xf]
          %v539 = vld [vmem:[%s445 + $0x15c] sm:$0xf]
          %v540 = vld [vmem:[%s445 + $0x160] sm:$0xf]
          %v541 = vld [vmem:[%s445 + $0x164] sm:$0xf]
          %v542 = vld [vmem:[%s445 + $0x168] sm:$0xf]
          %v543 = vld [vmem:[%s445 + $0x16c] sm:$0xf]
          %v544 = vld [vmem:[%s445 + $0x170] sm:$0xf]
          %v545 = vld [vmem:[%s445 + $0x174] sm:$0xf]
          %v546 = vld [vmem:[%s445 + $0x178] sm:$0xf]
          %v547 = vld [vmem:[%s445 + $0x17c] sm:$0xf]
          %v548 = vld [vmem:[%s445 + $0x180] sm:$0xf]
          %v549 = vld [vmem:[%s445 + $0x184] sm:$0xf]
          %v550 = vld [vmem:[%s445 + $0x188] sm:$0xf]
          %v551 = vld [vmem:[%s445 + $0x18c] sm:$0x3]
          %v552 = vld [vmem:[%s445 + $0x190] sm:$0xf]
          %v553 = vld [vmem:[%s445 + $0x194] sm:$0xf]
          %v554 = vld [vmem:[%s445 + $0x198] sm:$0xf]
          %v555 = vld [vmem:[%s445 + $0x19c] sm:$0xf]
          %v556 = vld [vmem:[%s445 + $0x1a0] sm:$0xf]
          %v557 = vld [vmem:[%s445 + $0x1a4] sm:$0xf]
          %v558 = vld [vmem:[%s445 + $0x1a8] sm:$0xf]
          %v559 = vld [vmem:[%s445 + $0x1ac] sm:$0xf]
          %v560 = vld [vmem:[%s445 + $0x1b0] sm:$0xf]
          %v561 = vld [vmem:[%s445 + $0x1b4] sm:$0xf]
          %v562 = vld [vmem:[%s445 + $0x1b8] sm:$0xf]
          %v563 = vld [vmem:[%s445 + $0x1bc] sm:$0xf]
          %v564 = vld [vmem:[%s445 + $0x1c0] sm:$0xf]
          %v565 = vld [vmem:[%s445 + $0x1c4] sm:$0xf]
          %v566 = vld [vmem:[%s445 + $0x1c8] sm:$0xf]
          %v567 = vld [vmem:[%s445 + $0x1cc] sm:$0xf]
          %v568 = vld [vmem:[%s445 + $0x1d0] sm:$0xf]
          %v569 = vld [vmem:[%s445 + $0x1d4] sm:$0xf]
          %v570 = vld [vmem:[%s445 + $0x1d8] sm:$0xf]
          %v571 = vld [vmem:[%s445 + $0x1dc] sm:$0xf]
          %v572 = vld [vmem:[%s445 + $0x1e0] sm:$0xf]
          %v573 = vld [vmem:[%s445 + $0x1e4] sm:$0xf]
          %v574 = vld [vmem:[%s445 + $0x1e8] sm:$0xf]
          %v575 = vld [vmem:[%s445 + $0x1ec] sm:$0xf]
          %v576 = vld [vmem:[%s445 + $0x1f0] sm:$0x3]
          %v577 = vld [vmem:[%s445 + $0x1f4] sm:$0xf]
          %v578 = vld [vmem:[%s445 + $0x1f8] sm:$0xf]
          %v579 = vld [vmem:[%s445 + $0x1fc] sm:$0xf]
          %v580 = vld [vmem:[%s445 + $0x200] sm:$0xf]
          %v581 = vld [vmem:[%s445 + $0x204] sm:$0xf]
          %v582 = vld [vmem:[%s445 + $0x208] sm:$0xf]
          %v583 = vld [vmem:[%s445 + $0x20c] sm:$0xf]
          %v584 = vld [vmem:[%s445 + $0x210] sm:$0xf]
          %v585 = vld [vmem:[%s445 + $0x214] sm:$0xf]
          %v586 = vld [vmem:[%s445 + $0x218] sm:$0xf]
          %v587 = vld [vmem:[%s445 + $0x21c] sm:$0xf]
          %v588 = vld [vmem:[%s445 + $0x220] sm:$0xf]
          %v589 = vld [vmem:[%s445 + $0x224] sm:$0xf]
          %v590 = vld [vmem:[%s445 + $0x228] sm:$0xf]
          %v591 = vld [vmem:[%s445 + $0x22c] sm:$0xf]
          %v592 = vld [vmem:[%s445 + $0x230] sm:$0xf]
          %v593 = vld [vmem:[%s445 + $0x234] sm:$0xf]
          %v594 = vld [vmem:[%s445 + $0x238] sm:$0xf]
          %v595 = vld [vmem:[%s445 + $0x23c] sm:$0xf]
          %v596 = vld [vmem:[%s445 + $0x240] sm:$0xf]
          %v597 = vld [vmem:[%s445 + $0x244] sm:$0xf]
          %v598 = vld [vmem:[%s445 + $0x248] sm:$0xf]
          %v599 = vld [vmem:[%s445 + $0x24c] sm:$0xf]
          %v600 = vld [vmem:[%s445 + $0x250] sm:$0xf]
          %v601 = vld [vmem:[%s445 + $0x254] sm:$0x3]
          %v602 = vld [vmem:[%s445 + $0x258] sm:$0xf]
          %v603 = vld [vmem:[%s445 + $0x25c] sm:$0xf]
          %v604 = vld [vmem:[%s445 + $0x260] sm:$0xf]
          %v605 = vld [vmem:[%s445 + $0x264] sm:$0xf]
          %v606 = vld [vmem:[%s445 + $0x268] sm:$0xf]
          %v607 = vld [vmem:[%s445 + $0x26c] sm:$0xf]
          %v608 = vld [vmem:[%s445 + $0x270] sm:$0xf]
          %v609 = vld [vmem:[%s445 + $0x274] sm:$0xf]
          %v610 = vld [vmem:[%s445 + $0x278] sm:$0xf]
          %v611 = vld [vmem:[%s445 + $0x27c] sm:$0xf]
          %v612 = vld [vmem:[%s445 + $0x280] sm:$0xf]
          %v613 = vld [vmem:[%s445 + $0x284] sm:$0xf]
          %v614 = vld [vmem:[%s445 + $0x288] sm:$0xf]
          %v615 = vld [vmem:[%s445 + $0x28c] sm:$0xf]
          %v616 = vld [vmem:[%s445 + $0x290] sm:$0xf]
          %v617 = vld [vmem:[%s445 + $0x294] sm:$0xf]
          %v618 = vld [vmem:[%s445 + $0x298] sm:$0xf]
          %v619 = vld [vmem:[%s445 + $0x29c] sm:$0xf]
          %v620 = vld [vmem:[%s445 + $0x2a0] sm:$0xf]
          %v621 = vld [vmem:[%s445 + $0x2a4] sm:$0xf]
          %v622 = vld [vmem:[%s445 + $0x2a8] sm:$0xf]
          %v623 = vld [vmem:[%s445 + $0x2ac] sm:$0xf]
          %v624 = vld [vmem:[%s445 + $0x2b0] sm:$0xf]
          %v625 = vld [vmem:[%s445 + $0x2b4] sm:$0xf]
          %v626 = vld [vmem:[%s445 + $0x2b8] sm:$0x3]
          %v627 = vld [vmem:[%s445 + $0x2bc] sm:$0xf]
          %v628 = vld [vmem:[%s445 + $0x2c0] sm:$0xf]
          %v629 = vld [vmem:[%s445 + $0x2c4] sm:$0xf]
          %v630 = vld [vmem:[%s445 + $0x2c8] sm:$0xf]
          %v631 = vld [vmem:[%s445 + $0x2cc] sm:$0xf]
          %v632 = vld [vmem:[%s445 + $0x2d0] sm:$0xf]
          %v633 = vld [vmem:[%s445 + $0x2d4] sm:$0xf]
          %v634 = vld [vmem:[%s445 + $0x2d8] sm:$0xf]
          %v635 = vld [vmem:[%s445 + $0x2dc] sm:$0xf]
          %v636 = vld [vmem:[%s445 + $0x2e0] sm:$0xf]
          %v637 = vld [vmem:[%s445 + $0x2e4] sm:$0xf]
          %v638 = vld [vmem:[%s445 + $0x2e8] sm:$0xf]
          %v639 = vld [vmem:[%s445 + $0x2ec] sm:$0xf]
          %v640 = vld [vmem:[%s445 + $0x2f0] sm:$0xf]
          %v641 = vld [vmem:[%s445 + $0x2f4] sm:$0xf]
          %v642 = vld [vmem:[%s445 + $0x2f8] sm:$0xf]
          %v643 = vld [vmem:[%s445 + $0x2fc] sm:$0xf]
          %v644 = vld [vmem:[%s445 + $0x300] sm:$0xf]
          %v645 = vld [vmem:[%s445 + $0x304] sm:$0xf]
          %v646 = vld [vmem:[%s445 + $0x308] sm:$0xf]
          %v647 = vld [vmem:[%s445 + $0x30c] sm:$0xf]
          %v648 = vld [vmem:[%s445 + $0x310] sm:$0xf]
          %v649 = vld [vmem:[%s445 + $0x314] sm:$0xf]
          %v650 = vld [vmem:[%s445 + $0x318] sm:$0xf]
          %v651 = vld [vmem:[%s445 + $0x31c] sm:$0x3]
          %v852 = vrot.slane %v452, 2
          %v853 = vrot.slane %v453, 2
          %v854 = vrot.slane %v454, 2
          %v855 = vrot.slane %v455, 2
          %v856 = vrot.slane %v456, 2
          %v857 = vrot.slane %v457, 2
          %v858 = vrot.slane %v458, 2
          %v859 = vrot.slane %v459, 2
          %v860 = vrot.slane %v460, 2
          %v861 = vrot.slane %v461, 2
          %v862 = vrot.slane %v462, 2
          %v863 = vrot.slane %v463, 2
          %v864 = vrot.slane %v464, 2
          %v865 = vrot.slane %v465, 2
          %v866 = vrot.slane %v466, 2
          %v867 = vrot.slane %v467, 2
          %v868 = vrot.slane %v468, 2
          %v869 = vrot.slane %v469, 2
          %v870 = vrot.slane %v470, 2
          %v871 = vrot.slane %v471, 2
          %v872 = vrot.slane %v472, 2
          %v873 = vrot.slane %v473, 2
          %v874 = vrot.slane %v474, 2
          %v875 = vrot.slane %v475, 2
          %v876 = vrot.slane %v476, 2
          %v877 = vrot.slane %v477, 2
          %v878 = vrot.slane %v478, 2
          %v879 = vrot.slane %v479, 2
          %v880 = vrot.slane %v480, 2
          %v881 = vrot.slane %v481, 2
          %v882 = vrot.slane %v482, 2
          %v883 = vrot.slane %v483, 2
          %v884 = vrot.slane %v484, 2
          %v885 = vrot.slane %v485, 2
          %v886 = vrot.slane %v486, 2
          %v887 = vrot.slane %v487, 2
          %v888 = vrot.slane %v488, 2
          %v889 = vrot.slane %v489, 2
          %v890 = vrot.slane %v490, 2
          %v891 = vrot.slane %v491, 2
          %v892 = vrot.slane %v492, 2
          %v893 = vrot.slane %v493, 2
          %v894 = vrot.slane %v494, 2
          %v895 = vrot.slane %v495, 2
          %v896 = vrot.slane %v496, 2
          %v897 = vrot.slane %v497, 2
          %v898 = vrot.slane %v498, 2
          %v899 = vrot.slane %v499, 2
          %v900 = vrot.slane %v500, 2
          %v901 = vrot.slane %v501, 2
          %v902 = vrot.slane %v502, 2
          %v903 = vrot.slane %v503, 2
          %v904 = vrot.slane %v504, 2
          %v905 = vrot.slane %v505, 2
          %v906 = vrot.slane %v506, 2
          %v907 = vrot.slane %v507, 2
          %v908 = vrot.slane %v508, 2
          %v909 = vrot.slane %v509, 2
          %v910 = vrot.slane %v510, 2
          %v911 = vrot.slane %v511, 2
          %v912 = vrot.slane %v512, 2
          %v913 = vrot.slane %v513, 2
          %v914 = vrot.slane %v514, 2
          %v915 = vrot.slane %v515, 2
          %v916 = vrot.slane %v516, 2
          %v917 = vrot.slane %v517, 2
          %v918 = vrot.slane %v518, 2
          %v919 = vrot.slane %v519, 2
          %v920 = vrot.slane %v520, 2
          %v921 = vrot.slane %v521, 2
          %v922 = vrot.slane %v522, 2
          %v923 = vrot.slane %v523, 2
          %v924 = vrot.slane %v524, 2
          %v925 = vrot.slane %v525, 2
          %v926 = vrot.slane %v526, 2
          %v927 = vrot.slane %v527, 2
          %v928 = vrot.slane %v528, 2
          %v929 = vrot.slane %v529, 2
          %v930 = vrot.slane %v530, 2
          %v931 = vrot.slane %v531, 2
          %v932 = vrot.slane %v532, 2
          %v933 = vrot.slane %v533, 2
          %v934 = vrot.slane %v534, 2
          %v935 = vrot.slane %v535, 2
          %v936 = vrot.slane %v536, 2
          %v937 = vrot.slane %v537, 2
          %v938 = vrot.slane %v538, 2
          %v939 = vrot.slane %v539, 2
          %v940 = vrot.slane %v540, 2
          %v941 = vrot.slane %v541, 2
          %v942 = vrot.slane %v542, 2
          %v943 = vrot.slane %v543, 2
          %v944 = vrot.slane %v544, 2
          %v945 = vrot.slane %v545, 2
          %v946 = vrot.slane %v546, 2
          %v947 = vrot.slane %v547, 2
          %v948 = vrot.slane %v548, 2
          %v949 = vrot.slane %v549, 2
          %v950 = vrot.slane %v550, 2
          %v951 = vrot.slane %v551, 2
          %v952 = vrot.slane %v552, 2
          %v953 = vrot.slane %v553, 2
          %v954 = vrot.slane %v554, 2
          %v955 = vrot.slane %v555, 2
          %v956 = vrot.slane %v556, 2
          %v957 = vrot.slane %v557, 2
          %v958 = vrot.slane %v558, 2
          %v959 = vrot.slane %v559, 2
          %v960 = vrot.slane %v560, 2
          %v961 = vrot.slane %v561, 2
          %v962 = vrot.slane %v562, 2
          %v963 = vrot.slane %v563, 2
          %v964 = vrot.slane %v564, 2
          %v965 = vrot.slane %v565, 2
          %v966 = vrot.slane %v566, 2
          %v967 = vrot.slane %v567, 2
          %v968 = vrot.slane %v568, 2
          %v969 = vrot.slane %v569, 2
          %v970 = vrot.slane %v570, 2
          %v971 = vrot.slane %v571, 2
          %v972 = vrot.slane %v572, 2
          %v973 = vrot.slane %v573, 2
          %v974 = vrot.slane %v574, 2
          %v975 = vrot.slane %v575, 2
          %v976 = vrot.slane %v576, 2
          %v977 = vrot.slane %v577, 2
          %v978 = vrot.slane %v578, 2
          %v979 = vrot.slane %v579, 2
          %v980 = vrot.slane %v580, 2
          %v981 = vrot.slane %v581, 2
          %v982 = vrot.slane %v582, 2
          %v983 = vrot.slane %v583, 2
          %v984 = vrot.slane %v584, 2
          %v985 = vrot.slane %v585, 2
          %v986 = vrot.slane %v586, 2
          %v987 = vrot.slane %v587, 2
          %v988 = vrot.slane %v588, 2
          %v989 = vrot.slane %v589, 2
          %v990 = vrot.slane %v590, 2
          %v991 = vrot.slane %v591, 2
          %v992 = vrot.slane %v592, 2
          %v993 = vrot.slane %v593, 2
          %v994 = vrot.slane %v594, 2
          %v995 = vrot.slane %v595, 2
          %v996 = vrot.slane %v596, 2
          %v997 = vrot.slane %v597, 2
          %v998 = vrot.slane %v598, 2
          %v999 = vrot.slane %v599, 2
          %v1000 = vrot.slane %v600, 2
          %v1001 = vrot.slane %v601, 2
          %v1002 = vrot.slane %v602, 2
          %v1003 = vrot.slane %v603, 2
          %v1004 = vrot.slane %v604, 2
          %v1005 = vrot.slane %v605, 2
          %v1006 = vrot.slane %v606, 2
          %v1007 = vrot.slane %v607, 2
          %v1008 = vrot.slane %v608, 2
          %v1009 = vrot.slane %v609, 2
          %v1010 = vrot.slane %v610, 2
          %v1011 = vrot.slane %v611, 2
          %v1012 = vrot.slane %v612, 2
          %v1013 = vrot.slane %v613, 2
          %v1014 = vrot.slane %v614, 2
          %v1015 = vrot.slane %v615, 2
          %v1016 = vrot.slane %v616, 2
          %v1017 = vrot.slane %v617, 2
          %v1018 = vrot.slane %v618, 2
          %v1019 = vrot.slane %v619, 2
          %v1020 = vrot.slane %v620, 2
          %v1021 = vrot.slane %v621, 2
          %v1022 = vrot.slane %v622, 2
          %v1023 = vrot.slane %v623, 2
          %v1024 = vrot.slane %v624, 2
          %v1025 = vrot.slane %v625, 2
          %v1026 = vrot.slane %v626, 2
          %v1027 = vrot.slane %v627, 2
          %v1028 = vrot.slane %v628, 2
          %v1029 = vrot.slane %v629, 2
          %v1030 = vrot.slane %v630, 2
          %v1031 = vrot.slane %v631, 2
          %v1032 = vrot.slane %v632, 2
          %v1033 = vrot.slane %v633, 2
          %v1034 = vrot.slane %v634, 2
          %v1035 = vrot.slane %v635, 2
          %v1036 = vrot.slane %v636, 2
          %v1037 = vrot.slane %v637, 2
          %v1038 = vrot.slane %v638, 2
          %v1039 = vrot.slane %v639, 2
          %v1040 = vrot.slane %v640, 2
          %v1041 = vrot.slane %v641, 2
          %v1042 = vrot.slane %v642, 2
          %v1043 = vrot.slane %v643, 2
          %v1044 = vrot.slane %v644, 2
          %v1045 = vrot.slane %v645, 2
          %v1046 = vrot.slane %v646, 2
          %v1047 = vrot.slane %v647, 2
          %v1048 = vrot.slane %v648, 2
          %v1049 = vrot.slane %v649, 2
          %v1050 = vrot.slane %v650, 2
          %v1051 = vrot.slane %v651, 2
          %vm1052 = vcmask 1041408
          %v1055 = vsel %vm1052, %v452, %v852
          %vm1056 = vcmask 1043458
          %v1057 = vsel %vm1056, %v452, %v852
          %v1059 = vrot.slane %v1057, 2
          %v1062 = vsel %vm1052, %v453, %v853
          %v1063 = vsel %vm1056, %v453, %v853
          %v1065 = vrot.slane %v1063, 2
          %v1068 = vsel %vm1052, %v454, %v854
          %v1069 = vsel %vm1056, %v454, %v854
          %v1071 = vrot.slane %v1069, 2
          %v1074 = vsel %vm1052, %v455, %v855
          %v1075 = vsel %vm1056, %v455, %v855
          %v1077 = vrot.slane %v1075, 2
          %v1080 = vsel %vm1052, %v456, %v856
          %v1081 = vsel %vm1056, %v456, %v856
          %v1083 = vrot.slane %v1081, 2
          %v1086 = vsel %vm1052, %v457, %v857
          %v1087 = vsel %vm1056, %v457, %v857
          %v1089 = vrot.slane %v1087, 2
          %v1092 = vsel %vm1052, %v458, %v858
          %v1093 = vsel %vm1056, %v458, %v858
          %v1095 = vrot.slane %v1093, 2
          %v1098 = vsel %vm1052, %v459, %v859
          %v1099 = vsel %vm1056, %v459, %v859
          %v1101 = vrot.slane %v1099, 2
          %v1104 = vsel %vm1052, %v460, %v860
          %v1105 = vsel %vm1056, %v460, %v860
          %v1107 = vrot.slane %v1105, 2
          %v1110 = vsel %vm1052, %v461, %v861
          %v1111 = vsel %vm1056, %v461, %v861
          %v1113 = vrot.slane %v1111, 2
          %v1116 = vsel %vm1052, %v462, %v862
          %v1117 = vsel %vm1056, %v462, %v862
          %v1119 = vrot.slane %v1117, 2
          %v1122 = vsel %vm1052, %v463, %v863
          %v1123 = vsel %vm1056, %v463, %v863
          %v1125 = vrot.slane %v1123, 2
          %v1128 = vsel %vm1052, %v464, %v864
          %v1129 = vsel %vm1056, %v464, %v864
          %v1131 = vrot.slane %v1129, 2
          %v1134 = vsel %vm1052, %v465, %v865
          %v1135 = vsel %vm1056, %v465, %v865
          %v1137 = vrot.slane %v1135, 2
          %v1140 = vsel %vm1052, %v466, %v866
          %v1141 = vsel %vm1056, %v466, %v866
          %v1143 = vrot.slane %v1141, 2
          %v1146 = vsel %vm1052, %v467, %v867
          %v1147 = vsel %vm1056, %v467, %v867
          %v1149 = vrot.slane %v1147, 2
          %v1152 = vsel %vm1052, %v468, %v868
          %v1153 = vsel %vm1056, %v468, %v868
          %v1155 = vrot.slane %v1153, 2
          %v1158 = vsel %vm1052, %v469, %v869
          %v1159 = vsel %vm1056, %v469, %v869
          %v1161 = vrot.slane %v1159, 2
          %v1164 = vsel %vm1052, %v470, %v870
          %v1165 = vsel %vm1056, %v470, %v870
          %v1167 = vrot.slane %v1165, 2
          %v1170 = vsel %vm1052, %v471, %v871
          %v1171 = vsel %vm1056, %v471, %v871
          %v1173 = vrot.slane %v1171, 2
          %v1176 = vsel %vm1052, %v472, %v872
          %v1177 = vsel %vm1056, %v472, %v872
          %v1179 = vrot.slane %v1177, 2
          %v1182 = vsel %vm1052, %v473, %v873
          %v1183 = vsel %vm1056, %v473, %v873
          %v1185 = vrot.slane %v1183, 2
          %v1188 = vsel %vm1052, %v474, %v874
          %v1189 = vsel %vm1056, %v474, %v874
          %v1191 = vrot.slane %v1189, 2
          %v1194 = vsel %vm1052, %v475, %v875
          %v1195 = vsel %vm1056, %v475, %v875
          %v1197 = vrot.slane %v1195, 2
          %v1200 = vsel %vm1052, %v476, %v876
          %v1203 = vsel %vm1052, %v477, %v877
          %v1204 = vsel %vm1056, %v477, %v877
          %v1206 = vrot.slane %v1204, 2
          %v1209 = vsel %vm1052, %v478, %v878
          %v1210 = vsel %vm1056, %v478, %v878
          %v1212 = vrot.slane %v1210, 2
          %v1215 = vsel %vm1052, %v479, %v879
          %v1216 = vsel %vm1056, %v479, %v879
          %v1218 = vrot.slane %v1216, 2
          %v1221 = vsel %vm1052, %v480, %v880
          %v1222 = vsel %vm1056, %v480, %v880
          %v1224 = vrot.slane %v1222, 2
          %v1227 = vsel %vm1052, %v481, %v881
          %v1228 = vsel %vm1056, %v481, %v881
          %v1230 = vrot.slane %v1228, 2
          %v1233 = vsel %vm1052, %v482, %v882
          %v1234 = vsel %vm1056, %v482, %v882
          %v1236 = vrot.slane %v1234, 2
          %v1239 = vsel %vm1052, %v483, %v883
          %v1240 = vsel %vm1056, %v483, %v883
          %v1242 = vrot.slane %v1240, 2
          %v1245 = vsel %vm1052, %v484, %v884
          %v1246 = vsel %vm1056, %v484, %v884
          %v1248 = vrot.slane %v1246, 2
          %v1251 = vsel %vm1052, %v485, %v885
          %v1252 = vsel %vm1056, %v485, %v885
          %v1254 = vrot.slane %v1252, 2
          %v1257 = vsel %vm1052, %v486, %v886
          %v1258 = vsel %vm1056, %v486, %v886
          %v1260 = vrot.slane %v1258, 2
          %v1263 = vsel %vm1052, %v487, %v887
          %v1264 = vsel %vm1056, %v487, %v887
          %v1266 = vrot.slane %v1264, 2
          %v1269 = vsel %vm1052, %v488, %v888
          %v1270 = vsel %vm1056, %v488, %v888
          %v1272 = vrot.slane %v1270, 2
          %v1275 = vsel %vm1052, %v489, %v889
          %v1276 = vsel %vm1056, %v489, %v889
          %v1278 = vrot.slane %v1276, 2
          %v1281 = vsel %vm1052, %v490, %v890
          %v1282 = vsel %vm1056, %v490, %v890
          %v1284 = vrot.slane %v1282, 2
          %v1287 = vsel %vm1052, %v491, %v891
          %v1288 = vsel %vm1056, %v491, %v891
          %v1290 = vrot.slane %v1288, 2
          %v1293 = vsel %vm1052, %v492, %v892
          %v1294 = vsel %vm1056, %v492, %v892
          %v1296 = vrot.slane %v1294, 2
          %v1299 = vsel %vm1052, %v493, %v893
          %v1300 = vsel %vm1056, %v493, %v893
          %v1302 = vrot.slane %v1300, 2
          %v1305 = vsel %vm1052, %v494, %v894
          %v1306 = vsel %vm1056, %v494, %v894
          %v1308 = vrot.slane %v1306, 2
          %v1311 = vsel %vm1052, %v495, %v895
          %v1312 = vsel %vm1056, %v495, %v895
          %v1314 = vrot.slane %v1312, 2
          %v1317 = vsel %vm1052, %v496, %v896
          %v1318 = vsel %vm1056, %v496, %v896
          %v1320 = vrot.slane %v1318, 2
          %v1323 = vsel %vm1052, %v497, %v897
          %v1324 = vsel %vm1056, %v497, %v897
          %v1326 = vrot.slane %v1324, 2
          %v1329 = vsel %vm1052, %v498, %v898
          %v1330 = vsel %vm1056, %v498, %v898
          %v1332 = vrot.slane %v1330, 2
          %v1335 = vsel %vm1052, %v499, %v899
          %v1336 = vsel %vm1056, %v499, %v899
          %v1338 = vrot.slane %v1336, 2
          %v1341 = vsel %vm1052, %v500, %v900
          %v1342 = vsel %vm1056, %v500, %v900
          %v1344 = vrot.slane %v1342, 2
          %v1347 = vsel %vm1052, %v501, %v901
          %v1350 = vsel %vm1052, %v502, %v902
          %v1351 = vsel %vm1056, %v502, %v902
          %v1353 = vrot.slane %v1351, 2
          %v1356 = vsel %vm1052, %v503, %v903
          %v1357 = vsel %vm1056, %v503, %v903
          %v1359 = vrot.slane %v1357, 2
          %v1362 = vsel %vm1052, %v504, %v904
          %v1363 = vsel %vm1056, %v504, %v904
          %v1365 = vrot.slane %v1363, 2
          %v1368 = vsel %vm1052, %v505, %v905
          %v1369 = vsel %vm1056, %v505, %v905
          %v1371 = vrot.slane %v1369, 2
          %v1374 = vsel %vm1052, %v506, %v906
          %v1375 = vsel %vm1056, %v506, %v906
          %v1377 = vrot.slane %v1375, 2
          %v1380 = vsel %vm1052, %v507, %v907
          %v1381 = vsel %vm1056, %v507, %v907
          %v1383 = vrot.slane %v1381, 2
          %v1386 = vsel %vm1052, %v508, %v908
          %v1387 = vsel %vm1056, %v508, %v908
          %v1389 = vrot.slane %v1387, 2
          %v1392 = vsel %vm1052, %v509, %v909
          %v1393 = vsel %vm1056, %v509, %v909
          %v1395 = vrot.slane %v1393, 2
          %v1398 = vsel %vm1052, %v510, %v910
          %v1399 = vsel %vm1056, %v510, %v910
          %v1401 = vrot.slane %v1399, 2
          %v1404 = vsel %vm1052, %v511, %v911
          %v1405 = vsel %vm1056, %v511, %v911
          %v1407 = vrot.slane %v1405, 2
          %v1410 = vsel %vm1052, %v512, %v912
          %v1411 = vsel %vm1056, %v512, %v912
          %v1413 = vrot.slane %v1411, 2
          %v1416 = vsel %vm1052, %v513, %v913
          %v1417 = vsel %vm1056, %v513, %v913
          %v1419 = vrot.slane %v1417, 2
          %v1422 = vsel %vm1052, %v514, %v914
          %v1423 = vsel %vm1056, %v514, %v914
          %v1425 = vrot.slane %v1423, 2
          %v1428 = vsel %vm1052, %v515, %v915
          %v1429 = vsel %vm1056, %v515, %v915
          %v1431 = vrot.slane %v1429, 2
          %v1434 = vsel %vm1052, %v516, %v916
          %v1435 = vsel %vm1056, %v516, %v916
          %v1437 = vrot.slane %v1435, 2
          %v1440 = vsel %vm1052, %v517, %v917
          %v1441 = vsel %vm1056, %v517, %v917
          %v1443 = vrot.slane %v1441, 2
          %v1446 = vsel %vm1052, %v518, %v918
          %v1447 = vsel %vm1056, %v518, %v918
          %v1449 = vrot.slane %v1447, 2
          %v1452 = vsel %vm1052, %v519, %v919
          %v1453 = vsel %vm1056, %v519, %v919
          %v1455 = vrot.slane %v1453, 2
          %v1458 = vsel %vm1052, %v520, %v920
          %v1459 = vsel %vm1056, %v520, %v920
          %v1461 = vrot.slane %v1459, 2
          %v1464 = vsel %vm1052, %v521, %v921
          %v1465 = vsel %vm1056, %v521, %v921
          %v1467 = vrot.slane %v1465, 2
          %v1470 = vsel %vm1052, %v522, %v922
          %v1471 = vsel %vm1056, %v522, %v922
          %v1473 = vrot.slane %v1471, 2
          %v1476 = vsel %vm1052, %v523, %v923
          %v1477 = vsel %vm1056, %v523, %v923
          %v1479 = vrot.slane %v1477, 2
          %v1482 = vsel %vm1052, %v524, %v924
          %v1483 = vsel %vm1056, %v524, %v924
          %v1485 = vrot.slane %v1483, 2
          %v1488 = vsel %vm1052, %v525, %v925
          %v1489 = vsel %vm1056, %v525, %v925
          %v1491 = vrot.slane %v1489, 2
          %v1494 = vsel %vm1052, %v526, %v926
          %v1497 = vsel %vm1052, %v527, %v927
          %v1498 = vsel %vm1056, %v527, %v927
          %v1500 = vrot.slane %v1498, 2
          %v1503 = vsel %vm1052, %v528, %v928
          %v1504 = vsel %vm1056, %v528, %v928
          %v1506 = vrot.slane %v1504, 2
          %v1509 = vsel %vm1052, %v529, %v929
          %v1510 = vsel %vm1056, %v529, %v929
          %v1512 = vrot.slane %v1510, 2
          %v1515 = vsel %vm1052, %v530, %v930
          %v1516 = vsel %vm1056, %v530, %v930
          %v1518 = vrot.slane %v1516, 2
          %v1521 = vsel %vm1052, %v531, %v931
          %v1522 = vsel %vm1056, %v531, %v931
          %v1524 = vrot.slane %v1522, 2
          %v1527 = vsel %vm1052, %v532, %v932
          %v1528 = vsel %vm1056, %v532, %v932
          %v1530 = vrot.slane %v1528, 2
          %v1533 = vsel %vm1052, %v533, %v933
          %v1534 = vsel %vm1056, %v533, %v933
          %v1536 = vrot.slane %v1534, 2
          %v1539 = vsel %vm1052, %v534, %v934
          %v1540 = vsel %vm1056, %v534, %v934
          %v1542 = vrot.slane %v1540, 2
          %v1545 = vsel %vm1052, %v535, %v935
          %v1546 = vsel %vm1056, %v535, %v935
          %v1548 = vrot.slane %v1546, 2
          %v1551 = vsel %vm1052, %v536, %v936
          %v1552 = vsel %vm1056, %v536, %v936
          %v1554 = vrot.slane %v1552, 2
          %v1557 = vsel %vm1052, %v537, %v937
          %v1558 = vsel %vm1056, %v537, %v937
          %v1560 = vrot.slane %v1558, 2
          %v1563 = vsel %vm1052, %v538, %v938
          %v1564 = vsel %vm1056, %v538, %v938
          %v1566 = vrot.slane %v1564, 2
          %v1569 = vsel %vm1052, %v539, %v939
          %v1570 = vsel %vm1056, %v539, %v939
          %v1572 = vrot.slane %v1570, 2
          %v1575 = vsel %vm1052, %v540, %v940
          %v1576 = vsel %vm1056, %v540, %v940
          %v1578 = vrot.slane %v1576, 2
          %v1581 = vsel %vm1052, %v541, %v941
          %v1582 = vsel %vm1056, %v541, %v941
          %v1584 = vrot.slane %v1582, 2
          %v1587 = vsel %vm1052, %v542, %v942
          %v1588 = vsel %vm1056, %v542, %v942
          %v1590 = vrot.slane %v1588, 2
          %v1593 = vsel %vm1052, %v543, %v943
          %v1594 = vsel %vm1056, %v543, %v943
          %v1596 = vrot.slane %v1594, 2
          %v1599 = vsel %vm1052, %v544, %v944
          %v1600 = vsel %vm1056, %v544, %v944
          %v1602 = vrot.slane %v1600, 2
          %v1605 = vsel %vm1052, %v545, %v945
          %v1606 = vsel %vm1056, %v545, %v945
          %v1608 = vrot.slane %v1606, 2
          %v1611 = vsel %vm1052, %v546, %v946
          %v1612 = vsel %vm1056, %v546, %v946
          %v1614 = vrot.slane %v1612, 2
          %v1617 = vsel %vm1052, %v547, %v947
          %v1618 = vsel %vm1056, %v547, %v947
          %v1620 = vrot.slane %v1618, 2
          %v1623 = vsel %vm1052, %v548, %v948
          %v1624 = vsel %vm1056, %v548, %v948
          %v1626 = vrot.slane %v1624, 2
          %v1629 = vsel %vm1052, %v549, %v949
          %v1630 = vsel %vm1056, %v549, %v949
          %v1632 = vrot.slane %v1630, 2
          %v1635 = vsel %vm1052, %v550, %v950
          %v1636 = vsel %vm1056, %v550, %v950
          %v1638 = vrot.slane %v1636, 2
          %v1641 = vsel %vm1052, %v551, %v951
          %v1644 = vsel %vm1052, %v552, %v952
          %v1645 = vsel %vm1056, %v552, %v952
          %v1647 = vrot.slane %v1645, 2
          %v1650 = vsel %vm1052, %v553, %v953
          %v1651 = vsel %vm1056, %v553, %v953
          %v1653 = vrot.slane %v1651, 2
          %v1656 = vsel %vm1052, %v554, %v954
          %v1657 = vsel %vm1056, %v554, %v954
          %v1659 = vrot.slane %v1657, 2
          %v1662 = vsel %vm1052, %v555, %v955
          %v1663 = vsel %vm1056, %v555, %v955
          %v1665 = vrot.slane %v1663, 2
          %v1668 = vsel %vm1052, %v556, %v956
          %v1669 = vsel %vm1056, %v556, %v956
          %v1671 = vrot.slane %v1669, 2
          %v1674 = vsel %vm1052, %v557, %v957
          %v1675 = vsel %vm1056, %v557, %v957
          %v1677 = vrot.slane %v1675, 2
          %v1680 = vsel %vm1052, %v558, %v958
          %v1681 = vsel %vm1056, %v558, %v958
          %v1683 = vrot.slane %v1681, 2
          %v1686 = vsel %vm1052, %v559, %v959
          %v1687 = vsel %vm1056, %v559, %v959
          %v1689 = vrot.slane %v1687, 2
          %v1692 = vsel %vm1052, %v560, %v960
          %v1693 = vsel %vm1056, %v560, %v960
          %v1695 = vrot.slane %v1693, 2
          %v1698 = vsel %vm1052, %v561, %v961
          %v1699 = vsel %vm1056, %v561, %v961
          %v1701 = vrot.slane %v1699, 2
          %v1704 = vsel %vm1052, %v562, %v962
          %v1705 = vsel %vm1056, %v562, %v962
          %v1707 = vrot.slane %v1705, 2
          %v1710 = vsel %vm1052, %v563, %v963
          %v1711 = vsel %vm1056, %v563, %v963
          %v1713 = vrot.slane %v1711, 2
          %v1716 = vsel %vm1052, %v564, %v964
          %v1717 = vsel %vm1056, %v564, %v964
          %v1719 = vrot.slane %v1717, 2
          %v1722 = vsel %vm1052, %v565, %v965
          %v1723 = vsel %vm1056, %v565, %v965
          %v1725 = vrot.slane %v1723, 2
          %v1728 = vsel %vm1052, %v566, %v966
          %v1729 = vsel %vm1056, %v566, %v966
          %v1731 = vrot.slane %v1729, 2
          %v1734 = vsel %vm1052, %v567, %v967
          %v1735 = vsel %vm1056, %v567, %v967
          %v1737 = vrot.slane %v1735, 2
          %v1740 = vsel %vm1052, %v568, %v968
          %v1741 = vsel %vm1056, %v568, %v968
          %v1743 = vrot.slane %v1741, 2
          %v1746 = vsel %vm1052, %v569, %v969
          %v1747 = vsel %vm1056, %v569, %v969
          %v1749 = vrot.slane %v1747, 2
          %v1752 = vsel %vm1052, %v570, %v970
          %v1753 = vsel %vm1056, %v570, %v970
          %v1755 = vrot.slane %v1753, 2
          %v1758 = vsel %vm1052, %v571, %v971
          %v1759 = vsel %vm1056, %v571, %v971
          %v1761 = vrot.slane %v1759, 2
          %v1764 = vsel %vm1052, %v572, %v972
          %v1765 = vsel %vm1056, %v572, %v972
          %v1767 = vrot.slane %v1765, 2
          %v1770 = vsel %vm1052, %v573, %v973
          %v1771 = vsel %vm1056, %v573, %v973
          %v1773 = vrot.slane %v1771, 2
          %v1776 = vsel %vm1052, %v574, %v974
          %v1777 = vsel %vm1056, %v574, %v974
          %v1779 = vrot.slane %v1777, 2
          %v1782 = vsel %vm1052, %v575, %v975
          %v1783 = vsel %vm1056, %v575, %v975
          %v1785 = vrot.slane %v1783, 2
          %v1788 = vsel %vm1052, %v576, %v976
          %v1791 = vsel %vm1052, %v577, %v977
          %v1792 = vsel %vm1056, %v577, %v977
          %v1794 = vrot.slane %v1792, 2
          %v1797 = vsel %vm1052, %v578, %v978
          %v1798 = vsel %vm1056, %v578, %v978
          %v1800 = vrot.slane %v1798, 2
          %v1803 = vsel %vm1052, %v579, %v979
          %v1804 = vsel %vm1056, %v579, %v979
          %v1806 = vrot.slane %v1804, 2
          %v1809 = vsel %vm1052, %v580, %v980
          %v1810 = vsel %vm1056, %v580, %v980
          %v1812 = vrot.slane %v1810, 2
          %v1815 = vsel %vm1052, %v581, %v981
          %v1816 = vsel %vm1056, %v581, %v981
          %v1818 = vrot.slane %v1816, 2
          %v1821 = vsel %vm1052, %v582, %v982
          %v1822 = vsel %vm1056, %v582, %v982
          %v1824 = vrot.slane %v1822, 2
          %v1827 = vsel %vm1052, %v583, %v983
          %v1828 = vsel %vm1056, %v583, %v983
          %v1830 = vrot.slane %v1828, 2
          %v1833 = vsel %vm1052, %v584, %v984
          %v1834 = vsel %vm1056, %v584, %v984
          %v1836 = vrot.slane %v1834, 2
          %v1839 = vsel %vm1052, %v585, %v985
          %v1840 = vsel %vm1056, %v585, %v985
          %v1842 = vrot.slane %v1840, 2
          %v1845 = vsel %vm1052, %v586, %v986
          %v1846 = vsel %vm1056, %v586, %v986
          %v1848 = vrot.slane %v1846, 2
          %v1851 = vsel %vm1052, %v587, %v987
          %v1852 = vsel %vm1056, %v587, %v987
          %v1854 = vrot.slane %v1852, 2
          %v1857 = vsel %vm1052, %v588, %v988
          %v1858 = vsel %vm1056, %v588, %v988
          %v1860 = vrot.slane %v1858, 2
          %v1863 = vsel %vm1052, %v589, %v989
          %v1864 = vsel %vm1056, %v589, %v989
          %v1866 = vrot.slane %v1864, 2
          %v1869 = vsel %vm1052, %v590, %v990
          %v1870 = vsel %vm1056, %v590, %v990
          %v1872 = vrot.slane %v1870, 2
          %v1875 = vsel %vm1052, %v591, %v991
          %v1876 = vsel %vm1056, %v591, %v991
          %v1878 = vrot.slane %v1876, 2
          %v1881 = vsel %vm1052, %v592, %v992
          %v1882 = vsel %vm1056, %v592, %v992
          %v1884 = vrot.slane %v1882, 2
          %v1887 = vsel %vm1052, %v593, %v993
          %v1888 = vsel %vm1056, %v593, %v993
          %v1890 = vrot.slane %v1888, 2
          %v1893 = vsel %vm1052, %v594, %v994
          %v1894 = vsel %vm1056, %v594, %v994
          %v1896 = vrot.slane %v1894, 2
          %v1899 = vsel %vm1052, %v595, %v995
          %v1900 = vsel %vm1056, %v595, %v995
          %v1902 = vrot.slane %v1900, 2
          %v1905 = vsel %vm1052, %v596, %v996
          %v1906 = vsel %vm1056, %v596, %v996
          %v1908 = vrot.slane %v1906, 2
          %v1911 = vsel %vm1052, %v597, %v997
          %v1912 = vsel %vm1056, %v597, %v997
          %v1914 = vrot.slane %v1912, 2
          %v1917 = vsel %vm1052, %v598, %v998
          %v1918 = vsel %vm1056, %v598, %v998
          %v1920 = vrot.slane %v1918, 2
          %v1923 = vsel %vm1052, %v599, %v999
          %v1924 = vsel %vm1056, %v599, %v999
          %v1926 = vrot.slane %v1924, 2
          %v1929 = vsel %vm1052, %v600, %v1000
          %v1930 = vsel %vm1056, %v600, %v1000
          %v1932 = vrot.slane %v1930, 2
          %v1935 = vsel %vm1052, %v601, %v1001
          %v1938 = vsel %vm1052, %v602, %v1002
          %v1939 = vsel %vm1056, %v602, %v1002
          %v1941 = vrot.slane %v1939, 2
          %v1944 = vsel %vm1052, %v603, %v1003
          %v1945 = vsel %vm1056, %v603, %v1003
          %v1947 = vrot.slane %v1945, 2
          %v1950 = vsel %vm1052, %v604, %v1004
          %v1951 = vsel %vm1056, %v604, %v1004
          %v1953 = vrot.slane %v1951, 2
          %v1956 = vsel %vm1052, %v605, %v1005
          %v1957 = vsel %vm1056, %v605, %v1005
          %v1959 = vrot.slane %v1957, 2
          %v1962 = vsel %vm1052, %v606, %v1006
          %v1963 = vsel %vm1056, %v606, %v1006
          %v1965 = vrot.slane %v1963, 2
          %v1968 = vsel %vm1052, %v607, %v1007
          %v1969 = vsel %vm1056, %v607, %v1007
          %v1971 = vrot.slane %v1969, 2
          %v1974 = vsel %vm1052, %v608, %v1008
          %v1975 = vsel %vm1056, %v608, %v1008
          %v1977 = vrot.slane %v1975, 2
          %v1980 = vsel %vm1052, %v609, %v1009
          %v1981 = vsel %vm1056, %v609, %v1009
          %v1983 = vrot.slane %v1981, 2
          %v1986 = vsel %vm1052, %v610, %v1010
          %v1987 = vsel %vm1056, %v610, %v1010
          %v1989 = vrot.slane %v1987, 2
          %v1992 = vsel %vm1052, %v611, %v1011
          %v1993 = vsel %vm1056, %v611, %v1011
          %v1995 = vrot.slane %v1993, 2
          %v1998 = vsel %vm1052, %v612, %v1012
          %v1999 = vsel %vm1056, %v612, %v1012
          %v2001 = vrot.slane %v1999, 2
          %v2004 = vsel %vm1052, %v613, %v1013
          %v2005 = vsel %vm1056, %v613, %v1013
          %v2007 = vrot.slane %v2005, 2
          %v2010 = vsel %vm1052, %v614, %v1014
          %v2011 = vsel %vm1056, %v614, %v1014
          %v2013 = vrot.slane %v2011, 2
          %v2016 = vsel %vm1052, %v615, %v1015
          %v2017 = vsel %vm1056, %v615, %v1015
          %v2019 = vrot.slane %v2017, 2
          %v2022 = vsel %vm1052, %v616, %v1016
          %v2023 = vsel %vm1056, %v616, %v1016
          %v2025 = vrot.slane %v2023, 2
          %v2028 = vsel %vm1052, %v617, %v1017
          %v2029 = vsel %vm1056, %v617, %v1017
          %v2031 = vrot.slane %v2029, 2
          %v2034 = vsel %vm1052, %v618, %v1018
          %v2035 = vsel %vm1056, %v618, %v1018
          %v2037 = vrot.slane %v2035, 2
          %v2040 = vsel %vm1052, %v619, %v1019
          %v2041 = vsel %vm1056, %v619, %v1019
          %v2043 = vrot.slane %v2041, 2
          %v2046 = vsel %vm1052, %v620, %v1020
          %v2047 = vsel %vm1056, %v620, %v1020
          %v2049 = vrot.slane %v2047, 2
          %v2052 = vsel %vm1052, %v621, %v1021
          %v2053 = vsel %vm1056, %v621, %v1021
          %v2055 = vrot.slane %v2053, 2
          %v2058 = vsel %vm1052, %v622, %v1022
          %v2059 = vsel %vm1056, %v622, %v1022
          %v2061 = vrot.slane %v2059, 2
          %v2064 = vsel %vm1052, %v623, %v1023
          %v2065 = vsel %vm1056, %v623, %v1023
          %v2067 = vrot.slane %v2065, 2
          %v2070 = vsel %vm1052, %v624, %v1024
          %v2071 = vsel %vm1056, %v624, %v1024
          %v2073 = vrot.slane %v2071, 2
          %v2076 = vsel %vm1052, %v625, %v1025
          %v2077 = vsel %vm1056, %v625, %v1025
          %v2079 = vrot.slane %v2077, 2
          %v2082 = vsel %vm1052, %v626, %v1026
          %v2085 = vsel %vm1052, %v627, %v1027
          %v2086 = vsel %vm1056, %v627, %v1027
          %v2088 = vrot.slane %v2086, 2
          %v2091 = vsel %vm1052, %v628, %v1028
          %v2092 = vsel %vm1056, %v628, %v1028
          %v2094 = vrot.slane %v2092, 2
          %v2097 = vsel %vm1052, %v629, %v1029
          %v2098 = vsel %vm1056, %v629, %v1029
          %v2100 = vrot.slane %v2098, 2
          %v2103 = vsel %vm1052, %v630, %v1030
          %v2104 = vsel %vm1056, %v630, %v1030
          %v2106 = vrot.slane %v2104, 2
          %v2109 = vsel %vm1052, %v631, %v1031
          %v2110 = vsel %vm1056, %v631, %v1031
          %v2112 = vrot.slane %v2110, 2
          %v2115 = vsel %vm1052, %v632, %v1032
          %v2116 = vsel %vm1056, %v632, %v1032
          %v2118 = vrot.slane %v2116, 2
          %v2121 = vsel %vm1052, %v633, %v1033
          %v2122 = vsel %vm1056, %v633, %v1033
          %v2124 = vrot.slane %v2122, 2
          %v2127 = vsel %vm1052, %v634, %v1034
          %v2128 = vsel %vm1056, %v634, %v1034
          %v2130 = vrot.slane %v2128, 2
          %v2133 = vsel %vm1052, %v635, %v1035
          %v2134 = vsel %vm1056, %v635, %v1035
          %v2136 = vrot.slane %v2134, 2
          %v2139 = vsel %vm1052, %v636, %v1036
          %v2140 = vsel %vm1056, %v636, %v1036
          %v2142 = vrot.slane %v2140, 2
          %v2145 = vsel %vm1052, %v637, %v1037
          %v2146 = vsel %vm1056, %v637, %v1037
          %v2148 = vrot.slane %v2146, 2
          %v2151 = vsel %vm1052, %v638, %v1038
          %v2152 = vsel %vm1056, %v638, %v1038
          %v2154 = vrot.slane %v2152, 2
          %v2157 = vsel %vm1052, %v639, %v1039
          %v2158 = vsel %vm1056, %v639, %v1039
          %v2160 = vrot.slane %v2158, 2
          %v2163 = vsel %vm1052, %v640, %v1040
          %v2164 = vsel %vm1056, %v640, %v1040
          %v2166 = vrot.slane %v2164, 2
          %v2169 = vsel %vm1052, %v641, %v1041
          %v2170 = vsel %vm1056, %v641, %v1041
          %v2172 = vrot.slane %v2170, 2
          %v2175 = vsel %vm1052, %v642, %v1042
          %v2176 = vsel %vm1056, %v642, %v1042
          %v2178 = vrot.slane %v2176, 2
          %v2181 = vsel %vm1052, %v643, %v1043
          %v2182 = vsel %vm1056, %v643, %v1043
          %v2184 = vrot.slane %v2182, 2
          %v2187 = vsel %vm1052, %v644, %v1044
          %v2188 = vsel %vm1056, %v644, %v1044
          %v2190 = vrot.slane %v2188, 2
          %v2193 = vsel %vm1052, %v645, %v1045
          %v2194 = vsel %vm1056, %v645, %v1045
          %v2196 = vrot.slane %v2194, 2
          %v2199 = vsel %vm1052, %v646, %v1046
          %v2200 = vsel %vm1056, %v646, %v1046
          %v2202 = vrot.slane %v2200, 2
          %v2205 = vsel %vm1052, %v647, %v1047
          %v2206 = vsel %vm1056, %v647, %v1047
          %v2208 = vrot.slane %v2206, 2
          %v2211 = vsel %vm1052, %v648, %v1048
          %v2212 = vsel %vm1056, %v648, %v1048
          %v2214 = vrot.slane %v2212, 2
          %v2217 = vsel %vm1052, %v649, %v1049
          %v2218 = vsel %vm1056, %v649, %v1049
          %v2220 = vrot.slane %v2218, 2
          %v2223 = vsel %vm1052, %v650, %v1050
          %v2224 = vsel %vm1056, %v650, %v1050
          %v2226 = vrot.slane %v2224, 2
          %v2229 = vsel %vm1052, %v651, %v1051
          %v2230 = vld [vmem:[#allocation7] sm:$0xf]
          %2231 = vst [vmem:[#allocation1] ss:$4 sm:$0xff] %v1055
          %s2233 = scalar_lea.vmem [#allocation1], 1
          %2234 = vst [vmem:[%s2233] ss:$4 sm:$0xff] %v1059
          %s2235 = scalar_lea.vmem [#allocation1], 2
          %2236 = vst [vmem:[%s2235] ss:$4 sm:$0xff] %v1062
          %s2238 = scalar_lea.vmem [#allocation1], 3
          %2239 = vst [vmem:[%s2238] ss:$4 sm:$0xff] %v1065
          %s2240 = scalar_lea.vmem [#allocation1], 32
          %2241 = vst [vmem:[%s2240] ss:$4 sm:$0xff] %v1068
          %s2243 = scalar_lea.vmem [#allocation1], 33
          %2244 = vst [vmem:[%s2243] ss:$4 sm:$0xff] %v1071
          %s2245 = scalar_lea.vmem [#allocation1], 34
          %2246 = vst [vmem:[%s2245] ss:$4 sm:$0xff] %v1074
          %s2248 = scalar_lea.vmem [#allocation1], 35
          %2249 = vst [vmem:[%s2248] ss:$4 sm:$0xff] %v1077
          %v2250 = vld.sshfl [vmem:[#allocation1] sm:$0xff pattern:$0x73625140]
          %v2251 = vld.sshfl [vmem:[#allocation1 + $0x20] sm:$0xff pattern:$0x73625140]
          %2252 = vst [vmem:[#allocation1] ss:$4 sm:$0xff] %v1080
          %2254 = vst [vmem:[%s2233] ss:$4 sm:$0xff] %v1083
          %2255 = vst [vmem:[%s2235] ss:$4 sm:$0xff] %v1086
          %2257 = vst [vmem:[%s2238] ss:$4 sm:$0xff] %v1089
          %2258 = vst [vmem:[%s2240] ss:$4 sm:$0xff] %v1092
          %2260 = vst [vmem:[%s2243] ss:$4 sm:$0xff] %v1095
          %2261 = vst [vmem:[%s2245] ss:$4 sm:$0xff] %v1098
          %2263 = vst [vmem:[%s2248] ss:$4 sm:$0xff] %v1101
          %v2264 = vld.sshfl [vmem:[#allocation1] sm:$0xff pattern:$0x73625140]
          %v2265 = vld.sshfl [vmem:[#allocation1 + $0x20] sm:$0xff pattern:$0x73625140]
          %2266 = vst [vmem:[#allocation1] ss:$4 sm:$0xff] %v1104
          %2268 = vst [vmem:[%s2233] ss:$4 sm:$0xff] %v1107
          %2269 = vst [vmem:[%s2235] ss:$4 sm:$0xff] %v1110
          %2271 = vst [vmem:[%s2238] ss:$4 sm:$0xff] %v1113
          %2272 = vst [vmem:[%s2240] ss:$4 sm:$0xff] %v1116
          %2274 = vst [vmem:[%s2243] ss:$4 sm:$0xff] %v1119
          %2275 = vst [vmem:[%s2245] ss:$4 sm:$0xff] %v1122
          %2277 = vst [vmem:[%s2248] ss:$4 sm:$0xff] %v1125
          %v2278 = vld.sshfl [vmem:[#allocation1] sm:$0xff pattern:$0x73625140]
          %v2279 = vld.sshfl [vmem:[#allocation1 + $0x20] sm:$0xff pattern:$0x73625140]
          %2280 = vst [vmem:[#allocation1] ss:$4 sm:$0xff] %v1128
          %2282 = vst [vmem:[%s2233] ss:$4 sm:$0xff] %v1131
          %2283 = vst [vmem:[%s2235] ss:$4 sm:$0xff] %v1134
          %2285 = vst [vmem:[%s2238] ss:$4 sm:$0xff] %v1137
          %2286 = vst [vmem:[%s2240] ss:$4 sm:$0xff] %v1140
          %2288 = vst [vmem:[%s2243] ss:$4 sm:$0xff] %v1143
          %2289 = vst [vmem:[%s2245] ss:$4 sm:$0xff] %v1146
          %2291 = vst [vmem:[%s2248] ss:$4 sm:$0xff] %v1149
          %v2292 = vld.sshfl [vmem:[#allocation1] sm:$0xff pattern:$0x73625140]
          %v2293 = vld.sshfl [vmem:[#allocation1 + $0x20] sm:$0xff pattern:$0x73625140]
          %2294 = vst [vmem:[#allocation1] ss:$4 sm:$0xff] %v1152
          %2296 = vst [vmem:[%s2233] ss:$4 sm:$0xff] %v1155
          %2297 = vst [vmem:[%s2235] ss:$4 sm:$0xff] %v1158
          %2299 = vst [vmem:[%s2238] ss:$4 sm:$0xff] %v1161
          %2300 = vst [vmem:[%s2240] ss:$4 sm:$0xff] %v1164
          %2302 = vst [vmem:[%s2243] ss:$4 sm:$0xff] %v1167
          %2303 = vst [vmem:[%s2245] ss:$4 sm:$0xff] %v1170
          %2305 = vst [vmem:[%s2248] ss:$4 sm:$0xff] %v1173
          %v2306 = vld.sshfl [vmem:[#allocation1] sm:$0xff pattern:$0x73625140]
          %v2307 = vld.sshfl [vmem:[#allocation1 + $0x20] sm:$0xff pattern:$0x73625140]
          %2308 = vst [vmem:[#allocation1] ss:$4 sm:$0xff] %v1176
          %2310 = vst [vmem:[%s2233] ss:$4 sm:$0xff] %v1179
          %2311 = vst [vmem:[%s2235] ss:$4 sm:$0xff] %v1182
          %2313 = vst [vmem:[%s2238] ss:$4 sm:$0xff] %v1185
          %2314 = vst [vmem:[%s2240] ss:$4 sm:$0xff] %v1188
          %2316 = vst [vmem:[%s2243] ss:$4 sm:$0xff] %v1191
          %2317 = vst [vmem:[%s2245] ss:$4 sm:$0xff] %v1194
          %2319 = vst [vmem:[%s2248] ss:$4 sm:$0xff] %v1197
          %v2320 = vld.sshfl [vmem:[#allocation1] sm:$0xff pattern:$0x73625140]
          %v2321 = vld.sshfl [vmem:[#allocation1 + $0x20] sm:$0xff pattern:$0x73625140]
          %2322 = vst [vmem:[#allocation1] ss:$4 sm:$0xff] %v1200
          %2323 = vst [vmem:[%s2233] ss:$4 sm:$0xff] %v1203
          %2325 = vst [vmem:[%s2235] ss:$4 sm:$0xff] %v1206
          %2326 = vst [vmem:[%s2238] ss:$4 sm:$0xff] %v1209
          %2328 = vst [vmem:[%s2240] ss:$4 sm:$0xff] %v1212
          %2329 = vst [vmem:[%s2243] ss:$4 sm:$0xff] %v1215
          %2331 = vst [vmem:[%s2245] ss:$4 sm:$0xff] %v1218
          %2332 = vst [vmem:[%s2248] ss:$4 sm:$0xff] %v1221
          %v2333 = vld.sshfl [vmem:[#allocation1] sm:$0xff pattern:$0x73625140]
          %v2334 = vld.sshfl [vmem:[#allocation1 + $0x20] sm:$0xff pattern:$0x73625140]
          %2336 = vst [vmem:[#allocation1] ss:$4 sm:$0xff] %v1224
          %2337 = vst [vmem:[%s2233] ss:$4 sm:$0xff] %v1227
          %2339 = vst [vmem:[%s2235] ss:$4 sm:$0xff] %v1230
          %2340 = vst [vmem:[%s2238] ss:$4 sm:$0xff] %v1233
          %2342 = vst [vmem:[%s2240] ss:$4 sm:$0xff] %v1236
          %2343 = vst [vmem:[%s2243] ss:$4 sm:$0xff] %v1239
          %2345 = vst [vmem:[%s2245] ss:$4 sm:$0xff] %v1242
          %2346 = vst [vmem:[%s2248] ss:$4 sm:$0xff] %v1245
          %v2347 = vld.sshfl [vmem:[#allocation1] sm:$0xff pattern:$0x73625140]
          %v2348 = vld.sshfl [vmem:[#allocation1 + $0x20] sm:$0xff pattern:$0x73625140]
          %2350 = vst [vmem:[#allocation1] ss:$4 sm:$0xff] %v1248
          %2351 = vst [vmem:[%s2233] ss:$4 sm:$0xff] %v1251
          %2353 = vst [vmem:[%s2235] ss:$4 sm:$0xff] %v1254
          %2354 = vst [vmem:[%s2238] ss:$4 sm:$0xff] %v1257
          %2356 = vst [vmem:[%s2240] ss:$4 sm:$0xff] %v1260
          %2357 = vst [vmem:[%s2243] ss:$4 sm:$0xff] %v1263
          %2359 = vst [vmem:[%s2245] ss:$4 sm:$0xff] %v1266
          %2360 = vst [vmem:[%s2248] ss:$4 sm:$0xff] %v1269
          %v2361 = vld.sshfl [vmem:[#allocation1] sm:$0xff pattern:$0x73625140]
          %v2362 = vld.sshfl [vmem:[#allocation1 + $0x20] sm:$0xff pattern:$0x73625140]
          %2364 = vst [vmem:[#allocation1] ss:$4 sm:$0xff] %v1272
          %2365 = vst [vmem:[%s2233] ss:$4 sm:$0xff] %v1275
          %2367 = vst [vmem:[%s2235] ss:$4 sm:$0xff] %v1278
          %2368 = vst [vmem:[%s2238] ss:$4 sm:$0xff] %v1281
          %2370 = vst [vmem:[%s2240] ss:$4 sm:$0xff] %v1284
          %2371 = vst [vmem:[%s2243] ss:$4 sm:$0xff] %v1287
          %2373 = vst [vmem:[%s2245] ss:$4 sm:$0xff] %v1290
          %2374 = vst [vmem:[%s2248] ss:$4 sm:$0xff] %v1293
          %v2375 = vld.sshfl [vmem:[#allocation1] sm:$0xff pattern:$0x73625140]
          %v2376 = vld.sshfl [vmem:[#allocation1 + $0x20] sm:$0xff pattern:$0x73625140]
          %2378 = vst [vmem:[#allocation1] ss:$4 sm:$0xff] %v1296
          %2379 = vst [vmem:[%s2233] ss:$4 sm:$0xff] %v1299
          %2381 = vst [vmem:[%s2235] ss:$4 sm:$0xff] %v1302
          %2382 = vst [vmem:[%s2238] ss:$4 sm:$0xff] %v1305
          %2384 = vst [vmem:[%s2240] ss:$4 sm:$0xff] %v1308
          %2385 = vst [vmem:[%s2243] ss:$4 sm:$0xff] %v1311
          %2387 = vst [vmem:[%s2245] ss:$4 sm:$0xff] %v1314
          %2388 = vst [vmem:[%s2248] ss:$4 sm:$0xff] %v1317
          %v2389 = vld.sshfl [vmem:[#allocation1] sm:$0xff pattern:$0x73625140]
          %v2390 = vld.sshfl [vmem:[#allocation1 + $0x20] sm:$0xff pattern:$0x73625140]
          %2392 = vst [vmem:[#allocation1] ss:$4 sm:$0xff] %v1320
          %2393 = vst [vmem:[%s2233] ss:$4 sm:$0xff] %v1323
          %2395 = vst [vmem:[%s2235] ss:$4 sm:$0xff] %v1326
          %2396 = vst [vmem:[%s2238] ss:$4 sm:$0xff] %v1329
          %2398 = vst [vmem:[%s2240] ss:$4 sm:$0xff] %v1332
          %2399 = vst [vmem:[%s2243] ss:$4 sm:$0xff] %v1335
          %2401 = vst [vmem:[%s2245] ss:$4 sm:$0xff] %v1338
          %2402 = vst [vmem:[%s2248] ss:$4 sm:$0xff] %v1341
          %v2403 = vld.sshfl [vmem:[#allocation1] sm:$0xff pattern:$0x73625140]
          %v2404 = vld.sshfl [vmem:[#allocation1 + $0x20] sm:$0xff pattern:$0x73625140]
          %2406 = vst [vmem:[#allocation1] ss:$4 sm:$0xff] %v1344
          %2407 = vst [vmem:[%s2233] ss:$4 sm:$0xff] %v1347
          %2408 = vst [vmem:[%s2235] ss:$4 sm:$0xff] %v1350
          %2410 = vst [vmem:[%s2238] ss:$4 sm:$0xff] %v1353
          %2411 = vst [vmem:[%s2240] ss:$4 sm:$0xff] %v1356
          %2413 = vst [vmem:[%s2243] ss:$4 sm:$0xff] %v1359
          %2414 = vst [vmem:[%s2245] ss:$4 sm:$0xff] %v1362
          %2416 = vst [vmem:[%s2248] ss:$4 sm:$0xff] %v1365
          %v2417 = vld.sshfl [vmem:[#allocation1] sm:$0xff pattern:$0x73625140]
          %v2418 = vld.sshfl [vmem:[#allocation1 + $0x20] sm:$0xff pattern:$0x73625140]
          %2419 = vst [vmem:[#allocation1] ss:$4 sm:$0xff] %v1368
          %2421 = vst [vmem:[%s2233] ss:$4 sm:$0xff] %v1371
          %2422 = vst [vmem:[%s2235] ss:$4 sm:$0xff] %v1374
          %2424 = vst [vmem:[%s2238] ss:$4 sm:$0xff] %v1377
          %2425 = vst [vmem:[%s2240] ss:$4 sm:$0xff] %v1380
          %2427 = vst [vmem:[%s2243] ss:$4 sm:$0xff] %v1383
          %2428 = vst [vmem:[%s2245] ss:$4 sm:$0xff] %v1386
          %2430 = vst [vmem:[%s2248] ss:$4 sm:$0xff] %v1389
          %v2431 = vld.sshfl [vmem:[#allocation1] sm:$0xff pattern:$0x73625140]
          %v2432 = vld.sshfl [vmem:[#allocation1 + $0x20] sm:$0xff pattern:$0x73625140]
          %2433 = vst [vmem:[#allocation1] ss:$4 sm:$0xff] %v1392
          %2435 = vst [vmem:[%s2233] ss:$4 sm:$0xff] %v1395
          %2436 = vst [vmem:[%s2235] ss:$4 sm:$0xff] %v1398
          %2438 = vst [vmem:[%s2238] ss:$4 sm:$0xff] %v1401
          %2439 = vst [vmem:[%s2240] ss:$4 sm:$0xff] %v1404
          %2441 = vst [vmem:[%s2243] ss:$4 sm:$0xff] %v1407
          %2442 = vst [vmem:[%s2245] ss:$4 sm:$0xff] %v1410
          %2444 = vst [vmem:[%s2248] ss:$4 sm:$0xff] %v1413
          %v2445 = vld.sshfl [vmem:[#allocation1] sm:$0xff pattern:$0x73625140]
          %v2446 = vld.sshfl [vmem:[#allocation1 + $0x20] sm:$0xff pattern:$0x73625140]
          %2447 = vst [vmem:[#allocation1] ss:$4 sm:$0xff] %v1416
          %2449 = vst [vmem:[%s2233] ss:$4 sm:$0xff] %v1419
          %2450 = vst [vmem:[%s2235] ss:$4 sm:$0xff] %v1422
          %2452 = vst [vmem:[%s2238] ss:$4 sm:$0xff] %v1425
          %2453 = vst [vmem:[%s2240] ss:$4 sm:$0xff] %v1428
          %2455 = vst [vmem:[%s2243] ss:$4 sm:$0xff] %v1431
          %2456 = vst [vmem:[%s2245] ss:$4 sm:$0xff] %v1434
          %2458 = vst [vmem:[%s2248] ss:$4 sm:$0xff] %v1437
          %v2459 = vld.sshfl [vmem:[#allocation1] sm:$0xff pattern:$0x73625140]
          %v2460 = vld.sshfl [vmem:[#allocation1 + $0x20] sm:$0xff pattern:$0x73625140]
          %2461 = vst [vmem:[#allocation1] ss:$4 sm:$0xff] %v1440
          %2463 = vst [vmem:[%s2233] ss:$4 sm:$0xff] %v1443
          %2464 = vst [vmem:[%s2235] ss:$4 sm:$0xff] %v1446
          %2466 = vst [vmem:[%s2238] ss:$4 sm:$0xff] %v1449
          %2467 = vst [vmem:[%s2240] ss:$4 sm:$0xff] %v1452
          %2469 = vst [vmem:[%s2243] ss:$4 sm:$0xff] %v1455
          %2470 = vst [vmem:[%s2245] ss:$4 sm:$0xff] %v1458
          %2472 = vst [vmem:[%s2248] ss:$4 sm:$0xff] %v1461
          %v2473 = vld.sshfl [vmem:[#allocation1] sm:$0xff pattern:$0x73625140]
          %v2474 = vld.sshfl [vmem:[#allocation1 + $0x20] sm:$0xff pattern:$0x73625140]
          %2475 = vst [vmem:[#allocation1] ss:$4 sm:$0xff] %v1464
          %2477 = vst [vmem:[%s2233] ss:$4 sm:$0xff] %v1467
          %2478 = vst [vmem:[%s2235] ss:$4 sm:$0xff] %v1470
          %2480 = vst [vmem:[%s2238] ss:$4 sm:$0xff] %v1473
          %2481 = vst [vmem:[%s2240] ss:$4 sm:$0xff] %v1476
          %2483 = vst [vmem:[%s2243] ss:$4 sm:$0xff] %v1479
          %2484 = vst [vmem:[%s2245] ss:$4 sm:$0xff] %v1482
          %2486 = vst [vmem:[%s2248] ss:$4 sm:$0xff] %v1485
          %v2487 = vld.sshfl [vmem:[#allocation1] sm:$0xff pattern:$0x73625140]
          %v2488 = vld.sshfl [vmem:[#allocation1 + $0x20] sm:$0xff pattern:$0x73625140]
          %2489 = vst [vmem:[#allocation1] ss:$4 sm:$0xff] %v1488
          %2491 = vst [vmem:[%s2233] ss:$4 sm:$0xff] %v1491
          %2492 = vst [vmem:[%s2235] ss:$4 sm:$0xff] %v1494
          %2493 = vst [vmem:[%s2238] ss:$4 sm:$0xff] %v1497
          %2495 = vst [vmem:[%s2240] ss:$4 sm:$0xff] %v1500
          %2496 = vst [vmem:[%s2243] ss:$4 sm:$0xff] %v1503
          %2498 = vst [vmem:[%s2245] ss:$4 sm:$0xff] %v1506
          %2499 = vst [vmem:[%s2248] ss:$4 sm:$0xff] %v1509
          %v2500 = vld.sshfl [vmem:[#allocation1] sm:$0xff pattern:$0x73625140]
          %v2501 = vld.sshfl [vmem:[#allocation1 + $0x20] sm:$0xff pattern:$0x73625140]
          %2503 = vst [vmem:[#allocation1] ss:$4 sm:$0xff] %v1512
          %2504 = vst [vmem:[%s2233] ss:$4 sm:$0xff] %v1515
          %2506 = vst [vmem:[%s2235] ss:$4 sm:$0xff] %v1518
          %2507 = vst [vmem:[%s2238] ss:$4 sm:$0xff] %v1521
          %2509 = vst [vmem:[%s2240] ss:$4 sm:$0xff] %v1524
          %2510 = vst [vmem:[%s2243] ss:$4 sm:$0xff] %v1527
          %2512 = vst [vmem:[%s2245] ss:$4 sm:$0xff] %v1530
          %2513 = vst [vmem:[%s2248] ss:$4 sm:$0xff] %v1533
          %v2514 = vld.sshfl [vmem:[#allocation1] sm:$0xff pattern:$0x73625140]
          %v2515 = vld.sshfl [vmem:[#allocation1 + $0x20] sm:$0xff pattern:$0x73625140]
          %2517 = vst [vmem:[#allocation1] ss:$4 sm:$0xff] %v1536
          %2518 = vst [vmem:[%s2233] ss:$4 sm:$0xff] %v1539
          %2520 = vst [vmem:[%s2235] ss:$4 sm:$0xff] %v1542
          %2521 = vst [vmem:[%s2238] ss:$4 sm:$0xff] %v1545
          %2523 = vst [vmem:[%s2240] ss:$4 sm:$0xff] %v1548
          %2524 = vst [vmem:[%s2243] ss:$4 sm:$0xff] %v1551
          %2526 = vst [vmem:[%s2245] ss:$4 sm:$0xff] %v1554
          %2527 = vst [vmem:[%s2248] ss:$4 sm:$0xff] %v1557
          %v2528 = vld.sshfl [vmem:[#allocation1] sm:$0xff pattern:$0x73625140]
          %v2529 = vld.sshfl [vmem:[#allocation1 + $0x20] sm:$0xff pattern:$0x73625140]
          %2531 = vst [vmem:[#allocation1] ss:$4 sm:$0xff] %v1560
          %2532 = vst [vmem:[%s2233] ss:$4 sm:$0xff] %v1563
          %2534 = vst [vmem:[%s2235] ss:$4 sm:$0xff] %v1566
          %2535 = vst [vmem:[%s2238] ss:$4 sm:$0xff] %v1569
          %2537 = vst [vmem:[%s2240] ss:$4 sm:$0xff] %v1572
          %2538 = vst [vmem:[%s2243] ss:$4 sm:$0xff] %v1575
          %2540 = vst [vmem:[%s2245] ss:$4 sm:$0xff] %v1578
          %2541 = vst [vmem:[%s2248] ss:$4 sm:$0xff] %v1581
          %v2542 = vld.sshfl [vmem:[#allocation1] sm:$0xff pattern:$0x73625140]
          %v2543 = vld.sshfl [vmem:[#allocation1 + $0x20] sm:$0xff pattern:$0x73625140]
          %2545 = vst [vmem:[#allocation1] ss:$4 sm:$0xff] %v1584
          %2546 = vst [vmem:[%s2233] ss:$4 sm:$0xff] %v1587
          %2548 = vst [vmem:[%s2235] ss:$4 sm:$0xff] %v1590
          %2549 = vst [vmem:[%s2238] ss:$4 sm:$0xff] %v1593
          %2551 = vst [vmem:[%s2240] ss:$4 sm:$0xff] %v1596
          %2552 = vst [vmem:[%s2243] ss:$4 sm:$0xff] %v1599
          %2554 = vst [vmem:[%s2245] ss:$4 sm:$0xff] %v1602
          %2555 = vst [vmem:[%s2248] ss:$4 sm:$0xff] %v1605
          %v2556 = vld.sshfl [vmem:[#allocation1] sm:$0xff pattern:$0x73625140]
          %v2557 = vld.sshfl [vmem:[#allocation1 + $0x20] sm:$0xff pattern:$0x73625140]
          %2559 = vst [vmem:[#allocation1] ss:$4 sm:$0xff] %v1608
          %2560 = vst [vmem:[%s2233] ss:$4 sm:$0xff] %v1611
          %2562 = vst [vmem:[%s2235] ss:$4 sm:$0xff] %v1614
          %2563 = vst [vmem:[%s2238] ss:$4 sm:$0xff] %v1617
          %2565 = vst [vmem:[%s2240] ss:$4 sm:$0xff] %v1620
          %2566 = vst [vmem:[%s2243] ss:$4 sm:$0xff] %v1623
          %2568 = vst [vmem:[%s2245] ss:$4 sm:$0xff] %v1626
          %2569 = vst [vmem:[%s2248] ss:$4 sm:$0xff] %v1629
          %v2570 = vld.sshfl [vmem:[#allocation1] sm:$0xff pattern:$0x73625140]
          %v2571 = vld.sshfl [vmem:[#allocation1 + $0x20] sm:$0xff pattern:$0x73625140]
          %2573 = vst [vmem:[#allocation1] ss:$4 sm:$0xff] %v1632
          %2574 = vst [vmem:[%s2233] ss:$4 sm:$0xff] %v1635
          %2576 = vst [vmem:[%s2235] ss:$4 sm:$0xff] %v1638
          %2577 = vst [vmem:[%s2238] ss:$4 sm:$0xff] %v1641
          %2578 = vst [vmem:[%s2240] ss:$4 sm:$0xff] %v1644
          %2580 = vst [vmem:[%s2243] ss:$4 sm:$0xff] %v1647
          %2581 = vst [vmem:[%s2245] ss:$4 sm:$0xff] %v1650
          %2583 = vst [vmem:[%s2248] ss:$4 sm:$0xff] %v1653
          %v2584 = vld.sshfl [vmem:[#allocation1] sm:$0xff pattern:$0x73625140]
          %v2585 = vld.sshfl [vmem:[#allocation1 + $0x20] sm:$0xff pattern:$0x73625140]
          %2586 = vst [vmem:[#allocation1] ss:$4 sm:$0xff] %v1656
          %2588 = vst [vmem:[%s2233] ss:$4 sm:$0xff] %v1659
          %2589 = vst [vmem:[%s2235] ss:$4 sm:$0xff] %v1662
          %2591 = vst [vmem:[%s2238] ss:$4 sm:$0xff] %v1665
          %2592 = vst [vmem:[%s2240] ss:$4 sm:$0xff] %v1668
          %2594 = vst [vmem:[%s2243] ss:$4 sm:$0xff] %v1671
          %2595 = vst [vmem:[%s2245] ss:$4 sm:$0xff] %v1674
          %2597 = vst [vmem:[%s2248] ss:$4 sm:$0xff] %v1677
          %v2598 = vld.sshfl [vmem:[#allocation1] sm:$0xff pattern:$0x73625140]
          %v2599 = vld.sshfl [vmem:[#allocation1 + $0x20] sm:$0xff pattern:$0x73625140]
          %2600 = vst [vmem:[#allocation1] ss:$4 sm:$0xff] %v1680
          %2602 = vst [vmem:[%s2233] ss:$4 sm:$0xff] %v1683
          %2603 = vst [vmem:[%s2235] ss:$4 sm:$0xff] %v1686
          %2605 = vst [vmem:[%s2238] ss:$4 sm:$0xff] %v1689
          %2606 = vst [vmem:[%s2240] ss:$4 sm:$0xff] %v1692
          %2608 = vst [vmem:[%s2243] ss:$4 sm:$0xff] %v1695
          %2609 = vst [vmem:[%s2245] ss:$4 sm:$0xff] %v1698
          %2611 = vst [vmem:[%s2248] ss:$4 sm:$0xff] %v1701
          %v2612 = vld.sshfl [vmem:[#allocation1] sm:$0xff pattern:$0x73625140]
          %v2613 = vld.sshfl [vmem:[#allocation1 + $0x20] sm:$0xff pattern:$0x73625140]
          %2614 = vst [vmem:[#allocation1] ss:$4 sm:$0xff] %v1704
          %2616 = vst [vmem:[%s2233] ss:$4 sm:$0xff] %v1707
          %2617 = vst [vmem:[%s2235] ss:$4 sm:$0xff] %v1710
          %2619 = vst [vmem:[%s2238] ss:$4 sm:$0xff] %v1713
          %2620 = vst [vmem:[%s2240] ss:$4 sm:$0xff] %v1716
          %2622 = vst [vmem:[%s2243] ss:$4 sm:$0xff] %v1719
          %2623 = vst [vmem:[%s2245] ss:$4 sm:$0xff] %v1722
          %2625 = vst [vmem:[%s2248] ss:$4 sm:$0xff] %v1725
          %v2626 = vld.sshfl [vmem:[#allocation1] sm:$0xff pattern:$0x73625140]
          %v2627 = vld.sshfl [vmem:[#allocation1 + $0x20] sm:$0xff pattern:$0x73625140]
          %2628 = vst [vmem:[#allocation1] ss:$4 sm:$0xff] %v1728
          %2630 = vst [vmem:[%s2233] ss:$4 sm:$0xff] %v1731
          %2631 = vst [vmem:[%s2235] ss:$4 sm:$0xff] %v1734
          %2633 = vst [vmem:[%s2238] ss:$4 sm:$0xff] %v1737
          %2634 = vst [vmem:[%s2240] ss:$4 sm:$0xff] %v1740
          %2636 = vst [vmem:[%s2243] ss:$4 sm:$0xff] %v1743
          %2637 = vst [vmem:[%s2245] ss:$4 sm:$0xff] %v1746
          %2639 = vst [vmem:[%s2248] ss:$4 sm:$0xff] %v1749
          %v2640 = vld.sshfl [vmem:[#allocation1] sm:$0xff pattern:$0x73625140]
          %v2641 = vld.sshfl [vmem:[#allocation1 + $0x20] sm:$0xff pattern:$0x73625140]
          %2642 = vst [vmem:[#allocation1] ss:$4 sm:$0xff] %v1752
          %2644 = vst [vmem:[%s2233] ss:$4 sm:$0xff] %v1755
          %2645 = vst [vmem:[%s2235] ss:$4 sm:$0xff] %v1758
          %2647 = vst [vmem:[%s2238] ss:$4 sm:$0xff] %v1761
          %2648 = vst [vmem:[%s2240] ss:$4 sm:$0xff] %v1764
          %2650 = vst [vmem:[%s2243] ss:$4 sm:$0xff] %v1767
          %2651 = vst [vmem:[%s2245] ss:$4 sm:$0xff] %v1770
          %2653 = vst [vmem:[%s2248] ss:$4 sm:$0xff] %v1773
          %v2654 = vld.sshfl [vmem:[#allocation1] sm:$0xff pattern:$0x73625140]
          %v2655 = vld.sshfl [vmem:[#allocation1 + $0x20] sm:$0xff pattern:$0x73625140]
          %2656 = vst [vmem:[#allocation1] ss:$4 sm:$0xff] %v1776
          %2658 = vst [vmem:[%s2233] ss:$4 sm:$0xff] %v1779
          %2659 = vst [vmem:[%s2235] ss:$4 sm:$0xff] %v1782
          %2661 = vst [vmem:[%s2238] ss:$4 sm:$0xff] %v1785
          %2662 = vst [vmem:[%s2240] ss:$4 sm:$0xff] %v1788
          %2663 = vst [vmem:[%s2243] ss:$4 sm:$0xff] %v1791
          %2665 = vst [vmem:[%s2245] ss:$4 sm:$0xff] %v1794
          %2666 = vst [vmem:[%s2248] ss:$4 sm:$0xff] %v1797
          %v2667 = vld.sshfl [vmem:[#allocation1] sm:$0xff pattern:$0x73625140]
          %v2668 = vld.sshfl [vmem:[#allocation1 + $0x20] sm:$0xff pattern:$0x73625140]
          %2670 = vst [vmem:[#allocation1] ss:$4 sm:$0xff] %v1800
          %2671 = vst [vmem:[%s2233] ss:$4 sm:$0xff] %v1803
          %2673 = vst [vmem:[%s2235] ss:$4 sm:$0xff] %v1806
          %2674 = vst [vmem:[%s2238] ss:$4 sm:$0xff] %v1809
          %2676 = vst [vmem:[%s2240] ss:$4 sm:$0xff] %v1812
          %2677 = vst [vmem:[%s2243] ss:$4 sm:$0xff] %v1815
          %2679 = vst [vmem:[%s2245] ss:$4 sm:$0xff] %v1818
          %2680 = vst [vmem:[%s2248] ss:$4 sm:$0xff] %v1821
          %v2681 = vld.sshfl [vmem:[#allocation1] sm:$0xff pattern:$0x73625140]
          %v2682 = vld.sshfl [vmem:[#allocation1 + $0x20] sm:$0xff pattern:$0x73625140]
          %2684 = vst [vmem:[#allocation1] ss:$4 sm:$0xff] %v1824
          %2685 = vst [vmem:[%s2233] ss:$4 sm:$0xff] %v1827
          %2687 = vst [vmem:[%s2235] ss:$4 sm:$0xff] %v1830
          %2688 = vst [vmem:[%s2238] ss:$4 sm:$0xff] %v1833
          %2690 = vst [vmem:[%s2240] ss:$4 sm:$0xff] %v1836
          %2691 = vst [vmem:[%s2243] ss:$4 sm:$0xff] %v1839
          %2693 = vst [vmem:[%s2245] ss:$4 sm:$0xff] %v1842
          %2694 = vst [vmem:[%s2248] ss:$4 sm:$0xff] %v1845
          %v2695 = vld.sshfl [vmem:[#allocation1] sm:$0xff pattern:$0x73625140]
          %v2696 = vld.sshfl [vmem:[#allocation1 + $0x20] sm:$0xff pattern:$0x73625140]
          %2698 = vst [vmem:[#allocation1] ss:$4 sm:$0xff] %v1848
          %2699 = vst [vmem:[%s2233] ss:$4 sm:$0xff] %v1851
          %2701 = vst [vmem:[%s2235] ss:$4 sm:$0xff] %v1854
          %2702 = vst [vmem:[%s2238] ss:$4 sm:$0xff] %v1857
          %2704 = vst [vmem:[%s2240] ss:$4 sm:$0xff] %v1860
          %2705 = vst [vmem:[%s2243] ss:$4 sm:$0xff] %v1863
          %2707 = vst [vmem:[%s2245] ss:$4 sm:$0xff] %v1866
          %2708 = vst [vmem:[%s2248] ss:$4 sm:$0xff] %v1869
          %v2709 = vld.sshfl [vmem:[#allocation1] sm:$0xff pattern:$0x73625140]
          %v2710 = vld.sshfl [vmem:[#allocation1 + $0x20] sm:$0xff pattern:$0x73625140]
          %2712 = vst [vmem:[#allocation1] ss:$4 sm:$0xff] %v1872
          %2713 = vst [vmem:[%s2233] ss:$4 sm:$0xff] %v1875
          %2715 = vst [vmem:[%s2235] ss:$4 sm:$0xff] %v1878
          %2716 = vst [vmem:[%s2238] ss:$4 sm:$0xff] %v1881
          %2718 = vst [vmem:[%s2240] ss:$4 sm:$0xff] %v1884
          %2719 = vst [vmem:[%s2243] ss:$4 sm:$0xff] %v1887
          %2721 = vst [vmem:[%s2245] ss:$4 sm:$0xff] %v1890
          %2722 = vst [vmem:[%s2248] ss:$4 sm:$0xff] %v1893
          %v2723 = vld.sshfl [vmem:[#allocation1] sm:$0xff pattern:$0x73625140]
          %v2724 = vld.sshfl [vmem:[#allocation1 + $0x20] sm:$0xff pattern:$0x73625140]
          %2726 = vst [vmem:[#allocation1] ss:$4 sm:$0xff] %v1896
          %2727 = vst [vmem:[%s2233] ss:$4 sm:$0xff] %v1899
          %2729 = vst [vmem:[%s2235] ss:$4 sm:$0xff] %v1902
          %2730 = vst [vmem:[%s2238] ss:$4 sm:$0xff] %v1905
          %2732 = vst [vmem:[%s2240] ss:$4 sm:$0xff] %v1908
          %2733 = vst [vmem:[%s2243] ss:$4 sm:$0xff] %v1911
          %2735 = vst [vmem:[%s2245] ss:$4 sm:$0xff] %v1914
          %2736 = vst [vmem:[%s2248] ss:$4 sm:$0xff] %v1917
          %v2737 = vld.sshfl [vmem:[#allocation1] sm:$0xff pattern:$0x73625140]
          %v2738 = vld.sshfl [vmem:[#allocation1 + $0x20] sm:$0xff pattern:$0x73625140]
          %2740 = vst [vmem:[#allocation1] ss:$4 sm:$0xff] %v1920
          %2741 = vst [vmem:[%s2233] ss:$4 sm:$0xff] %v1923
          %2743 = vst [vmem:[%s2235] ss:$4 sm:$0xff] %v1926
          %2744 = vst [vmem:[%s2238] ss:$4 sm:$0xff] %v1929
          %2746 = vst [vmem:[%s2240] ss:$4 sm:$0xff] %v1932
          %2747 = vst [vmem:[%s2243] ss:$4 sm:$0xff] %v1935
          %2748 = vst [vmem:[%s2245] ss:$4 sm:$0xff] %v1938
          %2750 = vst [vmem:[%s2248] ss:$4 sm:$0xff] %v1941
          %v2751 = vld.sshfl [vmem:[#allocation1] sm:$0xff pattern:$0x73625140]
          %v2752 = vld.sshfl [vmem:[#allocation1 + $0x20] sm:$0xff pattern:$0x73625140]
          %2753 = vst [vmem:[#allocation1] ss:$4 sm:$0xff] %v1944
          %2755 = vst [vmem:[%s2233] ss:$4 sm:$0xff] %v1947
          %2756 = vst [vmem:[%s2235] ss:$4 sm:$0xff] %v1950
          %2758 = vst [vmem:[%s2238] ss:$4 sm:$0xff] %v1953
          %2759 = vst [vmem:[%s2240] ss:$4 sm:$0xff] %v1956
          %2761 = vst [vmem:[%s2243] ss:$4 sm:$0xff] %v1959
          %2762 = vst [vmem:[%s2245] ss:$4 sm:$0xff] %v1962
          %2764 = vst [vmem:[%s2248] ss:$4 sm:$0xff] %v1965
          %v2765 = vld.sshfl [vmem:[#allocation1] sm:$0xff pattern:$0x73625140]
          %v2766 = vld.sshfl [vmem:[#allocation1 + $0x20] sm:$0xff pattern:$0x73625140]
          %2767 = vst [vmem:[#allocation1] ss:$4 sm:$0xff] %v1968
          %2769 = vst [vmem:[%s2233] ss:$4 sm:$0xff] %v1971
          %2770 = vst [vmem:[%s2235] ss:$4 sm:$0xff] %v1974
          %2772 = vst [vmem:[%s2238] ss:$4 sm:$0xff] %v1977
          %2773 = vst [vmem:[%s2240] ss:$4 sm:$0xff] %v1980
          %2775 = vst [vmem:[%s2243] ss:$4 sm:$0xff] %v1983
          %2776 = vst [vmem:[%s2245] ss:$4 sm:$0xff] %v1986
          %2778 = vst [vmem:[%s2248] ss:$4 sm:$0xff] %v1989
          %v2779 = vld.sshfl [vmem:[#allocation1] sm:$0xff pattern:$0x73625140]
          %v2780 = vld.sshfl [vmem:[#allocation1 + $0x20] sm:$0xff pattern:$0x73625140]
          %2781 = vst [vmem:[#allocation1] ss:$4 sm:$0xff] %v1992
          %2783 = vst [vmem:[%s2233] ss:$4 sm:$0xff] %v1995
          %2784 = vst [vmem:[%s2235] ss:$4 sm:$0xff] %v1998
          %2786 = vst [vmem:[%s2238] ss:$4 sm:$0xff] %v2001
          %2787 = vst [vmem:[%s2240] ss:$4 sm:$0xff] %v2004
          %2789 = vst [vmem:[%s2243] ss:$4 sm:$0xff] %v2007
          %2790 = vst [vmem:[%s2245] ss:$4 sm:$0xff] %v2010
          %2792 = vst [vmem:[%s2248] ss:$4 sm:$0xff] %v2013
          %v2793 = vld.sshfl [vmem:[#allocation1] sm:$0xff pattern:$0x73625140]
          %v2794 = vld.sshfl [vmem:[#allocation1 + $0x20] sm:$0xff pattern:$0x73625140]
          %2795 = vst [vmem:[#allocation1] ss:$4 sm:$0xff] %v2016
          %2797 = vst [vmem:[%s2233] ss:$4 sm:$0xff] %v2019
          %2798 = vst [vmem:[%s2235] ss:$4 sm:$0xff] %v2022
          %2800 = vst [vmem:[%s2238] ss:$4 sm:$0xff] %v2025
          %2801 = vst [vmem:[%s2240] ss:$4 sm:$0xff] %v2028
          %2803 = vst [vmem:[%s2243] ss:$4 sm:$0xff] %v2031
          %2804 = vst [vmem:[%s2245] ss:$4 sm:$0xff] %v2034
          %2806 = vst [vmem:[%s2248] ss:$4 sm:$0xff] %v2037
          %v2807 = vld.sshfl [vmem:[#allocation1] sm:$0xff pattern:$0x73625140]
          %v2808 = vld.sshfl [vmem:[#allocation1 + $0x20] sm:$0xff pattern:$0x73625140]
          %2809 = vst [vmem:[#allocation1] ss:$4 sm:$0xff] %v2040
          %2811 = vst [vmem:[%s2233] ss:$4 sm:$0xff] %v2043
          %2812 = vst [vmem:[%s2235] ss:$4 sm:$0xff] %v2046
          %2814 = vst [vmem:[%s2238] ss:$4 sm:$0xff] %v2049
          %2815 = vst [vmem:[%s2240] ss:$4 sm:$0xff] %v2052
          %2817 = vst [vmem:[%s2243] ss:$4 sm:$0xff] %v2055
          %2818 = vst [vmem:[%s2245] ss:$4 sm:$0xff] %v2058
          %2820 = vst [vmem:[%s2248] ss:$4 sm:$0xff] %v2061
          %v2821 = vld.sshfl [vmem:[#allocation1] sm:$0xff pattern:$0x73625140]
          %v2822 = vld.sshfl [vmem:[#allocation1 + $0x20] sm:$0xff pattern:$0x73625140]
          %2823 = vst [vmem:[#allocation1] ss:$4 sm:$0xff] %v2064
          %2825 = vst [vmem:[%s2233] ss:$4 sm:$0xff] %v2067
          %2826 = vst [vmem:[%s2235] ss:$4 sm:$0xff] %v2070
          %2828 = vst [vmem:[%s2238] ss:$4 sm:$0xff] %v2073
          %2829 = vst [vmem:[%s2240] ss:$4 sm:$0xff] %v2076
          %2831 = vst [vmem:[%s2243] ss:$4 sm:$0xff] %v2079
          %2832 = vst [vmem:[%s2245] ss:$4 sm:$0xff] %v2082
          %2833 = vst [vmem:[%s2248] ss:$4 sm:$0xff] %v2085
          %v2834 = vld.sshfl [vmem:[#allocation1] sm:$0xff pattern:$0x73625140]
          %v2835 = vld.sshfl [vmem:[#allocation1 + $0x20] sm:$0xff pattern:$0x73625140]
          %2837 = vst [vmem:[#allocation1] ss:$4 sm:$0xff] %v2088
          %2838 = vst [vmem:[%s2233] ss:$4 sm:$0xff] %v2091
          %2840 = vst [vmem:[%s2235] ss:$4 sm:$0xff] %v2094
          %2841 = vst [vmem:[%s2238] ss:$4 sm:$0xff] %v2097
          %2843 = vst [vmem:[%s2240] ss:$4 sm:$0xff] %v2100
          %2844 = vst [vmem:[%s2243] ss:$4 sm:$0xff] %v2103
          %2846 = vst [vmem:[%s2245] ss:$4 sm:$0xff] %v2106
          %2847 = vst [vmem:[%s2248] ss:$4 sm:$0xff] %v2109
          %v2848 = vld.sshfl [vmem:[#allocation1] sm:$0xff pattern:$0x73625140]
          %v2849 = vld.sshfl [vmem:[#allocation1 + $0x20] sm:$0xff pattern:$0x73625140]
          %2851 = vst [vmem:[#allocation1] ss:$4 sm:$0xff] %v2112
          %2852 = vst [vmem:[%s2233] ss:$4 sm:$0xff] %v2115
          %2854 = vst [vmem:[%s2235] ss:$4 sm:$0xff] %v2118
          %2855 = vst [vmem:[%s2238] ss:$4 sm:$0xff] %v2121
          %2857 = vst [vmem:[%s2240] ss:$4 sm:$0xff] %v2124
          %2858 = vst [vmem:[%s2243] ss:$4 sm:$0xff] %v2127
          %2860 = vst [vmem:[%s2245] ss:$4 sm:$0xff] %v2130
          %2861 = vst [vmem:[%s2248] ss:$4 sm:$0xff] %v2133
          %v2862 = vld.sshfl [vmem:[#allocation1] sm:$0xff pattern:$0x73625140]
          %v2863 = vld.sshfl [vmem:[#allocation1 + $0x20] sm:$0xff pattern:$0x73625140]
          %2865 = vst [vmem:[#allocation1] ss:$4 sm:$0xff] %v2136
          %2866 = vst [vmem:[%s2233] ss:$4 sm:$0xff] %v2139
          %2868 = vst [vmem:[%s2235] ss:$4 sm:$0xff] %v2142
          %2869 = vst [vmem:[%s2238] ss:$4 sm:$0xff] %v2145
          %2871 = vst [vmem:[%s2240] ss:$4 sm:$0xff] %v2148
          %2872 = vst [vmem:[%s2243] ss:$4 sm:$0xff] %v2151
          %2874 = vst [vmem:[%s2245] ss:$4 sm:$0xff] %v2154
          %2875 = vst [vmem:[%s2248] ss:$4 sm:$0xff] %v2157
          %v2876 = vld.sshfl [vmem:[#allocation1] sm:$0xff pattern:$0x73625140]
          %v2877 = vld.sshfl [vmem:[#allocation1 + $0x20] sm:$0xff pattern:$0x73625140]
          %2879 = vst [vmem:[#allocation1] ss:$4 sm:$0xff] %v2160
          %2880 = vst [vmem:[%s2233] ss:$4 sm:$0xff] %v2163
          %2882 = vst [vmem:[%s2235] ss:$4 sm:$0xff] %v2166
          %2883 = vst [vmem:[%s2238] ss:$4 sm:$0xff] %v2169
          %2885 = vst [vmem:[%s2240] ss:$4 sm:$0xff] %v2172
          %2886 = vst [vmem:[%s2243] ss:$4 sm:$0xff] %v2175
          %2888 = vst [vmem:[%s2245] ss:$4 sm:$0xff] %v2178
          %2889 = vst [vmem:[%s2248] ss:$4 sm:$0xff] %v2181
          %v2890 = vld.sshfl [vmem:[#allocation1] sm:$0xff pattern:$0x73625140]
          %v2891 = vld.sshfl [vmem:[#allocation1 + $0x20] sm:$0xff pattern:$0x73625140]
          %2893 = vst [vmem:[#allocation1] ss:$4 sm:$0xff] %v2184
          %2894 = vst [vmem:[%s2233] ss:$4 sm:$0xff] %v2187
          %2896 = vst [vmem:[%s2235] ss:$4 sm:$0xff] %v2190
          %2897 = vst [vmem:[%s2238] ss:$4 sm:$0xff] %v2193
          %2899 = vst [vmem:[%s2240] ss:$4 sm:$0xff] %v2196
          %2900 = vst [vmem:[%s2243] ss:$4 sm:$0xff] %v2199
          %2902 = vst [vmem:[%s2245] ss:$4 sm:$0xff] %v2202
          %2903 = vst [vmem:[%s2248] ss:$4 sm:$0xff] %v2205
          %v2904 = vld.sshfl [vmem:[#allocation1] sm:$0xff pattern:$0x73625140]
          %v2905 = vld.sshfl [vmem:[#allocation1 + $0x20] sm:$0xff pattern:$0x73625140]
          %2907 = vst [vmem:[#allocation1] ss:$4 sm:$0xff] %v2208
          %2908 = vst [vmem:[%s2233] ss:$4 sm:$0xff] %v2211
          %2910 = vst [vmem:[%s2235] ss:$4 sm:$0xff] %v2214
          %2911 = vst [vmem:[%s2238] ss:$4 sm:$0xff] %v2217
          %2913 = vst [vmem:[%s2240] ss:$4 sm:$0xff] %v2220
          %2914 = vst [vmem:[%s2243] ss:$4 sm:$0xff] %v2223
          %2916 = vst [vmem:[%s2245] ss:$4 sm:$0xff] %v2226
          %2917 = vst [vmem:[%s2248] ss:$4 sm:$0xff] %v2229
          %v2918 = vld.sshfl [vmem:[#allocation1] sm:$0xff pattern:$0x73625140]
          %v2919 = vld.sshfl [vmem:[#allocation1 + $0x20] sm:$0xff pattern:$0x73625140]
          %vm2920 = vcmask 64512
          %v2921 = vsel %vm2920, %v2250, 0
          %v2923 = vsel %vm2920, %v2251, 0
          %v2925 = vsel %vm2920, %v2264, 0
          %v2927 = vsel %vm2920, %v2265, 0
          %v2929 = vsel %vm2920, %v2278, 0
          %v2931 = vsel %vm2920, %v2279, 0
          %v2933 = vsel %vm2920, %v2292, 0
          %v2935 = vsel %vm2920, %v2293, 0
          %v2937 = vsel %vm2920, %v2306, 0
          %v2939 = vsel %vm2920, %v2307, 0
          %v2941 = vsel %vm2920, %v2320, 0
          %v2943 = vsel %vm2920, %v2321, 0
          %v2945 = vsel %vm2920, %v2333, 0
          %v2947 = vsel %vm2920, %v2334, 0
          %v2949 = vsel %vm2920, %v2347, 0
          %v2951 = vsel %vm2920, %v2348, 0
          %v2953 = vsel %vm2920, %v2361, 0
          %v2955 = vsel %vm2920, %v2362, 0
          %v2957 = vsel %vm2920, %v2375, 0
          %v2959 = vsel %vm2920, %v2376, 0
          %v2961 = vsel %vm2920, %v2389, 0
          %v2963 = vsel %vm2920, %v2390, 0
          %v2965 = vsel %vm2920, %v2403, 0
          %v2967 = vsel %vm2920, %v2404, 0
          %v2969 = vsel %vm2920, %v2417, 0
          %v2971 = vsel %vm2920, %v2418, 0
          %v2973 = vsel %vm2920, %v2431, 0
          %v2975 = vsel %vm2920, %v2432, 0
          %v2977 = vsel %vm2920, %v2445, 0
          %v2979 = vsel %vm2920, %v2446, 0
          %v2981 = vsel %vm2920, %v2459, 0
          %v2983 = vsel %vm2920, %v2460, 0
          %v2985 = vsel %vm2920, %v2473, 0
          %v2987 = vsel %vm2920, %v2474, 0
          %v2989 = vsel %vm2920, %v2487, 0
          %v2991 = vsel %vm2920, %v2488, 0
          %v2993 = vsel %vm2920, %v2500, 0
          %v2995 = vsel %vm2920, %v2501, 0
          %v2997 = vsel %vm2920, %v2514, 0
          %v2999 = vsel %vm2920, %v2515, 0
          %v3001 = vsel %vm2920, %v2528, 0
          %v3003 = vsel %vm2920, %v2529, 0
          %v3005 = vsel %vm2920, %v2542, 0
          %v3007 = vsel %vm2920, %v2543, 0
          %v3009 = vsel %vm2920, %v2556, 0
          %v3011 = vsel %vm2920, %v2557, 0
          %v3013 = vsel %vm2920, %v2570, 0
          %v3015 = vsel %vm2920, %v2571, 0
          %v3017 = vsel %vm2920, %v2584, 0
          %v3019 = vsel %vm2920, %v2585, 0
          %v3021 = vsel %vm2920, %v2598, 0
          %v3023 = vsel %vm2920, %v2599, 0
          %v3025 = vsel %vm2920, %v2612, 0
          %v3027 = vsel %vm2920, %v2613, 0
          %v3029 = vsel %vm2920, %v2626, 0
          %v3031 = vsel %vm2920, %v2627, 0
          %v3033 = vsel %vm2920, %v2640, 0
          %v3035 = vsel %vm2920, %v2641, 0
          %v3037 = vsel %vm2920, %v2654, 0
          %v3039 = vsel %vm2920, %v2655, 0
          %v3041 = vsel %vm2920, %v2667, 0
          %v3043 = vsel %vm2920, %v2668, 0
          %v3045 = vsel %vm2920, %v2681, 0
          %v3047 = vsel %vm2920, %v2682, 0
          %v3049 = vsel %vm2920, %v2695, 0
          %v3051 = vsel %vm2920, %v2696, 0
          %v3053 = vsel %vm2920, %v2709, 0
          %v3055 = vsel %vm2920, %v2710, 0
          %v3057 = vsel %vm2920, %v2723, 0
          %v3059 = vsel %vm2920, %v2724, 0
          %v3061 = vsel %vm2920, %v2737, 0
          %v3063 = vsel %vm2920, %v2738, 0
          %v3065 = vsel %vm2920, %v2751, 0
          %v3067 = vsel %vm2920, %v2752, 0
          %v3069 = vsel %vm2920, %v2765, 0
          %v3071 = vsel %vm2920, %v2766, 0
          %v3073 = vsel %vm2920, %v2779, 0
          %v3075 = vsel %vm2920, %v2780, 0
          %v3077 = vsel %vm2920, %v2793, 0
          %v3079 = vsel %vm2920, %v2794, 0
          %v3081 = vsel %vm2920, %v2807, 0
          %v3083 = vsel %vm2920, %v2808, 0
          %v3085 = vsel %vm2920, %v2821, 0
          %v3087 = vsel %vm2920, %v2822, 0
          %v3089 = vsel %vm2920, %v2834, 0
          %v3091 = vsel %vm2920, %v2835, 0
          %v3093 = vsel %vm2920, %v2848, 0
          %v3095 = vsel %vm2920, %v2849, 0
          %v3097 = vsel %vm2920, %v2862, 0
          %v3099 = vsel %vm2920, %v2863, 0
          %v3101 = vsel %vm2920, %v2876, 0
          %v3103 = vsel %vm2920, %v2877, 0
          %v3105 = vsel %vm2920, %v2890, 0
          %v3107 = vsel %vm2920, %v2891, 0
          %v3109 = vsel %vm2920, %v2904, 0
          %v3111 = vsel %vm2920, %v2905, 0
          %v3113 = vsel %vm2920, %v2918, 0
          %v3115 = vsel %vm2920, %v2919, 0
          %vm3117 = vcmask 1043456
          %v3119 = vsel %vm3117, %v2230, 0
          %3121 = vmatpush.bf16.msra.mxu0 0
          %3122 = vmatpush.bf16.msra.mxu0 0
          %3123 = vmatpush.bf16.msra.mxu0 0
          %3124 = vmatpush.bf16.msra.mxu0 0
          %3125 = vmatpush.bf16.msra.mxu0 0
          %3126 = vmatpush.bf16.msra.mxu0 0
          %3127 = vmatpush.bf16.msra.mxu0 0
          %3128 = vmatpush.bf16.msra.mxu0 %v3119
          %3129 = vmatmul.bf16.gmra.mxu0 %v2921
          %v3130 = vpop.f32.mrf.mxu0
          %v3131 = vadd.f32 0.0, %v3130
          %v3132 = vpop.f32.mrf.mxu0
          %v3133 = vadd.f32 0.0, %v3132
          %3134 = vmatmul.bf16.gmra.mxu0 %v2923
          %v3135 = vpop.f32.mrf.mxu0
          %v3136 = vadd.f32 0.0, %v3135
          %v3137 = vpop.f32.mrf.mxu0
          %v3138 = vadd.f32 0.0, %v3137
          %3139 = vmatmul.bf16.gmra.mxu0 %v2925
          %v3140 = vpop.f32.mrf.mxu0
          %v3141 = vadd.f32 0.0, %v3140
          %v3142 = vpop.f32.mrf.mxu0
          %v3143 = vadd.f32 0.0, %v3142
          %3144 = vmatmul.bf16.gmra.mxu0 %v2927
          %v3145 = vpop.f32.mrf.mxu0
          %v3146 = vadd.f32 0.0, %v3145
          %v3147 = vpop.f32.mrf.mxu0
          %v3148 = vadd.f32 0.0, %v3147
          %3149 = vmatmul.bf16.gmra.mxu0 %v2929
          %v3150 = vpop.f32.mrf.mxu0
          %v3151 = vadd.f32 0.0, %v3150
          %v3152 = vpop.f32.mrf.mxu0
          %v3153 = vadd.f32 0.0, %v3152
          %3154 = vmatmul.bf16.gmra.mxu0 %v2931
          %v3155 = vpop.f32.mrf.mxu0
          %v3156 = vadd.f32 0.0, %v3155
          %v3157 = vpop.f32.mrf.mxu0
          %v3158 = vadd.f32 0.0, %v3157
          %3159 = vmatmul.bf16.gmra.mxu0 %v2933
          %v3160 = vpop.f32.mrf.mxu0
          %v3161 = vadd.f32 0.0, %v3160
          %v3162 = vpop.f32.mrf.mxu0
          %v3163 = vadd.f32 0.0, %v3162
          %3164 = vmatmul.bf16.gmra.mxu0 %v2935
          %v3165 = vpop.f32.mrf.mxu0
          %v3166 = vadd.f32 0.0, %v3165
          %v3167 = vpop.f32.mrf.mxu0
          %v3168 = vadd.f32 0.0, %v3167
          %3169 = vmatmul.bf16.gmra.mxu0 %v2937
          %v3170 = vpop.f32.mrf.mxu0
          %v3171 = vadd.f32 0.0, %v3170
          %v3172 = vpop.f32.mrf.mxu0
          %v3173 = vadd.f32 0.0, %v3172
          %3174 = vmatmul.bf16.gmra.mxu0 %v2939
          %v3175 = vpop.f32.mrf.mxu0
          %v3176 = vadd.f32 0.0, %v3175
          %v3177 = vpop.f32.mrf.mxu0
          %v3178 = vadd.f32 0.0, %v3177
          %3179 = vmatmul.bf16.gmra.mxu0 %v2941
          %v3180 = vpop.f32.mrf.mxu0
          %v3181 = vadd.f32 0.0, %v3180
          %v3182 = vpop.f32.mrf.mxu0
          %v3183 = vadd.f32 0.0, %v3182
          %3184 = vmatmul.bf16.gmra.mxu0 %v2943
          %v3185 = vpop.f32.mrf.mxu0
          %v3186 = vadd.f32 0.0, %v3185
          %v3187 = vpop.f32.mrf.mxu0
          %v3188 = vadd.f32 0.0, %v3187
          %3189 = vmatmul.bf16.gmra.mxu0 %v2945
          %v3190 = vpop.f32.mrf.mxu0
          %v3191 = vadd.f32 0.0, %v3190
          %v3192 = vpop.f32.mrf.mxu0
          %v3193 = vadd.f32 0.0, %v3192
          %3194 = vmatmul.bf16.gmra.mxu0 %v2947
          %v3195 = vpop.f32.mrf.mxu0
          %v3196 = vadd.f32 0.0, %v3195
          %v3197 = vpop.f32.mrf.mxu0
          %v3198 = vadd.f32 0.0, %v3197
          %3199 = vmatmul.bf16.gmra.mxu0 %v2949
          %v3200 = vpop.f32.mrf.mxu0
          %v3201 = vadd.f32 0.0, %v3200
          %v3202 = vpop.f32.mrf.mxu0
          %v3203 = vadd.f32 0.0, %v3202
          %3204 = vmatmul.bf16.gmra.mxu0 %v2951
          %v3205 = vpop.f32.mrf.mxu0
          %v3206 = vadd.f32 0.0, %v3205
          %v3207 = vpop.f32.mrf.mxu0
          %v3208 = vadd.f32 0.0, %v3207
          %3209 = vmatmul.bf16.gmra.mxu0 %v2953
          %v3210 = vpop.f32.mrf.mxu0
          %v3211 = vadd.f32 0.0, %v3210
          %v3212 = vpop.f32.mrf.mxu0
          %v3213 = vadd.f32 0.0, %v3212
          %3214 = vmatmul.bf16.gmra.mxu0 %v2955
          %v3215 = vpop.f32.mrf.mxu0
          %v3216 = vadd.f32 0.0, %v3215
          %v3217 = vpop.f32.mrf.mxu0
          %v3218 = vadd.f32 0.0, %v3217
          %3219 = vmatmul.bf16.gmra.mxu0 %v2957
          %v3220 = vpop.f32.mrf.mxu0
          %v3221 = vadd.f32 0.0, %v3220
          %v3222 = vpop.f32.mrf.mxu0
          %v3223 = vadd.f32 0.0, %v3222
          %3224 = vmatmul.bf16.gmra.mxu0 %v2959
          %v3225 = vpop.f32.mrf.mxu0
          %v3226 = vadd.f32 0.0, %v3225
          %v3227 = vpop.f32.mrf.mxu0
          %v3228 = vadd.f32 0.0, %v3227
          %3229 = vmatmul.bf16.gmra.mxu0 %v2961
          %v3230 = vpop.f32.mrf.mxu0
          %v3231 = vadd.f32 0.0, %v3230
          %v3232 = vpop.f32.mrf.mxu0
          %v3233 = vadd.f32 0.0, %v3232
          %3234 = vmatmul.bf16.gmra.mxu0 %v2963
          %v3235 = vpop.f32.mrf.mxu0
          %v3236 = vadd.f32 0.0, %v3235
          %v3237 = vpop.f32.mrf.mxu0
          %v3238 = vadd.f32 0.0, %v3237
          %3239 = vmatmul.bf16.gmra.mxu0 %v2965
          %v3240 = vpop.f32.mrf.mxu0
          %v3241 = vadd.f32 0.0, %v3240
          %v3242 = vpop.f32.mrf.mxu0
          %v3243 = vadd.f32 0.0, %v3242
          %3244 = vmatmul.bf16.gmra.mxu0 %v2967
          %v3245 = vpop.f32.mrf.mxu0
          %v3246 = vadd.f32 0.0, %v3245
          %v3247 = vpop.f32.mrf.mxu0
          %v3248 = vadd.f32 0.0, %v3247
          %3249 = vmatmul.bf16.gmra.mxu0 %v2969
          %v3250 = vpop.f32.mrf.mxu0
          %v3251 = vadd.f32 0.0, %v3250
          %v3252 = vpop.f32.mrf.mxu0
          %v3253 = vadd.f32 0.0, %v3252
          %3254 = vmatmul.bf16.gmra.mxu0 %v2971
          %v3255 = vpop.f32.mrf.mxu0
          %v3256 = vadd.f32 0.0, %v3255
          %v3257 = vpop.f32.mrf.mxu0
          %v3258 = vadd.f32 0.0, %v3257
          %3259 = vmatmul.bf16.gmra.mxu0 %v2973
          %v3260 = vpop.f32.mrf.mxu0
          %v3261 = vadd.f32 0.0, %v3260
          %v3262 = vpop.f32.mrf.mxu0
          %v3263 = vadd.f32 0.0, %v3262
          %3264 = vmatmul.bf16.gmra.mxu0 %v2975
          %v3265 = vpop.f32.mrf.mxu0
          %v3266 = vadd.f32 0.0, %v3265
          %v3267 = vpop.f32.mrf.mxu0
          %v3268 = vadd.f32 0.0, %v3267
          %3269 = vmatmul.bf16.gmra.mxu0 %v2977
          %v3270 = vpop.f32.mrf.mxu0
          %v3271 = vadd.f32 0.0, %v3270
          %v3272 = vpop.f32.mrf.mxu0
          %v3273 = vadd.f32 0.0, %v3272
          %3274 = vmatmul.bf16.gmra.mxu0 %v2979
          %v3275 = vpop.f32.mrf.mxu0
          %v3276 = vadd.f32 0.0, %v3275
          %v3277 = vpop.f32.mrf.mxu0
          %v3278 = vadd.f32 0.0, %v3277
          %3279 = vmatmul.bf16.gmra.mxu0 %v2981
          %v3280 = vpop.f32.mrf.mxu0
          %v3281 = vadd.f32 0.0, %v3280
          %v3282 = vpop.f32.mrf.mxu0
          %v3283 = vadd.f32 0.0, %v3282
          %3284 = vmatmul.bf16.gmra.mxu0 %v2983
          %v3285 = vpop.f32.mrf.mxu0
          %v3286 = vadd.f32 0.0, %v3285
          %v3287 = vpop.f32.mrf.mxu0
          %v3288 = vadd.f32 0.0, %v3287
          %3289 = vmatmul.bf16.gmra.mxu0 %v2985
          %v3290 = vpop.f32.mrf.mxu0
          %v3291 = vadd.f32 0.0, %v3290
          %v3292 = vpop.f32.mrf.mxu0
          %v3293 = vadd.f32 0.0, %v3292
          %3294 = vmatmul.bf16.gmra.mxu0 %v2987
          %v3295 = vpop.f32.mrf.mxu0
          %v3296 = vadd.f32 0.0, %v3295
          %v3297 = vpop.f32.mrf.mxu0
          %v3298 = vadd.f32 0.0, %v3297
          %3299 = vmatmul.bf16.gmra.mxu0 %v2989
          %v3300 = vpop.f32.mrf.mxu0
          %v3301 = vadd.f32 0.0, %v3300
          %v3302 = vpop.f32.mrf.mxu0
          %v3303 = vadd.f32 0.0, %v3302
          %3304 = vmatmul.bf16.gmra.mxu0 %v2991
          %v3305 = vpop.f32.mrf.mxu0
          %v3306 = vadd.f32 0.0, %v3305
          %v3307 = vpop.f32.mrf.mxu0
          %v3308 = vadd.f32 0.0, %v3307
          %3309 = vmatmul.bf16.gmra.mxu0 %v2993
          %v3310 = vpop.f32.mrf.mxu0
          %v3311 = vadd.f32 0.0, %v3310
          %v3312 = vpop.f32.mrf.mxu0
          %v3313 = vadd.f32 0.0, %v3312
          %3314 = vmatmul.bf16.gmra.mxu0 %v2995
          %v3315 = vpop.f32.mrf.mxu0
          %v3316 = vadd.f32 0.0, %v3315
          %v3317 = vpop.f32.mrf.mxu0
          %v3318 = vadd.f32 0.0, %v3317
          %3319 = vmatmul.bf16.gmra.mxu0 %v2997
          %v3320 = vpop.f32.mrf.mxu0
          %v3321 = vadd.f32 0.0, %v3320
          %v3322 = vpop.f32.mrf.mxu0
          %v3323 = vadd.f32 0.0, %v3322
          %3324 = vmatmul.bf16.gmra.mxu0 %v2999
          %v3325 = vpop.f32.mrf.mxu0
          %v3326 = vadd.f32 0.0, %v3325
          %v3327 = vpop.f32.mrf.mxu0
          %v3328 = vadd.f32 0.0, %v3327
          %3329 = vmatmul.bf16.gmra.mxu0 %v3001
          %v3330 = vpop.f32.mrf.mxu0
          %v3331 = vadd.f32 0.0, %v3330
          %v3332 = vpop.f32.mrf.mxu0
          %v3333 = vadd.f32 0.0, %v3332
          %3334 = vmatmul.bf16.gmra.mxu0 %v3003
          %v3335 = vpop.f32.mrf.mxu0
          %v3336 = vadd.f32 0.0, %v3335
          %v3337 = vpop.f32.mrf.mxu0
          %v3338 = vadd.f32 0.0, %v3337
          %3339 = vmatmul.bf16.gmra.mxu0 %v3005
          %v3340 = vpop.f32.mrf.mxu0
          %v3341 = vadd.f32 0.0, %v3340
          %v3342 = vpop.f32.mrf.mxu0
          %v3343 = vadd.f32 0.0, %v3342
          %3344 = vmatmul.bf16.gmra.mxu0 %v3007
          %v3345 = vpop.f32.mrf.mxu0
          %v3346 = vadd.f32 0.0, %v3345
          %v3347 = vpop.f32.mrf.mxu0
          %v3348 = vadd.f32 0.0, %v3347
          %3349 = vmatmul.bf16.gmra.mxu0 %v3009
          %v3350 = vpop.f32.mrf.mxu0
          %v3351 = vadd.f32 0.0, %v3350
          %v3352 = vpop.f32.mrf.mxu0
          %v3353 = vadd.f32 0.0, %v3352
          %3354 = vmatmul.bf16.gmra.mxu0 %v3011
          %v3355 = vpop.f32.mrf.mxu0
          %v3356 = vadd.f32 0.0, %v3355
          %v3357 = vpop.f32.mrf.mxu0
          %v3358 = vadd.f32 0.0, %v3357
          %3359 = vmatmul.bf16.gmra.mxu0 %v3013
          %v3360 = vpop.f32.mrf.mxu0
          %v3361 = vadd.f32 0.0, %v3360
          %v3362 = vpop.f32.mrf.mxu0
          %v3363 = vadd.f32 0.0, %v3362
          %3364 = vmatmul.bf16.gmra.mxu0 %v3015
          %v3365 = vpop.f32.mrf.mxu0
          %v3366 = vadd.f32 0.0, %v3365
          %v3367 = vpop.f32.mrf.mxu0
          %v3368 = vadd.f32 0.0, %v3367
          %3369 = vmatmul.bf16.gmra.mxu0 %v3017
          %v3370 = vpop.f32.mrf.mxu0
          %v3371 = vadd.f32 0.0, %v3370
          %v3372 = vpop.f32.mrf.mxu0
          %v3373 = vadd.f32 0.0, %v3372
          %3374 = vmatmul.bf16.gmra.mxu0 %v3019
          %v3375 = vpop.f32.mrf.mxu0
          %v3376 = vadd.f32 0.0, %v3375
          %v3377 = vpop.f32.mrf.mxu0
          %v3378 = vadd.f32 0.0, %v3377
          %3379 = vmatmul.bf16.gmra.mxu0 %v3021
          %v3380 = vpop.f32.mrf.mxu0
          %v3381 = vadd.f32 0.0, %v3380
          %v3382 = vpop.f32.mrf.mxu0
          %v3383 = vadd.f32 0.0, %v3382
          %3384 = vmatmul.bf16.gmra.mxu0 %v3023
          %v3385 = vpop.f32.mrf.mxu0
          %v3386 = vadd.f32 0.0, %v3385
          %v3387 = vpop.f32.mrf.mxu0
          %v3388 = vadd.f32 0.0, %v3387
          %3389 = vmatmul.bf16.gmra.mxu0 %v3025
          %v3390 = vpop.f32.mrf.mxu0
          %v3391 = vadd.f32 0.0, %v3390
          %v3392 = vpop.f32.mrf.mxu0
          %v3393 = vadd.f32 0.0, %v3392
          %3394 = vmatmul.bf16.gmra.mxu0 %v3027
          %v3395 = vpop.f32.mrf.mxu0
          %v3396 = vadd.f32 0.0, %v3395
          %v3397 = vpop.f32.mrf.mxu0
          %v3398 = vadd.f32 0.0, %v3397
          %3399 = vmatmul.bf16.gmra.mxu0 %v3029
          %v3400 = vpop.f32.mrf.mxu0
          %v3401 = vadd.f32 0.0, %v3400
          %v3402 = vpop.f32.mrf.mxu0
          %v3403 = vadd.f32 0.0, %v3402
          %3404 = vmatmul.bf16.gmra.mxu0 %v3031
          %v3405 = vpop.f32.mrf.mxu0
          %v3406 = vadd.f32 0.0, %v3405
          %v3407 = vpop.f32.mrf.mxu0
          %v3408 = vadd.f32 0.0, %v3407
          %3409 = vmatmul.bf16.gmra.mxu0 %v3033
          %v3410 = vpop.f32.mrf.mxu0
          %v3411 = vadd.f32 0.0, %v3410
          %v3412 = vpop.f32.mrf.mxu0
          %v3413 = vadd.f32 0.0, %v3412
          %3414 = vmatmul.bf16.gmra.mxu0 %v3035
          %v3415 = vpop.f32.mrf.mxu0
          %v3416 = vadd.f32 0.0, %v3415
          %v3417 = vpop.f32.mrf.mxu0
          %v3418 = vadd.f32 0.0, %v3417
          %3419 = vmatmul.bf16.gmra.mxu0 %v3037
          %v3420 = vpop.f32.mrf.mxu0
          %v3421 = vadd.f32 0.0, %v3420
          %v3422 = vpop.f32.mrf.mxu0
          %v3423 = vadd.f32 0.0, %v3422
          %3424 = vmatmul.bf16.gmra.mxu0 %v3039
          %v3425 = vpop.f32.mrf.mxu0
          %v3426 = vadd.f32 0.0, %v3425
          %v3427 = vpop.f32.mrf.mxu0
          %v3428 = vadd.f32 0.0, %v3427
          %3429 = vmatmul.bf16.gmra.mxu0 %v3041
          %v3430 = vpop.f32.mrf.mxu0
          %v3431 = vadd.f32 0.0, %v3430
          %v3432 = vpop.f32.mrf.mxu0
          %v3433 = vadd.f32 0.0, %v3432
          %3434 = vmatmul.bf16.gmra.mxu0 %v3043
          %v3435 = vpop.f32.mrf.mxu0
          %v3436 = vadd.f32 0.0, %v3435
          %v3437 = vpop.f32.mrf.mxu0
          %v3438 = vadd.f32 0.0, %v3437
          %3439 = vmatmul.bf16.gmra.mxu0 %v3045
          %v3440 = vpop.f32.mrf.mxu0
          %v3441 = vadd.f32 0.0, %v3440
          %v3442 = vpop.f32.mrf.mxu0
          %v3443 = vadd.f32 0.0, %v3442
          %3444 = vmatmul.bf16.gmra.mxu0 %v3047
          %v3445 = vpop.f32.mrf.mxu0
          %v3446 = vadd.f32 0.0, %v3445
          %v3447 = vpop.f32.mrf.mxu0
          %v3448 = vadd.f32 0.0, %v3447
          %3449 = vmatmul.bf16.gmra.mxu0 %v3049
          %v3450 = vpop.f32.mrf.mxu0
          %v3451 = vadd.f32 0.0, %v3450
          %v3452 = vpop.f32.mrf.mxu0
          %v3453 = vadd.f32 0.0, %v3452
          %3454 = vmatmul.bf16.gmra.mxu0 %v3051
          %v3455 = vpop.f32.mrf.mxu0
          %v3456 = vadd.f32 0.0, %v3455
          %v3457 = vpop.f32.mrf.mxu0
          %v3458 = vadd.f32 0.0, %v3457
          %3459 = vmatmul.bf16.gmra.mxu0 %v3053
          %v3460 = vpop.f32.mrf.mxu0
          %v3461 = vadd.f32 0.0, %v3460
          %v3462 = vpop.f32.mrf.mxu0
          %v3463 = vadd.f32 0.0, %v3462
          %3464 = vmatmul.bf16.gmra.mxu0 %v3055
          %v3465 = vpop.f32.mrf.mxu0
          %v3466 = vadd.f32 0.0, %v3465
          %v3467 = vpop.f32.mrf.mxu0
          %v3468 = vadd.f32 0.0, %v3467
          %3469 = vmatmul.bf16.gmra.mxu0 %v3057
          %v3470 = vpop.f32.mrf.mxu0
          %v3471 = vadd.f32 0.0, %v3470
          %v3472 = vpop.f32.mrf.mxu0
          %v3473 = vadd.f32 0.0, %v3472
          %3474 = vmatmul.bf16.gmra.mxu0 %v3059
          %v3475 = vpop.f32.mrf.mxu0
          %v3476 = vadd.f32 0.0, %v3475
          %v3477 = vpop.f32.mrf.mxu0
          %v3478 = vadd.f32 0.0, %v3477
          %3479 = vmatmul.bf16.gmra.mxu0 %v3061
          %v3480 = vpop.f32.mrf.mxu0
          %v3481 = vadd.f32 0.0, %v3480
          %v3482 = vpop.f32.mrf.mxu0
          %v3483 = vadd.f32 0.0, %v3482
          %3484 = vmatmul.bf16.gmra.mxu0 %v3063
          %v3485 = vpop.f32.mrf.mxu0
          %v3486 = vadd.f32 0.0, %v3485
          %v3487 = vpop.f32.mrf.mxu0
          %v3488 = vadd.f32 0.0, %v3487
          %3489 = vmatmul.bf16.gmra.mxu0 %v3065
          %v3490 = vpop.f32.mrf.mxu0
          %v3491 = vadd.f32 0.0, %v3490
          %v3492 = vpop.f32.mrf.mxu0
          %v3493 = vadd.f32 0.0, %v3492
          %3494 = vmatmul.bf16.gmra.mxu0 %v3067
          %v3495 = vpop.f32.mrf.mxu0
          %v3496 = vadd.f32 0.0, %v3495
          %v3497 = vpop.f32.mrf.mxu0
          %v3498 = vadd.f32 0.0, %v3497
          %3499 = vmatmul.bf16.gmra.mxu0 %v3069
          %v3500 = vpop.f32.mrf.mxu0
          %v3501 = vadd.f32 0.0, %v3500
          %v3502 = vpop.f32.mrf.mxu0
          %v3503 = vadd.f32 0.0, %v3502
          %3504 = vmatmul.bf16.gmra.mxu0 %v3071
          %v3505 = vpop.f32.mrf.mxu0
          %v3506 = vadd.f32 0.0, %v3505
          %v3507 = vpop.f32.mrf.mxu0
          %v3508 = vadd.f32 0.0, %v3507
          %3509 = vmatmul.bf16.gmra.mxu0 %v3073
          %v3510 = vpop.f32.mrf.mxu0
          %v3511 = vadd.f32 0.0, %v3510
          %v3512 = vpop.f32.mrf.mxu0
          %v3513 = vadd.f32 0.0, %v3512
          %3514 = vmatmul.bf16.gmra.mxu0 %v3075
          %v3515 = vpop.f32.mrf.mxu0
          %v3516 = vadd.f32 0.0, %v3515
          %v3517 = vpop.f32.mrf.mxu0
          %v3518 = vadd.f32 0.0, %v3517
          %3519 = vmatmul.bf16.gmra.mxu0 %v3077
          %v3520 = vpop.f32.mrf.mxu0
          %v3521 = vadd.f32 0.0, %v3520
          %v3522 = vpop.f32.mrf.mxu0
          %v3523 = vadd.f32 0.0, %v3522
          %3524 = vmatmul.bf16.gmra.mxu0 %v3079
          %v3525 = vpop.f32.mrf.mxu0
          %v3526 = vadd.f32 0.0, %v3525
          %v3527 = vpop.f32.mrf.mxu0
          %v3528 = vadd.f32 0.0, %v3527
          %3529 = vmatmul.bf16.gmra.mxu0 %v3081
          %v3530 = vpop.f32.mrf.mxu0
          %v3531 = vadd.f32 0.0, %v3530
          %v3532 = vpop.f32.mrf.mxu0
          %v3533 = vadd.f32 0.0, %v3532
          %3534 = vmatmul.bf16.gmra.mxu0 %v3083
          %v3535 = vpop.f32.mrf.mxu0
          %v3536 = vadd.f32 0.0, %v3535
          %v3537 = vpop.f32.mrf.mxu0
          %v3538 = vadd.f32 0.0, %v3537
          %3539 = vmatmul.bf16.gmra.mxu0 %v3085
          %v3540 = vpop.f32.mrf.mxu0
          %v3541 = vadd.f32 0.0, %v3540
          %v3542 = vpop.f32.mrf.mxu0
          %v3543 = vadd.f32 0.0, %v3542
          %3544 = vmatmul.bf16.gmra.mxu0 %v3087
          %v3545 = vpop.f32.mrf.mxu0
          %v3546 = vadd.f32 0.0, %v3545
          %v3547 = vpop.f32.mrf.mxu0
          %v3548 = vadd.f32 0.0, %v3547
          %3549 = vmatmul.bf16.gmra.mxu0 %v3089
          %v3550 = vpop.f32.mrf.mxu0
          %v3551 = vadd.f32 0.0, %v3550
          %v3552 = vpop.f32.mrf.mxu0
          %v3553 = vadd.f32 0.0, %v3552
          %3554 = vmatmul.bf16.gmra.mxu0 %v3091
          %v3555 = vpop.f32.mrf.mxu0
          %v3556 = vadd.f32 0.0, %v3555
          %v3557 = vpop.f32.mrf.mxu0
          %v3558 = vadd.f32 0.0, %v3557
          %3559 = vmatmul.bf16.gmra.mxu0 %v3093
          %v3560 = vpop.f32.mrf.mxu0
          %v3561 = vadd.f32 0.0, %v3560
          %v3562 = vpop.f32.mrf.mxu0
          %v3563 = vadd.f32 0.0, %v3562
          %3564 = vmatmul.bf16.gmra.mxu0 %v3095
          %v3565 = vpop.f32.mrf.mxu0
          %v3566 = vadd.f32 0.0, %v3565
          %v3567 = vpop.f32.mrf.mxu0
          %v3568 = vadd.f32 0.0, %v3567
          %3569 = vmatmul.bf16.gmra.mxu0 %v3097
          %v3570 = vpop.f32.mrf.mxu0
          %v3571 = vadd.f32 0.0, %v3570
          %v3572 = vpop.f32.mrf.mxu0
          %v3573 = vadd.f32 0.0, %v3572
          %3574 = vmatmul.bf16.gmra.mxu0 %v3099
          %v3575 = vpop.f32.mrf.mxu0
          %v3576 = vadd.f32 0.0, %v3575
          %v3577 = vpop.f32.mrf.mxu0
          %v3578 = vadd.f32 0.0, %v3577
          %3579 = vmatmul.bf16.gmra.mxu0 %v3101
          %v3580 = vpop.f32.mrf.mxu0
          %v3581 = vadd.f32 0.0, %v3580
          %v3582 = vpop.f32.mrf.mxu0
          %v3583 = vadd.f32 0.0, %v3582
          %3584 = vmatmul.bf16.gmra.mxu0 %v3103
          %v3585 = vpop.f32.mrf.mxu0
          %v3586 = vadd.f32 0.0, %v3585
          %v3587 = vpop.f32.mrf.mxu0
          %v3588 = vadd.f32 0.0, %v3587
          %3589 = vmatmul.bf16.gmra.mxu0 %v3105
          %v3590 = vpop.f32.mrf.mxu0
          %v3591 = vadd.f32 0.0, %v3590
          %v3592 = vpop.f32.mrf.mxu0
          %v3593 = vadd.f32 0.0, %v3592
          %3594 = vmatmul.bf16.gmra.mxu0 %v3107
          %v3595 = vpop.f32.mrf.mxu0
          %v3596 = vadd.f32 0.0, %v3595
          %v3597 = vpop.f32.mrf.mxu0
          %v3598 = vadd.f32 0.0, %v3597
          %3599 = vmatmul.bf16.gmra.mxu0 %v3109
          %v3600 = vpop.f32.mrf.mxu0
          %v3601 = vadd.f32 0.0, %v3600
          %v3602 = vpop.f32.mrf.mxu0
          %v3603 = vadd.f32 0.0, %v3602
          %3604 = vmatmul.bf16.gmra.mxu0 %v3111
          %v3605 = vpop.f32.mrf.mxu0
          %v3606 = vadd.f32 0.0, %v3605
          %v3607 = vpop.f32.mrf.mxu0
          %v3608 = vadd.f32 0.0, %v3607
          %3609 = vmatmul.bf16.gmra.mxu0 %v3113
          %v3610 = vpop.f32.mrf.mxu0
          %v3611 = vadd.f32 0.0, %v3610
          %v3612 = vpop.f32.mrf.mxu0
          %v3613 = vadd.f32 0.0, %v3612
          %3614 = vmatmul.bf16.gmra.mxu0 %v3115
          %v3615 = vpop.f32.mrf.mxu0
          %v3616 = vadd.f32 0.0, %v3615
          %v3617 = vpop.f32.mrf.mxu0
          %v3618 = vadd.f32 0.0, %v3617
          %3619 = vdwg.mxu0
          %v3816 = vrot.slane %v3131, 4
          %v3817 = vrot.slane %v3133, 4
          %v3818 = vrot.slane %v3136, 4
          %v3819 = vrot.slane %v3138, 4
          %v3820 = vrot.slane %v3141, 4
          %v3821 = vrot.slane %v3143, 4
          %v3822 = vrot.slane %v3146, 4
          %v3823 = vrot.slane %v3148, 4
          %v3824 = vrot.slane %v3151, 4
          %v3825 = vrot.slane %v3153, 4
          %v3826 = vrot.slane %v3156, 4
          %v3827 = vrot.slane %v3158, 4
          %v3828 = vrot.slane %v3161, 4
          %v3829 = vrot.slane %v3163, 4
          %v3830 = vrot.slane %v3166, 4
          %v3831 = vrot.slane %v3168, 4
          %v3832 = vrot.slane %v3171, 4
          %v3833 = vrot.slane %v3173, 4
          %v3834 = vrot.slane %v3176, 4
          %v3835 = vrot.slane %v3178, 4
          %v3836 = vrot.slane %v3181, 4
          %v3837 = vrot.slane %v3183, 4
          %v3838 = vrot.slane %v3186, 4
          %v3839 = vrot.slane %v3188, 4
          %v3840 = vrot.slane %v3191, 4
          %v3841 = vrot.slane %v3193, 4
          %v3842 = vrot.slane %v3196, 4
          %v3843 = vrot.slane %v3198, 4
          %v3844 = vrot.slane %v3201, 4
          %v3845 = vrot.slane %v3203, 4
          %v3846 = vrot.slane %v3206, 4
          %v3847 = vrot.slane %v3208, 4
          %v3848 = vrot.slane %v3211, 4
          %v3849 = vrot.slane %v3213, 4
          %v3850 = vrot.slane %v3216, 4
          %v3851 = vrot.slane %v3218, 4
          %v3852 = vrot.slane %v3221, 4
          %v3853 = vrot.slane %v3223, 4
          %v3854 = vrot.slane %v3226, 4
          %v3855 = vrot.slane %v3228, 4
          %v3856 = vrot.slane %v3231, 4
          %v3857 = vrot.slane %v3233, 4
          %v3858 = vrot.slane %v3236, 4
          %v3859 = vrot.slane %v3238, 4
          %v3860 = vrot.slane %v3241, 4
          %v3861 = vrot.slane %v3243, 4
          %v3862 = vrot.slane %v3246, 4
          %v3863 = vrot.slane %v3248, 4
          %v3864 = vrot.slane %v3251, 4
          %v3865 = vrot.slane %v3253, 4
          %v3866 = vrot.slane %v3256, 4
          %v3867 = vrot.slane %v3258, 4
          %v3868 = vrot.slane %v3261, 4
          %v3869 = vrot.slane %v3263, 4
          %v3870 = vrot.slane %v3266, 4
          %v3871 = vrot.slane %v3268, 4
          %v3872 = vrot.slane %v3271, 4
          %v3873 = vrot.slane %v3273, 4
          %v3874 = vrot.slane %v3276, 4
          %v3875 = vrot.slane %v3278, 4
          %v3876 = vrot.slane %v3281, 4
          %v3877 = vrot.slane %v3283, 4
          %v3878 = vrot.slane %v3286, 4
          %v3879 = vrot.slane %v3288, 4
          %v3880 = vrot.slane %v3291, 4
          %v3881 = vrot.slane %v3293, 4
          %v3882 = vrot.slane %v3296, 4
          %v3883 = vrot.slane %v3298, 4
          %v3884 = vrot.slane %v3301, 4
          %v3885 = vrot.slane %v3303, 4
          %v3886 = vrot.slane %v3306, 4
          %v3887 = vrot.slane %v3308, 4
          %v3888 = vrot.slane %v3311, 4
          %v3889 = vrot.slane %v3313, 4
          %v3890 = vrot.slane %v3316, 4
          %v3891 = vrot.slane %v3318, 4
          %v3892 = vrot.slane %v3321, 4
          %v3893 = vrot.slane %v3323, 4
          %v3894 = vrot.slane %v3326, 4
          %v3895 = vrot.slane %v3328, 4
          %v3896 = vrot.slane %v3331, 4
          %v3897 = vrot.slane %v3333, 4
          %v3898 = vrot.slane %v3336, 4
          %v3899 = vrot.slane %v3338, 4
          %v3900 = vrot.slane %v3341, 4
          %v3901 = vrot.slane %v3343, 4
          %v3902 = vrot.slane %v3346, 4
          %v3903 = vrot.slane %v3348, 4
          %v3904 = vrot.slane %v3351, 4
          %v3905 = vrot.slane %v3353, 4
          %v3906 = vrot.slane %v3356, 4
          %v3907 = vrot.slane %v3358, 4
          %v3908 = vrot.slane %v3361, 4
          %v3909 = vrot.slane %v3363, 4
          %v3910 = vrot.slane %v3366, 4
          %v3911 = vrot.slane %v3368, 4
          %v3912 = vrot.slane %v3371, 4
          %v3913 = vrot.slane %v3373, 4
          %v3914 = vrot.slane %v3376, 4
          %v3915 = vrot.slane %v3378, 4
          %v3916 = vrot.slane %v3381, 4
          %v3917 = vrot.slane %v3383, 4
          %v3918 = vrot.slane %v3386, 4
          %v3919 = vrot.slane %v3388, 4
          %v3920 = vrot.slane %v3391, 4
          %v3921 = vrot.slane %v3393, 4
          %v3922 = vrot.slane %v3396, 4
          %v3923 = vrot.slane %v3398, 4
          %v3924 = vrot.slane %v3401, 4
          %v3925 = vrot.slane %v3403, 4
          %v3926 = vrot.slane %v3406, 4
          %v3927 = vrot.slane %v3408, 4
          %v3928 = vrot.slane %v3411, 4
          %v3929 = vrot.slane %v3413, 4
          %v3930 = vrot.slane %v3416, 4
          %v3931 = vrot.slane %v3418, 4
          %v3932 = vrot.slane %v3421, 4
          %v3933 = vrot.slane %v3423, 4
          %v3934 = vrot.slane %v3426, 4
          %v3935 = vrot.slane %v3428, 4
          %v3936 = vrot.slane %v3431, 4
          %v3937 = vrot.slane %v3433, 4
          %v3938 = vrot.slane %v3436, 4
          %v3939 = vrot.slane %v3438, 4
          %v3940 = vrot.slane %v3441, 4
          %v3941 = vrot.slane %v3443, 4
          %v3942 = vrot.slane %v3446, 4
          %v3943 = vrot.slane %v3448, 4
          %v3944 = vrot.slane %v3451, 4
          %v3945 = vrot.slane %v3453, 4
          %v3946 = vrot.slane %v3456, 4
          %v3947 = vrot.slane %v3458, 4
          %v3948 = vrot.slane %v3461, 4
          %v3949 = vrot.slane %v3463, 4
          %v3950 = vrot.slane %v3466, 4
          %v3951 = vrot.slane %v3468, 4
          %v3952 = vrot.slane %v3471, 4
          %v3953 = vrot.slane %v3473, 4
          %v3954 = vrot.slane %v3476, 4
          %v3955 = vrot.slane %v3478, 4
          %v3956 = vrot.slane %v3481, 4
          %v3957 = vrot.slane %v3483, 4
          %v3958 = vrot.slane %v3486, 4
          %v3959 = vrot.slane %v3488, 4
          %v3960 = vrot.slane %v3491, 4
          %v3961 = vrot.slane %v3493, 4
          %v3962 = vrot.slane %v3496, 4
          %v3963 = vrot.slane %v3498, 4
          %v3964 = vrot.slane %v3501, 4
          %v3965 = vrot.slane %v3503, 4
          %v3966 = vrot.slane %v3506, 4
          %v3967 = vrot.slane %v3508, 4
          %v3968 = vrot.slane %v3511, 4
          %v3969 = vrot.slane %v3513, 4
          %v3970 = vrot.slane %v3516, 4
          %v3971 = vrot.slane %v3518, 4
          %v3972 = vrot.slane %v3521, 4
          %v3973 = vrot.slane %v3523, 4
          %v3974 = vrot.slane %v3526, 4
          %v3975 = vrot.slane %v3528, 4
          %v3976 = vrot.slane %v3531, 4
          %v3977 = vrot.slane %v3533, 4
          %v3978 = vrot.slane %v3536, 4
          %v3979 = vrot.slane %v3538, 4
          %v3980 = vrot.slane %v3541, 4
          %v3981 = vrot.slane %v3543, 4
          %v3982 = vrot.slane %v3546, 4
          %v3983 = vrot.slane %v3548, 4
          %v3984 = vrot.slane %v3551, 4
          %v3985 = vrot.slane %v3553, 4
          %v3986 = vrot.slane %v3556, 4
          %v3987 = vrot.slane %v3558, 4
          %v3988 = vrot.slane %v3561, 4
          %v3989 = vrot.slane %v3563, 4
          %v3990 = vrot.slane %v3566, 4
          %v3991 = vrot.slane %v3568, 4
          %v3992 = vrot.slane %v3571, 4
          %v3993 = vrot.slane %v3573, 4
          %v3994 = vrot.slane %v3576, 4
          %v3995 = vrot.slane %v3578, 4
          %v3996 = vrot.slane %v3581, 4
          %v3997 = vrot.slane %v3583, 4
          %v3998 = vrot.slane %v3586, 4
          %v3999 = vrot.slane %v3588, 4
          %v4000 = vrot.slane %v3591, 4
          %v4001 = vrot.slane %v3593, 4
          %v4002 = vrot.slane %v3596, 4
          %v4003 = vrot.slane %v3598, 4
          %v4004 = vrot.slane %v3601, 4
          %v4005 = vrot.slane %v3603, 4
          %v4006 = vrot.slane %v3606, 4
          %v4007 = vrot.slane %v3608, 4
          %v4008 = vrot.slane %v3611, 4
          %v4009 = vrot.slane %v3613, 4
          %v4010 = vrot.slane %v3616, 4
          %v4011 = vrot.slane %v3618, 4
          %4012 = vst [vmem:[#allocation1] ss:$2 sm:$0xff] %v3131
          %s4013 = scalar_lea.vmem [#allocation1], 1
          %4014 = vst [vmem:[%s4013] ss:$2 sm:$0xff] %v3816
          %s4015 = scalar_lea.vmem [#allocation1], 16
          %4016 = vst [vmem:[%s4015] ss:$2 sm:$0xff] %v3133
          %s4017 = scalar_lea.vmem [#allocation1], 17
          %4018 = vst [vmem:[%s4017] ss:$2 sm:$0xff] %v3817
          %s4019 = scalar_lea.vmem [#allocation1], 32
          %4020 = vst [vmem:[%s4019] ss:$2 sm:$0xff] %v3136
          %s4021 = scalar_lea.vmem [#allocation1], 33
          %4022 = vst [vmem:[%s4021] ss:$2 sm:$0xff] %v3818
          %s4023 = scalar_lea.vmem [#allocation1], 48
          %4024 = vst [vmem:[%s4023] ss:$2 sm:$0xff] %v3138
          %s4025 = scalar_lea.vmem [#allocation1], 49
          %4026 = vst [vmem:[%s4025] ss:$2 sm:$0xff] %v3819
          %v4027 = vld.sshfl [vmem:[#allocation1] sm:$0xff pattern:$0x75316420]
          %v4028 = vld.sshfl [vmem:[#allocation1 + $0x10] sm:$0xff pattern:$0x75316420]
          %v4029 = vld.sshfl [vmem:[#allocation1 + $0x20] sm:$0xff pattern:$0x75316420]
          %v4030 = vld.sshfl [vmem:[#allocation1 + $0x30] sm:$0xff pattern:$0x75316420]
          %4031 = vst [vmem:[#allocation1] ss:$2 sm:$0xff] %v3141
          %4032 = vst [vmem:[%s4013] ss:$2 sm:$0xff] %v3820
          %4033 = vst [vmem:[%s4015] ss:$2 sm:$0xff] %v3143
          %4034 = vst [vmem:[%s4017] ss:$2 sm:$0xff] %v3821
          %4035 = vst [vmem:[%s4019] ss:$2 sm:$0xff] %v3146
          %4036 = vst [vmem:[%s4021] ss:$2 sm:$0xff] %v3822
          %4037 = vst [vmem:[%s4023] ss:$2 sm:$0xff] %v3148
          %4038 = vst [vmem:[%s4025] ss:$2 sm:$0xff] %v3823
          %v4039 = vld.sshfl [vmem:[#allocation1] sm:$0xff pattern:$0x75316420]
          %v4040 = vld.sshfl [vmem:[#allocation1 + $0x10] sm:$0xff pattern:$0x75316420]
          %v4041 = vld.sshfl [vmem:[#allocation1 + $0x20] sm:$0xff pattern:$0x75316420]
          %v4042 = vld.sshfl [vmem:[#allocation1 + $0x30] sm:$0xff pattern:$0x75316420]
          %4043 = vst [vmem:[#allocation1] ss:$2 sm:$0xff] %v3151
          %4044 = vst [vmem:[%s4013] ss:$2 sm:$0xff] %v3824
          %4045 = vst [vmem:[%s4015] ss:$2 sm:$0xff] %v3153
          %4046 = vst [vmem:[%s4017] ss:$2 sm:$0xff] %v3825
          %4047 = vst [vmem:[%s4019] ss:$2 sm:$0xff] %v3156
          %4048 = vst [vmem:[%s4021] ss:$2 sm:$0xff] %v3826
          %4049 = vst [vmem:[%s4023] ss:$2 sm:$0xff] %v3158
          %4050 = vst [vmem:[%s4025] ss:$2 sm:$0xff] %v3827
          %v4051 = vld.sshfl [vmem:[#allocation1] sm:$0xff pattern:$0x75316420]
          %v4052 = vld.sshfl [vmem:[#allocation1 + $0x10] sm:$0xff pattern:$0x75316420]
          %v4053 = vld.sshfl [vmem:[#allocation1 + $0x20] sm:$0xff pattern:$0x75316420]
          %v4054 = vld.sshfl [vmem:[#allocation1 + $0x30] sm:$0xff pattern:$0x75316420]
          %4055 = vst [vmem:[#allocation1] ss:$2 sm:$0xff] %v3161
          %4056 = vst [vmem:[%s4013] ss:$2 sm:$0xff] %v3828
          %4057 = vst [vmem:[%s4015] ss:$2 sm:$0xff] %v3163
          %4058 = vst [vmem:[%s4017] ss:$2 sm:$0xff] %v3829
          %4059 = vst [vmem:[%s4019] ss:$2 sm:$0xff] %v3166
          %4060 = vst [vmem:[%s4021] ss:$2 sm:$0xff] %v3830
          %4061 = vst [vmem:[%s4023] ss:$2 sm:$0xff] %v3168
          %4062 = vst [vmem:[%s4025] ss:$2 sm:$0xff] %v3831
          %v4063 = vld.sshfl [vmem:[#allocation1] sm:$0xff pattern:$0x75316420]
          %v4064 = vld.sshfl [vmem:[#allocation1 + $0x10] sm:$0xff pattern:$0x75316420]
          %v4065 = vld.sshfl [vmem:[#allocation1 + $0x20] sm:$0xff pattern:$0x75316420]
          %v4066 = vld.sshfl [vmem:[#allocation1 + $0x30] sm:$0xff pattern:$0x75316420]
          %4067 = vst [vmem:[#allocation1] ss:$2 sm:$0xff] %v3171
          %4068 = vst [vmem:[%s4013] ss:$2 sm:$0xff] %v3832
          %4069 = vst [vmem:[%s4015] ss:$2 sm:$0xff] %v3173
          %4070 = vst [vmem:[%s4017] ss:$2 sm:$0xff] %v3833
          %4071 = vst [vmem:[%s4019] ss:$2 sm:$0xff] %v3176
          %4072 = vst [vmem:[%s4021] ss:$2 sm:$0xff] %v3834
          %4073 = vst [vmem:[%s4023] ss:$2 sm:$0xff] %v3178
          %4074 = vst [vmem:[%s4025] ss:$2 sm:$0xff] %v3835
          %v4075 = vld.sshfl [vmem:[#allocation1] sm:$0xff pattern:$0x75316420]
          %v4076 = vld.sshfl [vmem:[#allocation1 + $0x10] sm:$0xff pattern:$0x75316420]
          %v4077 = vld.sshfl [vmem:[#allocation1 + $0x20] sm:$0xff pattern:$0x75316420]
          %v4078 = vld.sshfl [vmem:[#allocation1 + $0x30] sm:$0xff pattern:$0x75316420]
          %4079 = vst [vmem:[#allocation1] ss:$2 sm:$0xff] %v3181
          %4080 = vst [vmem:[%s4013] ss:$2 sm:$0xff] %v3836
          %4081 = vst [vmem:[%s4015] ss:$2 sm:$0xff] %v3183
          %4082 = vst [vmem:[%s4017] ss:$2 sm:$0xff] %v3837
          %4083 = vst [vmem:[%s4019] ss:$2 sm:$0xff] %v3186
          %4084 = vst [vmem:[%s4021] ss:$2 sm:$0xff] %v3838
          %4085 = vst [vmem:[%s4023] ss:$2 sm:$0xff] %v3188
          %4086 = vst [vmem:[%s4025] ss:$2 sm:$0xff] %v3839
          %v4087 = vld.sshfl [vmem:[#allocation1] sm:$0xff pattern:$0x75316420]
          %v4088 = vld.sshfl [vmem:[#allocation1 + $0x10] sm:$0xff pattern:$0x75316420]
          %v4089 = vld.sshfl [vmem:[#allocation1 + $0x20] sm:$0xff pattern:$0x75316420]
          %v4090 = vld.sshfl [vmem:[#allocation1 + $0x30] sm:$0xff pattern:$0x75316420]
          %4091 = vst [vmem:[#allocation1] ss:$2 sm:$0xff] %v3191
          %v4092 = vld.sshfl [vmem:[#allocation1] sm:$0xff pattern:$0x75316420]
          %4093 = vst [vmem:[%s4015] ss:$2 sm:$0xff] %v3840
          %4094 = vst [vmem:[%s4017] ss:$2 sm:$0xff] %v3193
          %4095 = vst [vmem:[%s4019] ss:$2 sm:$0xff] %v3841
          %4096 = vst [vmem:[%s4021] ss:$2 sm:$0xff] %v3196
          %4097 = vst [vmem:[%s4023] ss:$2 sm:$0xff] %v3842
          %4098 = vst [vmem:[%s4025] ss:$2 sm:$0xff] %v3198
          %v4099 = vld.sshfl [vmem:[#allocation1 + $0x10] sm:$0xff pattern:$0x75316420]
          %v4100 = vld.sshfl [vmem:[#allocation1 + $0x20] sm:$0xff pattern:$0x75316420]
          %v4101 = vld.sshfl [vmem:[#allocation1 + $0x30] sm:$0xff pattern:$0x75316420]
          %4102 = vst [vmem:[#allocation1] ss:$2 sm:$0xff] %v3843
          %4103 = vst [vmem:[%s4013] ss:$2 sm:$0xff] %v3201
          %4104 = vst [vmem:[%s4015] ss:$2 sm:$0xff] %v3844
          %4105 = vst [vmem:[%s4017] ss:$2 sm:$0xff] %v3203
          %4106 = vst [vmem:[%s4019] ss:$2 sm:$0xff] %v3845
          %4107 = vst [vmem:[%s4021] ss:$2 sm:$0xff] %v3206
          %4108 = vst [vmem:[%s4023] ss:$2 sm:$0xff] %v3846
          %4109 = vst [vmem:[%s4025] ss:$2 sm:$0xff] %v3208
          %v4110 = vld.sshfl [vmem:[#allocation1] sm:$0xff pattern:$0x75316420]
          %v4111 = vld.sshfl [vmem:[#allocation1 + $0x10] sm:$0xff pattern:$0x75316420]
          %v4112 = vld.sshfl [vmem:[#allocation1 + $0x20] sm:$0xff pattern:$0x75316420]
          %v4113 = vld.sshfl [vmem:[#allocation1 + $0x30] sm:$0xff pattern:$0x75316420]
          %4114 = vst [vmem:[#allocation1] ss:$2 sm:$0xff] %v3847
          %4115 = vst [vmem:[%s4013] ss:$2 sm:$0xff] %v3211
          %4116 = vst [vmem:[%s4015] ss:$2 sm:$0xff] %v3848
          %4117 = vst [vmem:[%s4017] ss:$2 sm:$0xff] %v3213
          %4118 = vst [vmem:[%s4019] ss:$2 sm:$0xff] %v3849
          %4119 = vst [vmem:[%s4021] ss:$2 sm:$0xff] %v3216
          %4120 = vst [vmem:[%s4023] ss:$2 sm:$0xff] %v3850
          %4121 = vst [vmem:[%s4025] ss:$2 sm:$0xff] %v3218
          %v4122 = vld.sshfl [vmem:[#allocation1] sm:$0xff pattern:$0x75316420]
          %v4123 = vld.sshfl [vmem:[#allocation1 + $0x10] sm:$0xff pattern:$0x75316420]
          %v4124 = vld.sshfl [vmem:[#allocation1 + $0x20] sm:$0xff pattern:$0x75316420]
          %v4125 = vld.sshfl [vmem:[#allocation1 + $0x30] sm:$0xff pattern:$0x75316420]
          %4126 = vst [vmem:[#allocation1] ss:$2 sm:$0xff] %v3851
          %4127 = vst [vmem:[%s4013] ss:$2 sm:$0xff] %v3221
          %4128 = vst [vmem:[%s4015] ss:$2 sm:$0xff] %v3852
          %4129 = vst [vmem:[%s4017] ss:$2 sm:$0xff] %v3223
          %4130 = vst [vmem:[%s4019] ss:$2 sm:$0xff] %v3853
          %4131 = vst [vmem:[%s4021] ss:$2 sm:$0xff] %v3226
          %4132 = vst [vmem:[%s4023] ss:$2 sm:$0xff] %v3854
          %4133 = vst [vmem:[%s4025] ss:$2 sm:$0xff] %v3228
          %v4134 = vld.sshfl [vmem:[#allocation1] sm:$0xff pattern:$0x75316420]
          %v4135 = vld.sshfl [vmem:[#allocation1 + $0x10] sm:$0xff pattern:$0x75316420]
          %v4136 = vld.sshfl [vmem:[#allocation1 + $0x20] sm:$0xff pattern:$0x75316420]
          %v4137 = vld.sshfl [vmem:[#allocation1 + $0x30] sm:$0xff pattern:$0x75316420]
          %4138 = vst [vmem:[#allocation1] ss:$2 sm:$0xff] %v3855
          %4139 = vst [vmem:[%s4013] ss:$2 sm:$0xff] %v3231
          %4140 = vst [vmem:[%s4015] ss:$2 sm:$0xff] %v3856
          %4141 = vst [vmem:[%s4017] ss:$2 sm:$0xff] %v3233
          %4142 = vst [vmem:[%s4019] ss:$2 sm:$0xff] %v3857
          %4143 = vst [vmem:[%s4021] ss:$2 sm:$0xff] %v3236
          %4144 = vst [vmem:[%s4023] ss:$2 sm:$0xff] %v3858
          %4145 = vst [vmem:[%s4025] ss:$2 sm:$0xff] %v3238
          %v4146 = vld.sshfl [vmem:[#allocation1] sm:$0xff pattern:$0x75316420]
          %v4147 = vld.sshfl [vmem:[#allocation1 + $0x10] sm:$0xff pattern:$0x75316420]
          %v4148 = vld.sshfl [vmem:[#allocation1 + $0x20] sm:$0xff pattern:$0x75316420]
          %v4149 = vld.sshfl [vmem:[#allocation1 + $0x30] sm:$0xff pattern:$0x75316420]
          %4150 = vst [vmem:[#allocation1] ss:$2 sm:$0xff] %v3859
          %4151 = vst [vmem:[%s4013] ss:$2 sm:$0xff] %v3241
          %4152 = vst [vmem:[%s4015] ss:$2 sm:$0xff] %v3860
          %4153 = vst [vmem:[%s4017] ss:$2 sm:$0xff] %v3243
          %4154 = vst [vmem:[%s4019] ss:$2 sm:$0xff] %v3861
          %4155 = vst [vmem:[%s4021] ss:$2 sm:$0xff] %v3246
          %4156 = vst [vmem:[%s4023] ss:$2 sm:$0xff] %v3862
          %4157 = vst [vmem:[%s4025] ss:$2 sm:$0xff] %v3248
          %v4158 = vld.sshfl [vmem:[#allocation1] sm:$0xff pattern:$0x75316420]
          %v4159 = vld.sshfl [vmem:[#allocation1 + $0x10] sm:$0xff pattern:$0x75316420]
          %v4160 = vld.sshfl [vmem:[#allocation1 + $0x20] sm:$0xff pattern:$0x75316420]
          %v4161 = vld.sshfl [vmem:[#allocation1 + $0x30] sm:$0xff pattern:$0x75316420]
          %4162 = vst [vmem:[#allocation1] ss:$2 sm:$0xff] %v3863
          %4163 = vst [vmem:[%s4013] ss:$2 sm:$0xff] %v3251
          %4164 = vst [vmem:[%s4015] ss:$2 sm:$0xff] %v3864
          %v4165 = vld.sshfl [vmem:[#allocation1] sm:$0xff pattern:$0x75316420]
          %v4166 = vld.sshfl [vmem:[#allocation1 + $0x10] sm:$0xff pattern:$0x75316420]
          %4167 = vst [vmem:[%s4019] ss:$2 sm:$0xff] %v3253
          %4168 = vst [vmem:[%s4021] ss:$2 sm:$0xff] %v3865
          %4169 = vst [vmem:[%s4023] ss:$2 sm:$0xff] %v3256
          %4170 = vst [vmem:[%s4025] ss:$2 sm:$0xff] %v3866
          %v4171 = vld.sshfl [vmem:[#allocation1 + $0x20] sm:$0xff pattern:$0x75316420]
          %v4172 = vld.sshfl [vmem:[#allocation1 + $0x30] sm:$0xff pattern:$0x75316420]
          %4173 = vst [vmem:[#allocation1] ss:$2 sm:$0xff] %v3258
          %4174 = vst [vmem:[%s4013] ss:$2 sm:$0xff] %v3867
          %4175 = vst [vmem:[%s4015] ss:$2 sm:$0xff] %v3261
          %4176 = vst [vmem:[%s4017] ss:$2 sm:$0xff] %v3868
          %4177 = vst [vmem:[%s4019] ss:$2 sm:$0xff] %v3263
          %4178 = vst [vmem:[%s4021] ss:$2 sm:$0xff] %v3869
          %4179 = vst [vmem:[%s4023] ss:$2 sm:$0xff] %v3266
          %4180 = vst [vmem:[%s4025] ss:$2 sm:$0xff] %v3870
          %v4181 = vld.sshfl [vmem:[#allocation1] sm:$0xff pattern:$0x75316420]
          %v4182 = vld.sshfl [vmem:[#allocation1 + $0x10] sm:$0xff pattern:$0x75316420]
          %v4183 = vld.sshfl [vmem:[#allocation1 + $0x20] sm:$0xff pattern:$0x75316420]
          %v4184 = vld.sshfl [vmem:[#allocation1 + $0x30] sm:$0xff pattern:$0x75316420]
          %4185 = vst [vmem:[#allocation1] ss:$2 sm:$0xff] %v3268
          %4186 = vst [vmem:[%s4013] ss:$2 sm:$0xff] %v3871
          %4187 = vst [vmem:[%s4015] ss:$2 sm:$0xff] %v3271
          %4188 = vst [vmem:[%s4017] ss:$2 sm:$0xff] %v3872
          %4189 = vst [vmem:[%s4019] ss:$2 sm:$0xff] %v3273
          %4190 = vst [vmem:[%s4021] ss:$2 sm:$0xff] %v3873
          %4191 = vst [vmem:[%s4023] ss:$2 sm:$0xff] %v3276
          %4192 = vst [vmem:[%s4025] ss:$2 sm:$0xff] %v3874
          %v4193 = vld.sshfl [vmem:[#allocation1] sm:$0xff pattern:$0x75316420]
          %v4194 = vld.sshfl [vmem:[#allocation1 + $0x10] sm:$0xff pattern:$0x75316420]
          %v4195 = vld.sshfl [vmem:[#allocation1 + $0x20] sm:$0xff pattern:$0x75316420]
          %v4196 = vld.sshfl [vmem:[#allocation1 + $0x30] sm:$0xff pattern:$0x75316420]
          %4197 = vst [vmem:[#allocation1] ss:$2 sm:$0xff] %v3278
          %4198 = vst [vmem:[%s4013] ss:$2 sm:$0xff] %v3875
          %4199 = vst [vmem:[%s4015] ss:$2 sm:$0xff] %v3281
          %4200 = vst [vmem:[%s4017] ss:$2 sm:$0xff] %v3876
          %4201 = vst [vmem:[%s4019] ss:$2 sm:$0xff] %v3283
          %4202 = vst [vmem:[%s4021] ss:$2 sm:$0xff] %v3877
          %4203 = vst [vmem:[%s4023] ss:$2 sm:$0xff] %v3286
          %4204 = vst [vmem:[%s4025] ss:$2 sm:$0xff] %v3878
          %v4205 = vld.sshfl [vmem:[#allocation1] sm:$0xff pattern:$0x75316420]
          %v4206 = vld.sshfl [vmem:[#allocation1 + $0x10] sm:$0xff pattern:$0x75316420]
          %v4207 = vld.sshfl [vmem:[#allocation1 + $0x20] sm:$0xff pattern:$0x75316420]
          %v4208 = vld.sshfl [vmem:[#allocation1 + $0x30] sm:$0xff pattern:$0x75316420]
          %4209 = vst [vmem:[#allocation1] ss:$2 sm:$0xff] %v3288
          %4210 = vst [vmem:[%s4013] ss:$2 sm:$0xff] %v3879
          %4211 = vst [vmem:[%s4015] ss:$2 sm:$0xff] %v3291
          %4212 = vst [vmem:[%s4017] ss:$2 sm:$0xff] %v3880
          %4213 = vst [vmem:[%s4019] ss:$2 sm:$0xff] %v3293
          %4214 = vst [vmem:[%s4021] ss:$2 sm:$0xff] %v3881
          %4215 = vst [vmem:[%s4023] ss:$2 sm:$0xff] %v3296
          %4216 = vst [vmem:[%s4025] ss:$2 sm:$0xff] %v3882
          %v4217 = vld.sshfl [vmem:[#allocation1] sm:$0xff pattern:$0x75316420]
          %v4218 = vld.sshfl [vmem:[#allocation1 + $0x10] sm:$0xff pattern:$0x75316420]
          %v4219 = vld.sshfl [vmem:[#allocation1 + $0x20] sm:$0xff pattern:$0x75316420]
          %v4220 = vld.sshfl [vmem:[#allocation1 + $0x30] sm:$0xff pattern:$0x75316420]
          %4221 = vst [vmem:[#allocation1] ss:$2 sm:$0xff] %v3298
          %4222 = vst [vmem:[%s4013] ss:$2 sm:$0xff] %v3883
          %4223 = vst [vmem:[%s4015] ss:$2 sm:$0xff] %v3301
          %4224 = vst [vmem:[%s4017] ss:$2 sm:$0xff] %v3884
          %4225 = vst [vmem:[%s4019] ss:$2 sm:$0xff] %v3303
          %4226 = vst [vmem:[%s4021] ss:$2 sm:$0xff] %v3885
          %4227 = vst [vmem:[%s4023] ss:$2 sm:$0xff] %v3306
          %4228 = vst [vmem:[%s4025] ss:$2 sm:$0xff] %v3886
          %v4229 = vld.sshfl [vmem:[#allocation1] sm:$0xff pattern:$0x75316420]
          %v4230 = vld.sshfl [vmem:[#allocation1 + $0x10] sm:$0xff pattern:$0x75316420]
          %v4231 = vld.sshfl [vmem:[#allocation1 + $0x20] sm:$0xff pattern:$0x75316420]
          %v4232 = vld.sshfl [vmem:[#allocation1 + $0x30] sm:$0xff pattern:$0x75316420]
          %4233 = vst [vmem:[#allocation1] ss:$2 sm:$0xff] %v3308
          %4234 = vst [vmem:[%s4013] ss:$2 sm:$0xff] %v3887
          %4235 = vst [vmem:[%s4015] ss:$2 sm:$0xff] %v3311
          %4236 = vst [vmem:[%s4017] ss:$2 sm:$0xff] %v3888
          %4237 = vst [vmem:[%s4019] ss:$2 sm:$0xff] %v3313
          %v4238 = vld.sshfl [vmem:[#allocation1] sm:$0xff pattern:$0x75316420]
          %v4239 = vld.sshfl [vmem:[#allocation1 + $0x10] sm:$0xff pattern:$0x75316420]
          %v4240 = vld.sshfl [vmem:[#allocation1 + $0x20] sm:$0xff pattern:$0x75316420]
          %4241 = vst [vmem:[%s4023] ss:$2 sm:$0xff] %v3889
          %4242 = vst [vmem:[%s4025] ss:$2 sm:$0xff] %v3316
          %v4243 = vld.sshfl [vmem:[#allocation1 + $0x30] sm:$0xff pattern:$0x75316420]
          %4244 = vst [vmem:[#allocation1] ss:$2 sm:$0xff] %v3890
          %4245 = vst [vmem:[%s4013] ss:$2 sm:$0xff] %v3318
          %4246 = vst [vmem:[%s4015] ss:$2 sm:$0xff] %v3891
          %4247 = vst [vmem:[%s4017] ss:$2 sm:$0xff] %v3321
          %4248 = vst [vmem:[%s4019] ss:$2 sm:$0xff] %v3892
          %4249 = vst [vmem:[%s4021] ss:$2 sm:$0xff] %v3323
          %4250 = vst [vmem:[%s4023] ss:$2 sm:$0xff] %v3893
          %4251 = vst [vmem:[%s4025] ss:$2 sm:$0xff] %v3326
          %v4252 = vld.sshfl [vmem:[#allocation1] sm:$0xff pattern:$0x75316420]
          %v4253 = vld.sshfl [vmem:[#allocation1 + $0x10] sm:$0xff pattern:$0x75316420]
          %v4254 = vld.sshfl [vmem:[#allocation1 + $0x20] sm:$0xff pattern:$0x75316420]
          %v4255 = vld.sshfl [vmem:[#allocation1 + $0x30] sm:$0xff pattern:$0x75316420]
          %4256 = vst [vmem:[#allocation1] ss:$2 sm:$0xff] %v3894
          %4257 = vst [vmem:[%s4013] ss:$2 sm:$0xff] %v3328
          %4258 = vst [vmem:[%s4015] ss:$2 sm:$0xff] %v3895
          %4259 = vst [vmem:[%s4017] ss:$2 sm:$0xff] %v3331
          %4260 = vst [vmem:[%s4019] ss:$2 sm:$0xff] %v3896
          %4261 = vst [vmem:[%s4021] ss:$2 sm:$0xff] %v3333
          %4262 = vst [vmem:[%s4023] ss:$2 sm:$0xff] %v3897
          %4263 = vst [vmem:[%s4025] ss:$2 sm:$0xff] %v3336
          %v4264 = vld.sshfl [vmem:[#allocation1] sm:$0xff pattern:$0x75316420]
          %v4265 = vld.sshfl [vmem:[#allocation1 + $0x10] sm:$0xff pattern:$0x75316420]
          %v4266 = vld.sshfl [vmem:[#allocation1 + $0x20] sm:$0xff pattern:$0x75316420]
          %v4267 = vld.sshfl [vmem:[#allocation1 + $0x30] sm:$0xff pattern:$0x75316420]
          %4268 = vst [vmem:[#allocation1] ss:$2 sm:$0xff] %v3898
          %4269 = vst [vmem:[%s4013] ss:$2 sm:$0xff] %v3338
          %4270 = vst [vmem:[%s4015] ss:$2 sm:$0xff] %v3899
          %4271 = vst [vmem:[%s4017] ss:$2 sm:$0xff] %v3341
          %4272 = vst [vmem:[%s4019] ss:$2 sm:$0xff] %v3900
          %4273 = vst [vmem:[%s4021] ss:$2 sm:$0xff] %v3343
          %4274 = vst [vmem:[%s4023] ss:$2 sm:$0xff] %v3901
          %4275 = vst [vmem:[%s4025] ss:$2 sm:$0xff] %v3346
          %v4276 = vld.sshfl [vmem:[#allocation1] sm:$0xff pattern:$0x75316420]
          %v4277 = vld.sshfl [vmem:[#allocation1 + $0x10] sm:$0xff pattern:$0x75316420]
          %v4278 = vld.sshfl [vmem:[#allocation1 + $0x20] sm:$0xff pattern:$0x75316420]
          %v4279 = vld.sshfl [vmem:[#allocation1 + $0x30] sm:$0xff pattern:$0x75316420]
          %4280 = vst [vmem:[#allocation1] ss:$2 sm:$0xff] %v3902
          %4281 = vst [vmem:[%s4013] ss:$2 sm:$0xff] %v3348
          %4282 = vst [vmem:[%s4015] ss:$2 sm:$0xff] %v3903
          %4283 = vst [vmem:[%s4017] ss:$2 sm:$0xff] %v3351
          %4284 = vst [vmem:[%s4019] ss:$2 sm:$0xff] %v3904
          %4285 = vst [vmem:[%s4021] ss:$2 sm:$0xff] %v3353
          %4286 = vst [vmem:[%s4023] ss:$2 sm:$0xff] %v3905
          %4287 = vst [vmem:[%s4025] ss:$2 sm:$0xff] %v3356
          %v4288 = vld.sshfl [vmem:[#allocation1] sm:$0xff pattern:$0x75316420]
          %v4289 = vld.sshfl [vmem:[#allocation1 + $0x10] sm:$0xff pattern:$0x75316420]
          %v4290 = vld.sshfl [vmem:[#allocation1 + $0x20] sm:$0xff pattern:$0x75316420]
          %v4291 = vld.sshfl [vmem:[#allocation1 + $0x30] sm:$0xff pattern:$0x75316420]
          %4292 = vst [vmem:[#allocation1] ss:$2 sm:$0xff] %v3906
          %4293 = vst [vmem:[%s4013] ss:$2 sm:$0xff] %v3358
          %4294 = vst [vmem:[%s4015] ss:$2 sm:$0xff] %v3907
          %4295 = vst [vmem:[%s4017] ss:$2 sm:$0xff] %v3361
          %4296 = vst [vmem:[%s4019] ss:$2 sm:$0xff] %v3908
          %4297 = vst [vmem:[%s4021] ss:$2 sm:$0xff] %v3363
          %4298 = vst [vmem:[%s4023] ss:$2 sm:$0xff] %v3909
          %4299 = vst [vmem:[%s4025] ss:$2 sm:$0xff] %v3366
          %v4300 = vld.sshfl [vmem:[#allocation1] sm:$0xff pattern:$0x75316420]
          %v4301 = vld.sshfl [vmem:[#allocation1 + $0x10] sm:$0xff pattern:$0x75316420]
          %v4302 = vld.sshfl [vmem:[#allocation1 + $0x20] sm:$0xff pattern:$0x75316420]
          %v4303 = vld.sshfl [vmem:[#allocation1 + $0x30] sm:$0xff pattern:$0x75316420]
          %4304 = vst [vmem:[#allocation1] ss:$2 sm:$0xff] %v3910
          %4305 = vst [vmem:[%s4013] ss:$2 sm:$0xff] %v3368
          %4306 = vst [vmem:[%s4015] ss:$2 sm:$0xff] %v3911
          %4307 = vst [vmem:[%s4017] ss:$2 sm:$0xff] %v3371
          %4308 = vst [vmem:[%s4019] ss:$2 sm:$0xff] %v3912
          %4309 = vst [vmem:[%s4021] ss:$2 sm:$0xff] %v3373
          %4310 = vst [vmem:[%s4023] ss:$2 sm:$0xff] %v3913
          %v4311 = vld.sshfl [vmem:[#allocation1] sm:$0xff pattern:$0x75316420]
          %v4312 = vld.sshfl [vmem:[#allocation1 + $0x10] sm:$0xff pattern:$0x75316420]
          %v4313 = vld.sshfl [vmem:[#allocation1 + $0x20] sm:$0xff pattern:$0x75316420]
          %v4314 = vld.sshfl [vmem:[#allocation1 + $0x30] sm:$0xff pattern:$0x75316420]
          %4315 = vst [vmem:[#allocation1] ss:$2 sm:$0xff] %v3376
          %4316 = vst [vmem:[%s4013] ss:$2 sm:$0xff] %v3914
          %4317 = vst [vmem:[%s4015] ss:$2 sm:$0xff] %v3378
          %4318 = vst [vmem:[%s4017] ss:$2 sm:$0xff] %v3915
          %4319 = vst [vmem:[%s4019] ss:$2 sm:$0xff] %v3381
          %4320 = vst [vmem:[%s4021] ss:$2 sm:$0xff] %v3916
          %4321 = vst [vmem:[%s4023] ss:$2 sm:$0xff] %v3383
          %4322 = vst [vmem:[%s4025] ss:$2 sm:$0xff] %v3917
          %v4323 = vld.sshfl [vmem:[#allocation1] sm:$0xff pattern:$0x75316420]
          %v4324 = vld.sshfl [vmem:[#allocation1 + $0x10] sm:$0xff pattern:$0x75316420]
          %v4325 = vld.sshfl [vmem:[#allocation1 + $0x20] sm:$0xff pattern:$0x75316420]
          %v4326 = vld.sshfl [vmem:[#allocation1 + $0x30] sm:$0xff pattern:$0x75316420]
          %4327 = vst [vmem:[#allocation1] ss:$2 sm:$0xff] %v3386
          %4328 = vst [vmem:[%s4013] ss:$2 sm:$0xff] %v3918
          %4329 = vst [vmem:[%s4015] ss:$2 sm:$0xff] %v3388
          %4330 = vst [vmem:[%s4017] ss:$2 sm:$0xff] %v3919
          %4331 = vst [vmem:[%s4019] ss:$2 sm:$0xff] %v3391
          %4332 = vst [vmem:[%s4021] ss:$2 sm:$0xff] %v3920
          %4333 = vst [vmem:[%s4023] ss:$2 sm:$0xff] %v3393
          %4334 = vst [vmem:[%s4025] ss:$2 sm:$0xff] %v3921
          %v4335 = vld.sshfl [vmem:[#allocation1] sm:$0xff pattern:$0x75316420]
          %v4336 = vld.sshfl [vmem:[#allocation1 + $0x10] sm:$0xff pattern:$0x75316420]
          %v4337 = vld.sshfl [vmem:[#allocation1 + $0x20] sm:$0xff pattern:$0x75316420]
          %v4338 = vld.sshfl [vmem:[#allocation1 + $0x30] sm:$0xff pattern:$0x75316420]
          %4339 = vst [vmem:[#allocation1] ss:$2 sm:$0xff] %v3396
          %4340 = vst [vmem:[%s4013] ss:$2 sm:$0xff] %v3922
          %4341 = vst [vmem:[%s4015] ss:$2 sm:$0xff] %v3398
          %4342 = vst [vmem:[%s4017] ss:$2 sm:$0xff] %v3923
          %4343 = vst [vmem:[%s4019] ss:$2 sm:$0xff] %v3401
          %4344 = vst [vmem:[%s4021] ss:$2 sm:$0xff] %v3924
          %4345 = vst [vmem:[%s4023] ss:$2 sm:$0xff] %v3403
          %4346 = vst [vmem:[%s4025] ss:$2 sm:$0xff] %v3925
          %v4347 = vld.sshfl [vmem:[#allocation1] sm:$0xff pattern:$0x75316420]
          %v4348 = vld.sshfl [vmem:[#allocation1 + $0x10] sm:$0xff pattern:$0x75316420]
          %v4349 = vld.sshfl [vmem:[#allocation1 + $0x20] sm:$0xff pattern:$0x75316420]
          %v4350 = vld.sshfl [vmem:[#allocation1 + $0x30] sm:$0xff pattern:$0x75316420]
          %4351 = vst [vmem:[#allocation1] ss:$2 sm:$0xff] %v3406
          %4352 = vst [vmem:[%s4013] ss:$2 sm:$0xff] %v3926
          %4353 = vst [vmem:[%s4015] ss:$2 sm:$0xff] %v3408
          %4354 = vst [vmem:[%s4017] ss:$2 sm:$0xff] %v3927
          %4355 = vst [vmem:[%s4019] ss:$2 sm:$0xff] %v3411
          %4356 = vst [vmem:[%s4021] ss:$2 sm:$0xff] %v3928
          %4357 = vst [vmem:[%s4023] ss:$2 sm:$0xff] %v3413
          %4358 = vst [vmem:[%s4025] ss:$2 sm:$0xff] %v3929
          %v4359 = vld.sshfl [vmem:[#allocation1] sm:$0xff pattern:$0x75316420]
          %v4360 = vld.sshfl [vmem:[#allocation1 + $0x10] sm:$0xff pattern:$0x75316420]
          %v4361 = vld.sshfl [vmem:[#allocation1 + $0x20] sm:$0xff pattern:$0x75316420]
          %v4362 = vld.sshfl [vmem:[#allocation1 + $0x30] sm:$0xff pattern:$0x75316420]
          %4363 = vst [vmem:[#allocation1] ss:$2 sm:$0xff] %v3416
          %4364 = vst [vmem:[%s4013] ss:$2 sm:$0xff] %v3930
          %4365 = vst [vmem:[%s4015] ss:$2 sm:$0xff] %v3418
          %4366 = vst [vmem:[%s4017] ss:$2 sm:$0xff] %v3931
          %4367 = vst [vmem:[%s4019] ss:$2 sm:$0xff] %v3421
          %4368 = vst [vmem:[%s4021] ss:$2 sm:$0xff] %v3932
          %4369 = vst [vmem:[%s4023] ss:$2 sm:$0xff] %v3423
          %4370 = vst [vmem:[%s4025] ss:$2 sm:$0xff] %v3933
          %v4371 = vld.sshfl [vmem:[#allocation1] sm:$0xff pattern:$0x75316420]
          %v4372 = vld.sshfl [vmem:[#allocation1 + $0x10] sm:$0xff pattern:$0x75316420]
          %v4373 = vld.sshfl [vmem:[#allocation1 + $0x20] sm:$0xff pattern:$0x75316420]
          %v4374 = vld.sshfl [vmem:[#allocation1 + $0x30] sm:$0xff pattern:$0x75316420]
          %4375 = vst [vmem:[#allocation1] ss:$2 sm:$0xff] %v3426
          %4376 = vst [vmem:[%s4013] ss:$2 sm:$0xff] %v3934
          %4377 = vst [vmem:[%s4015] ss:$2 sm:$0xff] %v3428
          %4378 = vst [vmem:[%s4017] ss:$2 sm:$0xff] %v3935
          %4379 = vst [vmem:[%s4019] ss:$2 sm:$0xff] %v3431
          %4380 = vst [vmem:[%s4021] ss:$2 sm:$0xff] %v3936
          %4381 = vst [vmem:[%s4023] ss:$2 sm:$0xff] %v3433
          %4382 = vst [vmem:[%s4025] ss:$2 sm:$0xff] %v3937
          %v4383 = vld.sshfl [vmem:[#allocation1] sm:$0xff pattern:$0x75316420]
          %v4384 = vld.sshfl [vmem:[#allocation1 + $0x10] sm:$0xff pattern:$0x75316420]
          %v4385 = vld.sshfl [vmem:[#allocation1 + $0x20] sm:$0xff pattern:$0x75316420]
          %v4386 = vld.sshfl [vmem:[#allocation1 + $0x30] sm:$0xff pattern:$0x75316420]
          %4387 = vst [vmem:[#allocation1] ss:$2 sm:$0xff] %v3436
          %v4388 = vld.sshfl [vmem:[#allocation1] sm:$0xff pattern:$0x75316420]
          %4389 = vst [vmem:[%s4015] ss:$2 sm:$0xff] %v3938
          %4390 = vst [vmem:[%s4017] ss:$2 sm:$0xff] %v3438
          %4391 = vst [vmem:[%s4019] ss:$2 sm:$0xff] %v3939
          %4392 = vst [vmem:[%s4021] ss:$2 sm:$0xff] %v3441
          %4393 = vst [vmem:[%s4023] ss:$2 sm:$0xff] %v3940
          %4394 = vst [vmem:[%s4025] ss:$2 sm:$0xff] %v3443
          %v4395 = vld.sshfl [vmem:[#allocation1 + $0x10] sm:$0xff pattern:$0x75316420]
          %v4396 = vld.sshfl [vmem:[#allocation1 + $0x20] sm:$0xff pattern:$0x75316420]
          %v4397 = vld.sshfl [vmem:[#allocation1 + $0x30] sm:$0xff pattern:$0x75316420]
          %4398 = vst [vmem:[#allocation1] ss:$2 sm:$0xff] %v3941
          %4399 = vst [vmem:[%s4013] ss:$2 sm:$0xff] %v3446
          %4400 = vst [vmem:[%s4015] ss:$2 sm:$0xff] %v3942
          %4401 = vst [vmem:[%s4017] ss:$2 sm:$0xff] %v3448
          %4402 = vst [vmem:[%s4019] ss:$2 sm:$0xff] %v3943
          %4403 = vst [vmem:[%s4021] ss:$2 sm:$0xff] %v3451
          %4404 = vst [vmem:[%s4023] ss:$2 sm:$0xff] %v3944
          %4405 = vst [vmem:[%s4025] ss:$2 sm:$0xff] %v3453
          %v4406 = vld.sshfl [vmem:[#allocation1] sm:$0xff pattern:$0x75316420]
          %v4407 = vld.sshfl [vmem:[#allocation1 + $0x10] sm:$0xff pattern:$0x75316420]
          %v4408 = vld.sshfl [vmem:[#allocation1 + $0x20] sm:$0xff pattern:$0x75316420]
          %v4409 = vld.sshfl [vmem:[#allocation1 + $0x30] sm:$0xff pattern:$0x75316420]
          %4410 = vst [vmem:[#allocation1] ss:$2 sm:$0xff] %v3945
          %4411 = vst [vmem:[%s4013] ss:$2 sm:$0xff] %v3456
          %4412 = vst [vmem:[%s4015] ss:$2 sm:$0xff] %v3946
          %4413 = vst [vmem:[%s4017] ss:$2 sm:$0xff] %v3458
          %4414 = vst [vmem:[%s4019] ss:$2 sm:$0xff] %v3947
          %4415 = vst [vmem:[%s4021] ss:$2 sm:$0xff] %v3461
          %4416 = vst [vmem:[%s4023] ss:$2 sm:$0xff] %v3948
          %4417 = vst [vmem:[%s4025] ss:$2 sm:$0xff] %v3463
          %v4418 = vld.sshfl [vmem:[#allocation1] sm:$0xff pattern:$0x75316420]
          %v4419 = vld.sshfl [vmem:[#allocation1 + $0x10] sm:$0xff pattern:$0x75316420]
          %v4420 = vld.sshfl [vmem:[#allocation1 + $0x20] sm:$0xff pattern:$0x75316420]
          %v4421 = vld.sshfl [vmem:[#allocation1 + $0x30] sm:$0xff pattern:$0x75316420]
          %4422 = vst [vmem:[#allocation1] ss:$2 sm:$0xff] %v3949
          %4423 = vst [vmem:[%s4013] ss:$2 sm:$0xff] %v3466
          %4424 = vst [vmem:[%s4015] ss:$2 sm:$0xff] %v3950
          %4425 = vst [vmem:[%s4017] ss:$2 sm:$0xff] %v3468
          %4426 = vst [vmem:[%s4019] ss:$2 sm:$0xff] %v3951
          %4427 = vst [vmem:[%s4021] ss:$2 sm:$0xff] %v3471
          %4428 = vst [vmem:[%s4023] ss:$2 sm:$0xff] %v3952
          %4429 = vst [vmem:[%s4025] ss:$2 sm:$0xff] %v3473
          %v4430 = vld.sshfl [vmem:[#allocation1] sm:$0xff pattern:$0x75316420]
          %v4431 = vld.sshfl [vmem:[#allocation1 + $0x10] sm:$0xff pattern:$0x75316420]
          %v4432 = vld.sshfl [vmem:[#allocation1 + $0x20] sm:$0xff pattern:$0x75316420]
          %v4433 = vld.sshfl [vmem:[#allocation1 + $0x30] sm:$0xff pattern:$0x75316420]
          %4434 = vst [vmem:[#allocation1] ss:$2 sm:$0xff] %v3953
          %4435 = vst [vmem:[%s4013] ss:$2 sm:$0xff] %v3476
          %4436 = vst [vmem:[%s4015] ss:$2 sm:$0xff] %v3954
          %4437 = vst [vmem:[%s4017] ss:$2 sm:$0xff] %v3478
          %4438 = vst [vmem:[%s4019] ss:$2 sm:$0xff] %v3955
          %4439 = vst [vmem:[%s4021] ss:$2 sm:$0xff] %v3481
          %4440 = vst [vmem:[%s4023] ss:$2 sm:$0xff] %v3956
          %4441 = vst [vmem:[%s4025] ss:$2 sm:$0xff] %v3483
          %v4442 = vld.sshfl [vmem:[#allocation1] sm:$0xff pattern:$0x75316420]
          %v4443 = vld.sshfl [vmem:[#allocation1 + $0x10] sm:$0xff pattern:$0x75316420]
          %v4444 = vld.sshfl [vmem:[#allocation1 + $0x20] sm:$0xff pattern:$0x75316420]
          %v4445 = vld.sshfl [vmem:[#allocation1 + $0x30] sm:$0xff pattern:$0x75316420]
          %4446 = vst [vmem:[#allocation1] ss:$2 sm:$0xff] %v3957
          %4447 = vst [vmem:[%s4013] ss:$2 sm:$0xff] %v3486
          %4448 = vst [vmem:[%s4015] ss:$2 sm:$0xff] %v3958
          %4449 = vst [vmem:[%s4017] ss:$2 sm:$0xff] %v3488
          %4450 = vst [vmem:[%s4019] ss:$2 sm:$0xff] %v3959
          %4451 = vst [vmem:[%s4021] ss:$2 sm:$0xff] %v3491
          %4452 = vst [vmem:[%s4023] ss:$2 sm:$0xff] %v3960
          %4453 = vst [vmem:[%s4025] ss:$2 sm:$0xff] %v3493
          %v4454 = vld.sshfl [vmem:[#allocation1] sm:$0xff pattern:$0x75316420]
          %v4455 = vld.sshfl [vmem:[#allocation1 + $0x10] sm:$0xff pattern:$0x75316420]
          %v4456 = vld.sshfl [vmem:[#allocation1 + $0x20] sm:$0xff pattern:$0x75316420]
          %v4457 = vld.sshfl [vmem:[#allocation1 + $0x30] sm:$0xff pattern:$0x75316420]
          %4458 = vst [vmem:[#allocation1] ss:$2 sm:$0xff] %v3961
          %4459 = vst [vmem:[%s4013] ss:$2 sm:$0xff] %v3496
          %4460 = vst [vmem:[%s4015] ss:$2 sm:$0xff] %v3962
          %v4461 = vld.sshfl [vmem:[#allocation1] sm:$0xff pattern:$0x75316420]
          %v4462 = vld.sshfl [vmem:[#allocation1 + $0x10] sm:$0xff pattern:$0x75316420]
          %4463 = vst [vmem:[%s4019] ss:$2 sm:$0xff] %v3498
          %4464 = vst [vmem:[%s4021] ss:$2 sm:$0xff] %v3963
          %4465 = vst [vmem:[%s4023] ss:$2 sm:$0xff] %v3501
          %4466 = vst [vmem:[%s4025] ss:$2 sm:$0xff] %v3964
          %v4467 = vld.sshfl [vmem:[#allocation1 + $0x20] sm:$0xff pattern:$0x75316420]
          %v4468 = vld.sshfl [vmem:[#allocation1 + $0x30] sm:$0xff pattern:$0x75316420]
          %4469 = vst [vmem:[#allocation1] ss:$2 sm:$0xff] %v3503
          %4470 = vst [vmem:[%s4013] ss:$2 sm:$0xff] %v3965
          %4471 = vst [vmem:[%s4015] ss:$2 sm:$0xff] %v3506
          %4472 = vst [vmem:[%s4017] ss:$2 sm:$0xff] %v3966
          %4473 = vst [vmem:[%s4019] ss:$2 sm:$0xff] %v3508
          %4474 = vst [vmem:[%s4021] ss:$2 sm:$0xff] %v3967
          %4475 = vst [vmem:[%s4023] ss:$2 sm:$0xff] %v3511
          %4476 = vst [vmem:[%s4025] ss:$2 sm:$0xff] %v3968
          %v4477 = vld.sshfl [vmem:[#allocation1] sm:$0xff pattern:$0x75316420]
          %v4478 = vld.sshfl [vmem:[#allocation1 + $0x10] sm:$0xff pattern:$0x75316420]
          %v4479 = vld.sshfl [vmem:[#allocation1 + $0x20] sm:$0xff pattern:$0x75316420]
          %v4480 = vld.sshfl [vmem:[#allocation1 + $0x30] sm:$0xff pattern:$0x75316420]
          %4481 = vst [vmem:[#allocation1] ss:$2 sm:$0xff] %v3513
          %4482 = vst [vmem:[%s4013] ss:$2 sm:$0xff] %v3969
          %4483 = vst [vmem:[%s4015] ss:$2 sm:$0xff] %v3516
          %4484 = vst [vmem:[%s4017] ss:$2 sm:$0xff] %v3970
          %4485 = vst [vmem:[%s4019] ss:$2 sm:$0xff] %v3518
          %4486 = vst [vmem:[%s4021] ss:$2 sm:$0xff] %v3971
          %4487 = vst [vmem:[%s4023] ss:$2 sm:$0xff] %v3521
          %4488 = vst [vmem:[%s4025] ss:$2 sm:$0xff] %v3972
          %v4489 = vld.sshfl [vmem:[#allocation1] sm:$0xff pattern:$0x75316420]
          %v4490 = vld.sshfl [vmem:[#allocation1 + $0x10] sm:$0xff pattern:$0x75316420]
          %v4491 = vld.sshfl [vmem:[#allocation1 + $0x20] sm:$0xff pattern:$0x75316420]
          %v4492 = vld.sshfl [vmem:[#allocation1 + $0x30] sm:$0xff pattern:$0x75316420]
          %4493 = vst [vmem:[#allocation1] ss:$2 sm:$0xff] %v3523
          %4494 = vst [vmem:[%s4013] ss:$2 sm:$0xff] %v3973
          %4495 = vst [vmem:[%s4015] ss:$2 sm:$0xff] %v3526
          %4496 = vst [vmem:[%s4017] ss:$2 sm:$0xff] %v3974
          %4497 = vst [vmem:[%s4019] ss:$2 sm:$0xff] %v3528
          %4498 = vst [vmem:[%s4021] ss:$2 sm:$0xff] %v3975
          %4499 = vst [vmem:[%s4023] ss:$2 sm:$0xff] %v3531
          %4500 = vst [vmem:[%s4025] ss:$2 sm:$0xff] %v3976
          %v4501 = vld.sshfl [vmem:[#allocation1] sm:$0xff pattern:$0x75316420]
          %v4502 = vld.sshfl [vmem:[#allocation1 + $0x10] sm:$0xff pattern:$0x75316420]
          %v4503 = vld.sshfl [vmem:[#allocation1 + $0x20] sm:$0xff pattern:$0x75316420]
          %v4504 = vld.sshfl [vmem:[#allocation1 + $0x30] sm:$0xff pattern:$0x75316420]
          %4505 = vst [vmem:[#allocation1] ss:$2 sm:$0xff] %v3533
          %4506 = vst [vmem:[%s4013] ss:$2 sm:$0xff] %v3977
          %4507 = vst [vmem:[%s4015] ss:$2 sm:$0xff] %v3536
          %4508 = vst [vmem:[%s4017] ss:$2 sm:$0xff] %v3978
          %4509 = vst [vmem:[%s4019] ss:$2 sm:$0xff] %v3538
          %4510 = vst [vmem:[%s4021] ss:$2 sm:$0xff] %v3979
          %4511 = vst [vmem:[%s4023] ss:$2 sm:$0xff] %v3541
          %4512 = vst [vmem:[%s4025] ss:$2 sm:$0xff] %v3980
          %v4513 = vld.sshfl [vmem:[#allocation1] sm:$0xff pattern:$0x75316420]
          %v4514 = vld.sshfl [vmem:[#allocation1 + $0x10] sm:$0xff pattern:$0x75316420]
          %v4515 = vld.sshfl [vmem:[#allocation1 + $0x20] sm:$0xff pattern:$0x75316420]
          %v4516 = vld.sshfl [vmem:[#allocation1 + $0x30] sm:$0xff pattern:$0x75316420]
          %4517 = vst [vmem:[#allocation1] ss:$2 sm:$0xff] %v3543
          %4518 = vst [vmem:[%s4013] ss:$2 sm:$0xff] %v3981
          %4519 = vst [vmem:[%s4015] ss:$2 sm:$0xff] %v3546
          %4520 = vst [vmem:[%s4017] ss:$2 sm:$0xff] %v3982
          %4521 = vst [vmem:[%s4019] ss:$2 sm:$0xff] %v3548
          %4522 = vst [vmem:[%s4021] ss:$2 sm:$0xff] %v3983
          %4523 = vst [vmem:[%s4023] ss:$2 sm:$0xff] %v3551
          %4524 = vst [vmem:[%s4025] ss:$2 sm:$0xff] %v3984
          %v4525 = vld.sshfl [vmem:[#allocation1] sm:$0xff pattern:$0x75316420]
          %v4526 = vld.sshfl [vmem:[#allocation1 + $0x10] sm:$0xff pattern:$0x75316420]
          %v4527 = vld.sshfl [vmem:[#allocation1 + $0x20] sm:$0xff pattern:$0x75316420]
          %v4528 = vld.sshfl [vmem:[#allocation1 + $0x30] sm:$0xff pattern:$0x75316420]
          %4529 = vst [vmem:[#allocation1] ss:$2 sm:$0xff] %v3553
          %4530 = vst [vmem:[%s4013] ss:$2 sm:$0xff] %v3985
          %4531 = vst [vmem:[%s4015] ss:$2 sm:$0xff] %v3556
          %4532 = vst [vmem:[%s4017] ss:$2 sm:$0xff] %v3986
          %4533 = vst [vmem:[%s4019] ss:$2 sm:$0xff] %v3558
          %v4534 = vld.sshfl [vmem:[#allocation1] sm:$0xff pattern:$0x75316420]
          %v4535 = vld.sshfl [vmem:[#allocation1 + $0x10] sm:$0xff pattern:$0x75316420]
          %v4536 = vld.sshfl [vmem:[#allocation1 + $0x20] sm:$0xff pattern:$0x75316420]
          %4537 = vst [vmem:[%s4023] ss:$2 sm:$0xff] %v3987
          %4538 = vst [vmem:[%s4025] ss:$2 sm:$0xff] %v3561
          %v4539 = vld.sshfl [vmem:[#allocation1 + $0x30] sm:$0xff pattern:$0x75316420]
          %4540 = vst [vmem:[#allocation1] ss:$2 sm:$0xff] %v3988
          %4541 = vst [vmem:[%s4013] ss:$2 sm:$0xff] %v3563
          %4542 = vst [vmem:[%s4015] ss:$2 sm:$0xff] %v3989
          %4543 = vst [vmem:[%s4017] ss:$2 sm:$0xff] %v3566
          %4544 = vst [vmem:[%s4019] ss:$2 sm:$0xff] %v3990
          %4545 = vst [vmem:[%s4021] ss:$2 sm:$0xff] %v3568
          %4546 = vst [vmem:[%s4023] ss:$2 sm:$0xff] %v3991
          %4547 = vst [vmem:[%s4025] ss:$2 sm:$0xff] %v3571
          %v4548 = vld.sshfl [vmem:[#allocation1] sm:$0xff pattern:$0x75316420]
          %v4549 = vld.sshfl [vmem:[#allocation1 + $0x10] sm:$0xff pattern:$0x75316420]
          %v4550 = vld.sshfl [vmem:[#allocation1 + $0x20] sm:$0xff pattern:$0x75316420]
          %v4551 = vld.sshfl [vmem:[#allocation1 + $0x30] sm:$0xff pattern:$0x75316420]
          %4552 = vst [vmem:[#allocation1] ss:$2 sm:$0xff] %v3992
          %4553 = vst [vmem:[%s4013] ss:$2 sm:$0xff] %v3573
          %4554 = vst [vmem:[%s4015] ss:$2 sm:$0xff] %v3993
          %4555 = vst [vmem:[%s4017] ss:$2 sm:$0xff] %v3576
          %4556 = vst [vmem:[%s4019] ss:$2 sm:$0xff] %v3994
          %4557 = vst [vmem:[%s4021] ss:$2 sm:$0xff] %v3578
          %4558 = vst [vmem:[%s4023] ss:$2 sm:$0xff] %v3995
          %4559 = vst [vmem:[%s4025] ss:$2 sm:$0xff] %v3581
          %v4560 = vld.sshfl [vmem:[#allocation1] sm:$0xff pattern:$0x75316420]
          %v4561 = vld.sshfl [vmem:[#allocation1 + $0x10] sm:$0xff pattern:$0x75316420]
          %v4562 = vld.sshfl [vmem:[#allocation1 + $0x20] sm:$0xff pattern:$0x75316420]
          %v4563 = vld.sshfl [vmem:[#allocation1 + $0x30] sm:$0xff pattern:$0x75316420]
          %4564 = vst [vmem:[#allocation1] ss:$2 sm:$0xff] %v3996
          %4565 = vst [vmem:[%s4013] ss:$2 sm:$0xff] %v3583
          %4566 = vst [vmem:[%s4015] ss:$2 sm:$0xff] %v3997
          %4567 = vst [vmem:[%s4017] ss:$2 sm:$0xff] %v3586
          %4568 = vst [vmem:[%s4019] ss:$2 sm:$0xff] %v3998
          %4569 = vst [vmem:[%s4021] ss:$2 sm:$0xff] %v3588
          %4570 = vst [vmem:[%s4023] ss:$2 sm:$0xff] %v3999
          %4571 = vst [vmem:[%s4025] ss:$2 sm:$0xff] %v3591
          %v4572 = vld.sshfl [vmem:[#allocation1] sm:$0xff pattern:$0x75316420]
          %v4573 = vld.sshfl [vmem:[#allocation1 + $0x10] sm:$0xff pattern:$0x75316420]
          %v4574 = vld.sshfl [vmem:[#allocation1 + $0x20] sm:$0xff pattern:$0x75316420]
          %v4575 = vld.sshfl [vmem:[#allocation1 + $0x30] sm:$0xff pattern:$0x75316420]
          %4576 = vst [vmem:[#allocation1] ss:$2 sm:$0xff] %v4000
          %4577 = vst [vmem:[%s4013] ss:$2 sm:$0xff] %v3593
          %4578 = vst [vmem:[%s4015] ss:$2 sm:$0xff] %v4001
          %4579 = vst [vmem:[%s4017] ss:$2 sm:$0xff] %v3596
          %4580 = vst [vmem:[%s4019] ss:$2 sm:$0xff] %v4002
          %4581 = vst [vmem:[%s4021] ss:$2 sm:$0xff] %v3598
          %4582 = vst [vmem:[%s4023] ss:$2 sm:$0xff] %v4003
          %4583 = vst [vmem:[%s4025] ss:$2 sm:$0xff] %v3601
          %v4584 = vld.sshfl [vmem:[#allocation1] sm:$0xff pattern:$0x75316420]
          %v4585 = vld.sshfl [vmem:[#allocation1 + $0x10] sm:$0xff pattern:$0x75316420]
          %v4586 = vld.sshfl [vmem:[#allocation1 + $0x20] sm:$0xff pattern:$0x75316420]
          %v4587 = vld.sshfl [vmem:[#allocation1 + $0x30] sm:$0xff pattern:$0x75316420]
          %4588 = vst [vmem:[#allocation1] ss:$2 sm:$0xff] %v4004
          %4589 = vst [vmem:[%s4013] ss:$2 sm:$0xff] %v3603
          %4590 = vst [vmem:[%s4015] ss:$2 sm:$0xff] %v4005
          %4591 = vst [vmem:[%s4017] ss:$2 sm:$0xff] %v3606
          %4592 = vst [vmem:[%s4019] ss:$2 sm:$0xff] %v4006
          %4593 = vst [vmem:[%s4021] ss:$2 sm:$0xff] %v3608
          %4594 = vst [vmem:[%s4023] ss:$2 sm:$0xff] %v4007
          %4595 = vst [vmem:[%s4025] ss:$2 sm:$0xff] %v3611
          %v4596 = vld.sshfl [vmem:[#allocation1] sm:$0xff pattern:$0x75316420]
          %v4597 = vld.sshfl [vmem:[#allocation1 + $0x10] sm:$0xff pattern:$0x75316420]
          %v4598 = vld.sshfl [vmem:[#allocation1 + $0x20] sm:$0xff pattern:$0x75316420]
          %v4599 = vld.sshfl [vmem:[#allocation1 + $0x30] sm:$0xff pattern:$0x75316420]
          %4600 = vst [vmem:[#allocation1] ss:$2 sm:$0xff] %v4008
          %4601 = vst [vmem:[%s4013] ss:$2 sm:$0xff] %v3613
          %4602 = vst [vmem:[%s4015] ss:$2 sm:$0xff] %v4009
          %4603 = vst [vmem:[%s4017] ss:$2 sm:$0xff] %v3616
          %4604 = vst [vmem:[%s4019] ss:$2 sm:$0xff] %v4010
          %4605 = vst [vmem:[%s4021] ss:$2 sm:$0xff] %v3618
          %4606 = vst [vmem:[%s4023] ss:$2 sm:$0xff] %v4011
          %v4607 = vld.sshfl [vmem:[#allocation1] sm:$0xff pattern:$0x75316420]
          %v4608 = vld.sshfl [vmem:[#allocation1 + $0x10] sm:$0xff pattern:$0x75316420]
          %v4609 = vld.sshfl [vmem:[#allocation1 + $0x20] sm:$0xff pattern:$0x75316420]
          %v4610 = vld.sshfl [vmem:[#allocation1 + $0x30] sm:$0xff pattern:$0x75316420]
          %v4811 = vpack.c.bf16 %v4027, %v4027
          %v4812 = vpack.c.bf16 %v4028, %v4028
          %v4813 = vpack.c.bf16 %v4029, %v4029
          %v4814 = vpack.c.bf16 %v4030, %v4030
          %v4815 = vpack.c.bf16 %v4039, %v4039
          %v4816 = vpack.c.bf16 %v4040, %v4040
          %v4817 = vpack.c.bf16 %v4041, %v4041
          %v4818 = vpack.c.bf16 %v4042, %v4042
          %v4819 = vpack.c.bf16 %v4051, %v4051
          %v4820 = vpack.c.bf16 %v4052, %v4052
          %v4821 = vpack.c.bf16 %v4053, %v4053
          %v4822 = vpack.c.bf16 %v4054, %v4054
          %v4823 = vpack.c.bf16 %v4063, %v4063
          %v4824 = vpack.c.bf16 %v4064, %v4064
          %v4825 = vpack.c.bf16 %v4065, %v4065
          %v4826 = vpack.c.bf16 %v4066, %v4066
          %v4827 = vpack.c.bf16 %v4075, %v4075
          %v4828 = vpack.c.bf16 %v4076, %v4076
          %v4829 = vpack.c.bf16 %v4077, %v4077
          %v4830 = vpack.c.bf16 %v4078, %v4078
          %v4831 = vpack.c.bf16 %v4087, %v4087
          %v4832 = vpack.c.bf16 %v4088, %v4088
          %v4833 = vpack.c.bf16 %v4089, %v4089
          %v4834 = vpack.c.bf16 %v4090, %v4090
          %v4835 = vpack.c.bf16 %v4092, %v4092
          %v4836 = vpack.c.bf16 %v4099, %v4099
          %v4837 = vpack.c.bf16 %v4100, %v4100
          %v4838 = vpack.c.bf16 %v4101, %v4101
          %v4839 = vpack.c.bf16 %v4110, %v4110
          %v4840 = vpack.c.bf16 %v4111, %v4111
          %v4841 = vpack.c.bf16 %v4112, %v4112
          %v4842 = vpack.c.bf16 %v4113, %v4113
          %v4843 = vpack.c.bf16 %v4122, %v4122
          %v4844 = vpack.c.bf16 %v4123, %v4123
          %v4845 = vpack.c.bf16 %v4124, %v4124
          %v4846 = vpack.c.bf16 %v4125, %v4125
          %v4847 = vpack.c.bf16 %v4134, %v4134
          %v4848 = vpack.c.bf16 %v4135, %v4135
          %v4849 = vpack.c.bf16 %v4136, %v4136
          %v4850 = vpack.c.bf16 %v4137, %v4137
          %v4851 = vpack.c.bf16 %v4146, %v4146
          %v4852 = vpack.c.bf16 %v4147, %v4147
          %v4853 = vpack.c.bf16 %v4148, %v4148
          %v4854 = vpack.c.bf16 %v4149, %v4149
          %v4855 = vpack.c.bf16 %v4158, %v4158
          %v4856 = vpack.c.bf16 %v4159, %v4159
          %v4857 = vpack.c.bf16 %v4160, %v4160
          %v4858 = vpack.c.bf16 %v4161, %v4161
          %v4859 = vpack.c.bf16 %v4165, %v4165
          %v4860 = vpack.c.bf16 %v4166, %v4166
          %v4861 = vpack.c.bf16 %v4171, %v4171
          %v4862 = vpack.c.bf16 %v4172, %v4172
          %v4863 = vpack.c.bf16 %v4181, %v4181
          %v4864 = vpack.c.bf16 %v4182, %v4182
          %v4865 = vpack.c.bf16 %v4183, %v4183
          %v4866 = vpack.c.bf16 %v4184, %v4184
          %v4867 = vpack.c.bf16 %v4193, %v4193
          %v4868 = vpack.c.bf16 %v4194, %v4194
          %v4869 = vpack.c.bf16 %v4195, %v4195
          %v4870 = vpack.c.bf16 %v4196, %v4196
          %v4871 = vpack.c.bf16 %v4205, %v4205
          %v4872 = vpack.c.bf16 %v4206, %v4206
          %v4873 = vpack.c.bf16 %v4207, %v4207
          %v4874 = vpack.c.bf16 %v4208, %v4208
          %v4875 = vpack.c.bf16 %v4217, %v4217
          %v4876 = vpack.c.bf16 %v4218, %v4218
          %v4877 = vpack.c.bf16 %v4219, %v4219
          %v4878 = vpack.c.bf16 %v4220, %v4220
          %v4879 = vpack.c.bf16 %v4229, %v4229
          %v4880 = vpack.c.bf16 %v4230, %v4230
          %v4881 = vpack.c.bf16 %v4231, %v4231
          %v4882 = vpack.c.bf16 %v4232, %v4232
          %v4883 = vpack.c.bf16 %v4238, %v4238
          %v4884 = vpack.c.bf16 %v4239, %v4239
          %v4885 = vpack.c.bf16 %v4240, %v4240
          %v4886 = vpack.c.bf16 %v4243, %v4243
          %v4887 = vpack.c.bf16 %v4252, %v4252
          %v4888 = vpack.c.bf16 %v4253, %v4253
          %v4889 = vpack.c.bf16 %v4254, %v4254
          %v4890 = vpack.c.bf16 %v4255, %v4255
          %v4891 = vpack.c.bf16 %v4264, %v4264
          %v4892 = vpack.c.bf16 %v4265, %v4265
          %v4893 = vpack.c.bf16 %v4266, %v4266
          %v4894 = vpack.c.bf16 %v4267, %v4267
          %v4895 = vpack.c.bf16 %v4276, %v4276
          %v4896 = vpack.c.bf16 %v4277, %v4277
          %v4897 = vpack.c.bf16 %v4278, %v4278
          %v4898 = vpack.c.bf16 %v4279, %v4279
          %v4899 = vpack.c.bf16 %v4288, %v4288
          %v4900 = vpack.c.bf16 %v4289, %v4289
          %v4901 = vpack.c.bf16 %v4290, %v4290
          %v4902 = vpack.c.bf16 %v4291, %v4291
          %v4903 = vpack.c.bf16 %v4300, %v4300
          %v4904 = vpack.c.bf16 %v4301, %v4301
          %v4905 = vpack.c.bf16 %v4302, %v4302
          %v4906 = vpack.c.bf16 %v4303, %v4303
          %v4907 = vpack.c.bf16 %v4311, %v4311
          %v4908 = vpack.c.bf16 %v4312, %v4312
          %v4909 = vpack.c.bf16 %v4313, %v4313
          %v4910 = vpack.c.bf16 %v4314, %v4314
          %v4911 = vpack.c.bf16 %v4323, %v4323
          %v4912 = vpack.c.bf16 %v4324, %v4324
          %v4913 = vpack.c.bf16 %v4325, %v4325
          %v4914 = vpack.c.bf16 %v4326, %v4326
          %v4915 = vpack.c.bf16 %v4335, %v4335
          %v4916 = vpack.c.bf16 %v4336, %v4336
          %v4917 = vpack.c.bf16 %v4337, %v4337
          %v4918 = vpack.c.bf16 %v4338, %v4338
          %v4919 = vpack.c.bf16 %v4347, %v4347
          %v4920 = vpack.c.bf16 %v4348, %v4348
          %v4921 = vpack.c.bf16 %v4349, %v4349
          %v4922 = vpack.c.bf16 %v4350, %v4350
          %v4923 = vpack.c.bf16 %v4359, %v4359
          %v4924 = vpack.c.bf16 %v4360, %v4360
          %v4925 = vpack.c.bf16 %v4361, %v4361
          %v4926 = vpack.c.bf16 %v4362, %v4362
          %v4927 = vpack.c.bf16 %v4371, %v4371
          %v4928 = vpack.c.bf16 %v4372, %v4372
          %v4929 = vpack.c.bf16 %v4373, %v4373
          %v4930 = vpack.c.bf16 %v4374, %v4374
          %v4931 = vpack.c.bf16 %v4383, %v4383
          %v4932 = vpack.c.bf16 %v4384, %v4384
          %v4933 = vpack.c.bf16 %v4385, %v4385
          %v4934 = vpack.c.bf16 %v4386, %v4386
          %v4935 = vpack.c.bf16 %v4388, %v4388
          %v4936 = vpack.c.bf16 %v4395, %v4395
          %v4937 = vpack.c.bf16 %v4396, %v4396
          %v4938 = vpack.c.bf16 %v4397, %v4397
          %v4939 = vpack.c.bf16 %v4406, %v4406
          %v4940 = vpack.c.bf16 %v4407, %v4407
          %v4941 = vpack.c.bf16 %v4408, %v4408
          %v4942 = vpack.c.bf16 %v4409, %v4409
          %v4943 = vpack.c.bf16 %v4418, %v4418
          %v4944 = vpack.c.bf16 %v4419, %v4419
          %v4945 = vpack.c.bf16 %v4420, %v4420
          %v4946 = vpack.c.bf16 %v4421, %v4421
          %v4947 = vpack.c.bf16 %v4430, %v4430
          %v4948 = vpack.c.bf16 %v4431, %v4431
          %v4949 = vpack.c.bf16 %v4432, %v4432
          %v4950 = vpack.c.bf16 %v4433, %v4433
          %v4951 = vpack.c.bf16 %v4442, %v4442
          %v4952 = vpack.c.bf16 %v4443, %v4443
          %v4953 = vpack.c.bf16 %v4444, %v4444
          %v4954 = vpack.c.bf16 %v4445, %v4445
          %v4955 = vpack.c.bf16 %v4454, %v4454
          %v4956 = vpack.c.bf16 %v4455, %v4455
          %v4957 = vpack.c.bf16 %v4456, %v4456
          %v4958 = vpack.c.bf16 %v4457, %v4457
          %v4959 = vpack.c.bf16 %v4461, %v4461
          %v4960 = vpack.c.bf16 %v4462, %v4462
          %v4961 = vpack.c.bf16 %v4467, %v4467
          %v4962 = vpack.c.bf16 %v4468, %v4468
          %v4963 = vpack.c.bf16 %v4477, %v4477
          %v4964 = vpack.c.bf16 %v4478, %v4478
          %v4965 = vpack.c.bf16 %v4479, %v4479
          %v4966 = vpack.c.bf16 %v4480, %v4480
          %v4967 = vpack.c.bf16 %v4489, %v4489
          %v4968 = vpack.c.bf16 %v4490, %v4490
          %v4969 = vpack.c.bf16 %v4491, %v4491
          %v4970 = vpack.c.bf16 %v4492, %v4492
          %v4971 = vpack.c.bf16 %v4501, %v4501
          %v4972 = vpack.c.bf16 %v4502, %v4502
          %v4973 = vpack.c.bf16 %v4503, %v4503
          %v4974 = vpack.c.bf16 %v4504, %v4504
          %v4975 = vpack.c.bf16 %v4513, %v4513
          %v4976 = vpack.c.bf16 %v4514, %v4514
          %v4977 = vpack.c.bf16 %v4515, %v4515
          %v4978 = vpack.c.bf16 %v4516, %v4516
          %v4979 = vpack.c.bf16 %v4525, %v4525
          %v4980 = vpack.c.bf16 %v4526, %v4526
          %v4981 = vpack.c.bf16 %v4527, %v4527
          %v4982 = vpack.c.bf16 %v4528, %v4528
          %v4983 = vpack.c.bf16 %v4534, %v4534
          %v4984 = vpack.c.bf16 %v4535, %v4535
          %v4985 = vpack.c.bf16 %v4536, %v4536
          %v4986 = vpack.c.bf16 %v4539, %v4539
          %v4987 = vpack.c.bf16 %v4548, %v4548
          %v4988 = vpack.c.bf16 %v4549, %v4549
          %v4989 = vpack.c.bf16 %v4550, %v4550
          %v4990 = vpack.c.bf16 %v4551, %v4551
          %v4991 = vpack.c.bf16 %v4560, %v4560
          %v4992 = vpack.c.bf16 %v4561, %v4561
          %v4993 = vpack.c.bf16 %v4562, %v4562
          %v4994 = vpack.c.bf16 %v4563, %v4563
          %v4995 = vpack.c.bf16 %v4572, %v4572
          %v4996 = vpack.c.bf16 %v4573, %v4573
          %v4997 = vpack.c.bf16 %v4574, %v4574
          %v4998 = vpack.c.bf16 %v4575, %v4575
          %v4999 = vpack.c.bf16 %v4584, %v4584
          %v5000 = vpack.c.bf16 %v4585, %v4585
          %v5001 = vpack.c.bf16 %v4586, %v4586
          %v5002 = vpack.c.bf16 %v4587, %v4587
          %v5003 = vpack.c.bf16 %v4596, %v4596
          %v5004 = vpack.c.bf16 %v4597, %v4597
          %v5005 = vpack.c.bf16 %v4598, %v4598
          %v5006 = vpack.c.bf16 %v4599, %v4599
          %v5007 = vpack.c.bf16 %v4607, %v4607
          %v5008 = vpack.c.bf16 %v4608, %v4608
          %v5009 = vpack.c.bf16 %v4609, %v4609
          %v5010 = vpack.c.bf16 %v4610, %v4610
          %v5011 = vld [vmem:[#allocation4] sm:$0xff]
          %v5012 = vld [vmem:[#allocation4 + $0x8] sm:$0xff]
          %v5013 = vld [vmem:[#allocation9] sm:$0x1]
          %v5015 = vperm.slane %v5013, 0
          %v5019 = vunpack.c.l.b16 %v5011
          %v5020 = vunpack.c.h.b16 %v5011
          %v5021 = vunpack.c.l.b16 %v5012
          %v5022 = vunpack.c.h.b16 %v5012
          %v5023 = vpack.c.b16 %v5021, %v5019
          %v5024 = vpack.c.b16 %v5022, %v5020
          %v5051 = vunpack.c.l.b16 %v4811
          %v5052 = vunpack.c.l.b16 %v4812
          %v5053 = vunpack.c.l.b16 %v4813
          %v5054 = vunpack.c.l.b16 %v4814
          %v5055 = vunpack.c.l.b16 %v4815
          %v5056 = vunpack.c.l.b16 %v4816
          %v5057 = vunpack.c.l.b16 %v4817
          %v5058 = vunpack.c.l.b16 %v4818
          %v5059 = vunpack.c.l.b16 %v4819
          %v5060 = vunpack.c.l.b16 %v4820
          %v5061 = vunpack.c.l.b16 %v4821
          %v5062 = vunpack.c.l.b16 %v4822
          %v5063 = vunpack.c.l.b16 %v4823
          %v5064 = vunpack.c.l.b16 %v4824
          %v5065 = vunpack.c.l.b16 %v4825
          %v5066 = vunpack.c.l.b16 %v4826
          %v5067 = vunpack.c.l.b16 %v4827
          %v5068 = vunpack.c.l.b16 %v4828
          %v5069 = vunpack.c.l.b16 %v4829
          %v5070 = vunpack.c.l.b16 %v4830
          %v5071 = vunpack.c.l.b16 %v4831
          %v5072 = vunpack.c.l.b16 %v4832
          %v5073 = vunpack.c.l.b16 %v4833
          %v5074 = vunpack.c.l.b16 %v4834
          %v5075 = vunpack.c.l.b16 %v4835
          %v5076 = vpack.c.b16 %v5052, %v5051
          %v5077 = vpack.c.b16 %v5054, %v5053
          %v5078 = vpack.c.b16 %v5056, %v5055
          %v5079 = vpack.c.b16 %v5058, %v5057
          %v5080 = vpack.c.b16 %v5060, %v5059
          %v5081 = vpack.c.b16 %v5062, %v5061
          %v5082 = vpack.c.b16 %v5064, %v5063
          %v5083 = vpack.c.b16 %v5066, %v5065
          %v5084 = vpack.c.b16 %v5068, %v5067
          %v5085 = vpack.c.b16 %v5070, %v5069
          %v5086 = vpack.c.b16 %v5072, %v5071
          %v5087 = vpack.c.b16 %v5074, %v5073
          %v5088 = vpack.c.b16 %v5075, %v5075
          %vm5101 = vcmask 556032
          %v5103 = vsel %vm5101, %v5024, 0
          %v5106 = vsel %vm1052, %v5088, 0
          %5108 = vmatpush.bf16.msra.mxu0 %v5083
          %5109 = vmatpush.bf16.msra.mxu0 %v5082
          %5110 = vmatpush.bf16.msra.mxu0 %v5081
          %5111 = vmatpush.bf16.msra.mxu0 %v5080
          %5112 = vmatpush.bf16.msra.mxu0 %v5079
          %5113 = vmatpush.bf16.msra.mxu0 %v5078
          %5114 = vmatpush.bf16.msra.mxu0 %v5077
          %5115 = vmatpush.bf16.msra.mxu0 %v5076
          %5116 = vmatmul.bf16.gmra.mxu0 %v5023
          %v5117 = vpop.f32.mrf.mxu0
          %v5118 = vadd.f32 %v5015, %v5117
          %v5119 = vpop.f32.mrf.mxu0
          %v5120 = vadd.f32 %v5015, %v5119
          %5121 = vdwg.mxu0
          %5122 = vmatpush.bf16.msra.mxu0 0
          %5123 = vmatpush.bf16.msra.mxu0 0
          %5124 = vmatpush.bf16.msra.mxu0 0
          %5125 = vmatpush.bf16.msra.mxu0 %v5106
          %5126 = vmatpush.bf16.msra.mxu0 %v5087
          %5127 = vmatpush.bf16.msra.mxu0 %v5086
          %5128 = vmatpush.bf16.msra.mxu0 %v5085
          %5129 = vmatpush.bf16.msra.mxu0 %v5084
          %5130 = vmatmul.bf16.gmra.mxu0 %v5103
          %v5131 = vpop.f32.mrf.mxu0
          %v5132 = vadd.f32 %v5118, %v5131
          %v5133 = vpop.f32.mrf.mxu0
          %v5134 = vadd.f32 %v5120, %v5133
          %5135 = vdwg.mxu0
          %v5136 = vmax.f32 %v5132, 0.0
          %v5137 = vmax.f32 %v5134, 0.0
          %v5138 = vpack.c.bf16 %v5136, %v5136
          %v5139 = vpack.c.bf16 %v5137, %v5137
          %v5165 = vunpack.c.l.b16 %v4836
          %v5166 = vunpack.c.l.b16 %v4837
          %v5167 = vunpack.c.l.b16 %v4838
          %v5168 = vunpack.c.l.b16 %v4839
          %v5169 = vunpack.c.l.b16 %v4840
          %v5170 = vunpack.c.l.b16 %v4841
          %v5171 = vunpack.c.l.b16 %v4842
          %v5172 = vunpack.c.l.b16 %v4843
          %v5173 = vunpack.c.l.b16 %v4844
          %v5174 = vunpack.c.l.b16 %v4845
          %v5175 = vunpack.c.l.b16 %v4846
          %v5176 = vunpack.c.l.b16 %v4847
          %v5177 = vunpack.c.l.b16 %v4848
          %v5178 = vunpack.c.l.b16 %v4849
          %v5179 = vunpack.c.l.b16 %v4850
          %v5180 = vunpack.c.l.b16 %v4851
          %v5181 = vunpack.c.l.b16 %v4852
          %v5182 = vunpack.c.l.b16 %v4853
          %v5183 = vunpack.c.l.b16 %v4854
          %v5184 = vunpack.c.l.b16 %v4855
          %v5185 = vunpack.c.l.b16 %v4856
          %v5186 = vunpack.c.l.b16 %v4857
          %v5187 = vunpack.c.l.b16 %v4858
          %v5188 = vunpack.c.l.b16 %v4859
          %v5189 = vunpack.c.l.b16 %v4860
          %v5190 = vpack.c.b16 %v5166, %v5165
          %v5191 = vpack.c.b16 %v5168, %v5167
          %v5192 = vpack.c.b16 %v5170, %v5169
          %v5193 = vpack.c.b16 %v5172, %v5171
          %v5194 = vpack.c.b16 %v5174, %v5173
          %v5195 = vpack.c.b16 %v5176, %v5175
          %v5196 = vpack.c.b16 %v5178, %v5177
          %v5197 = vpack.c.b16 %v5180, %v5179
          %v5198 = vpack.c.b16 %v5182, %v5181
          %v5199 = vpack.c.b16 %v5184, %v5183
          %v5200 = vpack.c.b16 %v5186, %v5185
          %v5201 = vpack.c.b16 %v5188, %v5187
          %v5202 = vpack.c.b16 %v5189, %v5189
          %v5216 = vsel %vm1052, %v5202, 0
          %5218 = vmatpush.bf16.msra.mxu0 %v5197
          %5219 = vmatpush.bf16.msra.mxu0 %v5196
          %5220 = vmatpush.bf16.msra.mxu0 %v5195
          %5221 = vmatpush.bf16.msra.mxu0 %v5194
          %5222 = vmatpush.bf16.msra.mxu0 %v5193
          %5223 = vmatpush.bf16.msra.mxu0 %v5192
          %5224 = vmatpush.bf16.msra.mxu0 %v5191
          %5225 = vmatpush.bf16.msra.mxu0 %v5190
          %5226 = vmatmul.bf16.gmra.mxu0 %v5023
          %v5227 = vpop.f32.mrf.mxu0
          %v5228 = vadd.f32 %v5015, %v5227
          %v5229 = vpop.f32.mrf.mxu0
          %v5230 = vadd.f32 %v5015, %v5229
          %5231 = vdwg.mxu0
          %5232 = vmatpush.bf16.msra.mxu0 0
          %5233 = vmatpush.bf16.msra.mxu0 0
          %5234 = vmatpush.bf16.msra.mxu0 0
          %5235 = vmatpush.bf16.msra.mxu0 %v5216
          %5236 = vmatpush.bf16.msra.mxu0 %v5201
          %5237 = vmatpush.bf16.msra.mxu0 %v5200
          %5238 = vmatpush.bf16.msra.mxu0 %v5199
          %5239 = vmatpush.bf16.msra.mxu0 %v5198
          %5240 = vmatmul.bf16.gmra.mxu0 %v5103
          %v5241 = vpop.f32.mrf.mxu0
          %v5242 = vadd.f32 %v5228, %v5241
          %v5243 = vpop.f32.mrf.mxu0
          %v5244 = vadd.f32 %v5230, %v5243
          %5245 = vdwg.mxu0
          %v5246 = vmax.f32 %v5242, 0.0
          %v5247 = vmax.f32 %v5244, 0.0
          %v5248 = vpack.c.bf16 %v5246, %v5246
          %v5249 = vpack.c.bf16 %v5247, %v5247
          %v5275 = vunpack.c.l.b16 %v4861
          %v5276 = vunpack.c.l.b16 %v4862
          %v5277 = vunpack.c.l.b16 %v4863
          %v5278 = vunpack.c.l.b16 %v4864
          %v5279 = vunpack.c.l.b16 %v4865
          %v5280 = vunpack.c.l.b16 %v4866
          %v5281 = vunpack.c.l.b16 %v4867
          %v5282 = vunpack.c.l.b16 %v4868
          %v5283 = vunpack.c.l.b16 %v4869
          %v5284 = vunpack.c.l.b16 %v4870
          %v5285 = vunpack.c.l.b16 %v4871
          %v5286 = vunpack.c.l.b16 %v4872
          %v5287 = vunpack.c.l.b16 %v4873
          %v5288 = vunpack.c.l.b16 %v4874
          %v5289 = vunpack.c.l.b16 %v4875
          %v5290 = vunpack.c.l.b16 %v4876
          %v5291 = vunpack.c.l.b16 %v4877
          %v5292 = vunpack.c.l.b16 %v4878
          %v5293 = vunpack.c.l.b16 %v4879
          %v5294 = vunpack.c.l.b16 %v4880
          %v5295 = vunpack.c.l.b16 %v4881
          %v5296 = vunpack.c.l.b16 %v4882
          %v5297 = vunpack.c.l.b16 %v4883
          %v5298 = vunpack.c.l.b16 %v4884
          %v5299 = vunpack.c.l.b16 %v4885
          %v5300 = vpack.c.b16 %v5276, %v5275
          %v5301 = vpack.c.b16 %v5278, %v5277
          %v5302 = vpack.c.b16 %v5280, %v5279
          %v5303 = vpack.c.b16 %v5282, %v5281
          %v5304 = vpack.c.b16 %v5284, %v5283
          %v5305 = vpack.c.b16 %v5286, %v5285
          %v5306 = vpack.c.b16 %v5288, %v5287
          %v5307 = vpack.c.b16 %v5290, %v5289
          %v5308 = vpack.c.b16 %v5292, %v5291
          %v5309 = vpack.c.b16 %v5294, %v5293
          %v5310 = vpack.c.b16 %v5296, %v5295
          %v5311 = vpack.c.b16 %v5298, %v5297
          %v5312 = vpack.c.b16 %v5299, %v5299
          %v5326 = vsel %vm1052, %v5312, 0
          %5328 = vmatpush.bf16.msra.mxu0 %v5307
          %5329 = vmatpush.bf16.msra.mxu0 %v5306
          %5330 = vmatpush.bf16.msra.mxu0 %v5305
          %5331 = vmatpush.bf16.msra.mxu0 %v5304
          %5332 = vmatpush.bf16.msra.mxu0 %v5303
          %5333 = vmatpush.bf16.msra.mxu0 %v5302
          %5334 = vmatpush.bf16.msra.mxu0 %v5301
          %5335 = vmatpush.bf16.msra.mxu0 %v5300
          %5336 = vmatmul.bf16.gmra.mxu0 %v5023
          %v5337 = vpop.f32.mrf.mxu0
          %v5338 = vadd.f32 %v5015, %v5337
          %v5339 = vpop.f32.mrf.mxu0
          %v5340 = vadd.f32 %v5015, %v5339
          %5341 = vdwg.mxu0
          %5342 = vmatpush.bf16.msra.mxu0 0
          %5343 = vmatpush.bf16.msra.mxu0 0
          %5344 = vmatpush.bf16.msra.mxu0 0
          %5345 = vmatpush.bf16.msra.mxu0 %v5326
          %5346 = vmatpush.bf16.msra.mxu0 %v5311
          %5347 = vmatpush.bf16.msra.mxu0 %v5310
          %5348 = vmatpush.bf16.msra.mxu0 %v5309
          %5349 = vmatpush.bf16.msra.mxu0 %v5308
          %5350 = vmatmul.bf16.gmra.mxu0 %v5103
          %v5351 = vpop.f32.mrf.mxu0
          %v5352 = vadd.f32 %v5338, %v5351
          %v5353 = vpop.f32.mrf.mxu0
          %v5354 = vadd.f32 %v5340, %v5353
          %5355 = vdwg.mxu0
          %v5356 = vmax.f32 %v5352, 0.0
          %v5357 = vmax.f32 %v5354, 0.0
          %v5358 = vpack.c.bf16 %v5356, %v5356
          %v5359 = vpack.c.bf16 %v5357, %v5357
          %v5385 = vunpack.c.l.b16 %v4886
          %v5386 = vunpack.c.l.b16 %v4887
          %v5387 = vunpack.c.l.b16 %v4888
          %v5388 = vunpack.c.l.b16 %v4889
          %v5389 = vunpack.c.l.b16 %v4890
          %v5390 = vunpack.c.l.b16 %v4891
          %v5391 = vunpack.c.l.b16 %v4892
          %v5392 = vunpack.c.l.b16 %v4893
          %v5393 = vunpack.c.l.b16 %v4894
          %v5394 = vunpack.c.l.b16 %v4895
          %v5395 = vunpack.c.l.b16 %v4896
          %v5396 = vunpack.c.l.b16 %v4897
          %v5397 = vunpack.c.l.b16 %v4898
          %v5398 = vunpack.c.l.b16 %v4899
          %v5399 = vunpack.c.l.b16 %v4900
          %v5400 = vunpack.c.l.b16 %v4901
          %v5401 = vunpack.c.l.b16 %v4902
          %v5402 = vunpack.c.l.b16 %v4903
          %v5403 = vunpack.c.l.b16 %v4904
          %v5404 = vunpack.c.l.b16 %v4905
          %v5405 = vunpack.c.l.b16 %v4906
          %v5406 = vunpack.c.l.b16 %v4907
          %v5407 = vunpack.c.l.b16 %v4908
          %v5408 = vunpack.c.l.b16 %v4909
          %v5409 = vunpack.c.l.b16 %v4910
          %v5410 = vpack.c.b16 %v5386, %v5385
          %v5411 = vpack.c.b16 %v5388, %v5387
          %v5412 = vpack.c.b16 %v5390, %v5389
          %v5413 = vpack.c.b16 %v5392, %v5391
          %v5414 = vpack.c.b16 %v5394, %v5393
          %v5415 = vpack.c.b16 %v5396, %v5395
          %v5416 = vpack.c.b16 %v5398, %v5397
          %v5417 = vpack.c.b16 %v5400, %v5399
          %v5418 = vpack.c.b16 %v5402, %v5401
          %v5419 = vpack.c.b16 %v5404, %v5403
          %v5420 = vpack.c.b16 %v5406, %v5405
          %v5421 = vpack.c.b16 %v5408, %v5407
          %v5422 = vpack.c.b16 %v5409, %v5409
          %v5436 = vsel %vm1052, %v5422, 0
          %5438 = vmatpush.bf16.msra.mxu0 %v5417
          %5439 = vmatpush.bf16.msra.mxu0 %v5416
          %5440 = vmatpush.bf16.msra.mxu0 %v5415
          %5441 = vmatpush.bf16.msra.mxu0 %v5414
          %5442 = vmatpush.bf16.msra.mxu0 %v5413
          %5443 = vmatpush.bf16.msra.mxu0 %v5412
          %5444 = vmatpush.bf16.msra.mxu0 %v5411
          %5445 = vmatpush.bf16.msra.mxu0 %v5410
          %5446 = vmatmul.bf16.gmra.mxu0 %v5023
          %v5447 = vpop.f32.mrf.mxu0
          %v5448 = vadd.f32 %v5015, %v5447
          %v5449 = vpop.f32.mrf.mxu0
          %v5450 = vadd.f32 %v5015, %v5449
          %5451 = vdwg.mxu0
          %5452 = vmatpush.bf16.msra.mxu0 0
          %5453 = vmatpush.bf16.msra.mxu0 0
          %5454 = vmatpush.bf16.msra.mxu0 0
          %5455 = vmatpush.bf16.msra.mxu0 %v5436
          %5456 = vmatpush.bf16.msra.mxu0 %v5421
          %5457 = vmatpush.bf16.msra.mxu0 %v5420
          %5458 = vmatpush.bf16.msra.mxu0 %v5419
          %5459 = vmatpush.bf16.msra.mxu0 %v5418
          %5460 = vmatmul.bf16.gmra.mxu0 %v5103
          %v5461 = vpop.f32.mrf.mxu0
          %v5462 = vadd.f32 %v5448, %v5461
          %v5463 = vpop.f32.mrf.mxu0
          %v5464 = vadd.f32 %v5450, %v5463
          %5465 = vdwg.mxu0
          %v5466 = vmax.f32 %v5462, 0.0
          %v5467 = vmax.f32 %v5464, 0.0
          %v5468 = vpack.c.bf16 %v5466, %v5466
          %v5469 = vpack.c.bf16 %v5467, %v5467
          %v5495 = vunpack.c.l.b16 %v4911
          %v5496 = vunpack.c.l.b16 %v4912
          %v5497 = vunpack.c.l.b16 %v4913
          %v5498 = vunpack.c.l.b16 %v4914
          %v5499 = vunpack.c.l.b16 %v4915
          %v5500 = vunpack.c.l.b16 %v4916
          %v5501 = vunpack.c.l.b16 %v4917
          %v5502 = vunpack.c.l.b16 %v4918
          %v5503 = vunpack.c.l.b16 %v4919
          %v5504 = vunpack.c.l.b16 %v4920
          %v5505 = vunpack.c.l.b16 %v4921
          %v5506 = vunpack.c.l.b16 %v4922
          %v5507 = vunpack.c.l.b16 %v4923
          %v5508 = vunpack.c.l.b16 %v4924
          %v5509 = vunpack.c.l.b16 %v4925
          %v5510 = vunpack.c.l.b16 %v4926
          %v5511 = vunpack.c.l.b16 %v4927
          %v5512 = vunpack.c.l.b16 %v4928
          %v5513 = vunpack.c.l.b16 %v4929
          %v5514 = vunpack.c.l.b16 %v4930
          %v5515 = vunpack.c.l.b16 %v4931
          %v5516 = vunpack.c.l.b16 %v4932
          %v5517 = vunpack.c.l.b16 %v4933
          %v5518 = vunpack.c.l.b16 %v4934
          %v5519 = vunpack.c.l.b16 %v4935
          %v5520 = vpack.c.b16 %v5496, %v5495
          %v5521 = vpack.c.b16 %v5498, %v5497
          %v5522 = vpack.c.b16 %v5500, %v5499
          %v5523 = vpack.c.b16 %v5502, %v5501
          %v5524 = vpack.c.b16 %v5504, %v5503
          %v5525 = vpack.c.b16 %v5506, %v5505
          %v5526 = vpack.c.b16 %v5508, %v5507
          %v5527 = vpack.c.b16 %v5510, %v5509
          %v5528 = vpack.c.b16 %v5512, %v5511
          %v5529 = vpack.c.b16 %v5514, %v5513
          %v5530 = vpack.c.b16 %v5516, %v5515
          %v5531 = vpack.c.b16 %v5518, %v5517
          %v5532 = vpack.c.b16 %v5519, %v5519
          %v5546 = vsel %vm1052, %v5532, 0
          %5548 = vmatpush.bf16.msra.mxu0 %v5527
          %5549 = vmatpush.bf16.msra.mxu0 %v5526
          %5550 = vmatpush.bf16.msra.mxu0 %v5525
          %5551 = vmatpush.bf16.msra.mxu0 %v5524
          %5552 = vmatpush.bf16.msra.mxu0 %v5523
          %5553 = vmatpush.bf16.msra.mxu0 %v5522
          %5554 = vmatpush.bf16.msra.mxu0 %v5521
          %5555 = vmatpush.bf16.msra.mxu0 %v5520
          %5556 = vmatmul.bf16.gmra.mxu0 %v5023
          %v5557 = vpop.f32.mrf.mxu0
          %v5558 = vadd.f32 %v5015, %v5557
          %v5559 = vpop.f32.mrf.mxu0
          %v5560 = vadd.f32 %v5015, %v5559
          %5561 = vdwg.mxu0
          %5562 = vmatpush.bf16.msra.mxu0 0
          %5563 = vmatpush.bf16.msra.mxu0 0
          %5564 = vmatpush.bf16.msra.mxu0 0
          %5565 = vmatpush.bf16.msra.mxu0 %v5546
          %5566 = vmatpush.bf16.msra.mxu0 %v5531
          %5567 = vmatpush.bf16.msra.mxu0 %v5530
          %5568 = vmatpush.bf16.msra.mxu0 %v5529
          %5569 = vmatpush.bf16.msra.mxu0 %v5528
          %5570 = vmatmul.bf16.gmra.mxu0 %v5103
          %v5571 = vpop.f32.mrf.mxu0
          %v5572 = vadd.f32 %v5558, %v5571
          %v5573 = vpop.f32.mrf.mxu0
          %v5574 = vadd.f32 %v5560, %v5573
          %5575 = vdwg.mxu0
          %v5576 = vmax.f32 %v5572, 0.0
          %v5577 = vmax.f32 %v5574, 0.0
          %v5578 = vpack.c.bf16 %v5576, %v5576
          %v5579 = vpack.c.bf16 %v5577, %v5577
          %v5605 = vunpack.c.l.b16 %v4936
          %v5606 = vunpack.c.l.b16 %v4937
          %v5607 = vunpack.c.l.b16 %v4938
          %v5608 = vunpack.c.l.b16 %v4939
          %v5609 = vunpack.c.l.b16 %v4940
          %v5610 = vunpack.c.l.b16 %v4941
          %v5611 = vunpack.c.l.b16 %v4942
          %v5612 = vunpack.c.l.b16 %v4943
          %v5613 = vunpack.c.l.b16 %v4944
          %v5614 = vunpack.c.l.b16 %v4945
          %v5615 = vunpack.c.l.b16 %v4946
          %v5616 = vunpack.c.l.b16 %v4947
          %v5617 = vunpack.c.l.b16 %v4948
          %v5618 = vunpack.c.l.b16 %v4949
          %v5619 = vunpack.c.l.b16 %v4950
          %v5620 = vunpack.c.l.b16 %v4951
          %v5621 = vunpack.c.l.b16 %v4952
          %v5622 = vunpack.c.l.b16 %v4953
          %v5623 = vunpack.c.l.b16 %v4954
          %v5624 = vunpack.c.l.b16 %v4955
          %v5625 = vunpack.c.l.b16 %v4956
          %v5626 = vunpack.c.l.b16 %v4957
          %v5627 = vunpack.c.l.b16 %v4958
          %v5628 = vunpack.c.l.b16 %v4959
          %v5629 = vunpack.c.l.b16 %v4960
          %v5630 = vpack.c.b16 %v5606, %v5605
          %v5631 = vpack.c.b16 %v5608, %v5607
          %v5632 = vpack.c.b16 %v5610, %v5609
          %v5633 = vpack.c.b16 %v5612, %v5611
          %v5634 = vpack.c.b16 %v5614, %v5613
          %v5635 = vpack.c.b16 %v5616, %v5615
          %v5636 = vpack.c.b16 %v5618, %v5617
          %v5637 = vpack.c.b16 %v5620, %v5619
          %v5638 = vpack.c.b16 %v5622, %v5621
          %v5639 = vpack.c.b16 %v5624, %v5623
          %v5640 = vpack.c.b16 %v5626, %v5625
          %v5641 = vpack.c.b16 %v5628, %v5627
          %v5642 = vpack.c.b16 %v5629, %v5629
          %v5656 = vsel %vm1052, %v5642, 0
          %5658 = vmatpush.bf16.msra.mxu0 %v5637
          %5659 = vmatpush.bf16.msra.mxu0 %v5636
          %5660 = vmatpush.bf16.msra.mxu0 %v5635
          %5661 = vmatpush.bf16.msra.mxu0 %v5634
          %5662 = vmatpush.bf16.msra.mxu0 %v5633
          %5663 = vmatpush.bf16.msra.mxu0 %v5632
          %5664 = vmatpush.bf16.msra.mxu0 %v5631
          %5665 = vmatpush.bf16.msra.mxu0 %v5630
          %5666 = vmatmul.bf16.gmra.mxu0 %v5023
          %v5667 = vpop.f32.mrf.mxu0
          %v5668 = vadd.f32 %v5015, %v5667
          %v5669 = vpop.f32.mrf.mxu0
          %v5670 = vadd.f32 %v5015, %v5669
          %5671 = vdwg.mxu0
          %5672 = vmatpush.bf16.msra.mxu0 0
          %5673 = vmatpush.bf16.msra.mxu0 0
          %5674 = vmatpush.bf16.msra.mxu0 0
          %5675 = vmatpush.bf16.msra.mxu0 %v5656
          %5676 = vmatpush.bf16.msra.mxu0 %v5641
          %5677 = vmatpush.bf16.msra.mxu0 %v5640
          %5678 = vmatpush.bf16.msra.mxu0 %v5639
          %5679 = vmatpush.bf16.msra.mxu0 %v5638
          %5680 = vmatmul.bf16.gmra.mxu0 %v5103
          %v5681 = vpop.f32.mrf.mxu0
          %v5682 = vadd.f32 %v5668, %v5681
          %v5683 = vpop.f32.mrf.mxu0
          %v5684 = vadd.f32 %v5670, %v5683
          %5685 = vdwg.mxu0
          %v5686 = vmax.f32 %v5682, 0.0
          %v5687 = vmax.f32 %v5684, 0.0
          %v5688 = vpack.c.bf16 %v5686, %v5686
          %v5689 = vpack.c.bf16 %v5687, %v5687
          %v5715 = vunpack.c.l.b16 %v4961
          %v5716 = vunpack.c.l.b16 %v4962
          %v5717 = vunpack.c.l.b16 %v4963
          %v5718 = vunpack.c.l.b16 %v4964
          %v5719 = vunpack.c.l.b16 %v4965
          %v5720 = vunpack.c.l.b16 %v4966
          %v5721 = vunpack.c.l.b16 %v4967
          %v5722 = vunpack.c.l.b16 %v4968
          %v5723 = vunpack.c.l.b16 %v4969
          %v5724 = vunpack.c.l.b16 %v4970
          %v5725 = vunpack.c.l.b16 %v4971
          %v5726 = vunpack.c.l.b16 %v4972
          %v5727 = vunpack.c.l.b16 %v4973
          %v5728 = vunpack.c.l.b16 %v4974
          %v5729 = vunpack.c.l.b16 %v4975
          %v5730 = vunpack.c.l.b16 %v4976
          %v5731 = vunpack.c.l.b16 %v4977
          %v5732 = vunpack.c.l.b16 %v4978
          %v5733 = vunpack.c.l.b16 %v4979
          %v5734 = vunpack.c.l.b16 %v4980
          %v5735 = vunpack.c.l.b16 %v4981
          %v5736 = vunpack.c.l.b16 %v4982
          %v5737 = vunpack.c.l.b16 %v4983
          %v5738 = vunpack.c.l.b16 %v4984
          %v5739 = vunpack.c.l.b16 %v4985
          %v5740 = vpack.c.b16 %v5716, %v5715
          %v5741 = vpack.c.b16 %v5718, %v5717
          %v5742 = vpack.c.b16 %v5720, %v5719
          %v5743 = vpack.c.b16 %v5722, %v5721
          %v5744 = vpack.c.b16 %v5724, %v5723
          %v5745 = vpack.c.b16 %v5726, %v5725
          %v5746 = vpack.c.b16 %v5728, %v5727
          %v5747 = vpack.c.b16 %v5730, %v5729
          %v5748 = vpack.c.b16 %v5732, %v5731
          %v5749 = vpack.c.b16 %v5734, %v5733
          %v5750 = vpack.c.b16 %v5736, %v5735
          %v5751 = vpack.c.b16 %v5738, %v5737
          %v5752 = vpack.c.b16 %v5739, %v5739
          %v5766 = vsel %vm1052, %v5752, 0
          %5768 = vmatpush.bf16.msra.mxu0 %v5747
          %5769 = vmatpush.bf16.msra.mxu0 %v5746
          %5770 = vmatpush.bf16.msra.mxu0 %v5745
          %5771 = vmatpush.bf16.msra.mxu0 %v5744
          %5772 = vmatpush.bf16.msra.mxu0 %v5743
          %5773 = vmatpush.bf16.msra.mxu0 %v5742
          %5774 = vmatpush.bf16.msra.mxu0 %v5741
          %5775 = vmatpush.bf16.msra.mxu0 %v5740
          %5776 = vmatmul.bf16.gmra.mxu0 %v5023
          %v5777 = vpop.f32.mrf.mxu0
          %v5778 = vadd.f32 %v5015, %v5777
          %v5779 = vpop.f32.mrf.mxu0
          %v5780 = vadd.f32 %v5015, %v5779
          %5781 = vdwg.mxu0
          %5782 = vmatpush.bf16.msra.mxu0 0
          %5783 = vmatpush.bf16.msra.mxu0 0
          %5784 = vmatpush.bf16.msra.mxu0 0
          %5785 = vmatpush.bf16.msra.mxu0 %v5766
          %5786 = vmatpush.bf16.msra.mxu0 %v5751
          %5787 = vmatpush.bf16.msra.mxu0 %v5750
          %5788 = vmatpush.bf16.msra.mxu0 %v5749
          %5789 = vmatpush.bf16.msra.mxu0 %v5748
          %5790 = vmatmul.bf16.gmra.mxu0 %v5103
          %v5791 = vpop.f32.mrf.mxu0
          %v5792 = vadd.f32 %v5778, %v5791
          %v5793 = vpop.f32.mrf.mxu0
          %v5794 = vadd.f32 %v5780, %v5793
          %5795 = vdwg.mxu0
          %v5796 = vmax.f32 %v5792, 0.0
          %v5797 = vmax.f32 %v5794, 0.0
          %v5798 = vpack.c.bf16 %v5796, %v5796
          %v5799 = vpack.c.bf16 %v5797, %v5797
          %v5825 = vunpack.c.l.b16 %v4986
          %v5826 = vunpack.c.l.b16 %v4987
          %v5827 = vunpack.c.l.b16 %v4988
          %v5828 = vunpack.c.l.b16 %v4989
          %v5829 = vunpack.c.l.b16 %v4990
          %v5830 = vunpack.c.l.b16 %v4991
          %v5831 = vunpack.c.l.b16 %v4992
          %v5832 = vunpack.c.l.b16 %v4993
          %v5833 = vunpack.c.l.b16 %v4994
          %v5834 = vunpack.c.l.b16 %v4995
          %v5835 = vunpack.c.l.b16 %v4996
          %v5836 = vunpack.c.l.b16 %v4997
          %v5837 = vunpack.c.l.b16 %v4998
          %v5838 = vunpack.c.l.b16 %v4999
          %v5839 = vunpack.c.l.b16 %v5000
          %v5840 = vunpack.c.l.b16 %v5001
          %v5841 = vunpack.c.l.b16 %v5002
          %v5842 = vunpack.c.l.b16 %v5003
          %v5843 = vunpack.c.l.b16 %v5004
          %v5844 = vunpack.c.l.b16 %v5005
          %v5845 = vunpack.c.l.b16 %v5006
          %v5846 = vunpack.c.l.b16 %v5007
          %v5847 = vunpack.c.l.b16 %v5008
          %v5848 = vunpack.c.l.b16 %v5009
          %v5849 = vunpack.c.l.b16 %v5010
          %v5850 = vpack.c.b16 %v5826, %v5825
          %v5851 = vpack.c.b16 %v5828, %v5827
          %v5852 = vpack.c.b16 %v5830, %v5829
          %v5853 = vpack.c.b16 %v5832, %v5831
          %v5854 = vpack.c.b16 %v5834, %v5833
          %v5855 = vpack.c.b16 %v5836, %v5835
          %v5856 = vpack.c.b16 %v5838, %v5837
          %v5857 = vpack.c.b16 %v5840, %v5839
          %v5858 = vpack.c.b16 %v5842, %v5841
          %v5859 = vpack.c.b16 %v5844, %v5843
          %v5860 = vpack.c.b16 %v5846, %v5845
          %v5861 = vpack.c.b16 %v5848, %v5847
          %v5862 = vpack.c.b16 %v5849, %v5849
          %v5876 = vsel %vm1052, %v5862, 0
          %5878 = vmatpush.bf16.msra.mxu0 %v5857
          %5879 = vmatpush.bf16.msra.mxu0 %v5856
          %5880 = vmatpush.bf16.msra.mxu0 %v5855
          %5881 = vmatpush.bf16.msra.mxu0 %v5854
          %5882 = vmatpush.bf16.msra.mxu0 %v5853
          %5883 = vmatpush.bf16.msra.mxu0 %v5852
          %5884 = vmatpush.bf16.msra.mxu0 %v5851
          %5885 = vmatpush.bf16.msra.mxu0 %v5850
          %5886 = vmatmul.bf16.gmra.mxu0 %v5023
          %v5887 = vpop.f32.mrf.mxu0
          %v5888 = vadd.f32 %v5015, %v5887
          %v5889 = vpop.f32.mrf.mxu0
          %v5890 = vadd.f32 %v5015, %v5889
          %5891 = vdwg.mxu0
          %5892 = vmatpush.bf16.msra.mxu0 0
          %5893 = vmatpush.bf16.msra.mxu0 0
          %5894 = vmatpush.bf16.msra.mxu0 0
          %5895 = vmatpush.bf16.msra.mxu0 %v5876
          %5896 = vmatpush.bf16.msra.mxu0 %v5861
          %5897 = vmatpush.bf16.msra.mxu0 %v5860
          %5898 = vmatpush.bf16.msra.mxu0 %v5859
          %5899 = vmatpush.bf16.msra.mxu0 %v5858
          %5900 = vmatmul.bf16.gmra.mxu0 %v5103
          %v5901 = vpop.f32.mrf.mxu0
          %v5902 = vadd.f32 %v5888, %v5901
          %v5903 = vpop.f32.mrf.mxu0
          %v5904 = vadd.f32 %v5890, %v5903
          %5905 = vdwg.mxu0
          %v5906 = vmax.f32 %v5902, 0.0
          %v5907 = vmax.f32 %v5904, 0.0
          %v5908 = vpack.c.bf16 %v5906, %v5906
          %v5909 = vpack.c.bf16 %v5907, %v5907
          %v5912 = vunpack.c.l.b16 %v5138
          %v5913 = vunpack.c.l.b16 %v5139
          %v5914 = vpack.c.b16 %v5913, %v5912
          %v5915 = vunpack.i.l.s16 %v5914
          %v5916 = vunpack.i.h.s16 %v5914
          %v5917 = vpack.c.b16 %v5916, %v5915
          %v5920 = vunpack.c.l.b16 %v5248
          %v5921 = vunpack.c.l.b16 %v5249
          %v5922 = vpack.c.b16 %v5921, %v5920
          %v5923 = vunpack.i.l.s16 %v5922
          %v5924 = vunpack.i.h.s16 %v5922
          %v5925 = vpack.c.b16 %v5924, %v5923
          %v5928 = vunpack.c.l.b16 %v5358
          %v5929 = vunpack.c.l.b16 %v5359
          %v5930 = vpack.c.b16 %v5929, %v5928
          %v5931 = vunpack.i.l.s16 %v5930
          %v5932 = vunpack.i.h.s16 %v5930
          %v5933 = vpack.c.b16 %v5932, %v5931
          %v5936 = vunpack.c.l.b16 %v5468
          %v5937 = vunpack.c.l.b16 %v5469
          %v5938 = vpack.c.b16 %v5937, %v5936
          %v5939 = vunpack.i.l.s16 %v5938
          %v5940 = vunpack.i.h.s16 %v5938
          %v5941 = vpack.c.b16 %v5940, %v5939
          %v5944 = vunpack.c.l.b16 %v5578
          %v5945 = vunpack.c.l.b16 %v5579
          %v5946 = vpack.c.b16 %v5945, %v5944
          %v5947 = vunpack.i.l.s16 %v5946
          %v5948 = vunpack.i.h.s16 %v5946
          %v5949 = vpack.c.b16 %v5948, %v5947
          %v5952 = vunpack.c.l.b16 %v5688
          %v5953 = vunpack.c.l.b16 %v5689
          %v5954 = vpack.c.b16 %v5953, %v5952
          %v5955 = vunpack.i.l.s16 %v5954
          %v5956 = vunpack.i.h.s16 %v5954
          %v5957 = vpack.c.b16 %v5956, %v5955
          %v5960 = vunpack.c.l.b16 %v5798
          %v5961 = vunpack.c.l.b16 %v5799
          %v5962 = vpack.c.b16 %v5961, %v5960
          %v5963 = vunpack.i.l.s16 %v5962
          %v5964 = vunpack.i.h.s16 %v5962
          %v5965 = vpack.c.b16 %v5964, %v5963
          %v5968 = vunpack.c.l.b16 %v5908
          %v5969 = vunpack.c.l.b16 %v5909
          %v5970 = vpack.c.b16 %v5969, %v5968
          %v5971 = vunpack.i.l.s16 %v5970
          %v5972 = vunpack.i.h.s16 %v5970
          %v5973 = vpack.c.b16 %v5972, %v5971
          %v5974 = vunpack.c.l.b16 %v5917
          %v5975 = vunpack.c.h.b16 %v5917
          %v5976 = vunpack.c.l.b16 %v5925
          %v5977 = vunpack.c.h.b16 %v5925
          %v5978 = vunpack.c.l.b16 %v5933
          %v5979 = vunpack.c.h.b16 %v5933
          %v5980 = vunpack.c.l.b16 %v5941
          %v5981 = vunpack.c.h.b16 %v5941
          %v5982 = vunpack.c.l.b16 %v5949
          %v5983 = vunpack.c.h.b16 %v5949
          %v5984 = vunpack.c.l.b16 %v5957
          %v5985 = vunpack.c.h.b16 %v5957
          %v5986 = vunpack.c.l.b16 %v5965
          %v5987 = vunpack.c.h.b16 %v5965
          %v5988 = vunpack.c.l.b16 %v5973
          %v5989 = vunpack.c.h.b16 %v5973
          %v5990 = vrot.slane %v5976, 7
          %vm5991 = vcmask 1041409
          %v5992 = vsel %vm5991, %v5990, %v5974
          %v5993 = vrot.slane %v5978, 6
          %vm5994 = vcmask 1042434
          %v5995 = vsel %vm5994, %v5993, %v5992
          %v5996 = vrot.slane %v5980, 5
          %vm5997 = vcmask 1043459
          %v5998 = vsel %vm5997, %v5996, %v5995
          %v5999 = vrot.slane %v5982, 4
          %vm6000 = vcmask 1044484
          %v6001 = vsel %vm6000, %v5999, %v5998
          %v6002 = vrot.slane %v5984, 3
          %vm6003 = vcmask 1045509
          %v6004 = vsel %vm6003, %v6002, %v6001
          %v6005 = vrot.slane %v5986, 2
          %vm6006 = vcmask 1046534
          %v6007 = vsel %vm6006, %v6005, %v6004
          %v6008 = vrot.slane %v5988, 1
          %vm6009 = vcmask 1047559
          %v6010 = vsel %vm6009, %v6008, %v6007
          %v6011 = vrot.slane %v5977, 7
          %v6012 = vsel %vm5991, %v6011, %v5975
          %v6013 = vrot.slane %v5979, 6
          %v6014 = vsel %vm5994, %v6013, %v6012
          %v6015 = vrot.slane %v5981, 5
          %v6016 = vsel %vm5997, %v6015, %v6014
          %v6017 = vrot.slane %v5983, 4
          %v6018 = vsel %vm6000, %v6017, %v6016
          %v6019 = vrot.slane %v5985, 3
          %v6020 = vsel %vm6003, %v6019, %v6018
          %v6021 = vrot.slane %v5987, 2
          %v6022 = vsel %vm6006, %v6021, %v6020
          %v6023 = vrot.slane %v5989, 1
          %v6024 = vsel %vm6009, %v6023, %v6022
          %v6025 = vpack.c.b16 %v6024, %v6010
          %6027 = vst [vmem:[#allocation2] sm:$0xff] %v6025
          %v6028 = vrot.slane %v5974, 1
          %v6029 = vsel %vm5991, %v5976, %v6028
          %v6030 = vrot.slane %v5978, 7
          %v6031 = vsel %vm5994, %v6030, %v6029
          %v6032 = vrot.slane %v5980, 6
          %v6033 = vsel %vm5997, %v6032, %v6031
          %v6034 = vrot.slane %v5982, 5
          %v6035 = vsel %vm6000, %v6034, %v6033
          %v6036 = vrot.slane %v5984, 4
          %v6037 = vsel %vm6003, %v6036, %v6035
          %v6038 = vrot.slane %v5986, 3
          %v6039 = vsel %vm6006, %v6038, %v6037
          %v6040 = vrot.slane %v5988, 2
          %v6041 = vsel %vm6009, %v6040, %v6039
          %v6042 = vrot.slane %v5975, 1
          %v6043 = vsel %vm5991, %v5977, %v6042
          %v6044 = vrot.slane %v5979, 7
          %v6045 = vsel %vm5994, %v6044, %v6043
          %v6046 = vrot.slane %v5981, 6
          %v6047 = vsel %vm5997, %v6046, %v6045
          %v6048 = vrot.slane %v5983, 5
          %v6049 = vsel %vm6000, %v6048, %v6047
          %v6050 = vrot.slane %v5985, 4
          %v6051 = vsel %vm6003, %v6050, %v6049
          %v6052 = vrot.slane %v5987, 3
          %v6053 = vsel %vm6006, %v6052, %v6051
          %v6054 = vrot.slane %v5989, 2
          %v6055 = vsel %vm6009, %v6054, %v6053
          %v6056 = vpack.c.b16 %v6055, %v6041
          %s6058 = scalar_lea.vmem [#allocation2], 8
          %6059 = vst [vmem:[%s6058] sm:$0xff] %v6056
          %v6060 = vrot.slane %v5974, 2
          %v6061 = vrot.slane %v5976, 1
          %v6062 = vsel %vm5991, %v6061, %v6060
          %v6063 = vsel %vm5994, %v5978, %v6062
          %v6064 = vrot.slane %v5980, 7
          %v6065 = vsel %vm5997, %v6064, %v6063
          %v6066 = vrot.slane %v5982, 6
          %v6067 = vsel %vm6000, %v6066, %v6065
          %v6068 = vrot.slane %v5984, 5
          %v6069 = vsel %vm6003, %v6068, %v6067
          %v6070 = vrot.slane %v5986, 4
          %v6071 = vsel %vm6006, %v6070, %v6069
          %v6072 = vrot.slane %v5988, 3
          %v6073 = vsel %vm6009, %v6072, %v6071
          %v6074 = vrot.slane %v5975, 2
          %v6075 = vrot.slane %v5977, 1
          %v6076 = vsel %vm5991, %v6075, %v6074
          %v6077 = vsel %vm5994, %v5979, %v6076
          %v6078 = vrot.slane %v5981, 7
          %v6079 = vsel %vm5997, %v6078, %v6077
          %v6080 = vrot.slane %v5983, 6
          %v6081 = vsel %vm6000, %v6080, %v6079
          %v6082 = vrot.slane %v5985, 5
          %v6083 = vsel %vm6003, %v6082, %v6081
          %v6084 = vrot.slane %v5987, 4
          %v6085 = vsel %vm6006, %v6084, %v6083
          %v6086 = vrot.slane %v5989, 3
          %v6087 = vsel %vm6009, %v6086, %v6085
          %v6088 = vpack.c.b16 %v6087, %v6073
          %s6090 = scalar_lea.vmem [#allocation2], 16
          %6091 = vst [vmem:[%s6090] sm:$0xff] %v6088
          %v6092 = vrot.slane %v5974, 3
          %v6093 = vrot.slane %v5976, 2
          %v6094 = vsel %vm5991, %v6093, %v6092
          %v6095 = vrot.slane %v5978, 1
          %v6096 = vsel %vm5994, %v6095, %v6094
          %v6097 = vsel %vm5997, %v5980, %v6096
          %v6098 = vrot.slane %v5982, 7
          %v6099 = vsel %vm6000, %v6098, %v6097
          %v6100 = vrot.slane %v5984, 6
          %v6101 = vsel %vm6003, %v6100, %v6099
          %v6102 = vrot.slane %v5986, 5
          %v6103 = vsel %vm6006, %v6102, %v6101
          %v6104 = vrot.slane %v5988, 4
          %v6105 = vsel %vm6009, %v6104, %v6103
          %v6106 = vrot.slane %v5975, 3
          %v6107 = vrot.slane %v5977, 2
          %v6108 = vsel %vm5991, %v6107, %v6106
          %v6109 = vrot.slane %v5979, 1
          %v6110 = vsel %vm5994, %v6109, %v6108
          %v6111 = vsel %vm5997, %v5981, %v6110
          %v6112 = vrot.slane %v5983, 7
          %v6113 = vsel %vm6000, %v6112, %v6111
          %v6114 = vrot.slane %v5985, 6
          %v6115 = vsel %vm6003, %v6114, %v6113
          %v6116 = vrot.slane %v5987, 5
          %v6117 = vsel %vm6006, %v6116, %v6115
          %v6118 = vrot.slane %v5989, 4
          %v6119 = vsel %vm6009, %v6118, %v6117
          %v6120 = vpack.c.b16 %v6119, %v6105
          %s6122 = scalar_lea.vmem [#allocation2], 24
          %6123 = vst [vmem:[%s6122] sm:$0xff] %v6120
          %v6124 = vrot.slane %v5974, 4
          %v6125 = vrot.slane %v5976, 3
          %v6126 = vsel %vm5991, %v6125, %v6124
          %v6127 = vrot.slane %v5978, 2
          %v6128 = vsel %vm5994, %v6127, %v6126
          %v6129 = vrot.slane %v5980, 1
          %v6130 = vsel %vm5997, %v6129, %v6128
          %v6131 = vsel %vm6000, %v5982, %v6130
          %v6132 = vrot.slane %v5984, 7
          %v6133 = vsel %vm6003, %v6132, %v6131
          %v6134 = vrot.slane %v5986, 6
          %v6135 = vsel %vm6006, %v6134, %v6133
          %v6136 = vrot.slane %v5988, 5
          %v6137 = vsel %vm6009, %v6136, %v6135
          %v6138 = vrot.slane %v5975, 4
          %v6139 = vrot.slane %v5977, 3
          %v6140 = vsel %vm5991, %v6139, %v6138
          %v6141 = vrot.slane %v5979, 2
          %v6142 = vsel %vm5994, %v6141, %v6140
          %v6143 = vrot.slane %v5981, 1
          %v6144 = vsel %vm5997, %v6143, %v6142
          %v6145 = vsel %vm6000, %v5983, %v6144
          %v6146 = vrot.slane %v5985, 7
          %v6147 = vsel %vm6003, %v6146, %v6145
          %v6148 = vrot.slane %v5987, 6
          %v6149 = vsel %vm6006, %v6148, %v6147
          %v6150 = vrot.slane %v5989, 5
          %v6151 = vsel %vm6009, %v6150, %v6149
          %v6152 = vpack.c.b16 %v6151, %v6137
          %s6154 = scalar_lea.vmem [#allocation2], 32
          %6155 = vst [vmem:[%s6154] sm:$0xff] %v6152
          %v6156 = vrot.slane %v5974, 5
          %v6157 = vrot.slane %v5976, 4
          %v6158 = vsel %vm5991, %v6157, %v6156
          %v6159 = vrot.slane %v5978, 3
          %v6160 = vsel %vm5994, %v6159, %v6158
          %v6161 = vrot.slane %v5980, 2
          %v6162 = vsel %vm5997, %v6161, %v6160
          %v6163 = vrot.slane %v5982, 1
          %v6164 = vsel %vm6000, %v6163, %v6162
          %v6165 = vsel %vm6003, %v5984, %v6164
          %v6166 = vrot.slane %v5986, 7
          %v6167 = vsel %vm6006, %v6166, %v6165
          %v6168 = vrot.slane %v5988, 6
          %v6169 = vsel %vm6009, %v6168, %v6167
          %v6170 = vrot.slane %v5975, 5
          %v6171 = vrot.slane %v5977, 4
          %v6172 = vsel %vm5991, %v6171, %v6170
          %v6173 = vrot.slane %v5979, 3
          %v6174 = vsel %vm5994, %v6173, %v6172
          %v6175 = vrot.slane %v5981, 2
          %v6176 = vsel %vm5997, %v6175, %v6174
          %v6177 = vrot.slane %v5983, 1
          %v6178 = vsel %vm6000, %v6177, %v6176
          %v6179 = vsel %vm6003, %v5985, %v6178
          %v6180 = vrot.slane %v5987, 7
          %v6181 = vsel %vm6006, %v6180, %v6179
          %v6182 = vrot.slane %v5989, 6
          %v6183 = vsel %vm6009, %v6182, %v6181
          %v6184 = vpack.c.b16 %v6183, %v6169
          %s6186 = scalar_lea.vmem [#allocation2], 40
          %6187 = vst [vmem:[%s6186] sm:$0xff] %v6184
          %v6188 = vrot.slane %v5974, 6
          %v6189 = vrot.slane %v5976, 5
          %v6190 = vsel %vm5991, %v6189, %v6188
          %v6191 = vrot.slane %v5978, 4
          %v6192 = vsel %vm5994, %v6191, %v6190
          %v6193 = vrot.slane %v5980, 3
          %v6194 = vsel %vm5997, %v6193, %v6192
          %v6195 = vrot.slane %v5982, 2
          %v6196 = vsel %vm6000, %v6195, %v6194
          %v6197 = vrot.slane %v5984, 1
          %v6198 = vsel %vm6003, %v6197, %v6196
          %v6199 = vsel %vm6006, %v5986, %v6198
          %v6200 = vrot.slane %v5988, 7
          %v6201 = vsel %vm6009, %v6200, %v6199
          %v6202 = vrot.slane %v5975, 6
          %v6203 = vrot.slane %v5977, 5
          %v6204 = vsel %vm5991, %v6203, %v6202
          %v6205 = vrot.slane %v5979, 4
          %v6206 = vsel %vm5994, %v6205, %v6204
          %v6207 = vrot.slane %v5981, 3
          %v6208 = vsel %vm5997, %v6207, %v6206
          %v6209 = vrot.slane %v5983, 2
          %v6210 = vsel %vm6000, %v6209, %v6208
          %v6211 = vrot.slane %v5985, 1
          %v6212 = vsel %vm6003, %v6211, %v6210
          %v6213 = vsel %vm6006, %v5987, %v6212
          %v6214 = vrot.slane %v5989, 7
          %v6215 = vsel %vm6009, %v6214, %v6213
          %v6216 = vpack.c.b16 %v6215, %v6201
          %s6218 = scalar_lea.vmem [#allocation2], 48
          %6219 = vst [vmem:[%s6218] sm:$0xff] %v6216
          %v6220 = vrot.slane %v5974, 7
          %v6221 = vrot.slane %v5976, 6
          %v6222 = vsel %vm5991, %v6221, %v6220
          %v6223 = vrot.slane %v5978, 5
          %v6224 = vsel %vm5994, %v6223, %v6222
          %v6225 = vrot.slane %v5980, 4
          %v6226 = vsel %vm5997, %v6225, %v6224
          %v6227 = vrot.slane %v5982, 3
          %v6228 = vsel %vm6000, %v6227, %v6226
          %v6229 = vrot.slane %v5984, 2
          %v6230 = vsel %vm6003, %v6229, %v6228
          %v6231 = vrot.slane %v5986, 1
          %v6232 = vsel %vm6006, %v6231, %v6230
          %v6233 = vsel %vm6009, %v5988, %v6232
          %v6234 = vrot.slane %v5975, 7
          %v6235 = vrot.slane %v5977, 6
          %v6236 = vsel %vm5991, %v6235, %v6234
          %v6237 = vrot.slane %v5979, 5
          %v6238 = vsel %vm5994, %v6237, %v6236
          %v6239 = vrot.slane %v5981, 4
          %v6240 = vsel %vm5997, %v6239, %v6238
          %v6241 = vrot.slane %v5983, 3
          %v6242 = vsel %vm6000, %v6241, %v6240
          %v6243 = vrot.slane %v5985, 2
          %v6244 = vsel %vm6003, %v6243, %v6242
          %v6245 = vrot.slane %v5987, 1
          %v6246 = vsel %vm6006, %v6245, %v6244
          %v6247 = vsel %vm6009, %v5989, %v6246
          %v6248 = vpack.c.b16 %v6247, %v6233
          %s6250 = scalar_lea.vmem [#allocation2], 56
          %6251 = vst [vmem:[%s6250] sm:$0xff] %v6248
          %v6252 = vld [vmem:[#allocation12] sm:$0xff]
          %v6254 = vperm.slane %v6252, 0
          %v6255 = vperm.slane %v6252, 1
          %v6256 = vperm.slane %v6252, 2
          %v6257 = vperm.slane %v6252, 3
          %v6258 = vperm.slane %v6252, 4
          %v6259 = vperm.slane %v6252, 5
          %v6260 = vperm.slane %v6252, 6
          %v6261 = vperm.slane %v6252, 7
          %6270 = vst [vmem:[#allocation3] sm:$0xff] %v6254
          %6271 = vst [vmem:[#allocation3 + $0x8] sm:$0xff] %v6255
          %6272 = vst [vmem:[#allocation3 + $0x10] sm:$0xff] %v6256
          %6273 = vst [vmem:[#allocation3 + $0x18] sm:$0xff] %v6257
          %6274 = vst [vmem:[#allocation3 + $0x20] sm:$0xff] %v6258
          %6275 = vst [vmem:[#allocation3 + $0x28] sm:$0xff] %v6259
          %6276 = vst [vmem:[#allocation3 + $0x30] sm:$0xff] %v6260
          %6277 = vst [vmem:[#allocation3 + $0x38] sm:$0xff] %v6261
        $region84: #{tpu_custom_call.1} parent=51 // pred_fallthru
          _
        %v6278 = vld [vmem:[#allocation3] sm:$0xff]
        %v6279 = vld [vmem:[#allocation3 + $0x8] sm:$0xff]
        %v6280 = vld [vmem:[#allocation3 + $0x10] sm:$0xff]
        %v6281 = vld [vmem:[#allocation3 + $0x18] sm:$0xff]
        %v6282 = vld [vmem:[#allocation3 + $0x20] sm:$0xff]
        %v6283 = vld [vmem:[#allocation3 + $0x28] sm:$0xff]
        %v6284 = vld [vmem:[#allocation3 + $0x30] sm:$0xff]
        %v6285 = vld [vmem:[#allocation3 + $0x38] sm:$0xff]
        %s6286 = smul.u32 %s31, 2
        %s6287 = smul.addr %s6286, 4
        %s6288 = scalar_lea.vmem [#allocation2], %s6287
        %v6289 = vld [vmem:[%s6288] sm:$0xff]
        %v6290 = vld [vmem:[%s390] sm:$0xff]
        %v6291 = vld [vmem:[%s390 + $0x8] sm:$0xff]
        %v6292 = vld [vmem:[%s390 + $0x10] sm:$0xff]
        %v6293 = vld [vmem:[%s390 + $0x18] sm:$0xff]
        %v6294 = vld [vmem:[%s390 + $0x20] sm:$0xff]
        %v6295 = vld [vmem:[%s390 + $0x28] sm:$0xff]
        %v6296 = vld [vmem:[%s390 + $0x30] sm:$0xff]
        %v6297 = vld [vmem:[%s390 + $0x38] sm:$0xff]
        %v6298 = vld [vmem:[%s390 + $0x40] sm:$0xff]
        %v6299 = vld [vmem:[%s390 + $0x48] sm:$0xff]
        %v6300 = vld [vmem:[%s390 + $0x50] sm:$0xff]
        %v6301 = vld [vmem:[%s390 + $0x58] sm:$0xff]
        %v6302 = vld [vmem:[%s390 + $0x60] sm:$0xff]
        %v6303 = vld [vmem:[%s390 + $0x68] sm:$0xff]
        %v6304 = vld [vmem:[%s390 + $0x70] sm:$0xff]
        %v6305 = vld [vmem:[%s390 + $0x78] sm:$0xff]
        %v6306 = vld [vmem:[%s390 + $0x80] sm:$0xff]
        %v6307 = vld [vmem:[%s390 + $0x88] sm:$0xff]
        %v6308 = vld [vmem:[%s390 + $0x90] sm:$0xff]
        %v6309 = vld [vmem:[%s390 + $0x98] sm:$0xff]
        %v6310 = vld [vmem:[%s390 + $0xa0] sm:$0xff]
        %v6311 = vld [vmem:[%s390 + $0xa8] sm:$0xff]
        %v6312 = vld [vmem:[%s390 + $0xb0] sm:$0xff]
        %v6313 = vld [vmem:[%s390 + $0xb8] sm:$0xff]
        %v6314 = vld [vmem:[%s390 + $0xc0] sm:$0xff]
        %v6315 = vld [vmem:[%s390 + $0xc8] sm:$0xff]
        %v6316 = vld [vmem:[%s390 + $0xd0] sm:$0xff]
        %v6317 = vld [vmem:[%s390 + $0xd8] sm:$0xff]
        %v6318 = vld [vmem:[%s390 + $0xe0] sm:$0xff]
        %v6319 = vld [vmem:[%s390 + $0xe8] sm:$0xff]
        %v6320 = vld [vmem:[%s390 + $0xf0] sm:$0xff]
        %v6321 = vld [vmem:[%s390 + $0xf8] sm:$0xff]
        %v6322 = vld [vmem:[%s390 + $0x100] sm:$0xff]
        %v6323 = vld [vmem:[%s390 + $0x108] sm:$0xff]
        %v6324 = vld [vmem:[%s390 + $0x110] sm:$0xff]
        %v6325 = vld [vmem:[%s390 + $0x118] sm:$0xff]
        %v6326 = vld [vmem:[%s390 + $0x120] sm:$0xff]
        %v6327 = vld [vmem:[%s390 + $0x128] sm:$0xff]
        %v6328 = vld [vmem:[%s390 + $0x130] sm:$0xff]
        %v6329 = vld [vmem:[%s390 + $0x138] sm:$0xff]
        %v6330 = vld [vmem:[%s390 + $0x140] sm:$0xff]
        %v6331 = vld [vmem:[%s390 + $0x148] sm:$0xff]
        %v6332 = vld [vmem:[%s390 + $0x150] sm:$0xff]
        %v6333 = vld [vmem:[%s390 + $0x158] sm:$0xff]
        %v6334 = vld [vmem:[%s390 + $0x160] sm:$0xff]
        %v6335 = vld [vmem:[%s390 + $0x168] sm:$0xff]
        %v6336 = vld [vmem:[%s390 + $0x170] sm:$0xff]
        %v6337 = vld [vmem:[%s390 + $0x178] sm:$0xff]
        %v6338 = vld [vmem:[%s390 + $0x180] sm:$0xff]
        %v6339 = vld [vmem:[%s390 + $0x188] sm:$0xff]
        %v6340 = vld [vmem:[%s390 + $0x190] sm:$0xff]
        %v6341 = vld [vmem:[%s390 + $0x198] sm:$0xff]
        %v6342 = vld [vmem:[%s390 + $0x1a0] sm:$0xff]
        %v6343 = vld [vmem:[%s390 + $0x1a8] sm:$0xff]
        %v6344 = vld [vmem:[%s390 + $0x1b0] sm:$0xff]
        %v6345 = vld [vmem:[%s390 + $0x1b8] sm:$0xff]
        %v6346 = vld [vmem:[%s390 + $0x1c0] sm:$0xff]
        %v6347 = vld [vmem:[%s390 + $0x1c8] sm:$0xff]
        %v6348 = vld [vmem:[%s390 + $0x1d0] sm:$0xff]
        %v6349 = vld [vmem:[%s390 + $0x1d8] sm:$0xff]
        %v6350 = vld [vmem:[%s390 + $0x1e0] sm:$0xff]
        %v6351 = vld [vmem:[%s390 + $0x1e8] sm:$0xff]
        %v6352 = vld [vmem:[%s390 + $0x1f0] sm:$0xff]
        %v6353 = vld [vmem:[%s390 + $0x1f8] sm:$0xff]
        %v6354 = vld [vmem:[%s390 + $0x200] sm:$0xff]
        %v6355 = vld [vmem:[%s390 + $0x208] sm:$0xff]
        %v6356 = vld [vmem:[%s390 + $0x210] sm:$0xff]
        %v6357 = vld [vmem:[%s390 + $0x218] sm:$0xff]
        %v6358 = vld [vmem:[%s390 + $0x220] sm:$0xff]
        %v6359 = vld [vmem:[%s390 + $0x228] sm:$0xff]
        %v6360 = vld [vmem:[%s390 + $0x230] sm:$0xff]
        %v6361 = vld [vmem:[%s390 + $0x238] sm:$0xff]
        %v6362 = vld [vmem:[%s390 + $0x240] sm:$0xff]
        %v6363 = vld [vmem:[%s390 + $0x248] sm:$0xff]
        %v6364 = vld [vmem:[%s390 + $0x250] sm:$0xff]
        %v6365 = vld [vmem:[%s390 + $0x258] sm:$0xff]
        %v6366 = vld [vmem:[%s390 + $0x260] sm:$0xff]
        %v6367 = vld [vmem:[%s390 + $0x268] sm:$0xff]
        %v6368 = vld [vmem:[%s390 + $0x270] sm:$0xff]
        %v6369 = vld [vmem:[%s390 + $0x278] sm:$0xff]
        %v6370 = vld [vmem:[%s390 + $0x280] sm:$0xff]
        %v6371 = vld [vmem:[%s390 + $0x288] sm:$0xff]
        %v6372 = vld [vmem:[%s390 + $0x290] sm:$0xff]
        %v6373 = vld [vmem:[%s390 + $0x298] sm:$0xff]
        %v6374 = vld [vmem:[%s390 + $0x2a0] sm:$0xff]
        %v6375 = vld [vmem:[%s390 + $0x2a8] sm:$0xff]
        %v6376 = vld [vmem:[%s390 + $0x2b0] sm:$0xff]
        %v6377 = vld [vmem:[%s390 + $0x2b8] sm:$0xff]
        %v6378 = vld [vmem:[%s390 + $0x2c0] sm:$0xff]
        %v6379 = vld [vmem:[%s390 + $0x2c8] sm:$0xff]
        %v6380 = vld [vmem:[%s390 + $0x2d0] sm:$0xff]
        %v6381 = vld [vmem:[%s390 + $0x2d8] sm:$0xff]
        %v6382 = vld [vmem:[%s390 + $0x2e0] sm:$0xff]
        %v6383 = vld [vmem:[%s390 + $0x2e8] sm:$0xff]
        %v6384 = vld [vmem:[%s390 + $0x2f0] sm:$0xff]
        %v6385 = vld [vmem:[%s390 + $0x2f8] sm:$0xff]
        %v6386 = vld [vmem:[%s390 + $0x300] sm:$0xff]
        %v6387 = vld [vmem:[%s390 + $0x308] sm:$0xff]
        %v6388 = vld [vmem:[%s390 + $0x310] sm:$0xff]
        %v6389 = vld [vmem:[%s390 + $0x318] sm:$0xff]
        %v6390 = vld [vmem:[%s390 + $0x320] sm:$0xff]
        %v6391 = vld [vmem:[%s390 + $0x328] sm:$0xff]
        %v6392 = vld [vmem:[%s390 + $0x330] sm:$0xff]
        %v6393 = vld [vmem:[%s390 + $0x338] sm:$0xff]
        %v6394 = vld [vmem:[%s390 + $0x340] sm:$0xff]
        %v6395 = vld [vmem:[%s390 + $0x348] sm:$0xff]
        %v6396 = vld [vmem:[%s390 + $0x350] sm:$0xff]
        %v6397 = vld [vmem:[%s390 + $0x358] sm:$0xff]
        %v6398 = vld [vmem:[%s390 + $0x360] sm:$0xff]
        %v6399 = vld [vmem:[%s390 + $0x368] sm:$0xff]
        %v6400 = vld [vmem:[%s390 + $0x370] sm:$0xff]
        %v6401 = vld [vmem:[%s390 + $0x378] sm:$0xff]
        %v6402 = vld [vmem:[%s390 + $0x380] sm:$0xff]
        %v6403 = vld [vmem:[%s390 + $0x388] sm:$0xff]
        %v6404 = vld [vmem:[%s390 + $0x390] sm:$0xff]
        %v6405 = vld [vmem:[%s390 + $0x398] sm:$0xff]
        %v6406 = vld [vmem:[%s390 + $0x3a0] sm:$0xff]
        %v6407 = vld [vmem:[%s390 + $0x3a8] sm:$0xff]
        %v6408 = vld [vmem:[%s390 + $0x3b0] sm:$0xff]
        %v6409 = vld [vmem:[%s390 + $0x3b8] sm:$0xff]
        %v6410 = vld [vmem:[%s390 + $0x3c0] sm:$0xff]
        %v6411 = vld [vmem:[%s390 + $0x3c8] sm:$0xff]
        %v6412 = vld [vmem:[%s390 + $0x3d0] sm:$0xff]
        %v6413 = vld [vmem:[%s390 + $0x3d8] sm:$0xff]
        %v6414 = vld [vmem:[%s390 + $0x3e0] sm:$0xff]
        %v6415 = vld [vmem:[%s390 + $0x3e8] sm:$0xff]
        %v6416 = vld [vmem:[%s390 + $0x3f0] sm:$0xff]
        %v6417 = vld [vmem:[%s390 + $0x3f8] sm:$0xff]
        %v6419 = vunpack.c.l.b16 %v6289
        %v6420 = vunpack.c.h.b16 %v6289
        %v6421 = vpack.c.b16 %v6419, %v6419
        %v6422 = vpack.c.b16 %v6420, %v6420
        %v6553 = vunpack.c.l.b16 %v6290
        %v6554 = vunpack.c.h.b16 %v6290
        %v6555 = vunpack.c.l.b16 %v6291
        %v6556 = vunpack.c.h.b16 %v6291
        %v6557 = vunpack.c.l.b16 %v6292
        %v6558 = vunpack.c.h.b16 %v6292
        %v6559 = vunpack.c.l.b16 %v6293
        %v6560 = vunpack.c.h.b16 %v6293
        %v6561 = vunpack.c.l.b16 %v6294
        %v6562 = vunpack.c.h.b16 %v6294
        %v6563 = vunpack.c.l.b16 %v6295
        %v6564 = vunpack.c.h.b16 %v6295
        %v6565 = vunpack.c.l.b16 %v6296
        %v6566 = vunpack.c.h.b16 %v6296
        %v6567 = vunpack.c.l.b16 %v6297
        %v6568 = vunpack.c.h.b16 %v6297
        %v6569 = vunpack.c.l.b16 %v6298
        %v6570 = vunpack.c.h.b16 %v6298
        %v6571 = vunpack.c.l.b16 %v6299
        %v6572 = vunpack.c.h.b16 %v6299
        %v6573 = vunpack.c.l.b16 %v6300
        %v6574 = vunpack.c.h.b16 %v6300
        %v6575 = vunpack.c.l.b16 %v6301
        %v6576 = vunpack.c.h.b16 %v6301
        %v6577 = vunpack.c.l.b16 %v6302
        %v6578 = vunpack.c.h.b16 %v6302
        %v6579 = vunpack.c.l.b16 %v6303
        %v6580 = vunpack.c.h.b16 %v6303
        %v6581 = vunpack.c.l.b16 %v6304
        %v6582 = vunpack.c.h.b16 %v6304
        %v6583 = vunpack.c.l.b16 %v6305
        %v6584 = vunpack.c.h.b16 %v6305
        %v6585 = vunpack.c.l.b16 %v6306
        %v6586 = vunpack.c.h.b16 %v6306
        %v6587 = vunpack.c.l.b16 %v6307
        %v6588 = vunpack.c.h.b16 %v6307
        %v6589 = vunpack.c.l.b16 %v6308
        %v6590 = vunpack.c.h.b16 %v6308
        %v6591 = vunpack.c.l.b16 %v6309
        %v6592 = vunpack.c.h.b16 %v6309
        %v6593 = vunpack.c.l.b16 %v6310
        %v6594 = vunpack.c.h.b16 %v6310
        %v6595 = vunpack.c.l.b16 %v6311
        %v6596 = vunpack.c.h.b16 %v6311
        %v6597 = vunpack.c.l.b16 %v6312
        %v6598 = vunpack.c.h.b16 %v6312
        %v6599 = vunpack.c.l.b16 %v6313
        %v6600 = vunpack.c.h.b16 %v6313
        %v6601 = vunpack.c.l.b16 %v6314
        %v6602 = vunpack.c.h.b16 %v6314
        %v6603 = vunpack.c.l.b16 %v6315
        %v6604 = vunpack.c.h.b16 %v6315
        %v6605 = vunpack.c.l.b16 %v6316
        %v6606 = vunpack.c.h.b16 %v6316
        %v6607 = vunpack.c.l.b16 %v6317
        %v6608 = vunpack.c.h.b16 %v6317
        %v6609 = vunpack.c.l.b16 %v6318
        %v6610 = vunpack.c.h.b16 %v6318
        %v6611 = vunpack.c.l.b16 %v6319
        %v6612 = vunpack.c.h.b16 %v6319
        %v6613 = vunpack.c.l.b16 %v6320
        %v6614 = vunpack.c.h.b16 %v6320
        %v6615 = vunpack.c.l.b16 %v6321
        %v6616 = vunpack.c.h.b16 %v6321
        %v6617 = vunpack.c.l.b16 %v6322
        %v6618 = vunpack.c.h.b16 %v6322
        %v6619 = vunpack.c.l.b16 %v6323
        %v6620 = vunpack.c.h.b16 %v6323
        %v6621 = vunpack.c.l.b16 %v6324
        %v6622 = vunpack.c.h.b16 %v6324
        %v6623 = vunpack.c.l.b16 %v6325
        %v6624 = vunpack.c.h.b16 %v6325
        %v6625 = vunpack.c.l.b16 %v6326
        %v6626 = vunpack.c.h.b16 %v6326
        %v6627 = vunpack.c.l.b16 %v6327
        %v6628 = vunpack.c.h.b16 %v6327
        %v6629 = vunpack.c.l.b16 %v6328
        %v6630 = vunpack.c.h.b16 %v6328
        %v6631 = vunpack.c.l.b16 %v6329
        %v6632 = vunpack.c.h.b16 %v6329
        %v6633 = vunpack.c.l.b16 %v6330
        %v6634 = vunpack.c.h.b16 %v6330
        %v6635 = vunpack.c.l.b16 %v6331
        %v6636 = vunpack.c.h.b16 %v6331
        %v6637 = vunpack.c.l.b16 %v6332
        %v6638 = vunpack.c.h.b16 %v6332
        %v6639 = vunpack.c.l.b16 %v6333
        %v6640 = vunpack.c.h.b16 %v6333
        %v6641 = vunpack.c.l.b16 %v6334
        %v6642 = vunpack.c.h.b16 %v6334
        %v6643 = vunpack.c.l.b16 %v6335
        %v6644 = vunpack.c.h.b16 %v6335
        %v6645 = vunpack.c.l.b16 %v6336
        %v6646 = vunpack.c.h.b16 %v6336
        %v6647 = vunpack.c.l.b16 %v6337
        %v6648 = vunpack.c.h.b16 %v6337
        %v6649 = vunpack.c.l.b16 %v6338
        %v6650 = vunpack.c.h.b16 %v6338
        %v6651 = vunpack.c.l.b16 %v6339
        %v6652 = vunpack.c.h.b16 %v6339
        %v6653 = vunpack.c.l.b16 %v6340
        %v6654 = vunpack.c.h.b16 %v6340
        %v6655 = vunpack.c.l.b16 %v6341
        %v6656 = vunpack.c.h.b16 %v6341
        %v6657 = vunpack.c.l.b16 %v6342
        %v6658 = vunpack.c.h.b16 %v6342
        %v6659 = vunpack.c.l.b16 %v6343
        %v6660 = vunpack.c.h.b16 %v6343
        %v6661 = vunpack.c.l.b16 %v6344
        %v6662 = vunpack.c.h.b16 %v6344
        %v6663 = vunpack.c.l.b16 %v6345
        %v6664 = vunpack.c.h.b16 %v6345
        %v6665 = vunpack.c.l.b16 %v6346
        %v6666 = vunpack.c.h.b16 %v6346
        %v6667 = vunpack.c.l.b16 %v6347
        %v6668 = vunpack.c.h.b16 %v6347
        %v6669 = vunpack.c.l.b16 %v6348
        %v6670 = vunpack.c.h.b16 %v6348
        %v6671 = vunpack.c.l.b16 %v6349
        %v6672 = vunpack.c.h.b16 %v6349
        %v6673 = vunpack.c.l.b16 %v6350
        %v6674 = vunpack.c.h.b16 %v6350
        %v6675 = vunpack.c.l.b16 %v6351
        %v6676 = vunpack.c.h.b16 %v6351
        %v6677 = vunpack.c.l.b16 %v6352
        %v6678 = vunpack.c.h.b16 %v6352
        %v6679 = vunpack.c.l.b16 %v6353
        %v6680 = vunpack.c.h.b16 %v6353
        %v6681 = vunpack.c.l.b16 %v6354
        %v6682 = vunpack.c.h.b16 %v6354
        %v6683 = vunpack.c.l.b16 %v6355
        %v6684 = vunpack.c.h.b16 %v6355
        %v6685 = vunpack.c.l.b16 %v6356
        %v6686 = vunpack.c.h.b16 %v6356
        %v6687 = vunpack.c.l.b16 %v6357
        %v6688 = vunpack.c.h.b16 %v6357
        %v6689 = vunpack.c.l.b16 %v6358
        %v6690 = vunpack.c.h.b16 %v6358
        %v6691 = vunpack.c.l.b16 %v6359
        %v6692 = vunpack.c.h.b16 %v6359
        %v6693 = vunpack.c.l.b16 %v6360
        %v6694 = vunpack.c.h.b16 %v6360
        %v6695 = vunpack.c.l.b16 %v6361
        %v6696 = vunpack.c.h.b16 %v6361
        %v6697 = vunpack.c.l.b16 %v6362
        %v6698 = vunpack.c.h.b16 %v6362
        %v6699 = vunpack.c.l.b16 %v6363
        %v6700 = vunpack.c.h.b16 %v6363
        %v6701 = vunpack.c.l.b16 %v6364
        %v6702 = vunpack.c.h.b16 %v6364
        %v6703 = vunpack.c.l.b16 %v6365
        %v6704 = vunpack.c.h.b16 %v6365
        %v6705 = vunpack.c.l.b16 %v6366
        %v6706 = vunpack.c.h.b16 %v6366
        %v6707 = vunpack.c.l.b16 %v6367
        %v6708 = vunpack.c.h.b16 %v6367
        %v6709 = vunpack.c.l.b16 %v6368
        %v6710 = vunpack.c.h.b16 %v6368
        %v6711 = vunpack.c.l.b16 %v6369
        %v6712 = vunpack.c.h.b16 %v6369
        %v6713 = vunpack.c.l.b16 %v6370
        %v6714 = vunpack.c.h.b16 %v6370
        %v6715 = vunpack.c.l.b16 %v6371
        %v6716 = vunpack.c.h.b16 %v6371
        %v6717 = vunpack.c.l.b16 %v6372
        %v6718 = vunpack.c.h.b16 %v6372
        %v6719 = vunpack.c.l.b16 %v6373
        %v6720 = vunpack.c.h.b16 %v6373
        %v6721 = vunpack.c.l.b16 %v6374
        %v6722 = vunpack.c.h.b16 %v6374
        %v6723 = vunpack.c.l.b16 %v6375
        %v6724 = vunpack.c.h.b16 %v6375
        %v6725 = vunpack.c.l.b16 %v6376
        %v6726 = vunpack.c.h.b16 %v6376
        %v6727 = vunpack.c.l.b16 %v6377
        %v6728 = vunpack.c.h.b16 %v6377
        %v6729 = vunpack.c.l.b16 %v6378
        %v6730 = vunpack.c.h.b16 %v6378
        %v6731 = vunpack.c.l.b16 %v6379
        %v6732 = vunpack.c.h.b16 %v6379
        %v6733 = vunpack.c.l.b16 %v6380
        %v6734 = vunpack.c.h.b16 %v6380
        %v6735 = vunpack.c.l.b16 %v6381
        %v6736 = vunpack.c.h.b16 %v6381
        %v6737 = vunpack.c.l.b16 %v6382
        %v6738 = vunpack.c.h.b16 %v6382
        %v6739 = vunpack.c.l.b16 %v6383
        %v6740 = vunpack.c.h.b16 %v6383
        %v6741 = vunpack.c.l.b16 %v6384
        %v6742 = vunpack.c.h.b16 %v6384
        %v6743 = vunpack.c.l.b16 %v6385
        %v6744 = vunpack.c.h.b16 %v6385
        %v6745 = vunpack.c.l.b16 %v6386
        %v6746 = vunpack.c.h.b16 %v6386
        %v6747 = vunpack.c.l.b16 %v6387
        %v6748 = vunpack.c.h.b16 %v6387
        %v6749 = vunpack.c.l.b16 %v6388
        %v6750 = vunpack.c.h.b16 %v6388
        %v6751 = vunpack.c.l.b16 %v6389
        %v6752 = vunpack.c.h.b16 %v6389
        %v6753 = vunpack.c.l.b16 %v6390
        %v6754 = vunpack.c.h.b16 %v6390
        %v6755 = vunpack.c.l.b16 %v6391
        %v6756 = vunpack.c.h.b16 %v6391
        %v6757 = vunpack.c.l.b16 %v6392
        %v6758 = vunpack.c.h.b16 %v6392
        %v6759 = vunpack.c.l.b16 %v6393
        %v6760 = vunpack.c.h.b16 %v6393
        %v6761 = vunpack.c.l.b16 %v6394
        %v6762 = vunpack.c.h.b16 %v6394
        %v6763 = vunpack.c.l.b16 %v6395
        %v6764 = vunpack.c.h.b16 %v6395
        %v6765 = vunpack.c.l.b16 %v6396
        %v6766 = vunpack.c.h.b16 %v6396
        %v6767 = vunpack.c.l.b16 %v6397
        %v6768 = vunpack.c.h.b16 %v6397
        %v6769 = vunpack.c.l.b16 %v6398
        %v6770 = vunpack.c.h.b16 %v6398
        %v6771 = vunpack.c.l.b16 %v6399
        %v6772 = vunpack.c.h.b16 %v6399
        %v6773 = vunpack.c.l.b16 %v6400
        %v6774 = vunpack.c.h.b16 %v6400
        %v6775 = vunpack.c.l.b16 %v6401
        %v6776 = vunpack.c.h.b16 %v6401
        %v6777 = vunpack.c.l.b16 %v6402
        %v6778 = vunpack.c.h.b16 %v6402
        %v6779 = vunpack.c.l.b16 %v6403
        %v6780 = vunpack.c.h.b16 %v6403
        %v6781 = vunpack.c.l.b16 %v6404
        %v6782 = vunpack.c.h.b16 %v6404
        %v6783 = vunpack.c.l.b16 %v6405
        %v6784 = vunpack.c.h.b16 %v6405
        %v6785 = vunpack.c.l.b16 %v6406
        %v6786 = vunpack.c.h.b16 %v6406
        %v6787 = vunpack.c.l.b16 %v6407
        %v6788 = vunpack.c.h.b16 %v6407
        %v6789 = vunpack.c.l.b16 %v6408
        %v6790 = vunpack.c.h.b16 %v6408
        %v6791 = vunpack.c.l.b16 %v6409
        %v6792 = vunpack.c.h.b16 %v6409
        %v6793 = vunpack.c.l.b16 %v6410
        %v6794 = vunpack.c.h.b16 %v6410
        %v6795 = vunpack.c.l.b16 %v6411
        %v6796 = vunpack.c.h.b16 %v6411
        %v6797 = vunpack.c.l.b16 %v6412
        %v6798 = vunpack.c.h.b16 %v6412
        %v6799 = vunpack.c.l.b16 %v6413
        %v6800 = vunpack.c.h.b16 %v6413
        %v6801 = vunpack.c.l.b16 %v6414
        %v6802 = vunpack.c.h.b16 %v6414
        %v6803 = vunpack.c.l.b16 %v6415
        %v6804 = vunpack.c.h.b16 %v6415
        %v6805 = vunpack.c.l.b16 %v6416
        %v6806 = vunpack.c.h.b16 %v6416
        %v6807 = vunpack.c.l.b16 %v6417
        %v6808 = vunpack.c.h.b16 %v6417
        %v6809 = vpack.c.b16 %v6561, %v6553
        %v6810 = vpack.c.b16 %v6562, %v6554
        %v6811 = vpack.c.b16 %v6563, %v6555
        %v6812 = vpack.c.b16 %v6564, %v6556
        %v6813 = vpack.c.b16 %v6565, %v6557
        %v6814 = vpack.c.b16 %v6566, %v6558
        %v6815 = vpack.c.b16 %v6567, %v6559
        %v6816 = vpack.c.b16 %v6568, %v6560
        %v6817 = vpack.c.b16 %v6577, %v6569
        %v6818 = vpack.c.b16 %v6578, %v6570
        %v6819 = vpack.c.b16 %v6579, %v6571
        %v6820 = vpack.c.b16 %v6580, %v6572
        %v6821 = vpack.c.b16 %v6581, %v6573
        %v6822 = vpack.c.b16 %v6582, %v6574
        %v6823 = vpack.c.b16 %v6583, %v6575
        %v6824 = vpack.c.b16 %v6584, %v6576
        %v6825 = vpack.c.b16 %v6593, %v6585
        %v6826 = vpack.c.b16 %v6594, %v6586
        %v6827 = vpack.c.b16 %v6595, %v6587
        %v6828 = vpack.c.b16 %v6596, %v6588
        %v6829 = vpack.c.b16 %v6597, %v6589
        %v6830 = vpack.c.b16 %v6598, %v6590
        %v6831 = vpack.c.b16 %v6599, %v6591
        %v6832 = vpack.c.b16 %v6600, %v6592
        %v6833 = vpack.c.b16 %v6609, %v6601
        %v6834 = vpack.c.b16 %v6610, %v6602
        %v6835 = vpack.c.b16 %v6611, %v6603
        %v6836 = vpack.c.b16 %v6612, %v6604
        %v6837 = vpack.c.b16 %v6613, %v6605
        %v6838 = vpack.c.b16 %v6614, %v6606
        %v6839 = vpack.c.b16 %v6615, %v6607
        %v6840 = vpack.c.b16 %v6616, %v6608
        %v6841 = vpack.c.b16 %v6625, %v6617
        %v6842 = vpack.c.b16 %v6626, %v6618
        %v6843 = vpack.c.b16 %v6627, %v6619
        %v6844 = vpack.c.b16 %v6628, %v6620
        %v6845 = vpack.c.b16 %v6629, %v6621
        %v6846 = vpack.c.b16 %v6630, %v6622
        %v6847 = vpack.c.b16 %v6631, %v6623
        %v6848 = vpack.c.b16 %v6632, %v6624
        %v6849 = vpack.c.b16 %v6641, %v6633
        %v6850 = vpack.c.b16 %v6642, %v6634
        %v6851 = vpack.c.b16 %v6643, %v6635
        %v6852 = vpack.c.b16 %v6644, %v6636
        %v6853 = vpack.c.b16 %v6645, %v6637
        %v6854 = vpack.c.b16 %v6646, %v6638
        %v6855 = vpack.c.b16 %v6647, %v6639
        %v6856 = vpack.c.b16 %v6648, %v6640
        %v6857 = vpack.c.b16 %v6657, %v6649
        %v6858 = vpack.c.b16 %v6658, %v6650
        %v6859 = vpack.c.b16 %v6659, %v6651
        %v6860 = vpack.c.b16 %v6660, %v6652
        %v6861 = vpack.c.b16 %v6661, %v6653
        %v6862 = vpack.c.b16 %v6662, %v6654
        %v6863 = vpack.c.b16 %v6663, %v6655
        %v6864 = vpack.c.b16 %v6664, %v6656
        %v6865 = vpack.c.b16 %v6673, %v6665
        %v6866 = vpack.c.b16 %v6674, %v6666
        %v6867 = vpack.c.b16 %v6675, %v6667
        %v6868 = vpack.c.b16 %v6676, %v6668
        %v6869 = vpack.c.b16 %v6677, %v6669
        %v6870 = vpack.c.b16 %v6678, %v6670
        %v6871 = vpack.c.b16 %v6679, %v6671
        %v6872 = vpack.c.b16 %v6680, %v6672
        %v6873 = vpack.c.b16 %v6689, %v6681
        %v6874 = vpack.c.b16 %v6690, %v6682
        %v6875 = vpack.c.b16 %v6691, %v6683
        %v6876 = vpack.c.b16 %v6692, %v6684
        %v6877 = vpack.c.b16 %v6693, %v6685
        %v6878 = vpack.c.b16 %v6694, %v6686
        %v6879 = vpack.c.b16 %v6695, %v6687
        %v6880 = vpack.c.b16 %v6696, %v6688
        %v6881 = vpack.c.b16 %v6705, %v6697
        %v6882 = vpack.c.b16 %v6706, %v6698
        %v6883 = vpack.c.b16 %v6707, %v6699
        %v6884 = vpack.c.b16 %v6708, %v6700
        %v6885 = vpack.c.b16 %v6709, %v6701
        %v6886 = vpack.c.b16 %v6710, %v6702
        %v6887 = vpack.c.b16 %v6711, %v6703
        %v6888 = vpack.c.b16 %v6712, %v6704
        %v6889 = vpack.c.b16 %v6721, %v6713
        %v6890 = vpack.c.b16 %v6722, %v6714
        %v6891 = vpack.c.b16 %v6723, %v6715
        %v6892 = vpack.c.b16 %v6724, %v6716
        %v6893 = vpack.c.b16 %v6725, %v6717
        %v6894 = vpack.c.b16 %v6726, %v6718
        %v6895 = vpack.c.b16 %v6727, %v6719
        %v6896 = vpack.c.b16 %v6728, %v6720
        %v6897 = vpack.c.b16 %v6737, %v6729
        %v6898 = vpack.c.b16 %v6738, %v6730
        %v6899 = vpack.c.b16 %v6739, %v6731
        %v6900 = vpack.c.b16 %v6740, %v6732
        %v6901 = vpack.c.b16 %v6741, %v6733
        %v6902 = vpack.c.b16 %v6742, %v6734
        %v6903 = vpack.c.b16 %v6743, %v6735
        %v6904 = vpack.c.b16 %v6744, %v6736
        %v6905 = vpack.c.b16 %v6753, %v6745
        %v6906 = vpack.c.b16 %v6754, %v6746
        %v6907 = vpack.c.b16 %v6755, %v6747
        %v6908 = vpack.c.b16 %v6756, %v6748
        %v6909 = vpack.c.b16 %v6757, %v6749
        %v6910 = vpack.c.b16 %v6758, %v6750
        %v6911 = vpack.c.b16 %v6759, %v6751
        %v6912 = vpack.c.b16 %v6760, %v6752
        %v6913 = vpack.c.b16 %v6769, %v6761
        %v6914 = vpack.c.b16 %v6770, %v6762
        %v6915 = vpack.c.b16 %v6771, %v6763
        %v6916 = vpack.c.b16 %v6772, %v6764
        %v6917 = vpack.c.b16 %v6773, %v6765
        %v6918 = vpack.c.b16 %v6774, %v6766
        %v6919 = vpack.c.b16 %v6775, %v6767
        %v6920 = vpack.c.b16 %v6776, %v6768
        %v6921 = vpack.c.b16 %v6785, %v6777
        %v6922 = vpack.c.b16 %v6786, %v6778
        %v6923 = vpack.c.b16 %v6787, %v6779
        %v6924 = vpack.c.b16 %v6788, %v6780
        %v6925 = vpack.c.b16 %v6789, %v6781
        %v6926 = vpack.c.b16 %v6790, %v6782
        %v6927 = vpack.c.b16 %v6791, %v6783
        %v6928 = vpack.c.b16 %v6792, %v6784
        %v6929 = vpack.c.b16 %v6801, %v6793
        %v6930 = vpack.c.b16 %v6802, %v6794
        %v6931 = vpack.c.b16 %v6803, %v6795
        %v6932 = vpack.c.b16 %v6804, %v6796
        %v6933 = vpack.c.b16 %v6805, %v6797
        %v6934 = vpack.c.b16 %v6806, %v6798
        %v6935 = vpack.c.b16 %v6807, %v6799
        %v6936 = vpack.c.b16 %v6808, %v6800
        %7065 = vmatpush.bf16.msra.mxu0 %v6865
        %7066 = vmatpush.bf16.msra.mxu0 %v6857
        %7067 = vmatpush.bf16.msra.mxu0 %v6849
        %7068 = vmatpush.bf16.msra.mxu0 %v6841
        %7069 = vmatpush.bf16.msra.mxu0 %v6833
        %7070 = vmatpush.bf16.msra.mxu0 %v6825
        %7071 = vmatpush.bf16.msra.mxu0 %v6817
        %7072 = vmatpush.bf16.msra.mxu0 %v6809
        %7073 = vmatmul.bf16.gmra.mxu0 %v6421
        %v7074 = vpop.f32.mrf.mxu0
        %v7075 = vadd.f32 0.0, %v7074
        %v7076 = vpop.f32.mrf.mxu0
        %7077 = vdwg.mxu0
        %7078 = vmatpush.bf16.msra.mxu0 %v6929
        %7079 = vmatpush.bf16.msra.mxu0 %v6921
        %7080 = vmatpush.bf16.msra.mxu0 %v6913
        %7081 = vmatpush.bf16.msra.mxu0 %v6905
        %7082 = vmatpush.bf16.msra.mxu0 %v6897
        %7083 = vmatpush.bf16.msra.mxu0 %v6889
        %7084 = vmatpush.bf16.msra.mxu0 %v6881
        %7085 = vmatpush.bf16.msra.mxu0 %v6873
        %7086 = vmatmul.bf16.gmra.mxu0 %v6422
        %v7087 = vpop.f32.mrf.mxu0
        %v7088 = vadd.f32 %v7075, %v7087
        %v7089 = vpop.f32.mrf.mxu0
        %7090 = vdwg.mxu0
        %7091 = vmatpush.bf16.msra.mxu0 %v6866
        %7092 = vmatpush.bf16.msra.mxu0 %v6858
        %7093 = vmatpush.bf16.msra.mxu0 %v6850
        %7094 = vmatpush.bf16.msra.mxu0 %v6842
        %7095 = vmatpush.bf16.msra.mxu0 %v6834
        %7096 = vmatpush.bf16.msra.mxu0 %v6826
        %7097 = vmatpush.bf16.msra.mxu0 %v6818
        %7098 = vmatpush.bf16.msra.mxu0 %v6810
        %7099 = vmatmul.bf16.gmra.mxu0 %v6421
        %v7100 = vpop.f32.mrf.mxu0
        %v7101 = vadd.f32 0.0, %v7100
        %v7102 = vpop.f32.mrf.mxu0
        %7103 = vdwg.mxu0
        %7104 = vmatpush.bf16.msra.mxu0 %v6930
        %7105 = vmatpush.bf16.msra.mxu0 %v6922
        %7106 = vmatpush.bf16.msra.mxu0 %v6914
        %7107 = vmatpush.bf16.msra.mxu0 %v6906
        %7108 = vmatpush.bf16.msra.mxu0 %v6898
        %7109 = vmatpush.bf16.msra.mxu0 %v6890
        %7110 = vmatpush.bf16.msra.mxu0 %v6882
        %7111 = vmatpush.bf16.msra.mxu0 %v6874
        %7112 = vmatmul.bf16.gmra.mxu0 %v6422
        %v7113 = vpop.f32.mrf.mxu0
        %v7114 = vadd.f32 %v7101, %v7113
        %v7115 = vpop.f32.mrf.mxu0
        %7116 = vdwg.mxu0
        %7117 = vmatpush.bf16.msra.mxu0 %v6867
        %7118 = vmatpush.bf16.msra.mxu0 %v6859
        %7119 = vmatpush.bf16.msra.mxu0 %v6851
        %7120 = vmatpush.bf16.msra.mxu0 %v6843
        %7121 = vmatpush.bf16.msra.mxu0 %v6835
        %7122 = vmatpush.bf16.msra.mxu0 %v6827
        %7123 = vmatpush.bf16.msra.mxu0 %v6819
        %7124 = vmatpush.bf16.msra.mxu0 %v6811
        %7125 = vmatmul.bf16.gmra.mxu0 %v6421
        %v7126 = vpop.f32.mrf.mxu0
        %v7127 = vadd.f32 0.0, %v7126
        %v7128 = vpop.f32.mrf.mxu0
        %7129 = vdwg.mxu0
        %7130 = vmatpush.bf16.msra.mxu0 %v6931
        %7131 = vmatpush.bf16.msra.mxu0 %v6923
        %7132 = vmatpush.bf16.msra.mxu0 %v6915
        %7133 = vmatpush.bf16.msra.mxu0 %v6907
        %7134 = vmatpush.bf16.msra.mxu0 %v6899
        %7135 = vmatpush.bf16.msra.mxu0 %v6891
        %7136 = vmatpush.bf16.msra.mxu0 %v6883
        %7137 = vmatpush.bf16.msra.mxu0 %v6875
        %7138 = vmatmul.bf16.gmra.mxu0 %v6422
        %v7139 = vpop.f32.mrf.mxu0
        %v7140 = vadd.f32 %v7127, %v7139
        %v7141 = vpop.f32.mrf.mxu0
        %7142 = vdwg.mxu0
        %7143 = vmatpush.bf16.msra.mxu0 %v6868
        %7144 = vmatpush.bf16.msra.mxu0 %v6860
        %7145 = vmatpush.bf16.msra.mxu0 %v6852
        %7146 = vmatpush.bf16.msra.mxu0 %v6844
        %7147 = vmatpush.bf16.msra.mxu0 %v6836
        %7148 = vmatpush.bf16.msra.mxu0 %v6828
        %7149 = vmatpush.bf16.msra.mxu0 %v6820
        %7150 = vmatpush.bf16.msra.mxu0 %v6812
        %7151 = vmatmul.bf16.gmra.mxu0 %v6421
        %v7152 = vpop.f32.mrf.mxu0
        %v7153 = vadd.f32 0.0, %v7152
        %v7154 = vpop.f32.mrf.mxu0
        %7155 = vdwg.mxu0
        %7156 = vmatpush.bf16.msra.mxu0 %v6932
        %7157 = vmatpush.bf16.msra.mxu0 %v6924
        %7158 = vmatpush.bf16.msra.mxu0 %v6916
        %7159 = vmatpush.bf16.msra.mxu0 %v6908
        %7160 = vmatpush.bf16.msra.mxu0 %v6900
        %7161 = vmatpush.bf16.msra.mxu0 %v6892
        %7162 = vmatpush.bf16.msra.mxu0 %v6884
        %7163 = vmatpush.bf16.msra.mxu0 %v6876
        %7164 = vmatmul.bf16.gmra.mxu0 %v6422
        %v7165 = vpop.f32.mrf.mxu0
        %v7166 = vadd.f32 %v7153, %v7165
        %v7167 = vpop.f32.mrf.mxu0
        %7168 = vdwg.mxu0
        %7169 = vmatpush.bf16.msra.mxu0 %v6869
        %7170 = vmatpush.bf16.msra.mxu0 %v6861
        %7171 = vmatpush.bf16.msra.mxu0 %v6853
        %7172 = vmatpush.bf16.msra.mxu0 %v6845
        %7173 = vmatpush.bf16.msra.mxu0 %v6837
        %7174 = vmatpush.bf16.msra.mxu0 %v6829
        %7175 = vmatpush.bf16.msra.mxu0 %v6821
        %7176 = vmatpush.bf16.msra.mxu0 %v6813
        %7177 = vmatmul.bf16.gmra.mxu0 %v6421
        %v7178 = vpop.f32.mrf.mxu0
        %v7179 = vadd.f32 0.0, %v7178
        %v7180 = vpop.f32.mrf.mxu0
        %7181 = vdwg.mxu0
        %7182 = vmatpush.bf16.msra.mxu0 %v6933
        %7183 = vmatpush.bf16.msra.mxu0 %v6925
        %7184 = vmatpush.bf16.msra.mxu0 %v6917
        %7185 = vmatpush.bf16.msra.mxu0 %v6909
        %7186 = vmatpush.bf16.msra.mxu0 %v6901
        %7187 = vmatpush.bf16.msra.mxu0 %v6893
        %7188 = vmatpush.bf16.msra.mxu0 %v6885
        %7189 = vmatpush.bf16.msra.mxu0 %v6877
        %7190 = vmatmul.bf16.gmra.mxu0 %v6422
        %v7191 = vpop.f32.mrf.mxu0
        %v7192 = vadd.f32 %v7179, %v7191
        %v7193 = vpop.f32.mrf.mxu0
        %7194 = vdwg.mxu0
        %7195 = vmatpush.bf16.msra.mxu0 %v6870
        %7196 = vmatpush.bf16.msra.mxu0 %v6862
        %7197 = vmatpush.bf16.msra.mxu0 %v6854
        %7198 = vmatpush.bf16.msra.mxu0 %v6846
        %7199 = vmatpush.bf16.msra.mxu0 %v6838
        %7200 = vmatpush.bf16.msra.mxu0 %v6830
        %7201 = vmatpush.bf16.msra.mxu0 %v6822
        %7202 = vmatpush.bf16.msra.mxu0 %v6814
        %7203 = vmatmul.bf16.gmra.mxu0 %v6421
        %v7204 = vpop.f32.mrf.mxu0
        %v7205 = vadd.f32 0.0, %v7204
        %v7206 = vpop.f32.mrf.mxu0
        %7207 = vdwg.mxu0
        %7208 = vmatpush.bf16.msra.mxu0 %v6934
        %7209 = vmatpush.bf16.msra.mxu0 %v6926
        %7210 = vmatpush.bf16.msra.mxu0 %v6918
        %7211 = vmatpush.bf16.msra.mxu0 %v6910
        %7212 = vmatpush.bf16.msra.mxu0 %v6902
        %7213 = vmatpush.bf16.msra.mxu0 %v6894
        %7214 = vmatpush.bf16.msra.mxu0 %v6886
        %7215 = vmatpush.bf16.msra.mxu0 %v6878
        %7216 = vmatmul.bf16.gmra.mxu0 %v6422
        %v7217 = vpop.f32.mrf.mxu0
        %v7218 = vadd.f32 %v7205, %v7217
        %v7219 = vpop.f32.mrf.mxu0
        %7220 = vdwg.mxu0
        %7221 = vmatpush.bf16.msra.mxu0 %v6871
        %7222 = vmatpush.bf16.msra.mxu0 %v6863
        %7223 = vmatpush.bf16.msra.mxu0 %v6855
        %7224 = vmatpush.bf16.msra.mxu0 %v6847
        %7225 = vmatpush.bf16.msra.mxu0 %v6839
        %7226 = vmatpush.bf16.msra.mxu0 %v6831
        %7227 = vmatpush.bf16.msra.mxu0 %v6823
        %7228 = vmatpush.bf16.msra.mxu0 %v6815
        %7229 = vmatmul.bf16.gmra.mxu0 %v6421
        %v7230 = vpop.f32.mrf.mxu0
        %v7231 = vadd.f32 0.0, %v7230
        %v7232 = vpop.f32.mrf.mxu0
        %7233 = vdwg.mxu0
        %7234 = vmatpush.bf16.msra.mxu0 %v6935
        %7235 = vmatpush.bf16.msra.mxu0 %v6927
        %7236 = vmatpush.bf16.msra.mxu0 %v6919
        %7237 = vmatpush.bf16.msra.mxu0 %v6911
        %7238 = vmatpush.bf16.msra.mxu0 %v6903
        %7239 = vmatpush.bf16.msra.mxu0 %v6895
        %7240 = vmatpush.bf16.msra.mxu0 %v6887
        %7241 = vmatpush.bf16.msra.mxu0 %v6879
        %7242 = vmatmul.bf16.gmra.mxu0 %v6422
        %v7243 = vpop.f32.mrf.mxu0
        %v7244 = vadd.f32 %v7231, %v7243
        %v7245 = vpop.f32.mrf.mxu0
        %7246 = vdwg.mxu0
        %7247 = vmatpush.bf16.msra.mxu0 %v6872
        %7248 = vmatpush.bf16.msra.mxu0 %v6864
        %7249 = vmatpush.bf16.msra.mxu0 %v6856
        %7250 = vmatpush.bf16.msra.mxu0 %v6848
        %7251 = vmatpush.bf16.msra.mxu0 %v6840
        %7252 = vmatpush.bf16.msra.mxu0 %v6832
        %7253 = vmatpush.bf16.msra.mxu0 %v6824
        %7254 = vmatpush.bf16.msra.mxu0 %v6816
        %7255 = vmatmul.bf16.gmra.mxu0 %v6421
        %v7256 = vpop.f32.mrf.mxu0
        %v7257 = vadd.f32 0.0, %v7256
        %v7258 = vpop.f32.mrf.mxu0
        %7259 = vdwg.mxu0
        %7260 = vmatpush.bf16.msra.mxu0 %v6936
        %7261 = vmatpush.bf16.msra.mxu0 %v6928
        %7262 = vmatpush.bf16.msra.mxu0 %v6920
        %7263 = vmatpush.bf16.msra.mxu0 %v6912
        %7264 = vmatpush.bf16.msra.mxu0 %v6904
        %7265 = vmatpush.bf16.msra.mxu0 %v6896
        %7266 = vmatpush.bf16.msra.mxu0 %v6888
        %7267 = vmatpush.bf16.msra.mxu0 %v6880
        %7268 = vmatmul.bf16.gmra.mxu0 %v6422
        %v7269 = vpop.f32.mrf.mxu0
        %v7270 = vadd.f32 %v7257, %v7269
        %v7271 = vpop.f32.mrf.mxu0
        %7272 = vdwg.mxu0
        %v7273 = vadd.f32 %v6278, %v7088
        %v7274 = vadd.f32 %v6279, %v7114
        %v7275 = vadd.f32 %v6280, %v7140
        %v7276 = vadd.f32 %v6281, %v7166
        %v7277 = vadd.f32 %v6282, %v7192
        %v7278 = vadd.f32 %v6283, %v7218
        %v7279 = vadd.f32 %v6284, %v7244
        %v7280 = vadd.f32 %v6285, %v7270
        %7281 = vst [vmem:[#allocation3] sm:$0xff] %v7273
        %7282 = vst [vmem:[#allocation3 + $0x8] sm:$0xff] %v7274
        %7283 = vst [vmem:[#allocation3 + $0x10] sm:$0xff] %v7275
        %7284 = vst [vmem:[#allocation3 + $0x18] sm:$0xff] %v7276
        %7285 = vst [vmem:[#allocation3 + $0x20] sm:$0xff] %v7277
        %7286 = vst [vmem:[#allocation3 + $0x28] sm:$0xff] %v7278
        %7287 = vst [vmem:[#allocation3 + $0x30] sm:$0xff] %v7279
        %7288 = vst [vmem:[#allocation3 + $0x38] sm:$0xff] %v7280
        %p7289 = scmp.eq.s32.totalorder %s31, 7
        // Predicated region
        $region85: #{tpu_custom_call.1} parent=51 // pred_check
          %p7290 = pneg %p7289
        $region86: #{tpu_custom_call.1} parent=51 // pred_check_branch
          %7292 = sbr.rel (%p7290) target = $region88
        $region87: #{tpu_custom_call.1} parent=51 // pred_region
          %v7293 = vld [vmem:[#allocation3] sm:$0xff]
          %v7294 = vld [vmem:[#allocation3 + $0x8] sm:$0xff]
          %v7295 = vld [vmem:[#allocation3 + $0x10] sm:$0xff]
          %v7296 = vld [vmem:[#allocation3 + $0x18] sm:$0xff]
          %v7297 = vld [vmem:[#allocation3 + $0x20] sm:$0xff]
          %v7298 = vld [vmem:[#allocation3 + $0x28] sm:$0xff]
          %v7299 = vld [vmem:[#allocation3 + $0x30] sm:$0xff]
          %v7300 = vld [vmem:[#allocation3 + $0x38] sm:$0xff]
          %v7301 = vmax.f32 %v7293, 0.0
          %v7302 = vmax.f32 %v7294, 0.0
          %v7303 = vmax.f32 %v7295, 0.0
          %v7304 = vmax.f32 %v7296, 0.0
          %v7305 = vmax.f32 %v7297, 0.0
          %v7306 = vmax.f32 %v7298, 0.0
          %v7307 = vmax.f32 %v7299, 0.0
          %v7308 = vmax.f32 %v7300, 0.0
          %v7309 = vpack.c.bf16 %v7301, %v7301
          %v7310 = vpack.c.bf16 %v7302, %v7302
          %v7311 = vpack.c.bf16 %v7303, %v7303
          %v7312 = vpack.c.bf16 %v7304, %v7304
          %v7313 = vpack.c.bf16 %v7305, %v7305
          %v7314 = vpack.c.bf16 %v7306, %v7306
          %v7315 = vpack.c.bf16 %v7307, %v7307
          %v7316 = vpack.c.bf16 %v7308, %v7308
          %v7317 = vld [vmem:[#allocation13] sm:$0xf]
          %v7318 = vld [vmem:[#allocation13 + $0x4] sm:$0xf]
          %v7319 = vld [vmem:[#allocation13 + $0x8] sm:$0xf]
          %v7320 = vld [vmem:[#allocation13 + $0xc] sm:$0xf]
          %v7321 = vld [vmem:[#allocation13 + $0x10] sm:$0xf]
          %v7322 = vld [vmem:[#allocation13 + $0x14] sm:$0xf]
          %v7323 = vld [vmem:[#allocation13 + $0x18] sm:$0xf]
          %v7324 = vld [vmem:[#allocation13 + $0x1c] sm:$0xf]
          %v7325 = vld [vmem:[#allocation13 + $0x20] sm:$0xf]
          %v7326 = vld [vmem:[#allocation13 + $0x24] sm:$0xf]
          %v7327 = vld [vmem:[#allocation13 + $0x28] sm:$0xf]
          %v7328 = vld [vmem:[#allocation13 + $0x2c] sm:$0xf]
          %v7329 = vld [vmem:[#allocation13 + $0x30] sm:$0xf]
          %v7330 = vld [vmem:[#allocation13 + $0x34] sm:$0xf]
          %v7331 = vld [vmem:[#allocation13 + $0x38] sm:$0xf]
          %v7332 = vld [vmem:[#allocation13 + $0x3c] sm:$0xf]
          %v7333 = vld [vmem:[#allocation13 + $0x40] sm:$0xf]
          %v7334 = vld [vmem:[#allocation13 + $0x44] sm:$0xf]
          %v7335 = vld [vmem:[#allocation13 + $0x48] sm:$0xf]
          %v7336 = vld [vmem:[#allocation13 + $0x4c] sm:$0xf]
          %v7337 = vld [vmem:[#allocation13 + $0x50] sm:$0xf]
          %v7338 = vld [vmem:[#allocation13 + $0x54] sm:$0xf]
          %v7339 = vld [vmem:[#allocation13 + $0x58] sm:$0xf]
          %v7340 = vld [vmem:[#allocation13 + $0x5c] sm:$0xf]
          %v7341 = vld [vmem:[#allocation13 + $0x60] sm:$0xf]
          %v7342 = vld [vmem:[#allocation13 + $0x64] sm:$0xf]
          %v7343 = vld [vmem:[#allocation13 + $0x68] sm:$0xf]
          %v7344 = vld [vmem:[#allocation13 + $0x6c] sm:$0xf]
          %v7345 = vld [vmem:[#allocation13 + $0x70] sm:$0xf]
          %v7346 = vld [vmem:[#allocation13 + $0x74] sm:$0xf]
          %v7347 = vld [vmem:[#allocation13 + $0x78] sm:$0xf]
          %v7348 = vld [vmem:[#allocation13 + $0x7c] sm:$0xf]
          %v7349 = vld [vmem:[#allocation13 + $0x80] sm:$0xf]
          %v7350 = vld [vmem:[#allocation13 + $0x84] sm:$0xf]
          %v7351 = vld [vmem:[#allocation13 + $0x88] sm:$0xf]
          %v7352 = vld [vmem:[#allocation13 + $0x8c] sm:$0xf]
          %v7353 = vld [vmem:[#allocation13 + $0x90] sm:$0xf]
          %v7354 = vld [vmem:[#allocation13 + $0x94] sm:$0xf]
          %v7355 = vld [vmem:[#allocation13 + $0x98] sm:$0xf]
          %v7356 = vld [vmem:[#allocation13 + $0x9c] sm:$0xf]
          %v7357 = vld [vmem:[#allocation13 + $0xa0] sm:$0xf]
          %v7358 = vld [vmem:[#allocation13 + $0xa4] sm:$0xf]
          %v7359 = vld [vmem:[#allocation13 + $0xa8] sm:$0xf]
          %v7360 = vld [vmem:[#allocation13 + $0xac] sm:$0xf]
          %v7361 = vld [vmem:[#allocation13 + $0xb0] sm:$0xf]
          %v7362 = vld [vmem:[#allocation13 + $0xb4] sm:$0xf]
          %v7363 = vld [vmem:[#allocation13 + $0xb8] sm:$0xf]
          %v7364 = vld [vmem:[#allocation13 + $0xbc] sm:$0xf]
          %v7365 = vld [vmem:[#allocation13 + $0xc0] sm:$0xf]
          %v7366 = vld [vmem:[#allocation13 + $0xc4] sm:$0xf]
          %v7367 = vld [vmem:[#allocation13 + $0xc8] sm:$0xf]
          %v7368 = vld [vmem:[#allocation13 + $0xcc] sm:$0xf]
          %v7369 = vld [vmem:[#allocation13 + $0xd0] sm:$0xf]
          %v7370 = vld [vmem:[#allocation13 + $0xd4] sm:$0xf]
          %v7371 = vld [vmem:[#allocation13 + $0xd8] sm:$0xf]
          %v7372 = vld [vmem:[#allocation13 + $0xdc] sm:$0xf]
          %v7373 = vld [vmem:[#allocation13 + $0xe0] sm:$0xf]
          %v7374 = vld [vmem:[#allocation13 + $0xe4] sm:$0xf]
          %v7375 = vld [vmem:[#allocation13 + $0xe8] sm:$0xf]
          %v7376 = vld [vmem:[#allocation13 + $0xec] sm:$0xf]
          %v7377 = vld [vmem:[#allocation13 + $0xf0] sm:$0xf]
          %v7378 = vld [vmem:[#allocation13 + $0xf4] sm:$0xf]
          %v7379 = vld [vmem:[#allocation13 + $0xf8] sm:$0xf]
          %v7380 = vld [vmem:[#allocation13 + $0xfc] sm:$0xf]
          %v7381 = vld [vmem:[#allocation13 + $0x100] sm:$0xf]
          %v7382 = vld [vmem:[#allocation13 + $0x104] sm:$0xf]
          %v7383 = vld [vmem:[#allocation13 + $0x108] sm:$0xf]
          %v7384 = vld [vmem:[#allocation13 + $0x10c] sm:$0xf]
          %v7385 = vld [vmem:[#allocation13 + $0x110] sm:$0xf]
          %v7386 = vld [vmem:[#allocation13 + $0x114] sm:$0xf]
          %v7387 = vld [vmem:[#allocation13 + $0x118] sm:$0xf]
          %v7388 = vld [vmem:[#allocation13 + $0x11c] sm:$0xf]
          %v7389 = vld [vmem:[#allocation13 + $0x120] sm:$0xf]
          %v7390 = vld [vmem:[#allocation13 + $0x124] sm:$0xf]
          %v7391 = vld [vmem:[#allocation13 + $0x128] sm:$0xf]
          %v7392 = vld [vmem:[#allocation13 + $0x12c] sm:$0xf]
          %v7393 = vld [vmem:[#allocation13 + $0x130] sm:$0xf]
          %v7394 = vld [vmem:[#allocation13 + $0x134] sm:$0xf]
          %v7395 = vld [vmem:[#allocation13 + $0x138] sm:$0xf]
          %v7396 = vld [vmem:[#allocation13 + $0x13c] sm:$0xf]
          %v7397 = vld [vmem:[#allocation13 + $0x140] sm:$0xf]
          %v7398 = vld [vmem:[#allocation13 + $0x144] sm:$0xf]
          %v7399 = vld [vmem:[#allocation13 + $0x148] sm:$0xf]
          %v7400 = vld [vmem:[#allocation13 + $0x14c] sm:$0xf]
          %v7401 = vld [vmem:[#allocation13 + $0x150] sm:$0xf]
          %v7402 = vld [vmem:[#allocation13 + $0x154] sm:$0xf]
          %v7403 = vld [vmem:[#allocation13 + $0x158] sm:$0xf]
          %v7404 = vld [vmem:[#allocation13 + $0x15c] sm:$0xf]
          %v7405 = vld [vmem:[#allocation13 + $0x160] sm:$0xf]
          %v7406 = vld [vmem:[#allocation13 + $0x164] sm:$0xf]
          %v7407 = vld [vmem:[#allocation13 + $0x168] sm:$0xf]
          %v7408 = vld [vmem:[#allocation13 + $0x16c] sm:$0xf]
          %v7409 = vld [vmem:[#allocation13 + $0x170] sm:$0xf]
          %v7410 = vld [vmem:[#allocation13 + $0x174] sm:$0xf]
          %v7411 = vld [vmem:[#allocation13 + $0x178] sm:$0xf]
          %v7412 = vld [vmem:[#allocation13 + $0x17c] sm:$0xf]
          %v7413 = vld [vmem:[#allocation13 + $0x180] sm:$0xf]
          %v7414 = vld [vmem:[#allocation13 + $0x184] sm:$0xf]
          %v7415 = vld [vmem:[#allocation13 + $0x188] sm:$0xf]
          %v7416 = vld [vmem:[#allocation13 + $0x18c] sm:$0xf]
          %v7417 = vld [vmem:[#allocation13 + $0x190] sm:$0xf]
          %v7418 = vld [vmem:[#allocation13 + $0x194] sm:$0xf]
          %v7419 = vld [vmem:[#allocation13 + $0x198] sm:$0xf]
          %v7420 = vld [vmem:[#allocation13 + $0x19c] sm:$0xf]
          %v7421 = vld [vmem:[#allocation13 + $0x1a0] sm:$0xf]
          %v7422 = vld [vmem:[#allocation13 + $0x1a4] sm:$0xf]
          %v7423 = vld [vmem:[#allocation13 + $0x1a8] sm:$0xf]
          %v7424 = vld [vmem:[#allocation13 + $0x1ac] sm:$0xf]
          %v7425 = vld [vmem:[#allocation13 + $0x1b0] sm:$0xf]
          %v7426 = vld [vmem:[#allocation13 + $0x1b4] sm:$0xf]
          %v7427 = vld [vmem:[#allocation13 + $0x1b8] sm:$0xf]
          %v7428 = vld [vmem:[#allocation13 + $0x1bc] sm:$0xf]
          %v7429 = vld [vmem:[#allocation13 + $0x1c0] sm:$0xf]
          %v7430 = vld [vmem:[#allocation13 + $0x1c4] sm:$0xf]
          %v7431 = vld [vmem:[#allocation13 + $0x1c8] sm:$0xf]
          %v7432 = vld [vmem:[#allocation13 + $0x1cc] sm:$0xf]
          %v7433 = vld [vmem:[#allocation13 + $0x1d0] sm:$0xf]
          %v7434 = vld [vmem:[#allocation13 + $0x1d4] sm:$0xf]
          %v7435 = vld [vmem:[#allocation13 + $0x1d8] sm:$0xf]
          %v7436 = vld [vmem:[#allocation13 + $0x1dc] sm:$0xf]
          %v7437 = vld [vmem:[#allocation13 + $0x1e0] sm:$0xf]
          %v7438 = vld [vmem:[#allocation13 + $0x1e4] sm:$0xf]
          %v7439 = vld [vmem:[#allocation13 + $0x1e8] sm:$0xf]
          %v7440 = vld [vmem:[#allocation13 + $0x1ec] sm:$0xf]
          %v7441 = vld [vmem:[#allocation13 + $0x1f0] sm:$0xf]
          %v7442 = vld [vmem:[#allocation13 + $0x1f4] sm:$0xf]
          %v7443 = vld [vmem:[#allocation13 + $0x1f8] sm:$0xf]
          %v7444 = vld [vmem:[#allocation13 + $0x1fc] sm:$0xf]
          %v7445 = vld [vmem:[#allocation15] sm:$0x1]
          %v7447 = vperm.slane %v7445, 0
          %v7577 = vunpack.c.l.b16 %v7317
          %v7578 = vunpack.c.l.b16 %v7318
          %v7579 = vunpack.c.l.b16 %v7319
          %v7580 = vunpack.c.l.b16 %v7320
          %v7581 = vunpack.c.l.b16 %v7321
          %v7582 = vunpack.c.l.b16 %v7322
          %v7583 = vunpack.c.l.b16 %v7323
          %v7584 = vunpack.c.l.b16 %v7324
          %v7585 = vunpack.c.l.b16 %v7325
          %v7586 = vunpack.c.l.b16 %v7326
          %v7587 = vunpack.c.l.b16 %v7327
          %v7588 = vunpack.c.l.b16 %v7328
          %v7589 = vunpack.c.l.b16 %v7329
          %v7590 = vunpack.c.l.b16 %v7330
          %v7591 = vunpack.c.l.b16 %v7331
          %v7592 = vunpack.c.l.b16 %v7332
          %v7593 = vunpack.c.l.b16 %v7333
          %v7594 = vunpack.c.l.b16 %v7334
          %v7595 = vunpack.c.l.b16 %v7335
          %v7596 = vunpack.c.l.b16 %v7336
          %v7597 = vunpack.c.l.b16 %v7337
          %v7598 = vunpack.c.l.b16 %v7338
          %v7599 = vunpack.c.l.b16 %v7339
          %v7600 = vunpack.c.l.b16 %v7340
          %v7601 = vunpack.c.l.b16 %v7341
          %v7602 = vunpack.c.l.b16 %v7342
          %v7603 = vunpack.c.l.b16 %v7343
          %v7604 = vunpack.c.l.b16 %v7344
          %v7605 = vunpack.c.l.b16 %v7345
          %v7606 = vunpack.c.l.b16 %v7346
          %v7607 = vunpack.c.l.b16 %v7347
          %v7608 = vunpack.c.l.b16 %v7348
          %v7609 = vunpack.c.l.b16 %v7349
          %v7610 = vunpack.c.l.b16 %v7350
          %v7611 = vunpack.c.l.b16 %v7351
          %v7612 = vunpack.c.l.b16 %v7352
          %v7613 = vunpack.c.l.b16 %v7353
          %v7614 = vunpack.c.l.b16 %v7354
          %v7615 = vunpack.c.l.b16 %v7355
          %v7616 = vunpack.c.l.b16 %v7356
          %v7617 = vunpack.c.l.b16 %v7357
          %v7618 = vunpack.c.l.b16 %v7358
          %v7619 = vunpack.c.l.b16 %v7359
          %v7620 = vunpack.c.l.b16 %v7360
          %v7621 = vunpack.c.l.b16 %v7361
          %v7622 = vunpack.c.l.b16 %v7362
          %v7623 = vunpack.c.l.b16 %v7363
          %v7624 = vunpack.c.l.b16 %v7364
          %v7625 = vunpack.c.l.b16 %v7365
          %v7626 = vunpack.c.l.b16 %v7366
          %v7627 = vunpack.c.l.b16 %v7367
          %v7628 = vunpack.c.l.b16 %v7368
          %v7629 = vunpack.c.l.b16 %v7369
          %v7630 = vunpack.c.l.b16 %v7370
          %v7631 = vunpack.c.l.b16 %v7371
          %v7632 = vunpack.c.l.b16 %v7372
          %v7633 = vunpack.c.l.b16 %v7373
          %v7634 = vunpack.c.l.b16 %v7374
          %v7635 = vunpack.c.l.b16 %v7375
          %v7636 = vunpack.c.l.b16 %v7376
          %v7637 = vunpack.c.l.b16 %v7377
          %v7638 = vunpack.c.l.b16 %v7378
          %v7639 = vunpack.c.l.b16 %v7379
          %v7640 = vunpack.c.l.b16 %v7380
          %v7641 = vunpack.c.l.b16 %v7381
          %v7642 = vunpack.c.l.b16 %v7382
          %v7643 = vunpack.c.l.b16 %v7383
          %v7644 = vunpack.c.l.b16 %v7384
          %v7645 = vunpack.c.l.b16 %v7385
          %v7646 = vunpack.c.l.b16 %v7386
          %v7647 = vunpack.c.l.b16 %v7387
          %v7648 = vunpack.c.l.b16 %v7388
          %v7649 = vunpack.c.l.b16 %v7389
          %v7650 = vunpack.c.l.b16 %v7390
          %v7651 = vunpack.c.l.b16 %v7391
          %v7652 = vunpack.c.l.b16 %v7392
          %v7653 = vunpack.c.l.b16 %v7393
          %v7654 = vunpack.c.l.b16 %v7394
          %v7655 = vunpack.c.l.b16 %v7395
          %v7656 = vunpack.c.l.b16 %v7396
          %v7657 = vunpack.c.l.b16 %v7397
          %v7658 = vunpack.c.l.b16 %v7398
          %v7659 = vunpack.c.l.b16 %v7399
          %v7660 = vunpack.c.l.b16 %v7400
          %v7661 = vunpack.c.l.b16 %v7401
          %v7662 = vunpack.c.l.b16 %v7402
          %v7663 = vunpack.c.l.b16 %v7403
          %v7664 = vunpack.c.l.b16 %v7404
          %v7665 = vunpack.c.l.b16 %v7405
          %v7666 = vunpack.c.l.b16 %v7406
          %v7667 = vunpack.c.l.b16 %v7407
          %v7668 = vunpack.c.l.b16 %v7408
          %v7669 = vunpack.c.l.b16 %v7409
          %v7670 = vunpack.c.l.b16 %v7410
          %v7671 = vunpack.c.l.b16 %v7411
          %v7672 = vunpack.c.l.b16 %v7412
          %v7673 = vunpack.c.l.b16 %v7413
          %v7674 = vunpack.c.l.b16 %v7414
          %v7675 = vunpack.c.l.b16 %v7415
          %v7676 = vunpack.c.l.b16 %v7416
          %v7677 = vunpack.c.l.b16 %v7417
          %v7678 = vunpack.c.l.b16 %v7418
          %v7679 = vunpack.c.l.b16 %v7419
          %v7680 = vunpack.c.l.b16 %v7420
          %v7681 = vunpack.c.l.b16 %v7421
          %v7682 = vunpack.c.l.b16 %v7422
          %v7683 = vunpack.c.l.b16 %v7423
          %v7684 = vunpack.c.l.b16 %v7424
          %v7685 = vunpack.c.l.b16 %v7425
          %v7686 = vunpack.c.l.b16 %v7426
          %v7687 = vunpack.c.l.b16 %v7427
          %v7688 = vunpack.c.l.b16 %v7428
          %v7689 = vunpack.c.l.b16 %v7429
          %v7690 = vunpack.c.l.b16 %v7430
          %v7691 = vunpack.c.l.b16 %v7431
          %v7692 = vunpack.c.l.b16 %v7432
          %v7693 = vunpack.c.l.b16 %v7433
          %v7694 = vunpack.c.l.b16 %v7434
          %v7695 = vunpack.c.l.b16 %v7435
          %v7696 = vunpack.c.l.b16 %v7436
          %v7697 = vunpack.c.l.b16 %v7437
          %v7698 = vunpack.c.l.b16 %v7438
          %v7699 = vunpack.c.l.b16 %v7439
          %v7700 = vunpack.c.l.b16 %v7440
          %v7701 = vunpack.c.l.b16 %v7441
          %v7702 = vunpack.c.l.b16 %v7442
          %v7703 = vunpack.c.l.b16 %v7443
          %v7704 = vunpack.c.l.b16 %v7444
          %v7705 = vpack.c.b16 %v7578, %v7577
          %v7706 = vpack.c.b16 %v7580, %v7579
          %v7707 = vpack.c.b16 %v7582, %v7581
          %v7708 = vpack.c.b16 %v7584, %v7583
          %v7709 = vpack.c.b16 %v7586, %v7585
          %v7710 = vpack.c.b16 %v7588, %v7587
          %v7711 = vpack.c.b16 %v7590, %v7589
          %v7712 = vpack.c.b16 %v7592, %v7591
          %v7713 = vpack.c.b16 %v7594, %v7593
          %v7714 = vpack.c.b16 %v7596, %v7595
          %v7715 = vpack.c.b16 %v7598, %v7597
          %v7716 = vpack.c.b16 %v7600, %v7599
          %v7717 = vpack.c.b16 %v7602, %v7601
          %v7718 = vpack.c.b16 %v7604, %v7603
          %v7719 = vpack.c.b16 %v7606, %v7605
          %v7720 = vpack.c.b16 %v7608, %v7607
          %v7721 = vpack.c.b16 %v7610, %v7609
          %v7722 = vpack.c.b16 %v7612, %v7611
          %v7723 = vpack.c.b16 %v7614, %v7613
          %v7724 = vpack.c.b16 %v7616, %v7615
          %v7725 = vpack.c.b16 %v7618, %v7617
          %v7726 = vpack.c.b16 %v7620, %v7619
          %v7727 = vpack.c.b16 %v7622, %v7621
          %v7728 = vpack.c.b16 %v7624, %v7623
          %v7729 = vpack.c.b16 %v7626, %v7625
          %v7730 = vpack.c.b16 %v7628, %v7627
          %v7731 = vpack.c.b16 %v7630, %v7629
          %v7732 = vpack.c.b16 %v7632, %v7631
          %v7733 = vpack.c.b16 %v7634, %v7633
          %v7734 = vpack.c.b16 %v7636, %v7635
          %v7735 = vpack.c.b16 %v7638, %v7637
          %v7736 = vpack.c.b16 %v7640, %v7639
          %v7737 = vpack.c.b16 %v7642, %v7641
          %v7738 = vpack.c.b16 %v7644, %v7643
          %v7739 = vpack.c.b16 %v7646, %v7645
          %v7740 = vpack.c.b16 %v7648, %v7647
          %v7741 = vpack.c.b16 %v7650, %v7649
          %v7742 = vpack.c.b16 %v7652, %v7651
          %v7743 = vpack.c.b16 %v7654, %v7653
          %v7744 = vpack.c.b16 %v7656, %v7655
          %v7745 = vpack.c.b16 %v7658, %v7657
          %v7746 = vpack.c.b16 %v7660, %v7659
          %v7747 = vpack.c.b16 %v7662, %v7661
          %v7748 = vpack.c.b16 %v7664, %v7663
          %v7749 = vpack.c.b16 %v7666, %v7665
          %v7750 = vpack.c.b16 %v7668, %v7667
          %v7751 = vpack.c.b16 %v7670, %v7669
          %v7752 = vpack.c.b16 %v7672, %v7671
          %v7753 = vpack.c.b16 %v7674, %v7673
          %v7754 = vpack.c.b16 %v7676, %v7675
          %v7755 = vpack.c.b16 %v7678, %v7677
          %v7756 = vpack.c.b16 %v7680, %v7679
          %v7757 = vpack.c.b16 %v7682, %v7681
          %v7758 = vpack.c.b16 %v7684, %v7683
          %v7759 = vpack.c.b16 %v7686, %v7685
          %v7760 = vpack.c.b16 %v7688, %v7687
          %v7761 = vpack.c.b16 %v7690, %v7689
          %v7762 = vpack.c.b16 %v7692, %v7691
          %v7763 = vpack.c.b16 %v7694, %v7693
          %v7764 = vpack.c.b16 %v7696, %v7695
          %v7765 = vpack.c.b16 %v7698, %v7697
          %v7766 = vpack.c.b16 %v7700, %v7699
          %v7767 = vpack.c.b16 %v7702, %v7701
          %v7768 = vpack.c.b16 %v7704, %v7703
          %7833 = vmatpush.bf16.msra.mxu0 %v7712
          %7834 = vmatpush.bf16.msra.mxu0 %v7711
          %7835 = vmatpush.bf16.msra.mxu0 %v7710
          %7836 = vmatpush.bf16.msra.mxu0 %v7709
          %7837 = vmatpush.bf16.msra.mxu0 %v7708
          %7838 = vmatpush.bf16.msra.mxu0 %v7707
          %7839 = vmatpush.bf16.msra.mxu0 %v7706
          %7840 = vmatpush.bf16.msra.mxu0 %v7705
          %7841 = vmatmul.bf16.gmra.mxu0 %v7309
          %v7842 = vpop.f32.mrf.mxu0
          %v7843 = vadd.f32 %v7447, %v7842
          %v7844 = vpop.f32.mrf.mxu0
          %7845 = vdwg.mxu0
          %7846 = vmatpush.bf16.msra.mxu0 %v7720
          %7847 = vmatpush.bf16.msra.mxu0 %v7719
          %7848 = vmatpush.bf16.msra.mxu0 %v7718
          %7849 = vmatpush.bf16.msra.mxu0 %v7717
          %7850 = vmatpush.bf16.msra.mxu0 %v7716
          %7851 = vmatpush.bf16.msra.mxu0 %v7715
          %7852 = vmatpush.bf16.msra.mxu0 %v7714
          %7853 = vmatpush.bf16.msra.mxu0 %v7713
          %7854 = vmatmul.bf16.gmra.mxu0 %v7310
          %v7855 = vpop.f32.mrf.mxu0
          %v7856 = vadd.f32 %v7843, %v7855
          %v7857 = vpop.f32.mrf.mxu0
          %7858 = vdwg.mxu0
          %7859 = vmatpush.bf16.msra.mxu0 %v7728
          %7860 = vmatpush.bf16.msra.mxu0 %v7727
          %7861 = vmatpush.bf16.msra.mxu0 %v7726
          %7862 = vmatpush.bf16.msra.mxu0 %v7725
          %7863 = vmatpush.bf16.msra.mxu0 %v7724
          %7864 = vmatpush.bf16.msra.mxu0 %v7723
          %7865 = vmatpush.bf16.msra.mxu0 %v7722
          %7866 = vmatpush.bf16.msra.mxu0 %v7721
          %7867 = vmatmul.bf16.gmra.mxu0 %v7311
          %v7868 = vpop.f32.mrf.mxu0
          %v7869 = vadd.f32 %v7856, %v7868
          %v7870 = vpop.f32.mrf.mxu0
          %7871 = vdwg.mxu0
          %7872 = vmatpush.bf16.msra.mxu0 %v7736
          %7873 = vmatpush.bf16.msra.mxu0 %v7735
          %7874 = vmatpush.bf16.msra.mxu0 %v7734
          %7875 = vmatpush.bf16.msra.mxu0 %v7733
          %7876 = vmatpush.bf16.msra.mxu0 %v7732
          %7877 = vmatpush.bf16.msra.mxu0 %v7731
          %7878 = vmatpush.bf16.msra.mxu0 %v7730
          %7879 = vmatpush.bf16.msra.mxu0 %v7729
          %7880 = vmatmul.bf16.gmra.mxu0 %v7312
          %v7881 = vpop.f32.mrf.mxu0
          %v7882 = vadd.f32 %v7869, %v7881
          %v7883 = vpop.f32.mrf.mxu0
          %7884 = vdwg.mxu0
          %7885 = vmatpush.bf16.msra.mxu0 %v7744
          %7886 = vmatpush.bf16.msra.mxu0 %v7743
          %7887 = vmatpush.bf16.msra.mxu0 %v7742
          %7888 = vmatpush.bf16.msra.mxu0 %v7741
          %7889 = vmatpush.bf16.msra.mxu0 %v7740
          %7890 = vmatpush.bf16.msra.mxu0 %v7739
          %7891 = vmatpush.bf16.msra.mxu0 %v7738
          %7892 = vmatpush.bf16.msra.mxu0 %v7737
          %7893 = vmatmul.bf16.gmra.mxu0 %v7313
          %v7894 = vpop.f32.mrf.mxu0
          %v7895 = vadd.f32 %v7882, %v7894
          %v7896 = vpop.f32.mrf.mxu0
          %7897 = vdwg.mxu0
          %7898 = vmatpush.bf16.msra.mxu0 %v7752
          %7899 = vmatpush.bf16.msra.mxu0 %v7751
          %7900 = vmatpush.bf16.msra.mxu0 %v7750
          %7901 = vmatpush.bf16.msra.mxu0 %v7749
          %7902 = vmatpush.bf16.msra.mxu0 %v7748
          %7903 = vmatpush.bf16.msra.mxu0 %v7747
          %7904 = vmatpush.bf16.msra.mxu0 %v7746
          %7905 = vmatpush.bf16.msra.mxu0 %v7745
          %7906 = vmatmul.bf16.gmra.mxu0 %v7314
          %v7907 = vpop.f32.mrf.mxu0
          %v7908 = vadd.f32 %v7895, %v7907
          %v7909 = vpop.f32.mrf.mxu0
          %7910 = vdwg.mxu0
          %7911 = vmatpush.bf16.msra.mxu0 %v7760
          %7912 = vmatpush.bf16.msra.mxu0 %v7759
          %7913 = vmatpush.bf16.msra.mxu0 %v7758
          %7914 = vmatpush.bf16.msra.mxu0 %v7757
          %7915 = vmatpush.bf16.msra.mxu0 %v7756
          %7916 = vmatpush.bf16.msra.mxu0 %v7755
          %7917 = vmatpush.bf16.msra.mxu0 %v7754
          %7918 = vmatpush.bf16.msra.mxu0 %v7753
          %7919 = vmatmul.bf16.gmra.mxu0 %v7315
          %v7920 = vpop.f32.mrf.mxu0
          %v7921 = vadd.f32 %v7908, %v7920
          %v7922 = vpop.f32.mrf.mxu0
          %7923 = vdwg.mxu0
          %7924 = vmatpush.bf16.msra.mxu0 %v7768
          %7925 = vmatpush.bf16.msra.mxu0 %v7767
          %7926 = vmatpush.bf16.msra.mxu0 %v7766
          %7927 = vmatpush.bf16.msra.mxu0 %v7765
          %7928 = vmatpush.bf16.msra.mxu0 %v7764
          %7929 = vmatpush.bf16.msra.mxu0 %v7763
          %7930 = vmatpush.bf16.msra.mxu0 %v7762
          %7931 = vmatpush.bf16.msra.mxu0 %v7761
          %7932 = vmatmul.bf16.gmra.mxu0 %v7316
          %v7933 = vpop.f32.mrf.mxu0
          %v7934 = vadd.f32 %v7921, %v7933
          %v7935 = vpop.f32.mrf.mxu0
          %7936 = vdwg.mxu0
          %7937 = vst [vmem:[#allocation16] sm:$0xff] %v7934
        $region88: #{tpu_custom_call.1} parent=51 // pred_fallthru
          _
        // Predicated region
        $region89: #{tpu_custom_call.1} parent=51 // pred_check
          %p7938 = pneg %p234
        $region90: #{tpu_custom_call.1} parent=51 // pred_check_branch
          %7940 = sbr.rel (%p7938) target = $region92
        $region91: #{tpu_custom_call.1} parent=51 // pred_region
          %7942 = vsyncadd [#allocation6], 0
          %s7943 = smul.addr %s30, 8
          %s7944 = scalar_lea.hbm %s8, %s7943
          %s7946 = sshll.u32 [#allocation16], 4
          %s7947 = int_to_ptr.vmem [resolvable:$true] %s7946
          %s7948 = sshll.u32 %s7944, 4
          %s7949 = int_to_ptr.hbm [resolvable:$true] %s7948
          %7951 = dma.vmem_to_hbm [thread:$0]  %s7947, 128, %s7949, [#allocation6]
        $region92: #{tpu_custom_call.1} parent=51 // pred_fallthru
          _
        // Predicated region
        $region93: #{tpu_custom_call.1} parent=51 // pred_check
          %p7952 = pneg %p234
        $region94: #{tpu_custom_call.1} parent=51 // pred_check_branch
          %7954 = sbr.rel (%p7952) target = $region96
        $region95: #{tpu_custom_call.1} parent=51 // pred_region
          %7956 = dma.done [#allocation6], 128
        $region96: #{tpu_custom_call.1} parent=51 // pred_fallthru
          _
      $region52: #{tpu_custom_call.1} parent=5 // pred_fallthru
        _
      %p7957 = scmp.le.s32.totalorder 2, %s21
      // Predicated region
      $region97: #{tpu_custom_call.1} parent=5 // pred_check
        %p7958 = pneg %p7957
      $region98: #{tpu_custom_call.1} parent=5 // pred_check_branch
        %7960 = sbr.rel (%p7958) target = $region100
      $region99: #{tpu_custom_call.1} parent=5 // pred_region
        %s7961 = ssub.s32 %s21, 2
      $region100: #{tpu_custom_call.1} parent=5 // pred_fallthru
        _
    $region6: #{tpu_custom_call.1} parent=1 // loop_footer
      %s25 = sadd.s32 1, %s21
    $region7: #{tpu_custom_call.1} parent=1 // loop_footer_branch
      %20 = sbr.rel target = $region3
    $region8: #{tpu_custom_call.1} parent=1 // loop_exit
      _
    %7962 = vsyncpa [#allocation5], 1
    %s7963 = scalar_lea.sflag [#allocation5], 1
    %7964 = vsyncpa %s7963, 1
    %7965 = vsyncpa [#allocation8], 1
    %7966 = vsyncpa [#allocation11], 1
    %s7967 = scalar_lea.sflag [#allocation11], 1
    %7968 = vsyncpa %s7967, 1
    %7969 = vsyncpa [#allocation14], 1
    %7970 = vsyncpa [#allocation6], 1
    %s7971 = scalar_lea.sflag [#allocation6], 1
    %7972 = vsyncpa %s7971, 1

</llo_original>
